<compile_context>
chip_gen: v7x
topology: tpu7x:2x2x1
jax: 0.10.0
libtpu: 0.0.40
codegen_flags: <defaults>
</compile_context>

<pallas_src>
import math

import numpy as np
import jax
import jax.numpy as jnp
from jax.experimental import pallas as pl
from jax.experimental.pallas import tpu as pltpu

# ----------------------------- sizes ----------------------------------------
B = 256                # batch
L = 128                # EEG signal length (full lane width)
TEMB = 128             # sinusoidal time-embedding dim
HID = 256              # stand-in denoiser hidden dim
KDIM = 2 * L + TEMB    # total contraction dim of the first layer
NUM_TIMESTEPS = 1000
BM = B                 # single grid step (one TensorCore on v5e/v6e)


# --------------------- diffusion schedule (glue, numpy float64) --------------
def sigmoid_beta_schedule_np(timesteps, start=-3.0, end=3.0, tau=1.0):
    steps = timesteps + 1
    t = np.linspace(0.0, float(timesteps), steps, dtype=np.float64) / timesteps
    sigmoid = lambda x: 1.0 / (1.0 + np.exp(-x))
    v_start = sigmoid(start / tau)
    v_end = sigmoid(end / tau)
    alphas_cumprod = (-sigmoid((t * (end - start) + start) / tau) + v_end) / (v_end - v_start)
    alphas_cumprod = alphas_cumprod / alphas_cumprod[0]
    betas = 1.0 - alphas_cumprod[1:] / alphas_cumprod[:-1]
    return np.clip(betas, 0.0, 0.999)


def build_schedule_table(timesteps):
    """(T, 4) float32 table: [sqrt_ac, sqrt_1m_ac, sqrt_recip_ac, sqrt_recipm1_ac]."""
    betas = sigmoid_beta_schedule_np(timesteps)
    alphas = 1.0 - betas
    ac = np.cumprod(alphas)
    table = np.stack(
        [np.sqrt(ac), np.sqrt(1.0 - ac), np.sqrt(1.0 / ac), np.sqrt(1.0 / ac - 1.0)],
        axis=-1,
    )
    return jnp.asarray(table, dtype=jnp.float32)


# ----------------- hoisted time-embedding constants (numpy f32) --------------
_HALF = TEMB // 2
_FREQ_BASE = np.exp(
    np.arange(_HALF, dtype=np.float32) * np.float32(-math.log(10000.0) / (_HALF - 1))
).astype(np.float32)                                              # (HALF,)
_TEMB_CONST = np.stack(
    [
        np.concatenate([_FREQ_BASE, _FREQ_BASE]),                 # row 0: per-lane frequency
        np.concatenate([np.zeros(_HALF, np.float32),              # row 1: cos-selector mask
                        np.ones(_HALF, np.float32)]),
    ],
    axis=0,
).astype(np.float32)                                              # (2, TEMB)


# ----------------------------- Pallas kernel ---------------------------------
def e2e_kernel(
    x0_ref, nz_ref, gd_ref, meta_ref, tc_ref,        # activations, packed coefs/t, temb consts
    w1_ref, b1_ref, w2_ref, b2_ref,                   # bf16 weights, f32 biases (VMEM resident)
    pre_noise_ref, pre_x0_ref,                        # two lane-dense (BM, L) f32 outputs
):
    l = x0_ref.shape[1]
    temb_dim = tc_ref.shape[1]

    meta = meta_ref[...]                              # (BM, 8) f32
    c1 = meta[:, 0:1]                                 # sqrt_alphas_cumprod[t]
    c2 = meta[:, 1:2]                                 # sqrt_one_minus_alphas_cumprod[t]
    c3 = meta[:, 2:3]                                 # sqrt_recip_alphas_cumprod[t]
    c4 = meta[:, 3:4]                                 # sqrt_recipm1_alphas_cumprod[t]
    t_f = meta[:, 4:5]                                # t as float

    # (1) guided slab needs zero compute -> start the MXU immediately.
    acc = jnp.dot(
        gd_ref[...].astype(jnp.bfloat16),
        w1_ref[pl.ds(l, l), :],
        preferred_element_type=jnp.float32,
    )

    # (2) q_sample (VPU) overlaps with the first matmul.
    noise_eeg = c1 * x0_ref[...] + c2 * nz_ref[...]   # (BM, L) f32
    acc = acc + jnp.dot(
        noise_eeg.astype(jnp.bfloat16),
        w1_ref[pl.ds(0, l), :],
        preferred_element_type=jnp.float32,
    )

    # (3) sinusoidal time embedding: [sin(t*f) | cos(t*f)] (EUP) overlaps too.
    freqs = tc_ref[0:1, :]                            # (1, TEMB)
    cos_sel = tc_ref[1:2, :] > 0.5                    # (1, TEMB) bool
    args = t_f * freqs                                # (BM, TEMB)
    temb = jnp.where(cos_sel, jnp.cos(args), jnp.sin(args))
    acc = acc + jnp.dot(
        temb.astype(jnp.bfloat16),
        w1_ref[pl.ds(2 * l, temb_dim), :],
        preferred_element_type=jnp.float32,
    )

    # stand-in denoiser tail: relu(acc + b1) @ W2 + b2
    h = jnp.maximum(acc + b1_ref[...], 0.0)
    pre_noise = (
        jnp.dot(h.astype(jnp.bfloat16), w2_ref[...], preferred_element_type=jnp.float32)
        + b2_ref[...]
    )

    # predict_start_from_noise + clamp(-1, 1)
    pre_noise_ref[...] = pre_noise
    pre_x0_ref[...] = jnp.clip(c3 * noise_eeg - c4 * pre_noise, -1.0, 1.0)


# ----------------------------- forward wrapper --------------------------------
def _sample_t_and_noise(key, shape, num_timesteps):
    k_t, k_n = jax.random.split(key)
    t = jax.random.randint(k_t, (shape[0],), 0, num_timesteps)
    noise = jax.random.normal(k_n, shape, dtype=jnp.float32)
    return t, noise


def diffusion_e2e_forward(eeg_noise, eeg_pure, params, sched_table, key):
    """Mirror of GaussianDiffusion_E2ELoss.forward -> (noise, pre_noise, pre_x0)."""
    b, l = eeg_pure.shape
    assert l == L and b % BM == 0

    # RNG + per-timestep coefficient gather stay in glue (as in the PyTorch code);
    # all 4 coefficients come from ONE packed gather, shipped with t as (B, 8).
    t, noise = _sample_t_and_noise(key, (b, l), NUM_TIMESTEPS)
    coefs = sched_table[t]                                           # (B, 4)
    meta = jnp.concatenate(
        [coefs, t.astype(jnp.float32)[:, None], jnp.zeros((b, 3), jnp.float32)],
        axis=-1,
    )                                                                # (B, 8) lane-padded
    tconst = jnp.asarray(_TEMB_CONST)                                # (2, TEMB)

    grid = (b // BM,)
    flops = 2 * b * KDIM * HID + 2 * b * HID * L
    transcendentals = 2 * b * TEMB                                   # sin + cos
    bytes_accessed = (
        3 * b * l * 4 + b * 8 * 4 + 2 * TEMB * 4                     # activations + meta + consts
        + KDIM * HID * 2 + HID * 4 + HID * L * 2 + L * 4             # weights / biases
        + 2 * b * l * 4                                              # two outputs
    )

    pre_noise, pre_x0 = pl.pallas_call(
        e2e_kernel,
        out_shape=(
            jax.ShapeDtypeStruct((b, l), jnp.float32),
            jax.ShapeDtypeStruct((b, l), jnp.float32),
        ),
        grid_spec=pltpu.PrefetchScalarGridSpec(
            num_scalar_prefetch=0,
            grid=grid,
            in_specs=[
                pl.BlockSpec((BM, L), lambda i: (i, 0)),             # eeg_pure tile
                pl.BlockSpec((BM, L), lambda i: (i, 0)),             # noise tile
                pl.BlockSpec((BM, L), lambda i: (i, 0)),             # guided tile
                pl.BlockSpec((BM, 8), lambda i: (i, 0)),             # packed coefs + t
                pl.BlockSpec((2, TEMB), lambda i: (0, 0)),           # temb consts (resident)
                pl.BlockSpec((KDIM, HID), lambda i: (0, 0)),         # W1 (resident)
                pl.BlockSpec((1, HID), lambda i: (0, 0)),            # b1 (resident)
                pl.BlockSpec((HID, L), lambda i: (0, 0)),            # W2 (resident)
                pl.BlockSpec((1, L), lambda i: (0, 0)),              # b2 (resident)
            ],
            out_specs=[
                pl.BlockSpec((BM, L), lambda i: (i, 0)),             # pre_noise
                pl.BlockSpec((BM, L), lambda i: (i, 0)),             # pre_x0
            ],
        ),
        compiler_params=pltpu.CompilerParams(dimension_semantics=("arbitrary",)),
        cost_estimate=pl.CostEstimate(
            flops=flops, transcendentals=transcendentals, bytes_accessed=bytes_accessed
        ),
    )(
        eeg_pure, noise, eeg_noise, meta, tconst,
        params["w1"], params["b1"], params["w2"], params["b2"],
    )

    return noise, pre_noise, pre_x0


# ----------------------------- pure-JAX reference ------------------------------
def diffusion_e2e_reference(eeg_noise, eeg_pure, params, sched_table, key):
    b, l = eeg_pure.shape
    t, noise = _sample_t_and_noise(key, (b, l), NUM_TIMESTEPS)
    coefs = sched_table[t]
    c1, c2, c3, c4 = (coefs[:, i:i + 1] for i in range(4))

    noise_eeg = c1 * eeg_pure + c2 * noise

    freqs = jnp.asarray(_FREQ_BASE)                                  # same f32 constants
    args = t.astype(jnp.float32)[:, None] * freqs[None, :]
    temb = jnp.concatenate([jnp.sin(args), jnp.cos(args)], axis=-1)

    lhs = jnp.concatenate([noise_eeg, eeg_noise, temb], axis=-1).astype(jnp.bfloat16)
    h = jnp.dot(lhs, params["w1"], preferred_element_type=jnp.float32)
    h = jnp.maximum(h + params["b1"], 0.0)
    pre_noise = (
        jnp.dot(h.astype(jnp.bfloat16), params["w2"], preferred_element_type=jnp.float32)
        + params["b2"]
    )
    pre_x0 = jnp.clip(c3 * noise_eeg - c4 * pre_noise, -1.0, 1.0)
    return noise, pre_noise, pre_x0


# ----------------------------- parameter init --------------------------------
def init_params(key):
    # TODO(synk): `self.model` in the original code is an arbitrary external
    # denoiser; it is replaced here by a deterministic bf16 2-layer MLP stand-in
    # conditioned on [noise_eeg | guided | time-embedding].
    k1, k2 = jax.random.split(key)
    scale = 0.02
    return {
        "w1": (scale * jax.random.normal(k1, (KDIM, HID), jnp.float32)).astype(jnp.bfloat16),
        "b1": jnp.zeros((1, HID), jnp.float32),
        "w2": (scale * jax.random.normal(k2, (HID, L), jnp.float32)).astype(jnp.bfloat16),
        "b2": jnp.zeros((1, L), jnp.float32),
    }


# --------------------------------- main ---------------------------------------
if __name__ == "__main__":
    root = jax.random.PRNGKey(0)
    k_param, k_x, k_g, k_fwd = jax.random.split(root, 4)

    sched_table = build_schedule_table(NUM_TIMESTEPS)                # (T, 4) f32
    params = init_params(k_param)

    eeg_pure = jax.random.normal(k_x, (B, L), jnp.float32)           # clean EEG
    eeg_noise = jax.random.normal(k_g, (B, L), jnp.float32)          # noisy / guided EEG

    fwd = jax.jit(diffusion_e2e_forward)
    noise, pre_noise, pre_x0 = fwd(eeg_noise, eeg_pure, params, sched_table, k_fwd)
    jax.block_until_ready((noise, pre_noise, pre_x0))

    assert noise.shape == (B, L) and pre_noise.shape == (B, L) and pre_x0.shape == (B, L)
    assert bool(jnp.all(pre_x0 <= 1.0)) and bool(jnp.all(pre_x0 >= -1.0))
    assert bool(jnp.all(jnp.isfinite(pre_noise)))

    # correctness vs pure-JAX reference (same glue RNG, same bf16 weights)
    r_noise, r_pre_noise, r_pre_x0 = diffusion_e2e_reference(
        eeg_noise, eeg_pure, params, sched_table, k_fwd
    )
    assert bool(jnp.array_equal(noise, r_noise))
    assert bool(jnp.allclose(pre_noise, r_pre_noise, atol=1e-2, rtol=1e-2))
    assert bool(jnp.allclose(pre_x0, r_pre_x0, atol=1e-2, rtol=1e-2))

    print("KERNEL_OK")
</pallas_src>

<mosaic_0001>
module attributes {stable_mosaic.version = 11 : i64} {
  func.func @e2e_kernel(%arg0: i32, %arg1: memref<256x128xf32, #tpu.memory_space<vmem>>, %arg2: memref<256x128xf32, #tpu.memory_space<vmem>>, %arg3: memref<256x128xf32, #tpu.memory_space<vmem>>, %arg4: memref<256x8xf32, #tpu.memory_space<vmem>>, %arg5: memref<2x128xf32, #tpu.memory_space<vmem>>, %arg6: memref<384x256xbf16, #tpu.memory_space<vmem>>, %arg7: memref<1x256xf32, #tpu.memory_space<vmem>>, %arg8: memref<256x128xbf16, #tpu.memory_space<vmem>>, %arg9: memref<1x128xf32, #tpu.memory_space<vmem>>, %arg10: memref<256x128xf32, #tpu.memory_space<vmem>>, %arg11: memref<256x128xf32, #tpu.memory_space<vmem>>) attributes {dimension_semantics = [#tpu.dimension_semantics<arbitrary>], iteration_bounds = array<i64: 1>, scalar_prefetch = 0 : i64, scratch_operands = 0 : i64, tpu.core_type = #tpu.core_type<tc>, window_params = [{transform_indices = @transform_0, window_bounds = array<i64: 256, 128>}, {transform_indices = @transform_1, window_bounds = array<i64: 256, 128>}, {transform_indices = @transform_2, window_bounds = array<i64: 256, 128>}, {transform_indices = @transform_3, window_bounds = array<i64: 256, 8>}, {pipeline_mode = #tpu.pipeline_mode<synchronous>, transform_indices = @transform_4, window_bounds = array<i64: 2, 128>}, {pipeline_mode = #tpu.pipeline_mode<synchronous>, transform_indices = @transform_5, window_bounds = array<i64: 384, 256>}, {pipeline_mode = #tpu.pipeline_mode<synchronous>, transform_indices = @transform_6, window_bounds = array<i64: 1, 256>}, {pipeline_mode = #tpu.pipeline_mode<synchronous>, transform_indices = @transform_7, window_bounds = array<i64: 256, 128>}, {pipeline_mode = #tpu.pipeline_mode<synchronous>, transform_indices = @transform_8, window_bounds = array<i64: 1, 128>}, {transform_indices = @transform_9, window_bounds = array<i64: 256, 128>}, {transform_indices = @transform_10, window_bounds = array<i64: 256, 128>}]} {
    %c0 = arith.constant 0 : index
    %c0_0 = arith.constant 0 : index
    %0 = vector.load %arg4[%c0, %c0_0] : memref<256x8xf32, #tpu.memory_space<vmem>>, vector<256x8xf32>
    %1 = vector.extract_strided_slice %0 {offsets = [0, 0], sizes = [256, 1], strides = [1, 1]} : vector<256x8xf32> to vector<256x1xf32>
    %2 = vector.extract_strided_slice %0 {offsets = [0, 1], sizes = [256, 1], strides = [1, 1]} : vector<256x8xf32> to vector<256x1xf32>
    %3 = vector.extract_strided_slice %0 {offsets = [0, 2], sizes = [256, 1], strides = [1, 1]} : vector<256x8xf32> to vector<256x1xf32>
    %4 = vector.extract_strided_slice %0 {offsets = [0, 3], sizes = [256, 1], strides = [1, 1]} : vector<256x8xf32> to vector<256x1xf32>
    %5 = vector.extract_strided_slice %0 {offsets = [0, 4], sizes = [256, 1], strides = [1, 1]} : vector<256x8xf32> to vector<256x1xf32>
    %c0_1 = arith.constant 0 : index
    %c0_2 = arith.constant 0 : index
    %6 = vector.load %arg3[%c0_1, %c0_2] : memref<256x128xf32, #tpu.memory_space<vmem>>, vector<256x128xf32>
    %7 = arith.truncf %6 : vector<256x128xf32> to vector<256x128xbf16>
    %c128 = arith.constant 128 : index
    %c0_3 = arith.constant 0 : index
    %8 = vector.load %arg6[%c128, %c0_3] : memref<384x256xbf16, #tpu.memory_space<vmem>>, vector<128x256xbf16>
    %cst = arith.constant dense<0.000000e+00> : vector<256x256xf32>
    %9 = tpu.matmul %7, %8, %cst {dimension_numbers = #tpu.dot_dimension_numbers<[1], [0], [0], [1], [0, 0, 1, 1], [], []>} : vector<256x128xbf16>, vector<128x256xbf16>, vector<256x256xf32> -> vector<256x256xf32>
    %c0_4 = arith.constant 0 : index
    %c0_5 = arith.constant 0 : index
    %10 = vector.load %arg1[%c0_4, %c0_5] : memref<256x128xf32, #tpu.memory_space<vmem>>, vector<256x128xf32>
    %11 = vector.broadcast %1 : vector<256x1xf32> to vector<256x128xf32>
    %12 = arith.mulf %11, %10 : vector<256x128xf32>
    %c0_6 = arith.constant 0 : index
    %c0_7 = arith.constant 0 : index
    %13 = vector.load %arg2[%c0_6, %c0_7] : memref<256x128xf32, #tpu.memory_space<vmem>>, vector<256x128xf32>
    %14 = vector.broadcast %2 : vector<256x1xf32> to vector<256x128xf32>
    %15 = arith.mulf %14, %13 : vector<256x128xf32>
    %16 = arith.addf %12, %15 : vector<256x128xf32>
    %17 = arith.truncf %16 : vector<256x128xf32> to vector<256x128xbf16>
    %c0_8 = arith.constant 0 : index
    %c0_9 = arith.constant 0 : index
    %18 = vector.load %arg6[%c0_8, %c0_9] : memref<384x256xbf16, #tpu.memory_space<vmem>>, vector<128x256xbf16>
    %cst_10 = arith.constant dense<0.000000e+00> : vector<256x256xf32>
    %19 = tpu.matmul %17, %18, %cst_10 {dimension_numbers = #tpu.dot_dimension_numbers<[1], [0], [0], [1], [0, 0, 1, 1], [], []>} : vector<256x128xbf16>, vector<128x256xbf16>, vector<256x256xf32> -> vector<256x256xf32>
    %20 = arith.addf %9, %19 : vector<256x256xf32>
    %c0_11 = arith.constant 0 : index
    %c0_12 = arith.constant 0 : index
    %21 = vector.load %arg5[%c0_11, %c0_12] : memref<2x128xf32, #tpu.memory_space<vmem>>, vector<1x128xf32>
    %c1 = arith.constant 1 : index
    %c0_13 = arith.constant 0 : index
    %22 = vector.load %arg5[%c1, %c0_13] : memref<2x128xf32, #tpu.memory_space<vmem>>, vector<1x128xf32>
    %cst_14 = arith.constant 5.000000e-01 : f32
    %23 = vector.broadcast %cst_14 : f32 to vector<1x128xf32>
    %24 = arith.cmpf ogt, %22, %23 : vector<1x128xf32>
    %25 = vector.broadcast %5 : vector<256x1xf32> to vector<256x128xf32>
    %26 = vector.broadcast %21 : vector<1x128xf32> to vector<256x128xf32>
    %27 = arith.mulf %25, %26 : vector<256x128xf32>
    %28 = math.cos %27 : vector<256x128xf32>
    %29 = math.sin %27 : vector<256x128xf32>
    %30 = vector.shape_cast %24 : vector<1x128xi1> to vector<1x128xi1>
    %31 = vector.broadcast %30 : vector<1x128xi1> to vector<256x128xi1>
    %32 = arith.select %31, %28, %29 : vector<256x128xi1>, vector<256x128xf32>
    %33 = arith.truncf %32 : vector<256x128xf32> to vector<256x128xbf16>
    %c256 = arith.constant 256 : index
    %c0_15 = arith.constant 0 : index
    %34 = vector.load %arg6[%c256, %c0_15] : memref<384x256xbf16, #tpu.memory_space<vmem>>, vector<128x256xbf16>
    %cst_16 = arith.constant dense<0.000000e+00> : vector<256x256xf32>
    %35 = tpu.matmul %33, %34, %cst_16 {dimension_numbers = #tpu.dot_dimension_numbers<[1], [0], [0], [1], [0, 0, 1, 1], [], []>} : vector<256x128xbf16>, vector<128x256xbf16>, vector<256x256xf32> -> vector<256x256xf32>
    %36 = arith.addf %20, %35 : vector<256x256xf32>
    %c0_17 = arith.constant 0 : index
    %c0_18 = arith.constant 0 : index
    %37 = vector.load %arg7[%c0_17, %c0_18] : memref<1x256xf32, #tpu.memory_space<vmem>>, vector<1x256xf32>
    %38 = vector.broadcast %37 : vector<1x256xf32> to vector<256x256xf32>
    %39 = arith.addf %36, %38 : vector<256x256xf32>
    %cst_19 = arith.constant 0.000000e+00 : f32
    %40 = vector.broadcast %cst_19 : f32 to vector<256x256xf32>
    %41 = arith.maximumf %39, %40 : vector<256x256xf32>
    %42 = arith.truncf %41 : vector<256x256xf32> to vector<256x256xbf16>
    %c0_20 = arith.constant 0 : index
    %c0_21 = arith.constant 0 : index
    %43 = vector.load %arg8[%c0_20, %c0_21] : memref<256x128xbf16, #tpu.memory_space<vmem>>, vector<256x128xbf16>
    %cst_22 = arith.constant dense<0.000000e+00> : vector<256x128xf32>
    %44 = tpu.matmul %42, %43, %cst_22 {dimension_numbers = #tpu.dot_dimension_numbers<[1], [0], [0], [1], [0, 0, 1, 1], [], []>} : vector<256x256xbf16>, vector<256x128xbf16>, vector<256x128xf32> -> vector<256x128xf32>
    %c0_23 = arith.constant 0 : index
    %c0_24 = arith.constant 0 : index
    %45 = vector.load %arg9[%c0_23, %c0_24] : memref<1x128xf32, #tpu.memory_space<vmem>>, vector<1x128xf32>
    %46 = vector.broadcast %45 : vector<1x128xf32> to vector<256x128xf32>
    %47 = arith.addf %44, %46 : vector<256x128xf32>
    %c0_25 = arith.constant 0 : index
    %c0_26 = arith.constant 0 : index
    %48 = vector.load %arg10[%c0_25, %c0_26] : memref<256x128xf32, #tpu.memory_space<vmem>>, vector<256x128xf32>
    tpu.vector_store %arg10[%c0_25, %c0_26], %47 {strides = array<i32>} : memref<256x128xf32, #tpu.memory_space<vmem>>, vector<256x128xf32>,
    %49 = vector.broadcast %3 : vector<256x1xf32> to vector<256x128xf32>
    %50 = arith.mulf %49, %16 : vector<256x128xf32>
    %51 = vector.broadcast %4 : vector<256x1xf32> to vector<256x128xf32>
    %52 = arith.mulf %51, %47 : vector<256x128xf32>
    %53 = arith.subf %50, %52 : vector<256x128xf32>
    %cst_27 = arith.constant -1.000000e+00 : f32
    %cst_28 = arith.constant 1.000000e+00 : f32
    %54 = vector.broadcast %cst_27 : f32 to vector<256x128xf32>
    %55 = arith.maximumf %54, %53 : vector<256x128xf32>
    %56 = vector.broadcast %cst_28 : f32 to vector<256x128xf32>
    %57 = arith.minimumf %56, %55 : vector<256x128xf32>
    %c0_29 = arith.constant 0 : index
    %c0_30 = arith.constant 0 : index
    %58 = vector.load %arg11[%c0_29, %c0_30] : memref<256x128xf32, #tpu.memory_space<vmem>>, vector<256x128xf32>
    tpu.vector_store %arg11[%c0_29, %c0_30], %57 {strides = array<i32>} : memref<256x128xf32, #tpu.memory_space<vmem>>, vector<256x128xf32>,
    return
  }
  func.func @transform_0(%arg0: i32) -> (i32, i32) {
    %c0_i32 = arith.constant 0 : i32
    %c0_i32_0 = arith.constant 0 : i32
    return %arg0, %c0_i32 : i32, i32
  }
  func.func @transform_1(%arg0: i32) -> (i32, i32) {
    %c0_i32 = arith.constant 0 : i32
    %c0_i32_0 = arith.constant 0 : i32
    return %arg0, %c0_i32 : i32, i32
  }
  func.func @transform_2(%arg0: i32) -> (i32, i32) {
    %c0_i32 = arith.constant 0 : i32
    %c0_i32_0 = arith.constant 0 : i32
    return %arg0, %c0_i32 : i32, i32
  }
  func.func @transform_3(%arg0: i32) -> (i32, i32) {
    %c0_i32 = arith.constant 0 : i32
    %c0_i32_0 = arith.constant 0 : i32
    return %arg0, %c0_i32 : i32, i32
  }
  func.func @transform_4(%arg0: i32) -> (i32, i32) {
    %c0_i32 = arith.constant 0 : i32
    %c0_i32_0 = arith.constant 0 : i32
    %c0_i32_1 = arith.constant 0 : i32
    return %c0_i32, %c0_i32_0 : i32, i32
  }
  func.func @transform_5(%arg0: i32) -> (i32, i32) {
    %c0_i32 = arith.constant 0 : i32
    %c0_i32_0 = arith.constant 0 : i32
    %c0_i32_1 = arith.constant 0 : i32
    return %c0_i32, %c0_i32_0 : i32, i32
  }
  func.func @transform_6(%arg0: i32) -> (i32, i32) {
    %c0_i32 = arith.constant 0 : i32
    %c0_i32_0 = arith.constant 0 : i32
    %c0_i32_1 = arith.constant 0 : i32
    return %c0_i32, %c0_i32_0 : i32, i32
  }
  func.func @transform_7(%arg0: i32) -> (i32, i32) {
    %c0_i32 = arith.constant 0 : i32
    %c0_i32_0 = arith.constant 0 : i32
    %c0_i32_1 = arith.constant 0 : i32
    return %c0_i32, %c0_i32_0 : i32, i32
  }
  func.func @transform_8(%arg0: i32) -> (i32, i32) {
    %c0_i32 = arith.constant 0 : i32
    %c0_i32_0 = arith.constant 0 : i32
    %c0_i32_1 = arith.constant 0 : i32
    return %c0_i32, %c0_i32_0 : i32, i32
  }
  func.func @transform_9(%arg0: i32) -> (i32, i32) {
    %c0_i32 = arith.constant 0 : i32
    %c0_i32_0 = arith.constant 0 : i32
    return %arg0, %c0_i32 : i32, i32
  }
  func.func @transform_10(%arg0: i32) -> (i32, i32) {
    %c0_i32 = arith.constant 0 : i32
    %c0_i32_0 = arith.constant 0 : i32
    return %arg0, %c0_i32 : i32, i32
  }
}

</mosaic_0001>

<llo_original>
// kernel: diffusion_e2e_forward.1
$region0: #{diffusion_e2e_forward.1}
  #allocation0 [shape = 'u32[]', space=smem, size = 0x4, offset = 0x4, fixed_abs, tag = 'smem constant byte address 0x4 - core index']
  #allocation1 [shape = 'u32[144,128]{1,0:T(1,128)}', space=vmem, size = 0x12000, scoped, tag = 'internal scratch']
  %s0 = inlined_call_operand.vmem [shape: f32[256,128], index: 0, kind: input, shape index: {}]
  %s1 = inlined_call_operand.vmem [shape: f32[256,128], index: 1, kind: input, shape index: {}]
  %s2 = inlined_call_operand.vmem [shape: f32[256,128], index: 2, kind: input, shape index: {}]
  %s3 = inlined_call_operand.vmem [shape: f32[256,8], index: 3, kind: input, shape index: {}]
  %s4 = inlined_call_operand.vmem [shape: f32[2,128], index: 4, kind: input, shape index: {}]
  %s5 = inlined_call_operand.vmem [shape: bf16[384,256], index: 5, kind: input, shape index: {}]
  %s6 = inlined_call_operand.vmem [shape: f32[1,256], index: 6, kind: input, shape index: {}]
  %s7 = inlined_call_operand.vmem [shape: bf16[256,128], index: 7, kind: input, shape index: {}]
  %s8 = inlined_call_operand.vmem [shape: f32[1,128], index: 8, kind: input, shape index: {}]
  %s9 = inlined_call_operand.hbm [shape: f32[256,128], index: 9, kind: output, shape index: {0}]
  %s10 = inlined_call_operand.hbm [shape: f32[256,128], index: 10, kind: output, shape index: {1}]
  %11 = xla_tuple %s9, %s10
  %s12 = sld [smem:[#allocation0]]
  $region54: #{diffusion_e2e_forward.1} parent=0
    _
  %s14 = ssub.s32 1, %s12
  %s15 = scalar_select 0, %s14, %s12
  $region1: #{diffusion_e2e_forward.1} parent=0
    #allocation2 [shape = 'u8[131072]{0}', space=vmem, size = 0x20000, scoped, tag = 'output window, operand 0, single buffered']
    #allocation3 [shape = 's32[1]{0}', space=sflag, size = 0x4, scoped, tag = 'scoped memory for diffusion_e2e_forward.1']
    #allocation4 [shape = 'u8[131072]{0}', space=vmem, size = 0x20000, scoped, tag = 'output window, operand 1, single buffered']
    #allocation5 [shape = 's32[1]{0}', space=sflag, size = 0x4, scoped, tag = 'scoped memory for diffusion_e2e_forward.1']
    %16 = vsyncpa [#allocation3], 0
    %17 = vsyncpa [#allocation5], 0
    // Predicated region
    $region2: #{diffusion_e2e_forward.1} parent=1 // pred_check
      _
    $region3: #{diffusion_e2e_forward.1} parent=1 // pred_check_branch
      %19 = sbr.rel (0) target = $region5
    $region4: #{diffusion_e2e_forward.1} parent=1 // pred_region
      _
    $region5: #{diffusion_e2e_forward.1} parent=1 // pred_fallthru
      _
    // Predicated region
    $region6: #{diffusion_e2e_forward.1} parent=1 // pred_check
      _
    $region7: #{diffusion_e2e_forward.1} parent=1 // pred_check_branch
      %21 = sbr.rel (0) target = $region9
    $region8: #{diffusion_e2e_forward.1} parent=1 // pred_region
      _
    $region9: #{diffusion_e2e_forward.1} parent=1 // pred_fallthru
      _
    // Predicated region
    $region10: #{diffusion_e2e_forward.1} parent=1 // pred_check
      _
    $region11: #{diffusion_e2e_forward.1} parent=1 // pred_check_branch
      %23 = sbr.rel (0) target = $region13
    $region12: #{diffusion_e2e_forward.1} parent=1 // pred_region
      _
    $region13: #{diffusion_e2e_forward.1} parent=1 // pred_fallthru
      _
    // Predicated region
    $region14: #{diffusion_e2e_forward.1} parent=1 // pred_check
      _
    $region15: #{diffusion_e2e_forward.1} parent=1 // pred_check_branch
      %25 = sbr.rel (0) target = $region17
    $region16: #{diffusion_e2e_forward.1} parent=1 // pred_region
      _
    $region17: #{diffusion_e2e_forward.1} parent=1 // pred_fallthru
      _
    // Predicated region
    $region18: #{diffusion_e2e_forward.1} parent=1 // pred_check
      _
    $region19: #{diffusion_e2e_forward.1} parent=1 // pred_check_branch
      %27 = sbr.rel (0) target = $region21
    $region20: #{diffusion_e2e_forward.1} parent=1 // pred_region
      _
    $region21: #{diffusion_e2e_forward.1} parent=1 // pred_fallthru
      _
    // Predicated region
    $region22: #{diffusion_e2e_forward.1} parent=1 // pred_check
      _
    $region23: #{diffusion_e2e_forward.1} parent=1 // pred_check_branch
      %29 = sbr.rel (0) target = $region25
    $region24: #{diffusion_e2e_forward.1} parent=1 // pred_region
      _
    $region25: #{diffusion_e2e_forward.1} parent=1 // pred_fallthru
      _
    // Predicated region
    $region26: #{diffusion_e2e_forward.1} parent=1 // pred_check
      _
    $region27: #{diffusion_e2e_forward.1} parent=1 // pred_check_branch
      %31 = sbr.rel (0) target = $region29
    $region28: #{diffusion_e2e_forward.1} parent=1 // pred_region
      _
    $region29: #{diffusion_e2e_forward.1} parent=1 // pred_fallthru
      _
    // Predicated region
    $region30: #{diffusion_e2e_forward.1} parent=1 // pred_check
      _
    $region31: #{diffusion_e2e_forward.1} parent=1 // pred_check_branch
      %33 = sbr.rel (0) target = $region33
    $region32: #{diffusion_e2e_forward.1} parent=1 // pred_region
      _
    $region33: #{diffusion_e2e_forward.1} parent=1 // pred_fallthru
      _
    // Predicated region
    $region34: #{diffusion_e2e_forward.1} parent=1 // pred_check
      _
    $region35: #{diffusion_e2e_forward.1} parent=1 // pred_check_branch
      %35 = sbr.rel (0) target = $region37
    $region36: #{diffusion_e2e_forward.1} parent=1 // pred_region
      _
    $region37: #{diffusion_e2e_forward.1} parent=1 // pred_fallthru
      _
    %v37 = vld [vmem:[%s3] sm:$0xff]
    %v38 = vld [vmem:[%s3 + $0x8] sm:$0xff]
    %v39 = vld [vmem:[%s3 + $0x10] sm:$0xff]
    %v40 = vld [vmem:[%s3 + $0x18] sm:$0xff]
    %v41 = vld [vmem:[%s3 + $0x20] sm:$0xff]
    %v42 = vld [vmem:[%s3 + $0x28] sm:$0xff]
    %v43 = vld [vmem:[%s3 + $0x30] sm:$0xff]
    %v44 = vld [vmem:[%s3 + $0x38] sm:$0xff]
    %v45 = vld [vmem:[%s3 + $0x40] sm:$0xff]
    %v46 = vld [vmem:[%s3 + $0x48] sm:$0xff]
    %v47 = vld [vmem:[%s3 + $0x50] sm:$0xff]
    %v48 = vld [vmem:[%s3 + $0x58] sm:$0xff]
    %v49 = vld [vmem:[%s3 + $0x60] sm:$0xff]
    %v50 = vld [vmem:[%s3 + $0x68] sm:$0xff]
    %v51 = vld [vmem:[%s3 + $0x70] sm:$0xff]
    %v52 = vld [vmem:[%s3 + $0x78] sm:$0xff]
    %v53 = vld [vmem:[%s3 + $0x80] sm:$0xff]
    %v54 = vld [vmem:[%s3 + $0x88] sm:$0xff]
    %v55 = vld [vmem:[%s3 + $0x90] sm:$0xff]
    %v56 = vld [vmem:[%s3 + $0x98] sm:$0xff]
    %v57 = vld [vmem:[%s3 + $0xa0] sm:$0xff]
    %v58 = vld [vmem:[%s3 + $0xa8] sm:$0xff]
    %v59 = vld [vmem:[%s3 + $0xb0] sm:$0xff]
    %v60 = vld [vmem:[%s3 + $0xb8] sm:$0xff]
    %v61 = vld [vmem:[%s3 + $0xc0] sm:$0xff]
    %v62 = vld [vmem:[%s3 + $0xc8] sm:$0xff]
    %v63 = vld [vmem:[%s3 + $0xd0] sm:$0xff]
    %v64 = vld [vmem:[%s3 + $0xd8] sm:$0xff]
    %v65 = vld [vmem:[%s3 + $0xe0] sm:$0xff]
    %v66 = vld [vmem:[%s3 + $0xe8] sm:$0xff]
    %v67 = vld [vmem:[%s3 + $0xf0] sm:$0xff]
    %v68 = vld [vmem:[%s3 + $0xf8] sm:$0xff]
    %v69 = vld [vmem:[%s2] sm:$0xff]
    %v70 = vld [vmem:[%s2 + $0x8] sm:$0xff]
    %v71 = vld [vmem:[%s2 + $0x10] sm:$0xff]
    %v72 = vld [vmem:[%s2 + $0x18] sm:$0xff]
    %v73 = vld [vmem:[%s2 + $0x20] sm:$0xff]
    %v74 = vld [vmem:[%s2 + $0x28] sm:$0xff]
    %v75 = vld [vmem:[%s2 + $0x30] sm:$0xff]
    %v76 = vld [vmem:[%s2 + $0x38] sm:$0xff]
    %v77 = vld [vmem:[%s2 + $0x40] sm:$0xff]
    %v78 = vld [vmem:[%s2 + $0x48] sm:$0xff]
    %v79 = vld [vmem:[%s2 + $0x50] sm:$0xff]
    %v80 = vld [vmem:[%s2 + $0x58] sm:$0xff]
    %v81 = vld [vmem:[%s2 + $0x60] sm:$0xff]
    %v82 = vld [vmem:[%s2 + $0x68] sm:$0xff]
    %v83 = vld [vmem:[%s2 + $0x70] sm:$0xff]
    %v84 = vld [vmem:[%s2 + $0x78] sm:$0xff]
    %v85 = vld [vmem:[%s2 + $0x80] sm:$0xff]
    %v86 = vld [vmem:[%s2 + $0x88] sm:$0xff]
    %v87 = vld [vmem:[%s2 + $0x90] sm:$0xff]
    %v88 = vld [vmem:[%s2 + $0x98] sm:$0xff]
    %v89 = vld [vmem:[%s2 + $0xa0] sm:$0xff]
    %v90 = vld [vmem:[%s2 + $0xa8] sm:$0xff]
    %v91 = vld [vmem:[%s2 + $0xb0] sm:$0xff]
    %v92 = vld [vmem:[%s2 + $0xb8] sm:$0xff]
    %v93 = vld [vmem:[%s2 + $0xc0] sm:$0xff]
    %v94 = vld [vmem:[%s2 + $0xc8] sm:$0xff]
    %v95 = vld [vmem:[%s2 + $0xd0] sm:$0xff]
    %v96 = vld [vmem:[%s2 + $0xd8] sm:$0xff]
    %v97 = vld [vmem:[%s2 + $0xe0] sm:$0xff]
    %v98 = vld [vmem:[%s2 + $0xe8] sm:$0xff]
    %v99 = vld [vmem:[%s2 + $0xf0] sm:$0xff]
    %v100 = vld [vmem:[%s2 + $0xf8] sm:$0xff]
    %v101 = vpack.c.bf16 %v70, %v69
    %v102 = vpack.c.bf16 %v72, %v71
    %v103 = vpack.c.bf16 %v74, %v73
    %v104 = vpack.c.bf16 %v76, %v75
    %v105 = vpack.c.bf16 %v78, %v77
    %v106 = vpack.c.bf16 %v80, %v79
    %v107 = vpack.c.bf16 %v82, %v81
    %v108 = vpack.c.bf16 %v84, %v83
    %v109 = vpack.c.bf16 %v86, %v85
    %v110 = vpack.c.bf16 %v88, %v87
    %v111 = vpack.c.bf16 %v90, %v89
    %v112 = vpack.c.bf16 %v92, %v91
    %v113 = vpack.c.bf16 %v94, %v93
    %v114 = vpack.c.bf16 %v96, %v95
    %v115 = vpack.c.bf16 %v98, %v97
    %v116 = vpack.c.bf16 %v100, %v99
    %v117 = vld [vmem:[%s5 + $0x80] sm:$0xff]
    %v118 = vld [vmem:[%s5 + $0x88] sm:$0xff]
    %v119 = vld [vmem:[%s5 + $0x90] sm:$0xff]
    %v120 = vld [vmem:[%s5 + $0x98] sm:$0xff]
    %v121 = vld [vmem:[%s5 + $0xa0] sm:$0xff]
    %v122 = vld [vmem:[%s5 + $0xa8] sm:$0xff]
    %v123 = vld [vmem:[%s5 + $0xb0] sm:$0xff]
    %v124 = vld [vmem:[%s5 + $0xb8] sm:$0xff]
    %v125 = vld [vmem:[%s5 + $0xc0] sm:$0xff]
    %v126 = vld [vmem:[%s5 + $0xc8] sm:$0xff]
    %v127 = vld [vmem:[%s5 + $0xd0] sm:$0xff]
    %v128 = vld [vmem:[%s5 + $0xd8] sm:$0xff]
    %v129 = vld [vmem:[%s5 + $0xe0] sm:$0xff]
    %v130 = vld [vmem:[%s5 + $0xe8] sm:$0xff]
    %v131 = vld [vmem:[%s5 + $0xf0] sm:$0xff]
    %v132 = vld [vmem:[%s5 + $0xf8] sm:$0xff]
    %v133 = vld [vmem:[%s0] sm:$0xff]
    %v134 = vld [vmem:[%s0 + $0x8] sm:$0xff]
    %v135 = vld [vmem:[%s0 + $0x10] sm:$0xff]
    %v136 = vld [vmem:[%s0 + $0x18] sm:$0xff]
    %v137 = vld [vmem:[%s0 + $0x20] sm:$0xff]
    %v138 = vld [vmem:[%s0 + $0x28] sm:$0xff]
    %v139 = vld [vmem:[%s0 + $0x30] sm:$0xff]
    %v140 = vld [vmem:[%s0 + $0x38] sm:$0xff]
    %v141 = vld [vmem:[%s0 + $0x40] sm:$0xff]
    %v142 = vld [vmem:[%s0 + $0x48] sm:$0xff]
    %v143 = vld [vmem:[%s0 + $0x50] sm:$0xff]
    %v144 = vld [vmem:[%s0 + $0x58] sm:$0xff]
    %v145 = vld [vmem:[%s0 + $0x60] sm:$0xff]
    %v146 = vld [vmem:[%s0 + $0x68] sm:$0xff]
    %v147 = vld [vmem:[%s0 + $0x70] sm:$0xff]
    %v148 = vld [vmem:[%s0 + $0x78] sm:$0xff]
    %v149 = vld [vmem:[%s0 + $0x80] sm:$0xff]
    %v150 = vld [vmem:[%s0 + $0x88] sm:$0xff]
    %v151 = vld [vmem:[%s0 + $0x90] sm:$0xff]
    %v152 = vld [vmem:[%s0 + $0x98] sm:$0xff]
    %v153 = vld [vmem:[%s0 + $0xa0] sm:$0xff]
    %v154 = vld [vmem:[%s0 + $0xa8] sm:$0xff]
    %v155 = vld [vmem:[%s0 + $0xb0] sm:$0xff]
    %v156 = vld [vmem:[%s0 + $0xb8] sm:$0xff]
    %v157 = vld [vmem:[%s0 + $0xc0] sm:$0xff]
    %v158 = vld [vmem:[%s0 + $0xc8] sm:$0xff]
    %v159 = vld [vmem:[%s0 + $0xd0] sm:$0xff]
    %v160 = vld [vmem:[%s0 + $0xd8] sm:$0xff]
    %v161 = vld [vmem:[%s0 + $0xe0] sm:$0xff]
    %v162 = vld [vmem:[%s0 + $0xe8] sm:$0xff]
    %v163 = vld [vmem:[%s0 + $0xf0] sm:$0xff]
    %v164 = vld [vmem:[%s0 + $0xf8] sm:$0xff]
    %166 = vset.pattern.permute.xlu0 0
    %167 = vperm.xlu0 %166, %v37
    %v168 = vpop.permute.xlu0 %167
    %171 = vset.pattern.permute.xlu0 0
    %172 = vperm.xlu0 %171, %v38
    %v173 = vpop.permute.xlu0 %172
    %176 = vset.pattern.permute.xlu0 0
    %177 = vperm.xlu0 %176, %v39
    %v178 = vpop.permute.xlu0 %177
    %181 = vset.pattern.permute.xlu0 0
    %182 = vperm.xlu0 %181, %v40
    %v183 = vpop.permute.xlu0 %182
    %186 = vset.pattern.permute.xlu0 0
    %187 = vperm.xlu0 %186, %v41
    %v188 = vpop.permute.xlu0 %187
    %191 = vset.pattern.permute.xlu0 0
    %192 = vperm.xlu0 %191, %v42
    %v193 = vpop.permute.xlu0 %192
    %196 = vset.pattern.permute.xlu0 0
    %197 = vperm.xlu0 %196, %v43
    %v198 = vpop.permute.xlu0 %197
    %201 = vset.pattern.permute.xlu0 0
    %202 = vperm.xlu0 %201, %v44
    %v203 = vpop.permute.xlu0 %202
    %206 = vset.pattern.permute.xlu0 0
    %207 = vperm.xlu0 %206, %v45
    %v208 = vpop.permute.xlu0 %207
    %211 = vset.pattern.permute.xlu0 0
    %212 = vperm.xlu0 %211, %v46
    %v213 = vpop.permute.xlu0 %212
    %216 = vset.pattern.permute.xlu0 0
    %217 = vperm.xlu0 %216, %v47
    %v218 = vpop.permute.xlu0 %217
    %221 = vset.pattern.permute.xlu0 0
    %222 = vperm.xlu0 %221, %v48
    %v223 = vpop.permute.xlu0 %222
    %226 = vset.pattern.permute.xlu0 0
    %227 = vperm.xlu0 %226, %v49
    %v228 = vpop.permute.xlu0 %227
    %231 = vset.pattern.permute.xlu0 0
    %232 = vperm.xlu0 %231, %v50
    %v233 = vpop.permute.xlu0 %232
    %236 = vset.pattern.permute.xlu0 0
    %237 = vperm.xlu0 %236, %v51
    %v238 = vpop.permute.xlu0 %237
    %241 = vset.pattern.permute.xlu0 0
    %242 = vperm.xlu0 %241, %v52
    %v243 = vpop.permute.xlu0 %242
    %246 = vset.pattern.permute.xlu0 0
    %247 = vperm.xlu0 %246, %v53
    %v248 = vpop.permute.xlu0 %247
    %251 = vset.pattern.permute.xlu0 0
    %252 = vperm.xlu0 %251, %v54
    %v253 = vpop.permute.xlu0 %252
    %256 = vset.pattern.permute.xlu0 0
    %257 = vperm.xlu0 %256, %v55
    %v258 = vpop.permute.xlu0 %257
    %261 = vset.pattern.permute.xlu0 0
    %262 = vperm.xlu0 %261, %v56
    %v263 = vpop.permute.xlu0 %262
    %266 = vset.pattern.permute.xlu0 0
    %267 = vperm.xlu0 %266, %v57
    %v268 = vpop.permute.xlu0 %267
    %271 = vset.pattern.permute.xlu0 0
    %272 = vperm.xlu0 %271, %v58
    %v273 = vpop.permute.xlu0 %272
    %276 = vset.pattern.permute.xlu0 0
    %277 = vperm.xlu0 %276, %v59
    %v278 = vpop.permute.xlu0 %277
    %281 = vset.pattern.permute.xlu0 0
    %282 = vperm.xlu0 %281, %v60
    %v283 = vpop.permute.xlu0 %282
    %286 = vset.pattern.permute.xlu0 0
    %287 = vperm.xlu0 %286, %v61
    %v288 = vpop.permute.xlu0 %287
    %291 = vset.pattern.permute.xlu0 0
    %292 = vperm.xlu0 %291, %v62
    %v293 = vpop.permute.xlu0 %292
    %296 = vset.pattern.permute.xlu0 0
    %297 = vperm.xlu0 %296, %v63
    %v298 = vpop.permute.xlu0 %297
    %301 = vset.pattern.permute.xlu0 0
    %302 = vperm.xlu0 %301, %v64
    %v303 = vpop.permute.xlu0 %302
    %306 = vset.pattern.permute.xlu0 0
    %307 = vperm.xlu0 %306, %v65
    %v308 = vpop.permute.xlu0 %307
    %311 = vset.pattern.permute.xlu0 0
    %312 = vperm.xlu0 %311, %v66
    %v313 = vpop.permute.xlu0 %312
    %316 = vset.pattern.permute.xlu0 0
    %317 = vperm.xlu0 %316, %v67
    %v318 = vpop.permute.xlu0 %317
    %321 = vset.pattern.permute.xlu0 0
    %322 = vperm.xlu0 %321, %v68
    %v323 = vpop.permute.xlu0 %322
    %v325 = vmul.f32 %v168, %v133
    %v326 = vmul.f32 %v173, %v134
    %v327 = vmul.f32 %v178, %v135
    %v328 = vmul.f32 %v183, %v136
    %v329 = vmul.f32 %v188, %v137
    %v330 = vmul.f32 %v193, %v138
    %v331 = vmul.f32 %v198, %v139
    %v332 = vmul.f32 %v203, %v140
    %v333 = vmul.f32 %v208, %v141
    %v334 = vmul.f32 %v213, %v142
    %v335 = vmul.f32 %v218, %v143
    %v336 = vmul.f32 %v223, %v144
    %v337 = vmul.f32 %v228, %v145
    %v338 = vmul.f32 %v233, %v146
    %v339 = vmul.f32 %v238, %v147
    %v340 = vmul.f32 %v243, %v148
    %v341 = vmul.f32 %v248, %v149
    %v342 = vmul.f32 %v253, %v150
    %v343 = vmul.f32 %v258, %v151
    %v344 = vmul.f32 %v263, %v152
    %v345 = vmul.f32 %v268, %v153
    %v346 = vmul.f32 %v273, %v154
    %v347 = vmul.f32 %v278, %v155
    %v348 = vmul.f32 %v283, %v156
    %v349 = vmul.f32 %v288, %v157
    %v350 = vmul.f32 %v293, %v158
    %v351 = vmul.f32 %v298, %v159
    %v352 = vmul.f32 %v303, %v160
    %v353 = vmul.f32 %v308, %v161
    %v354 = vmul.f32 %v313, %v162
    %v355 = vmul.f32 %v318, %v163
    %v356 = vmul.f32 %v323, %v164
    %v357 = vld [vmem:[%s1] sm:$0xff]
    %v358 = vld [vmem:[%s1 + $0x8] sm:$0xff]
    %v359 = vld [vmem:[%s1 + $0x10] sm:$0xff]
    %v360 = vld [vmem:[%s1 + $0x18] sm:$0xff]
    %v361 = vld [vmem:[%s1 + $0x20] sm:$0xff]
    %v362 = vld [vmem:[%s1 + $0x28] sm:$0xff]
    %v363 = vld [vmem:[%s1 + $0x30] sm:$0xff]
    %v364 = vld [vmem:[%s1 + $0x38] sm:$0xff]
    %v365 = vld [vmem:[%s1 + $0x40] sm:$0xff]
    %v366 = vld [vmem:[%s1 + $0x48] sm:$0xff]
    %v367 = vld [vmem:[%s1 + $0x50] sm:$0xff]
    %v368 = vld [vmem:[%s1 + $0x58] sm:$0xff]
    %v369 = vld [vmem:[%s1 + $0x60] sm:$0xff]
    %v370 = vld [vmem:[%s1 + $0x68] sm:$0xff]
    %v371 = vld [vmem:[%s1 + $0x70] sm:$0xff]
    %v372 = vld [vmem:[%s1 + $0x78] sm:$0xff]
    %v373 = vld [vmem:[%s1 + $0x80] sm:$0xff]
    %v374 = vld [vmem:[%s1 + $0x88] sm:$0xff]
    %v375 = vld [vmem:[%s1 + $0x90] sm:$0xff]
    %v376 = vld [vmem:[%s1 + $0x98] sm:$0xff]
    %v377 = vld [vmem:[%s1 + $0xa0] sm:$0xff]
    %v378 = vld [vmem:[%s1 + $0xa8] sm:$0xff]
    %v379 = vld [vmem:[%s1 + $0xb0] sm:$0xff]
    %v380 = vld [vmem:[%s1 + $0xb8] sm:$0xff]
    %v381 = vld [vmem:[%s1 + $0xc0] sm:$0xff]
    %v382 = vld [vmem:[%s1 + $0xc8] sm:$0xff]
    %v383 = vld [vmem:[%s1 + $0xd0] sm:$0xff]
    %v384 = vld [vmem:[%s1 + $0xd8] sm:$0xff]
    %v385 = vld [vmem:[%s1 + $0xe0] sm:$0xff]
    %v386 = vld [vmem:[%s1 + $0xe8] sm:$0xff]
    %v387 = vld [vmem:[%s1 + $0xf0] sm:$0xff]
    %v388 = vld [vmem:[%s1 + $0xf8] sm:$0xff]
    %389 = vset.pattern.permute.xlu0 1
    %390 = vperm.xlu0 %389, %v37
    %v391 = vpop.permute.xlu0 %390
    %393 = vset.pattern.permute.xlu0 1
    %394 = vperm.xlu0 %393, %v38
    %v395 = vpop.permute.xlu0 %394
    %397 = vset.pattern.permute.xlu0 1
    %398 = vperm.xlu0 %397, %v39
    %v399 = vpop.permute.xlu0 %398
    %401 = vset.pattern.permute.xlu0 1
    %402 = vperm.xlu0 %401, %v40
    %v403 = vpop.permute.xlu0 %402
    %405 = vset.pattern.permute.xlu0 1
    %406 = vperm.xlu0 %405, %v41
    %v407 = vpop.permute.xlu0 %406
    %409 = vset.pattern.permute.xlu0 1
    %410 = vperm.xlu0 %409, %v42
    %v411 = vpop.permute.xlu0 %410
    %413 = vset.pattern.permute.xlu0 1
    %414 = vperm.xlu0 %413, %v43
    %v415 = vpop.permute.xlu0 %414
    %417 = vset.pattern.permute.xlu0 1
    %418 = vperm.xlu0 %417, %v44
    %v419 = vpop.permute.xlu0 %418
    %421 = vset.pattern.permute.xlu0 1
    %422 = vperm.xlu0 %421, %v45
    %v423 = vpop.permute.xlu0 %422
    %425 = vset.pattern.permute.xlu0 1
    %426 = vperm.xlu0 %425, %v46
    %v427 = vpop.permute.xlu0 %426
    %429 = vset.pattern.permute.xlu0 1
    %430 = vperm.xlu0 %429, %v47
    %v431 = vpop.permute.xlu0 %430
    %433 = vset.pattern.permute.xlu0 1
    %434 = vperm.xlu0 %433, %v48
    %v435 = vpop.permute.xlu0 %434
    %437 = vset.pattern.permute.xlu0 1
    %438 = vperm.xlu0 %437, %v49
    %v439 = vpop.permute.xlu0 %438
    %441 = vset.pattern.permute.xlu0 1
    %442 = vperm.xlu0 %441, %v50
    %v443 = vpop.permute.xlu0 %442
    %445 = vset.pattern.permute.xlu0 1
    %446 = vperm.xlu0 %445, %v51
    %v447 = vpop.permute.xlu0 %446
    %449 = vset.pattern.permute.xlu0 1
    %450 = vperm.xlu0 %449, %v52
    %v451 = vpop.permute.xlu0 %450
    %453 = vset.pattern.permute.xlu0 1
    %454 = vperm.xlu0 %453, %v53
    %v455 = vpop.permute.xlu0 %454
    %457 = vset.pattern.permute.xlu0 1
    %458 = vperm.xlu0 %457, %v54
    %v459 = vpop.permute.xlu0 %458
    %461 = vset.pattern.permute.xlu0 1
    %462 = vperm.xlu0 %461, %v55
    %v463 = vpop.permute.xlu0 %462
    %465 = vset.pattern.permute.xlu0 1
    %466 = vperm.xlu0 %465, %v56
    %v467 = vpop.permute.xlu0 %466
    %469 = vset.pattern.permute.xlu0 1
    %470 = vperm.xlu0 %469, %v57
    %v471 = vpop.permute.xlu0 %470
    %473 = vset.pattern.permute.xlu0 1
    %474 = vperm.xlu0 %473, %v58
    %v475 = vpop.permute.xlu0 %474
    %477 = vset.pattern.permute.xlu0 1
    %478 = vperm.xlu0 %477, %v59
    %v479 = vpop.permute.xlu0 %478
    %481 = vset.pattern.permute.xlu0 1
    %482 = vperm.xlu0 %481, %v60
    %v483 = vpop.permute.xlu0 %482
    %485 = vset.pattern.permute.xlu0 1
    %486 = vperm.xlu0 %485, %v61
    %v487 = vpop.permute.xlu0 %486
    %489 = vset.pattern.permute.xlu0 1
    %490 = vperm.xlu0 %489, %v62
    %v491 = vpop.permute.xlu0 %490
    %493 = vset.pattern.permute.xlu0 1
    %494 = vperm.xlu0 %493, %v63
    %v495 = vpop.permute.xlu0 %494
    %497 = vset.pattern.permute.xlu0 1
    %498 = vperm.xlu0 %497, %v64
    %v499 = vpop.permute.xlu0 %498
    %501 = vset.pattern.permute.xlu0 1
    %502 = vperm.xlu0 %501, %v65
    %v503 = vpop.permute.xlu0 %502
    %505 = vset.pattern.permute.xlu0 1
    %506 = vperm.xlu0 %505, %v66
    %v507 = vpop.permute.xlu0 %506
    %509 = vset.pattern.permute.xlu0 1
    %510 = vperm.xlu0 %509, %v67
    %v511 = vpop.permute.xlu0 %510
    %513 = vset.pattern.permute.xlu0 1
    %514 = vperm.xlu0 %513, %v68
    %v515 = vpop.permute.xlu0 %514
    %v517 = vmul.f32 %v391, %v357
    %v518 = vmul.f32 %v395, %v358
    %v519 = vmul.f32 %v399, %v359
    %v520 = vmul.f32 %v403, %v360
    %v521 = vmul.f32 %v407, %v361
    %v522 = vmul.f32 %v411, %v362
    %v523 = vmul.f32 %v415, %v363
    %v524 = vmul.f32 %v419, %v364
    %v525 = vmul.f32 %v423, %v365
    %v526 = vmul.f32 %v427, %v366
    %v527 = vmul.f32 %v431, %v367
    %v528 = vmul.f32 %v435, %v368
    %v529 = vmul.f32 %v439, %v369
    %v530 = vmul.f32 %v443, %v370
    %v531 = vmul.f32 %v447, %v371
    %v532 = vmul.f32 %v451, %v372
    %v533 = vmul.f32 %v455, %v373
    %v534 = vmul.f32 %v459, %v374
    %v535 = vmul.f32 %v463, %v375
    %v536 = vmul.f32 %v467, %v376
    %v537 = vmul.f32 %v471, %v377
    %v538 = vmul.f32 %v475, %v378
    %v539 = vmul.f32 %v479, %v379
    %v540 = vmul.f32 %v483, %v380
    %v541 = vmul.f32 %v487, %v381
    %v542 = vmul.f32 %v491, %v382
    %v543 = vmul.f32 %v495, %v383
    %v544 = vmul.f32 %v499, %v384
    %v545 = vmul.f32 %v503, %v385
    %v546 = vmul.f32 %v507, %v386
    %v547 = vmul.f32 %v511, %v387
    %v548 = vmul.f32 %v515, %v388
    %v549 = vadd.f32 %v325, %v517
    %v550 = vadd.f32 %v326, %v518
    %v551 = vadd.f32 %v327, %v519
    %v552 = vadd.f32 %v328, %v520
    %v553 = vadd.f32 %v329, %v521
    %v554 = vadd.f32 %v330, %v522
    %v555 = vadd.f32 %v331, %v523
    %v556 = vadd.f32 %v332, %v524
    %v557 = vadd.f32 %v333, %v525
    %v558 = vadd.f32 %v334, %v526
    %v559 = vadd.f32 %v335, %v527
    %v560 = vadd.f32 %v336, %v528
    %v561 = vadd.f32 %v337, %v529
    %v562 = vadd.f32 %v338, %v530
    %v563 = vadd.f32 %v339, %v531
    %v564 = vadd.f32 %v340, %v532
    %v565 = vadd.f32 %v341, %v533
    %v566 = vadd.f32 %v342, %v534
    %v567 = vadd.f32 %v343, %v535
    %v568 = vadd.f32 %v344, %v536
    %v569 = vadd.f32 %v345, %v537
    %v570 = vadd.f32 %v346, %v538
    %v571 = vadd.f32 %v347, %v539
    %v572 = vadd.f32 %v348, %v540
    %v573 = vadd.f32 %v349, %v541
    %v574 = vadd.f32 %v350, %v542
    %v575 = vadd.f32 %v351, %v543
    %v576 = vadd.f32 %v352, %v544
    %v577 = vadd.f32 %v353, %v545
    %v578 = vadd.f32 %v354, %v546
    %v579 = vadd.f32 %v355, %v547
    %v580 = vadd.f32 %v356, %v548
    %v581 = vpack.c.bf16 %v550, %v549
    %v582 = vpack.c.bf16 %v552, %v551
    %v583 = vpack.c.bf16 %v554, %v553
    %v584 = vpack.c.bf16 %v556, %v555
    %v585 = vpack.c.bf16 %v558, %v557
    %v586 = vpack.c.bf16 %v560, %v559
    %v587 = vpack.c.bf16 %v562, %v561
    %v588 = vpack.c.bf16 %v564, %v563
    %v589 = vpack.c.bf16 %v566, %v565
    %v590 = vpack.c.bf16 %v568, %v567
    %v591 = vpack.c.bf16 %v570, %v569
    %v592 = vpack.c.bf16 %v572, %v571
    %v593 = vpack.c.bf16 %v574, %v573
    %v594 = vpack.c.bf16 %v576, %v575
    %v595 = vpack.c.bf16 %v578, %v577
    %v596 = vpack.c.bf16 %v580, %v579
    %v597 = vld [vmem:[%s5] sm:$0xff]
    %v598 = vld [vmem:[%s5 + $0x8] sm:$0xff]
    %v599 = vld [vmem:[%s5 + $0x10] sm:$0xff]
    %v600 = vld [vmem:[%s5 + $0x18] sm:$0xff]
    %v601 = vld [vmem:[%s5 + $0x20] sm:$0xff]
    %v602 = vld [vmem:[%s5 + $0x28] sm:$0xff]
    %v603 = vld [vmem:[%s5 + $0x30] sm:$0xff]
    %v604 = vld [vmem:[%s5 + $0x38] sm:$0xff]
    %v605 = vld [vmem:[%s5 + $0x40] sm:$0xff]
    %v606 = vld [vmem:[%s5 + $0x48] sm:$0xff]
    %v607 = vld [vmem:[%s5 + $0x50] sm:$0xff]
    %v608 = vld [vmem:[%s5 + $0x58] sm:$0xff]
    %v609 = vld [vmem:[%s5 + $0x60] sm:$0xff]
    %v610 = vld [vmem:[%s5 + $0x68] sm:$0xff]
    %v611 = vld [vmem:[%s5 + $0x70] sm:$0xff]
    %v612 = vld [vmem:[%s5 + $0x78] sm:$0xff]
    %v629 = vunpack.c.l.b16 %v597
    %v630 = vunpack.c.h.b16 %v597
    %v631 = vunpack.c.l.b16 %v598
    %v632 = vunpack.c.h.b16 %v598
    %v633 = vunpack.c.l.b16 %v599
    %v634 = vunpack.c.h.b16 %v599
    %v635 = vunpack.c.l.b16 %v600
    %v636 = vunpack.c.h.b16 %v600
    %v637 = vunpack.c.l.b16 %v601
    %v638 = vunpack.c.h.b16 %v601
    %v639 = vunpack.c.l.b16 %v602
    %v640 = vunpack.c.h.b16 %v602
    %v641 = vunpack.c.l.b16 %v603
    %v642 = vunpack.c.h.b16 %v603
    %v643 = vunpack.c.l.b16 %v604
    %v644 = vunpack.c.h.b16 %v604
    %v645 = vunpack.c.l.b16 %v605
    %v646 = vunpack.c.h.b16 %v605
    %v647 = vunpack.c.l.b16 %v606
    %v648 = vunpack.c.h.b16 %v606
    %v649 = vunpack.c.l.b16 %v607
    %v650 = vunpack.c.h.b16 %v607
    %v651 = vunpack.c.l.b16 %v608
    %v652 = vunpack.c.h.b16 %v608
    %v653 = vunpack.c.l.b16 %v609
    %v654 = vunpack.c.h.b16 %v609
    %v655 = vunpack.c.l.b16 %v610
    %v656 = vunpack.c.h.b16 %v610
    %v657 = vunpack.c.l.b16 %v611
    %v658 = vunpack.c.h.b16 %v611
    %v659 = vunpack.c.l.b16 %v612
    %v660 = vunpack.c.h.b16 %v612
    %v661 = vpack.c.b16 %v631, %v629
    %v662 = vpack.c.b16 %v632, %v630
    %v663 = vpack.c.b16 %v635, %v633
    %v664 = vpack.c.b16 %v636, %v634
    %v665 = vpack.c.b16 %v639, %v637
    %v666 = vpack.c.b16 %v640, %v638
    %v667 = vpack.c.b16 %v643, %v641
    %v668 = vpack.c.b16 %v644, %v642
    %v669 = vpack.c.b16 %v647, %v645
    %v670 = vpack.c.b16 %v648, %v646
    %v671 = vpack.c.b16 %v651, %v649
    %v672 = vpack.c.b16 %v652, %v650
    %v673 = vpack.c.b16 %v655, %v653
    %v674 = vpack.c.b16 %v656, %v654
    %v675 = vpack.c.b16 %v659, %v657
    %v676 = vpack.c.b16 %v660, %v658
    %693 = vmatprep.subr.bf16.mxu0 %v662
    %694 = vmatpush1.bf16.msra.mxu0 %v661
    %695 = vmatprep.subr.bf16.mxu0 %v664
    %696 = vmatpush1.bf16.msra.mxu0 %v663
    %697 = vmatprep.subr.bf16.mxu0 %v666
    %698 = vmatpush1.bf16.msra.mxu0 %v665
    %699 = vmatprep.subr.bf16.mxu0 %v668
    %700 = vmatpush1.bf16.msra.mxu0 %v667
    %701 = vmatprep.subr.bf16.mxu0 %v670
    %702 = vmatpush1.bf16.msra.mxu0 %v669
    %703 = vmatprep.subr.bf16.mxu0 %v672
    %704 = vmatpush1.bf16.msra.mxu0 %v671
    %705 = vmatprep.subr.bf16.mxu0 %v674
    %706 = vmatpush1.bf16.msra.mxu0 %v673
    %707 = vmatprep.subr.bf16.mxu0 %v676
    %708 = vmatpush1.bf16.msra.mxu0 %v675
    %709 = vmatprep.subr.bf16.mxu0 0
    %710 = vmatpush1.bf16.msra.mxu0 0
    %711 = vmatprep.subr.bf16.mxu0 0
    %712 = vmatpush1.bf16.msra.mxu0 0
    %713 = vmatprep.subr.bf16.mxu0 0
    %714 = vmatpush1.bf16.msra.mxu0 0
    %715 = vmatprep.subr.bf16.mxu0 0
    %716 = vmatpush1.bf16.msra.mxu0 0
    %717 = vmatprep.subr.bf16.mxu0 0
    %718 = vmatpush1.bf16.msra.mxu0 0
    %719 = vmatprep.subr.bf16.mxu0 0
    %720 = vmatpush1.bf16.msra.mxu0 0
    %721 = vmatprep.subr.bf16.mxu0 0
    %722 = vmatpush1.bf16.msra.mxu0 0
    %723 = vmatprep.subr.bf16.mxu0 0
    %724 = vmatpush1.bf16.msra.mxu0 0
    %725 = vmatprep.mubr.bf16.mxu0 0
    %726 = vmatmul.mubr.bf16.gmra.mrb[0].mxu0 %v581
    %v727 = vpop.f32.mrb[0].mxu0
    %v728 = vadd.f32 0.0, %v727
    %v729 = vpop.f32.mrb[0].mxu0
    %v730 = vadd.f32 0.0, %v729
    %v731 = vpop.f32.mrb[0].mxu0
    %v732 = vadd.f32 0.0, %v731
    %v733 = vpop.f32.mrb[0].mxu0
    %v734 = vadd.f32 0.0, %v733
    %735 = vmatprep.mubr.bf16.mxu0 0
    %736 = vmatmul.mubr.bf16.gmra.mrb[0].mxu0 %v582
    %v737 = vpop.f32.mrb[0].mxu0
    %v738 = vadd.f32 0.0, %v737
    %v739 = vpop.f32.mrb[0].mxu0
    %v740 = vadd.f32 0.0, %v739
    %v741 = vpop.f32.mrb[0].mxu0
    %v742 = vadd.f32 0.0, %v741
    %v743 = vpop.f32.mrb[0].mxu0
    %v744 = vadd.f32 0.0, %v743
    %745 = vmatprep.mubr.bf16.mxu0 0
    %746 = vmatmul.mubr.bf16.gmra.mrb[0].mxu0 %v583
    %v747 = vpop.f32.mrb[0].mxu0
    %v748 = vadd.f32 0.0, %v747
    %v749 = vpop.f32.mrb[0].mxu0
    %v750 = vadd.f32 0.0, %v749
    %v751 = vpop.f32.mrb[0].mxu0
    %v752 = vadd.f32 0.0, %v751
    %v753 = vpop.f32.mrb[0].mxu0
    %v754 = vadd.f32 0.0, %v753
    %755 = vmatprep.mubr.bf16.mxu0 0
    %756 = vmatmul.mubr.bf16.gmra.mrb[0].mxu0 %v584
    %v757 = vpop.f32.mrb[0].mxu0
    %v758 = vadd.f32 0.0, %v757
    %v759 = vpop.f32.mrb[0].mxu0
    %v760 = vadd.f32 0.0, %v759
    %v761 = vpop.f32.mrb[0].mxu0
    %v762 = vadd.f32 0.0, %v761
    %v763 = vpop.f32.mrb[0].mxu0
    %v764 = vadd.f32 0.0, %v763
    %765 = vmatprep.mubr.bf16.mxu0 0
    %766 = vmatmul.mubr.bf16.gmra.mrb[0].mxu0 %v585
    %v767 = vpop.f32.mrb[0].mxu0
    %v768 = vadd.f32 0.0, %v767
    %v769 = vpop.f32.mrb[0].mxu0
    %v770 = vadd.f32 0.0, %v769
    %v771 = vpop.f32.mrb[0].mxu0
    %v772 = vadd.f32 0.0, %v771
    %v773 = vpop.f32.mrb[0].mxu0
    %v774 = vadd.f32 0.0, %v773
    %775 = vmatprep.mubr.bf16.mxu0 0
    %776 = vmatmul.mubr.bf16.gmra.mrb[0].mxu0 %v586
    %v777 = vpop.f32.mrb[0].mxu0
    %v778 = vadd.f32 0.0, %v777
    %v779 = vpop.f32.mrb[0].mxu0
    %v780 = vadd.f32 0.0, %v779
    %v781 = vpop.f32.mrb[0].mxu0
    %v782 = vadd.f32 0.0, %v781
    %v783 = vpop.f32.mrb[0].mxu0
    %v784 = vadd.f32 0.0, %v783
    %785 = vmatprep.mubr.bf16.mxu0 0
    %786 = vmatmul.mubr.bf16.gmra.mrb[0].mxu0 %v587
    %v787 = vpop.f32.mrb[0].mxu0
    %v788 = vadd.f32 0.0, %v787
    %v789 = vpop.f32.mrb[0].mxu0
    %v790 = vadd.f32 0.0, %v789
    %v791 = vpop.f32.mrb[0].mxu0
    %v792 = vadd.f32 0.0, %v791
    %v793 = vpop.f32.mrb[0].mxu0
    %v794 = vadd.f32 0.0, %v793
    %795 = vmatprep.mubr.bf16.mxu0 0
    %796 = vmatmul.mubr.bf16.gmra.mrb[0].mxu0 %v588
    %v797 = vpop.f32.mrb[0].mxu0
    %v798 = vadd.f32 0.0, %v797
    %v799 = vpop.f32.mrb[0].mxu0
    %v800 = vadd.f32 0.0, %v799
    %v801 = vpop.f32.mrb[0].mxu0
    %v802 = vadd.f32 0.0, %v801
    %v803 = vpop.f32.mrb[0].mxu0
    %v804 = vadd.f32 0.0, %v803
    %805 = vmatprep.mubr.bf16.mxu0 0
    %806 = vmatmul.mubr.bf16.gmra.mrb[0].mxu0 %v589
    %v807 = vpop.f32.mrb[0].mxu0
    %v808 = vadd.f32 0.0, %v807
    %v809 = vpop.f32.mrb[0].mxu0
    %v810 = vadd.f32 0.0, %v809
    %v811 = vpop.f32.mrb[0].mxu0
    %v812 = vadd.f32 0.0, %v811
    %v813 = vpop.f32.mrb[0].mxu0
    %v814 = vadd.f32 0.0, %v813
    %815 = vmatprep.mubr.bf16.mxu0 0
    %816 = vmatmul.mubr.bf16.gmra.mrb[0].mxu0 %v590
    %v817 = vpop.f32.mrb[0].mxu0
    %v818 = vadd.f32 0.0, %v817
    %v819 = vpop.f32.mrb[0].mxu0
    %v820 = vadd.f32 0.0, %v819
    %v821 = vpop.f32.mrb[0].mxu0
    %v822 = vadd.f32 0.0, %v821
    %v823 = vpop.f32.mrb[0].mxu0
    %v824 = vadd.f32 0.0, %v823
    %825 = vmatprep.mubr.bf16.mxu0 0
    %826 = vmatmul.mubr.bf16.gmra.mrb[0].mxu0 %v591
    %v827 = vpop.f32.mrb[0].mxu0
    %v828 = vadd.f32 0.0, %v827
    %v829 = vpop.f32.mrb[0].mxu0
    %v830 = vadd.f32 0.0, %v829
    %v831 = vpop.f32.mrb[0].mxu0
    %v832 = vadd.f32 0.0, %v831
    %v833 = vpop.f32.mrb[0].mxu0
    %v834 = vadd.f32 0.0, %v833
    %835 = vmatprep.mubr.bf16.mxu0 0
    %836 = vmatmul.mubr.bf16.gmra.mrb[0].mxu0 %v592
    %v837 = vpop.f32.mrb[0].mxu0
    %v838 = vadd.f32 0.0, %v837
    %v839 = vpop.f32.mrb[0].mxu0
    %v840 = vadd.f32 0.0, %v839
    %v841 = vpop.f32.mrb[0].mxu0
    %v842 = vadd.f32 0.0, %v841
    %v843 = vpop.f32.mrb[0].mxu0
    %v844 = vadd.f32 0.0, %v843
    %845 = vmatprep.mubr.bf16.mxu0 0
    %846 = vmatmul.mubr.bf16.gmra.mrb[0].mxu0 %v593
    %v847 = vpop.f32.mrb[0].mxu0
    %v848 = vadd.f32 0.0, %v847
    %v849 = vpop.f32.mrb[0].mxu0
    %v850 = vadd.f32 0.0, %v849
    %v851 = vpop.f32.mrb[0].mxu0
    %v852 = vadd.f32 0.0, %v851
    %v853 = vpop.f32.mrb[0].mxu0
    %v854 = vadd.f32 0.0, %v853
    %855 = vmatprep.mubr.bf16.mxu0 0
    %856 = vmatmul.mubr.bf16.gmra.mrb[0].mxu0 %v594
    %v857 = vpop.f32.mrb[0].mxu0
    %v858 = vadd.f32 0.0, %v857
    %v859 = vpop.f32.mrb[0].mxu0
    %v860 = vadd.f32 0.0, %v859
    %v861 = vpop.f32.mrb[0].mxu0
    %v862 = vadd.f32 0.0, %v861
    %v863 = vpop.f32.mrb[0].mxu0
    %v864 = vadd.f32 0.0, %v863
    %865 = vmatprep.mubr.bf16.mxu0 0
    %866 = vmatmul.mubr.bf16.gmra.mrb[0].mxu0 %v595
    %v867 = vpop.f32.mrb[0].mxu0
    %v868 = vadd.f32 0.0, %v867
    %v869 = vpop.f32.mrb[0].mxu0
    %v870 = vadd.f32 0.0, %v869
    %v871 = vpop.f32.mrb[0].mxu0
    %v872 = vadd.f32 0.0, %v871
    %v873 = vpop.f32.mrb[0].mxu0
    %v874 = vadd.f32 0.0, %v873
    %875 = vmatprep.mubr.bf16.mxu0 0
    %876 = vmatmul.mubr.bf16.gmra.mrb[0].mxu0 %v596
    %v877 = vpop.f32.mrb[0].mxu0
    %v878 = vadd.f32 0.0, %v877
    %v879 = vpop.f32.mrb[0].mxu0
    %v880 = vadd.f32 0.0, %v879
    %v881 = vpop.f32.mrb[0].mxu0
    %v882 = vadd.f32 0.0, %v881
    %v883 = vpop.f32.mrb[0].mxu0
    %v884 = vadd.f32 0.0, %v883
    %885 = vdwg.mxu0
    %v902 = vunpack.c.l.b16 %v117
    %v903 = vunpack.c.h.b16 %v117
    %v904 = vunpack.c.l.b16 %v118
    %v905 = vunpack.c.h.b16 %v118
    %v906 = vunpack.c.l.b16 %v119
    %v907 = vunpack.c.h.b16 %v119
    %v908 = vunpack.c.l.b16 %v120
    %v909 = vunpack.c.h.b16 %v120
    %v910 = vunpack.c.l.b16 %v121
    %v911 = vunpack.c.h.b16 %v121
    %v912 = vunpack.c.l.b16 %v122
    %v913 = vunpack.c.h.b16 %v122
    %v914 = vunpack.c.l.b16 %v123
    %v915 = vunpack.c.h.b16 %v123
    %v916 = vunpack.c.l.b16 %v124
    %v917 = vunpack.c.h.b16 %v124
    %v918 = vunpack.c.l.b16 %v125
    %v919 = vunpack.c.h.b16 %v125
    %v920 = vunpack.c.l.b16 %v126
    %v921 = vunpack.c.h.b16 %v126
    %v922 = vunpack.c.l.b16 %v127
    %v923 = vunpack.c.h.b16 %v127
    %v924 = vunpack.c.l.b16 %v128
    %v925 = vunpack.c.h.b16 %v128
    %v926 = vunpack.c.l.b16 %v129
    %v927 = vunpack.c.h.b16 %v129
    %v928 = vunpack.c.l.b16 %v130
    %v929 = vunpack.c.h.b16 %v130
    %v930 = vunpack.c.l.b16 %v131
    %v931 = vunpack.c.h.b16 %v131
    %v932 = vunpack.c.l.b16 %v132
    %v933 = vunpack.c.h.b16 %v132
    %v934 = vpack.c.b16 %v904, %v902
    %v935 = vpack.c.b16 %v905, %v903
    %v936 = vpack.c.b16 %v908, %v906
    %v937 = vpack.c.b16 %v909, %v907
    %v938 = vpack.c.b16 %v912, %v910
    %v939 = vpack.c.b16 %v913, %v911
    %v940 = vpack.c.b16 %v916, %v914
    %v941 = vpack.c.b16 %v917, %v915
    %v942 = vpack.c.b16 %v920, %v918
    %v943 = vpack.c.b16 %v921, %v919
    %v944 = vpack.c.b16 %v924, %v922
    %v945 = vpack.c.b16 %v925, %v923
    %v946 = vpack.c.b16 %v928, %v926
    %v947 = vpack.c.b16 %v929, %v927
    %v948 = vpack.c.b16 %v932, %v930
    %v949 = vpack.c.b16 %v933, %v931
    %966 = vmatprep.subr.bf16.mxu0 %v935
    %967 = vmatpush1.bf16.msra.mxu0 %v934
    %968 = vmatprep.subr.bf16.mxu0 %v937
    %969 = vmatpush1.bf16.msra.mxu0 %v936
    %970 = vmatprep.subr.bf16.mxu0 %v939
    %971 = vmatpush1.bf16.msra.mxu0 %v938
    %972 = vmatprep.subr.bf16.mxu0 %v941
    %973 = vmatpush1.bf16.msra.mxu0 %v940
    %974 = vmatprep.subr.bf16.mxu0 %v943
    %975 = vmatpush1.bf16.msra.mxu0 %v942
    %976 = vmatprep.subr.bf16.mxu0 %v945
    %977 = vmatpush1.bf16.msra.mxu0 %v944
    %978 = vmatprep.subr.bf16.mxu0 %v947
    %979 = vmatpush1.bf16.msra.mxu0 %v946
    %980 = vmatprep.subr.bf16.mxu0 %v949
    %981 = vmatpush1.bf16.msra.mxu0 %v948
    %982 = vmatprep.subr.bf16.mxu0 0
    %983 = vmatpush1.bf16.msra.mxu0 0
    %984 = vmatprep.subr.bf16.mxu0 0
    %985 = vmatpush1.bf16.msra.mxu0 0
    %986 = vmatprep.subr.bf16.mxu0 0
    %987 = vmatpush1.bf16.msra.mxu0 0
    %988 = vmatprep.subr.bf16.mxu0 0
    %989 = vmatpush1.bf16.msra.mxu0 0
    %990 = vmatprep.subr.bf16.mxu0 0
    %991 = vmatpush1.bf16.msra.mxu0 0
    %992 = vmatprep.subr.bf16.mxu0 0
    %993 = vmatpush1.bf16.msra.mxu0 0
    %994 = vmatprep.subr.bf16.mxu0 0
    %995 = vmatpush1.bf16.msra.mxu0 0
    %996 = vmatprep.subr.bf16.mxu0 0
    %997 = vmatpush1.bf16.msra.mxu0 0
    %998 = vmatprep.mubr.bf16.mxu0 0
    %999 = vmatmul.mubr.bf16.gmra.mrb[0].mxu0 %v101
    %v1000 = vpop.f32.mrb[0].mxu0
    %v1001 = vadd.f32 %v728, %v1000
    %v1002 = vpop.f32.mrb[0].mxu0
    %v1003 = vadd.f32 %v730, %v1002
    %v1004 = vpop.f32.mrb[0].mxu0
    %v1005 = vadd.f32 %v732, %v1004
    %v1006 = vpop.f32.mrb[0].mxu0
    %v1007 = vadd.f32 %v734, %v1006
    %1008 = vmatprep.mubr.bf16.mxu0 0
    %1009 = vmatmul.mubr.bf16.gmra.mrb[0].mxu0 %v102
    %v1010 = vpop.f32.mrb[0].mxu0
    %v1011 = vadd.f32 %v738, %v1010
    %v1012 = vpop.f32.mrb[0].mxu0
    %v1013 = vadd.f32 %v740, %v1012
    %v1014 = vpop.f32.mrb[0].mxu0
    %v1015 = vadd.f32 %v742, %v1014
    %v1016 = vpop.f32.mrb[0].mxu0
    %v1017 = vadd.f32 %v744, %v1016
    %1018 = vmatprep.mubr.bf16.mxu0 0
    %1019 = vmatmul.mubr.bf16.gmra.mrb[0].mxu0 %v103
    %v1020 = vpop.f32.mrb[0].mxu0
    %v1021 = vadd.f32 %v748, %v1020
    %v1022 = vpop.f32.mrb[0].mxu0
    %v1023 = vadd.f32 %v750, %v1022
    %v1024 = vpop.f32.mrb[0].mxu0
    %v1025 = vadd.f32 %v752, %v1024
    %v1026 = vpop.f32.mrb[0].mxu0
    %v1027 = vadd.f32 %v754, %v1026
    %1028 = vmatprep.mubr.bf16.mxu0 0
    %1029 = vmatmul.mubr.bf16.gmra.mrb[0].mxu0 %v104
    %v1030 = vpop.f32.mrb[0].mxu0
    %v1031 = vadd.f32 %v758, %v1030
    %v1032 = vpop.f32.mrb[0].mxu0
    %v1033 = vadd.f32 %v760, %v1032
    %v1034 = vpop.f32.mrb[0].mxu0
    %v1035 = vadd.f32 %v762, %v1034
    %v1036 = vpop.f32.mrb[0].mxu0
    %v1037 = vadd.f32 %v764, %v1036
    %1038 = vmatprep.mubr.bf16.mxu0 0
    %1039 = vmatmul.mubr.bf16.gmra.mrb[0].mxu0 %v105
    %v1040 = vpop.f32.mrb[0].mxu0
    %v1041 = vadd.f32 %v768, %v1040
    %v1042 = vpop.f32.mrb[0].mxu0
    %v1043 = vadd.f32 %v770, %v1042
    %v1044 = vpop.f32.mrb[0].mxu0
    %v1045 = vadd.f32 %v772, %v1044
    %v1046 = vpop.f32.mrb[0].mxu0
    %v1047 = vadd.f32 %v774, %v1046
    %1048 = vmatprep.mubr.bf16.mxu0 0
    %1049 = vmatmul.mubr.bf16.gmra.mrb[0].mxu0 %v106
    %v1050 = vpop.f32.mrb[0].mxu0
    %v1051 = vadd.f32 %v778, %v1050
    %v1052 = vpop.f32.mrb[0].mxu0
    %v1053 = vadd.f32 %v780, %v1052
    %v1054 = vpop.f32.mrb[0].mxu0
    %v1055 = vadd.f32 %v782, %v1054
    %v1056 = vpop.f32.mrb[0].mxu0
    %v1057 = vadd.f32 %v784, %v1056
    %1058 = vmatprep.mubr.bf16.mxu0 0
    %1059 = vmatmul.mubr.bf16.gmra.mrb[0].mxu0 %v107
    %v1060 = vpop.f32.mrb[0].mxu0
    %v1061 = vadd.f32 %v788, %v1060
    %v1062 = vpop.f32.mrb[0].mxu0
    %v1063 = vadd.f32 %v790, %v1062
    %v1064 = vpop.f32.mrb[0].mxu0
    %v1065 = vadd.f32 %v792, %v1064
    %v1066 = vpop.f32.mrb[0].mxu0
    %v1067 = vadd.f32 %v794, %v1066
    %1068 = vmatprep.mubr.bf16.mxu0 0
    %1069 = vmatmul.mubr.bf16.gmra.mrb[0].mxu0 %v108
    %v1070 = vpop.f32.mrb[0].mxu0
    %v1071 = vadd.f32 %v798, %v1070
    %v1072 = vpop.f32.mrb[0].mxu0
    %v1073 = vadd.f32 %v800, %v1072
    %v1074 = vpop.f32.mrb[0].mxu0
    %v1075 = vadd.f32 %v802, %v1074
    %v1076 = vpop.f32.mrb[0].mxu0
    %v1077 = vadd.f32 %v804, %v1076
    %1078 = vmatprep.mubr.bf16.mxu0 0
    %1079 = vmatmul.mubr.bf16.gmra.mrb[0].mxu0 %v109
    %v1080 = vpop.f32.mrb[0].mxu0
    %v1081 = vadd.f32 %v808, %v1080
    %v1082 = vpop.f32.mrb[0].mxu0
    %v1083 = vadd.f32 %v810, %v1082
    %v1084 = vpop.f32.mrb[0].mxu0
    %v1085 = vadd.f32 %v812, %v1084
    %v1086 = vpop.f32.mrb[0].mxu0
    %v1087 = vadd.f32 %v814, %v1086
    %1088 = vmatprep.mubr.bf16.mxu0 0
    %1089 = vmatmul.mubr.bf16.gmra.mrb[0].mxu0 %v110
    %v1090 = vpop.f32.mrb[0].mxu0
    %v1091 = vadd.f32 %v818, %v1090
    %v1092 = vpop.f32.mrb[0].mxu0
    %v1093 = vadd.f32 %v820, %v1092
    %v1094 = vpop.f32.mrb[0].mxu0
    %v1095 = vadd.f32 %v822, %v1094
    %v1096 = vpop.f32.mrb[0].mxu0
    %v1097 = vadd.f32 %v824, %v1096
    %1098 = vmatprep.mubr.bf16.mxu0 0
    %1099 = vmatmul.mubr.bf16.gmra.mrb[0].mxu0 %v111
    %v1100 = vpop.f32.mrb[0].mxu0
    %v1101 = vadd.f32 %v828, %v1100
    %v1102 = vpop.f32.mrb[0].mxu0
    %v1103 = vadd.f32 %v830, %v1102
    %v1104 = vpop.f32.mrb[0].mxu0
    %v1105 = vadd.f32 %v832, %v1104
    %v1106 = vpop.f32.mrb[0].mxu0
    %v1107 = vadd.f32 %v834, %v1106
    %1108 = vmatprep.mubr.bf16.mxu0 0
    %1109 = vmatmul.mubr.bf16.gmra.mrb[0].mxu0 %v112
    %v1110 = vpop.f32.mrb[0].mxu0
    %v1111 = vadd.f32 %v838, %v1110
    %v1112 = vpop.f32.mrb[0].mxu0
    %v1113 = vadd.f32 %v840, %v1112
    %v1114 = vpop.f32.mrb[0].mxu0
    %v1115 = vadd.f32 %v842, %v1114
    %v1116 = vpop.f32.mrb[0].mxu0
    %v1117 = vadd.f32 %v844, %v1116
    %1118 = vmatprep.mubr.bf16.mxu0 0
    %1119 = vmatmul.mubr.bf16.gmra.mrb[0].mxu0 %v113
    %v1120 = vpop.f32.mrb[0].mxu0
    %v1121 = vadd.f32 %v848, %v1120
    %v1122 = vpop.f32.mrb[0].mxu0
    %v1123 = vadd.f32 %v850, %v1122
    %v1124 = vpop.f32.mrb[0].mxu0
    %v1125 = vadd.f32 %v852, %v1124
    %v1126 = vpop.f32.mrb[0].mxu0
    %v1127 = vadd.f32 %v854, %v1126
    %1128 = vmatprep.mubr.bf16.mxu0 0
    %1129 = vmatmul.mubr.bf16.gmra.mrb[0].mxu0 %v114
    %v1130 = vpop.f32.mrb[0].mxu0
    %v1131 = vadd.f32 %v858, %v1130
    %v1132 = vpop.f32.mrb[0].mxu0
    %v1133 = vadd.f32 %v860, %v1132
    %v1134 = vpop.f32.mrb[0].mxu0
    %v1135 = vadd.f32 %v862, %v1134
    %v1136 = vpop.f32.mrb[0].mxu0
    %v1137 = vadd.f32 %v864, %v1136
    %1138 = vmatprep.mubr.bf16.mxu0 0
    %1139 = vmatmul.mubr.bf16.gmra.mrb[0].mxu0 %v115
    %v1140 = vpop.f32.mrb[0].mxu0
    %v1141 = vadd.f32 %v868, %v1140
    %v1142 = vpop.f32.mrb[0].mxu0
    %v1143 = vadd.f32 %v870, %v1142
    %v1144 = vpop.f32.mrb[0].mxu0
    %v1145 = vadd.f32 %v872, %v1144
    %v1146 = vpop.f32.mrb[0].mxu0
    %v1147 = vadd.f32 %v874, %v1146
    %1148 = vmatprep.mubr.bf16.mxu0 0
    %1149 = vmatmul.mubr.bf16.gmra.mrb[0].mxu0 %v116
    %v1150 = vpop.f32.mrb[0].mxu0
    %v1151 = vadd.f32 %v878, %v1150
    %v1152 = vpop.f32.mrb[0].mxu0
    %v1153 = vadd.f32 %v880, %v1152
    %v1154 = vpop.f32.mrb[0].mxu0
    %v1155 = vadd.f32 %v882, %v1154
    %v1156 = vpop.f32.mrb[0].mxu0
    %v1157 = vadd.f32 %v884, %v1156
    %1158 = vdwg.mxu0
    %v1159 = vld [vmem:[%s4] sm:$0x1]
    %v1160 = vld [vmem:[%s4 + $0x1] sm:$0x1]
    %vm1161 = vcmp.gt.f32.partialorder %v1160, 0.5
    %1162 = vset.pattern.permute.xlu0 4
    %1163 = vperm.xlu0 %1162, %v37
    %v1164 = vpop.permute.xlu0 %1163
    %1166 = vset.pattern.permute.xlu0 4
    %1167 = vperm.xlu0 %1166, %v38
    %v1168 = vpop.permute.xlu0 %1167
    %1170 = vset.pattern.permute.xlu0 4
    %1171 = vperm.xlu0 %1170, %v39
    %v1172 = vpop.permute.xlu0 %1171
    %1174 = vset.pattern.permute.xlu0 4
    %1175 = vperm.xlu0 %1174, %v40
    %v1176 = vpop.permute.xlu0 %1175
    %1178 = vset.pattern.permute.xlu0 4
    %1179 = vperm.xlu0 %1178, %v41
    %v1180 = vpop.permute.xlu0 %1179
    %1182 = vset.pattern.permute.xlu0 4
    %1183 = vperm.xlu0 %1182, %v42
    %v1184 = vpop.permute.xlu0 %1183
    %1186 = vset.pattern.permute.xlu0 4
    %1187 = vperm.xlu0 %1186, %v43
    %v1188 = vpop.permute.xlu0 %1187
    %1190 = vset.pattern.permute.xlu0 4
    %1191 = vperm.xlu0 %1190, %v44
    %v1192 = vpop.permute.xlu0 %1191
    %1194 = vset.pattern.permute.xlu0 4
    %1195 = vperm.xlu0 %1194, %v45
    %v1196 = vpop.permute.xlu0 %1195
    %1198 = vset.pattern.permute.xlu0 4
    %1199 = vperm.xlu0 %1198, %v46
    %v1200 = vpop.permute.xlu0 %1199
    %1202 = vset.pattern.permute.xlu0 4
    %1203 = vperm.xlu0 %1202, %v47
    %v1204 = vpop.permute.xlu0 %1203
    %1206 = vset.pattern.permute.xlu0 4
    %1207 = vperm.xlu0 %1206, %v48
    %v1208 = vpop.permute.xlu0 %1207
    %1210 = vset.pattern.permute.xlu0 4
    %1211 = vperm.xlu0 %1210, %v49
    %v1212 = vpop.permute.xlu0 %1211
    %1214 = vset.pattern.permute.xlu0 4
    %1215 = vperm.xlu0 %1214, %v50
    %v1216 = vpop.permute.xlu0 %1215
    %1218 = vset.pattern.permute.xlu0 4
    %1219 = vperm.xlu0 %1218, %v51
    %v1220 = vpop.permute.xlu0 %1219
    %1222 = vset.pattern.permute.xlu0 4
    %1223 = vperm.xlu0 %1222, %v52
    %v1224 = vpop.permute.xlu0 %1223
    %1226 = vset.pattern.permute.xlu0 4
    %1227 = vperm.xlu0 %1226, %v53
    %v1228 = vpop.permute.xlu0 %1227
    %1230 = vset.pattern.permute.xlu0 4
    %1231 = vperm.xlu0 %1230, %v54
    %v1232 = vpop.permute.xlu0 %1231
    %1234 = vset.pattern.permute.xlu0 4
    %1235 = vperm.xlu0 %1234, %v55
    %v1236 = vpop.permute.xlu0 %1235
    %1238 = vset.pattern.permute.xlu0 4
    %1239 = vperm.xlu0 %1238, %v56
    %v1240 = vpop.permute.xlu0 %1239
    %1242 = vset.pattern.permute.xlu0 4
    %1243 = vperm.xlu0 %1242, %v57
    %v1244 = vpop.permute.xlu0 %1243
    %1246 = vset.pattern.permute.xlu0 4
    %1247 = vperm.xlu0 %1246, %v58
    %v1248 = vpop.permute.xlu0 %1247
    %1250 = vset.pattern.permute.xlu0 4
    %1251 = vperm.xlu0 %1250, %v59
    %v1252 = vpop.permute.xlu0 %1251
    %1254 = vset.pattern.permute.xlu0 4
    %1255 = vperm.xlu0 %1254, %v60
    %v1256 = vpop.permute.xlu0 %1255
    %1258 = vset.pattern.permute.xlu0 4
    %1259 = vperm.xlu0 %1258, %v61
    %v1260 = vpop.permute.xlu0 %1259
    %1262 = vset.pattern.permute.xlu0 4
    %1263 = vperm.xlu0 %1262, %v62
    %v1264 = vpop.permute.xlu0 %1263
    %1266 = vset.pattern.permute.xlu0 4
    %1267 = vperm.xlu0 %1266, %v63
    %v1268 = vpop.permute.xlu0 %1267
    %1270 = vset.pattern.permute.xlu0 4
    %1271 = vperm.xlu0 %1270, %v64
    %v1272 = vpop.permute.xlu0 %1271
    %1274 = vset.pattern.permute.xlu0 4
    %1275 = vperm.xlu0 %1274, %v65
    %v1276 = vpop.permute.xlu0 %1275
    %1278 = vset.pattern.permute.xlu0 4
    %1279 = vperm.xlu0 %1278, %v66
    %v1280 = vpop.permute.xlu0 %1279
    %1282 = vset.pattern.permute.xlu0 4
    %1283 = vperm.xlu0 %1282, %v67
    %v1284 = vpop.permute.xlu0 %1283
    %1286 = vset.pattern.permute.xlu0 4
    %1287 = vperm.xlu0 %1286, %v68
    %v1288 = vpop.permute.xlu0 %1287
    %v1290 = vlaneseq
    %v1291 = vshrl.u32 %v1290, 7
    %v1292 = vsub.s32 0, %v1291
    %v1293 = vrot.slane %v1159, %v1292
    %v1294 = vmul.f32 %v1164, %v1293
    %v1295 = vmul.f32 %v1168, %v1293
    %v1296 = vmul.f32 %v1172, %v1293
    %v1297 = vmul.f32 %v1176, %v1293
    %v1298 = vmul.f32 %v1180, %v1293
    %v1299 = vmul.f32 %v1184, %v1293
    %v1300 = vmul.f32 %v1188, %v1293
    %v1301 = vmul.f32 %v1192, %v1293
    %v1302 = vmul.f32 %v1196, %v1293
    %v1303 = vmul.f32 %v1200, %v1293
    %v1304 = vmul.f32 %v1204, %v1293
    %v1305 = vmul.f32 %v1208, %v1293
    %v1306 = vmul.f32 %v1212, %v1293
    %v1307 = vmul.f32 %v1216, %v1293
    %v1308 = vmul.f32 %v1220, %v1293
    %v1309 = vmul.f32 %v1224, %v1293
    %v1310 = vmul.f32 %v1228, %v1293
    %v1311 = vmul.f32 %v1232, %v1293
    %v1312 = vmul.f32 %v1236, %v1293
    %v1313 = vmul.f32 %v1240, %v1293
    %v1314 = vmul.f32 %v1244, %v1293
    %v1315 = vmul.f32 %v1248, %v1293
    %v1316 = vmul.f32 %v1252, %v1293
    %v1317 = vmul.f32 %v1256, %v1293
    %v1318 = vmul.f32 %v1260, %v1293
    %v1319 = vmul.f32 %v1264, %v1293
    %v1320 = vmul.f32 %v1268, %v1293
    %v1321 = vmul.f32 %v1272, %v1293
    %v1322 = vmul.f32 %v1276, %v1293
    %v1323 = vmul.f32 %v1280, %v1293
    %v1324 = vmul.f32 %v1284, %v1293
    %v1325 = vmul.f32 %v1288, %v1293
    %v1326 = vand.u32 2147483647, %v1294
    %vm1327 = vcmp.le.f32.partialorder %v1326, 0.7853982
    %vm1328 = vcmp.lt.s32.totalorder %v1294, 0
    %v1329 = vand.u32 %v1294, 2139095040
    %v1330 = vshrl.u32 %v1329, 23
    %v1331 = vsub.s32 %v1330, 127
    %v1332 = vand.u32 2147483647, %v1294
    %v1333 = vand.u32 %v1332, 8388607
    %v1334 = vor.u32 %v1333, 8388608
    %v1335 = vsub.s32 0, %v1334
    %v1336 = vadd.s32 %v1331, 1
    %vm1337 = vcmp.gt.s32.totalorder %v1336, 0
    %v1338 = vsel %vm1337, %v1336, 0
    %v1339 = vshrl.u32 %v1338, 5
    %v1340 = vand.u32 %v1338, 31
    %v1341 = vsub.s32 32, %v1340
    %v1342 = vshrl.u32 683565275, %v1341
    %v1343 = vshll.u32 683565275, %v1340
    %v1344 = vshrl.u32 2475754826, %v1341
    %v1345 = vor.u32 %v1343, %v1344
    %v1346 = vshll.u32 2475754826, %v1340
    %v1347 = vshrl.u32 2131351028, %v1341
    %v1348 = vor.u32 %v1346, %v1347
    %v1349 = vshll.u32 2131351028, %v1340
    %v1350 = vshrl.u32 2102212464, %v1341
    %v1351 = vor.u32 %v1349, %v1350
    %v1352 = vshll.u32 2102212464, %v1340
    %v1353 = vshrl.u32 920167782, %v1341
    %v1354 = vor.u32 %v1352, %v1353
    %v1355 = vshll.u32 920167782, %v1340
    %v1356 = vshrl.u32 1326507024, %v1341
    %v1357 = vor.u32 %v1355, %v1356
    %vm1358 = vcmp.lt.s32.totalorder %v1339, 1
    %vm1359 = vcmp.lt.s32.totalorder %v1339, 2
    %vm1360 = vcmp.lt.s32.totalorder %v1339, 3
    %vm1361 = vcmp.lt.s32.totalorder %v1339, 4
    %v1362 = vsel %vm1358, %v1342, %v1345
    %v1363 = vsel %vm1361, %v1351, 2102212464
    %v1364 = vsel %vm1360, %v1348, %v1363
    %v1365 = vsel %vm1359, %v1362, %v1364
    %v1366 = vsel %vm1358, %v1345, %v1348
    %v1367 = vsel %vm1361, %v1354, 920167782
    %v1368 = vsel %vm1360, %v1351, %v1367
    %v1369 = vsel %vm1359, %v1366, %v1368
    %v1370 = vsel %vm1358, %v1348, %v1351
    %v1371 = vsel %vm1361, %v1357, 1326507024
    %v1372 = vsel %vm1360, %v1354, %v1371
    %v1373 = vsel %vm1359, %v1370, %v1372
    %v1374 = vshll.u32 %v1334, 8
    %v1375 = vmul.u32.u64.compose %v1374, %v1373
    %v1376 = vextract.low.u32 %v1375
    %v1377 = vextract.high.u32 %v1375
    %v1378 = vmul.u32.u64.compose %v1374, %v1369
    %v1379 = vextract.low.u32 %v1378
    %v1380 = vextract.high.u32 %v1378
    %v1381 = vmul.u32 %v1374, %v1365
    %v1382 = vadd.s32 %v1377, %v1379
    %vm1383 = vc.u32 %v1377, %v1379
    %v1384 = vadd.s32 %v1380, 1
    %v1385 = vsel %vm1383, %v1384, %v1380
    %v1386 = vadd.s32 %v1381, %v1385
    %v1387 = vadd.s32 %v1386, 536870912
    %v1388 = vshrl.u32 %v1387, 30
    %v1389 = vshll.u32 %v1388, 30
    %v1390 = vsub.s32 %v1386, %v1389
    %vm1391 = vcmp.lt.s32.totalorder %v1390, 0
    %v1392 = vsub.s32 0, %v1390
    %v1393 = vsel %vm1391, %v1392, %v1390
    %v1394 = vclz %v1393
    %v1395 = vsub.s32 %v1394, 2
    %vm1396 = vcmp.gt.s32.totalorder 0, %v1395
    %v1397 = vsel %vm1396, 0, %v1395
    %v1398 = vsub.s32 32, %v1397
    %v1399 = vshll.u32 %v1390, %v1397
    %v1400 = vshrl.u32 %v1382, %v1398
    %v1401 = vor.u32 %v1399, %v1400
    %v1402 = vsub.s32 4294967266, %v1397
    %v1403 = vadd.s32 %v1402, 127
    %v1404 = vshll.u32 %v1403, 23
    %v1405 = vor.u32 4788187, %v1404
    %v1406 = vand.u32 2147483647, %v1405
    %v1408 = vcvt.s32.f32 %v1401
    %v1409 = vmul.f32 %v1408, %v1406
    %v1410 = vxor.u32 %v1409, 2147483648
    %v1411 = vsel %vm1328, %v1410, %v1409
    %v1412 = vsub.s32 4, %v1388
    %v1413 = vsel %vm1328, %v1412, %v1388
    %v1414 = vsel %vm1327, %v1294, %v1411
    %v1415 = vsel %vm1327, 0, %v1413
    %v1416 = vcosq.f32.pop %v1414
    %v1417 = vsinq.f32.pop %v1414
    %vm1418 = vweird.f32 %v1294
    %v1419 = vand.u32 %v1415, 3
    %vm1420 = vcmp.lt.s32.totalorder %v1419, 2
    %vm1421 = vcmp.eq.s32.totalorder %v1419, 0
    %v1422 = vxor.u32 %v1417, 2147483648
    %v1423 = vsel %vm1421, %v1416, %v1422
    %vm1424 = vcmp.eq.s32.totalorder %v1419, 2
    %v1425 = vxor.u32 %v1416, 2147483648
    %v1426 = vsel %vm1424, %v1425, %v1417
    %v1427 = vsel %vm1420, %v1423, %v1426
    %v1428 = vsel %vm1418, nan, %v1427
    %v1429 = vand.u32 2147483647, %v1295
    %vm1430 = vcmp.le.f32.partialorder %v1429, 0.7853982
    %vm1431 = vcmp.lt.s32.totalorder %v1295, 0
    %v1432 = vand.u32 %v1295, 2139095040
    %v1433 = vshrl.u32 %v1432, 23
    %v1434 = vsub.s32 %v1433, 127
    %v1435 = vand.u32 2147483647, %v1295
    %v1436 = vand.u32 %v1435, 8388607
    %v1437 = vor.u32 %v1436, 8388608
    %v1438 = vsub.s32 0, %v1437
    %v1439 = vadd.s32 %v1434, 1
    %vm1440 = vcmp.gt.s32.totalorder %v1439, 0
    %v1441 = vsel %vm1440, %v1439, 0
    %v1442 = vshrl.u32 %v1441, 5
    %v1443 = vand.u32 %v1441, 31
    %v1444 = vsub.s32 32, %v1443
    %v1445 = vshrl.u32 683565275, %v1444
    %v1446 = vshll.u32 683565275, %v1443
    %v1447 = vshrl.u32 2475754826, %v1444
    %v1448 = vor.u32 %v1446, %v1447
    %v1449 = vshll.u32 2475754826, %v1443
    %v1450 = vshrl.u32 2131351028, %v1444
    %v1451 = vor.u32 %v1449, %v1450
    %v1452 = vshll.u32 2131351028, %v1443
    %v1453 = vshrl.u32 2102212464, %v1444
    %v1454 = vor.u32 %v1452, %v1453
    %v1455 = vshll.u32 2102212464, %v1443
    %v1456 = vshrl.u32 920167782, %v1444
    %v1457 = vor.u32 %v1455, %v1456
    %v1458 = vshll.u32 920167782, %v1443
    %v1459 = vshrl.u32 1326507024, %v1444
    %v1460 = vor.u32 %v1458, %v1459
    %vm1461 = vcmp.lt.s32.totalorder %v1442, 1
    %vm1462 = vcmp.lt.s32.totalorder %v1442, 2
    %vm1463 = vcmp.lt.s32.totalorder %v1442, 3
    %vm1464 = vcmp.lt.s32.totalorder %v1442, 4
    %v1465 = vsel %vm1461, %v1445, %v1448
    %v1466 = vsel %vm1464, %v1454, 2102212464
    %v1467 = vsel %vm1463, %v1451, %v1466
    %v1468 = vsel %vm1462, %v1465, %v1467
    %v1469 = vsel %vm1461, %v1448, %v1451
    %v1470 = vsel %vm1464, %v1457, 920167782
    %v1471 = vsel %vm1463, %v1454, %v1470
    %v1472 = vsel %vm1462, %v1469, %v1471
    %v1473 = vsel %vm1461, %v1451, %v1454
    %v1474 = vsel %vm1464, %v1460, 1326507024
    %v1475 = vsel %vm1463, %v1457, %v1474
    %v1476 = vsel %vm1462, %v1473, %v1475
    %v1477 = vshll.u32 %v1437, 8
    %v1478 = vmul.u32.u64.compose %v1477, %v1476
    %v1479 = vextract.low.u32 %v1478
    %v1480 = vextract.high.u32 %v1478
    %v1481 = vmul.u32.u64.compose %v1477, %v1472
    %v1482 = vextract.low.u32 %v1481
    %v1483 = vextract.high.u32 %v1481
    %v1484 = vmul.u32 %v1477, %v1468
    %v1485 = vadd.s32 %v1480, %v1482
    %vm1486 = vc.u32 %v1480, %v1482
    %v1487 = vadd.s32 %v1483, 1
    %v1488 = vsel %vm1486, %v1487, %v1483
    %v1489 = vadd.s32 %v1484, %v1488
    %v1490 = vadd.s32 %v1489, 536870912
    %v1491 = vshrl.u32 %v1490, 30
    %v1492 = vshll.u32 %v1491, 30
    %v1493 = vsub.s32 %v1489, %v1492
    %vm1494 = vcmp.lt.s32.totalorder %v1493, 0
    %v1495 = vsub.s32 0, %v1493
    %v1496 = vsel %vm1494, %v1495, %v1493
    %v1497 = vclz %v1496
    %v1498 = vsub.s32 %v1497, 2
    %vm1499 = vcmp.gt.s32.totalorder 0, %v1498
    %v1500 = vsel %vm1499, 0, %v1498
    %v1501 = vsub.s32 32, %v1500
    %v1502 = vshll.u32 %v1493, %v1500
    %v1503 = vshrl.u32 %v1485, %v1501
    %v1504 = vor.u32 %v1502, %v1503
    %v1505 = vsub.s32 4294967266, %v1500
    %v1506 = vadd.s32 %v1505, 127
    %v1507 = vshll.u32 %v1506, 23
    %v1508 = vor.u32 4788187, %v1507
    %v1509 = vand.u32 2147483647, %v1508
    %v1511 = vcvt.s32.f32 %v1504
    %v1512 = vmul.f32 %v1511, %v1509
    %v1513 = vxor.u32 %v1512, 2147483648
    %v1514 = vsel %vm1431, %v1513, %v1512
    %v1515 = vsub.s32 4, %v1491
    %v1516 = vsel %vm1431, %v1515, %v1491
    %v1517 = vsel %vm1430, %v1295, %v1514
    %v1518 = vsel %vm1430, 0, %v1516
    %v1519 = vcosq.f32.pop %v1517
    %v1520 = vsinq.f32.pop %v1517
    %vm1521 = vweird.f32 %v1295
    %v1522 = vand.u32 %v1518, 3
    %vm1523 = vcmp.lt.s32.totalorder %v1522, 2
    %vm1524 = vcmp.eq.s32.totalorder %v1522, 0
    %v1525 = vxor.u32 %v1520, 2147483648
    %v1526 = vsel %vm1524, %v1519, %v1525
    %vm1527 = vcmp.eq.s32.totalorder %v1522, 2
    %v1528 = vxor.u32 %v1519, 2147483648
    %v1529 = vsel %vm1527, %v1528, %v1520
    %v1530 = vsel %vm1523, %v1526, %v1529
    %v1531 = vsel %vm1521, nan, %v1530
    %v1532 = vand.u32 2147483647, %v1296
    %vm1533 = vcmp.le.f32.partialorder %v1532, 0.7853982
    %vm1534 = vcmp.lt.s32.totalorder %v1296, 0
    %v1535 = vand.u32 %v1296, 2139095040
    %v1536 = vshrl.u32 %v1535, 23
    %v1537 = vsub.s32 %v1536, 127
    %v1538 = vand.u32 2147483647, %v1296
    %v1539 = vand.u32 %v1538, 8388607
    %v1540 = vor.u32 %v1539, 8388608
    %v1541 = vsub.s32 0, %v1540
    %v1542 = vadd.s32 %v1537, 1
    %vm1543 = vcmp.gt.s32.totalorder %v1542, 0
    %v1544 = vsel %vm1543, %v1542, 0
    %v1545 = vshrl.u32 %v1544, 5
    %v1546 = vand.u32 %v1544, 31
    %v1547 = vsub.s32 32, %v1546
    %v1548 = vshrl.u32 683565275, %v1547
    %v1549 = vshll.u32 683565275, %v1546
    %v1550 = vshrl.u32 2475754826, %v1547
    %v1551 = vor.u32 %v1549, %v1550
    %v1552 = vshll.u32 2475754826, %v1546
    %v1553 = vshrl.u32 2131351028, %v1547
    %v1554 = vor.u32 %v1552, %v1553
    %v1555 = vshll.u32 2131351028, %v1546
    %v1556 = vshrl.u32 2102212464, %v1547
    %v1557 = vor.u32 %v1555, %v1556
    %v1558 = vshll.u32 2102212464, %v1546
    %v1559 = vshrl.u32 920167782, %v1547
    %v1560 = vor.u32 %v1558, %v1559
    %v1561 = vshll.u32 920167782, %v1546
    %v1562 = vshrl.u32 1326507024, %v1547
    %v1563 = vor.u32 %v1561, %v1562
    %vm1564 = vcmp.lt.s32.totalorder %v1545, 1
    %vm1565 = vcmp.lt.s32.totalorder %v1545, 2
    %vm1566 = vcmp.lt.s32.totalorder %v1545, 3
    %vm1567 = vcmp.lt.s32.totalorder %v1545, 4
    %v1568 = vsel %vm1564, %v1548, %v1551
    %v1569 = vsel %vm1567, %v1557, 2102212464
    %v1570 = vsel %vm1566, %v1554, %v1569
    %v1571 = vsel %vm1565, %v1568, %v1570
    %v1572 = vsel %vm1564, %v1551, %v1554
    %v1573 = vsel %vm1567, %v1560, 920167782
    %v1574 = vsel %vm1566, %v1557, %v1573
    %v1575 = vsel %vm1565, %v1572, %v1574
    %v1576 = vsel %vm1564, %v1554, %v1557
    %v1577 = vsel %vm1567, %v1563, 1326507024
    %v1578 = vsel %vm1566, %v1560, %v1577
    %v1579 = vsel %vm1565, %v1576, %v1578
    %v1580 = vshll.u32 %v1540, 8
    %v1581 = vmul.u32.u64.compose %v1580, %v1579
    %v1582 = vextract.low.u32 %v1581
    %v1583 = vextract.high.u32 %v1581
    %v1584 = vmul.u32.u64.compose %v1580, %v1575
    %v1585 = vextract.low.u32 %v1584
    %v1586 = vextract.high.u32 %v1584
    %v1587 = vmul.u32 %v1580, %v1571
    %v1588 = vadd.s32 %v1583, %v1585
    %vm1589 = vc.u32 %v1583, %v1585
    %v1590 = vadd.s32 %v1586, 1
    %v1591 = vsel %vm1589, %v1590, %v1586
    %v1592 = vadd.s32 %v1587, %v1591
    %v1593 = vadd.s32 %v1592, 536870912
    %v1594 = vshrl.u32 %v1593, 30
    %v1595 = vshll.u32 %v1594, 30
    %v1596 = vsub.s32 %v1592, %v1595
    %vm1597 = vcmp.lt.s32.totalorder %v1596, 0
    %v1598 = vsub.s32 0, %v1596
    %v1599 = vsel %vm1597, %v1598, %v1596
    %v1600 = vclz %v1599
    %v1601 = vsub.s32 %v1600, 2
    %vm1602 = vcmp.gt.s32.totalorder 0, %v1601
    %v1603 = vsel %vm1602, 0, %v1601
    %v1604 = vsub.s32 32, %v1603
    %v1605 = vshll.u32 %v1596, %v1603
    %v1606 = vshrl.u32 %v1588, %v1604
    %v1607 = vor.u32 %v1605, %v1606
    %v1608 = vsub.s32 4294967266, %v1603
    %v1609 = vadd.s32 %v1608, 127
    %v1610 = vshll.u32 %v1609, 23
    %v1611 = vor.u32 4788187, %v1610
    %v1612 = vand.u32 2147483647, %v1611
    %v1614 = vcvt.s32.f32 %v1607
    %v1615 = vmul.f32 %v1614, %v1612
    %v1616 = vxor.u32 %v1615, 2147483648
    %v1617 = vsel %vm1534, %v1616, %v1615
    %v1618 = vsub.s32 4, %v1594
    %v1619 = vsel %vm1534, %v1618, %v1594
    %v1620 = vsel %vm1533, %v1296, %v1617
    %v1621 = vsel %vm1533, 0, %v1619
    %v1622 = vcosq.f32.pop %v1620
    %v1623 = vsinq.f32.pop %v1620
    %vm1624 = vweird.f32 %v1296
    %v1625 = vand.u32 %v1621, 3
    %vm1626 = vcmp.lt.s32.totalorder %v1625, 2
    %vm1627 = vcmp.eq.s32.totalorder %v1625, 0
    %v1628 = vxor.u32 %v1623, 2147483648
    %v1629 = vsel %vm1627, %v1622, %v1628
    %vm1630 = vcmp.eq.s32.totalorder %v1625, 2
    %v1631 = vxor.u32 %v1622, 2147483648
    %v1632 = vsel %vm1630, %v1631, %v1623
    %v1633 = vsel %vm1626, %v1629, %v1632
    %v1634 = vsel %vm1624, nan, %v1633
    %v1635 = vand.u32 2147483647, %v1297
    %vm1636 = vcmp.le.f32.partialorder %v1635, 0.7853982
    %vm1637 = vcmp.lt.s32.totalorder %v1297, 0
    %v1638 = vand.u32 %v1297, 2139095040
    %v1639 = vshrl.u32 %v1638, 23
    %v1640 = vsub.s32 %v1639, 127
    %v1641 = vand.u32 2147483647, %v1297
    %v1642 = vand.u32 %v1641, 8388607
    %v1643 = vor.u32 %v1642, 8388608
    %v1644 = vsub.s32 0, %v1643
    %v1645 = vadd.s32 %v1640, 1
    %vm1646 = vcmp.gt.s32.totalorder %v1645, 0
    %v1647 = vsel %vm1646, %v1645, 0
    %v1648 = vshrl.u32 %v1647, 5
    %v1649 = vand.u32 %v1647, 31
    %v1650 = vsub.s32 32, %v1649
    %v1651 = vshrl.u32 683565275, %v1650
    %v1652 = vshll.u32 683565275, %v1649
    %v1653 = vshrl.u32 2475754826, %v1650
    %v1654 = vor.u32 %v1652, %v1653
    %v1655 = vshll.u32 2475754826, %v1649
    %v1656 = vshrl.u32 2131351028, %v1650
    %v1657 = vor.u32 %v1655, %v1656
    %v1658 = vshll.u32 2131351028, %v1649
    %v1659 = vshrl.u32 2102212464, %v1650
    %v1660 = vor.u32 %v1658, %v1659
    %v1661 = vshll.u32 2102212464, %v1649
    %v1662 = vshrl.u32 920167782, %v1650
    %v1663 = vor.u32 %v1661, %v1662
    %v1664 = vshll.u32 920167782, %v1649
    %v1665 = vshrl.u32 1326507024, %v1650
    %v1666 = vor.u32 %v1664, %v1665
    %vm1667 = vcmp.lt.s32.totalorder %v1648, 1
    %vm1668 = vcmp.lt.s32.totalorder %v1648, 2
    %vm1669 = vcmp.lt.s32.totalorder %v1648, 3
    %vm1670 = vcmp.lt.s32.totalorder %v1648, 4
    %v1671 = vsel %vm1667, %v1651, %v1654
    %v1672 = vsel %vm1670, %v1660, 2102212464
    %v1673 = vsel %vm1669, %v1657, %v1672
    %v1674 = vsel %vm1668, %v1671, %v1673
    %v1675 = vsel %vm1667, %v1654, %v1657
    %v1676 = vsel %vm1670, %v1663, 920167782
    %v1677 = vsel %vm1669, %v1660, %v1676
    %v1678 = vsel %vm1668, %v1675, %v1677
    %v1679 = vsel %vm1667, %v1657, %v1660
    %v1680 = vsel %vm1670, %v1666, 1326507024
    %v1681 = vsel %vm1669, %v1663, %v1680
    %v1682 = vsel %vm1668, %v1679, %v1681
    %v1683 = vshll.u32 %v1643, 8
    %v1684 = vmul.u32.u64.compose %v1683, %v1682
    %v1685 = vextract.low.u32 %v1684
    %v1686 = vextract.high.u32 %v1684
    %v1687 = vmul.u32.u64.compose %v1683, %v1678
    %v1688 = vextract.low.u32 %v1687
    %v1689 = vextract.high.u32 %v1687
    %v1690 = vmul.u32 %v1683, %v1674
    %v1691 = vadd.s32 %v1686, %v1688
    %vm1692 = vc.u32 %v1686, %v1688
    %v1693 = vadd.s32 %v1689, 1
    %v1694 = vsel %vm1692, %v1693, %v1689
    %v1695 = vadd.s32 %v1690, %v1694
    %v1696 = vadd.s32 %v1695, 536870912
    %v1697 = vshrl.u32 %v1696, 30
    %v1698 = vshll.u32 %v1697, 30
    %v1699 = vsub.s32 %v1695, %v1698
    %vm1700 = vcmp.lt.s32.totalorder %v1699, 0
    %v1701 = vsub.s32 0, %v1699
    %v1702 = vsel %vm1700, %v1701, %v1699
    %v1703 = vclz %v1702
    %v1704 = vsub.s32 %v1703, 2
    %vm1705 = vcmp.gt.s32.totalorder 0, %v1704
    %v1706 = vsel %vm1705, 0, %v1704
    %v1707 = vsub.s32 32, %v1706
    %v1708 = vshll.u32 %v1699, %v1706
    %v1709 = vshrl.u32 %v1691, %v1707
    %v1710 = vor.u32 %v1708, %v1709
    %v1711 = vsub.s32 4294967266, %v1706
    %v1712 = vadd.s32 %v1711, 127
    %v1713 = vshll.u32 %v1712, 23
    %v1714 = vor.u32 4788187, %v1713
    %v1715 = vand.u32 2147483647, %v1714
    %v1717 = vcvt.s32.f32 %v1710
    %v1718 = vmul.f32 %v1717, %v1715
    %v1719 = vxor.u32 %v1718, 2147483648
    %v1720 = vsel %vm1637, %v1719, %v1718
    %v1721 = vsub.s32 4, %v1697
    %v1722 = vsel %vm1637, %v1721, %v1697
    %v1723 = vsel %vm1636, %v1297, %v1720
    %v1724 = vsel %vm1636, 0, %v1722
    %v1725 = vcosq.f32.pop %v1723
    %v1726 = vsinq.f32.pop %v1723
    %vm1727 = vweird.f32 %v1297
    %v1728 = vand.u32 %v1724, 3
    %vm1729 = vcmp.lt.s32.totalorder %v1728, 2
    %vm1730 = vcmp.eq.s32.totalorder %v1728, 0
    %v1731 = vxor.u32 %v1726, 2147483648
    %v1732 = vsel %vm1730, %v1725, %v1731
    %vm1733 = vcmp.eq.s32.totalorder %v1728, 2
    %v1734 = vxor.u32 %v1725, 2147483648
    %v1735 = vsel %vm1733, %v1734, %v1726
    %v1736 = vsel %vm1729, %v1732, %v1735
    %v1737 = vsel %vm1727, nan, %v1736
    %v1738 = vand.u32 2147483647, %v1298
    %vm1739 = vcmp.le.f32.partialorder %v1738, 0.7853982
    %vm1740 = vcmp.lt.s32.totalorder %v1298, 0
    %v1741 = vand.u32 %v1298, 2139095040
    %v1742 = vshrl.u32 %v1741, 23
    %v1743 = vsub.s32 %v1742, 127
    %v1744 = vand.u32 2147483647, %v1298
    %v1745 = vand.u32 %v1744, 8388607
    %v1746 = vor.u32 %v1745, 8388608
    %v1747 = vsub.s32 0, %v1746
    %v1748 = vadd.s32 %v1743, 1
    %vm1749 = vcmp.gt.s32.totalorder %v1748, 0
    %v1750 = vsel %vm1749, %v1748, 0
    %v1751 = vshrl.u32 %v1750, 5
    %v1752 = vand.u32 %v1750, 31
    %v1753 = vsub.s32 32, %v1752
    %v1754 = vshrl.u32 683565275, %v1753
    %v1755 = vshll.u32 683565275, %v1752
    %v1756 = vshrl.u32 2475754826, %v1753
    %v1757 = vor.u32 %v1755, %v1756
    %v1758 = vshll.u32 2475754826, %v1752
    %v1759 = vshrl.u32 2131351028, %v1753
    %v1760 = vor.u32 %v1758, %v1759
    %v1761 = vshll.u32 2131351028, %v1752
    %v1762 = vshrl.u32 2102212464, %v1753
    %v1763 = vor.u32 %v1761, %v1762
    %v1764 = vshll.u32 2102212464, %v1752
    %v1765 = vshrl.u32 920167782, %v1753
    %v1766 = vor.u32 %v1764, %v1765
    %v1767 = vshll.u32 920167782, %v1752
    %v1768 = vshrl.u32 1326507024, %v1753
    %v1769 = vor.u32 %v1767, %v1768
    %vm1770 = vcmp.lt.s32.totalorder %v1751, 1
    %vm1771 = vcmp.lt.s32.totalorder %v1751, 2
    %vm1772 = vcmp.lt.s32.totalorder %v1751, 3
    %vm1773 = vcmp.lt.s32.totalorder %v1751, 4
    %v1774 = vsel %vm1770, %v1754, %v1757
    %v1775 = vsel %vm1773, %v1763, 2102212464
    %v1776 = vsel %vm1772, %v1760, %v1775
    %v1777 = vsel %vm1771, %v1774, %v1776
    %v1778 = vsel %vm1770, %v1757, %v1760
    %v1779 = vsel %vm1773, %v1766, 920167782
    %v1780 = vsel %vm1772, %v1763, %v1779
    %v1781 = vsel %vm1771, %v1778, %v1780
    %v1782 = vsel %vm1770, %v1760, %v1763
    %v1783 = vsel %vm1773, %v1769, 1326507024
    %v1784 = vsel %vm1772, %v1766, %v1783
    %v1785 = vsel %vm1771, %v1782, %v1784
    %v1786 = vshll.u32 %v1746, 8
    %v1787 = vmul.u32.u64.compose %v1786, %v1785
    %v1788 = vextract.low.u32 %v1787
    %v1789 = vextract.high.u32 %v1787
    %v1790 = vmul.u32.u64.compose %v1786, %v1781
    %v1791 = vextract.low.u32 %v1790
    %v1792 = vextract.high.u32 %v1790
    %v1793 = vmul.u32 %v1786, %v1777
    %v1794 = vadd.s32 %v1789, %v1791
    %vm1795 = vc.u32 %v1789, %v1791
    %v1796 = vadd.s32 %v1792, 1
    %v1797 = vsel %vm1795, %v1796, %v1792
    %v1798 = vadd.s32 %v1793, %v1797
    %v1799 = vadd.s32 %v1798, 536870912
    %v1800 = vshrl.u32 %v1799, 30
    %v1801 = vshll.u32 %v1800, 30
    %v1802 = vsub.s32 %v1798, %v1801
    %vm1803 = vcmp.lt.s32.totalorder %v1802, 0
    %v1804 = vsub.s32 0, %v1802
    %v1805 = vsel %vm1803, %v1804, %v1802
    %v1806 = vclz %v1805
    %v1807 = vsub.s32 %v1806, 2
    %vm1808 = vcmp.gt.s32.totalorder 0, %v1807
    %v1809 = vsel %vm1808, 0, %v1807
    %v1810 = vsub.s32 32, %v1809
    %v1811 = vshll.u32 %v1802, %v1809
    %v1812 = vshrl.u32 %v1794, %v1810
    %v1813 = vor.u32 %v1811, %v1812
    %v1814 = vsub.s32 4294967266, %v1809
    %v1815 = vadd.s32 %v1814, 127
    %v1816 = vshll.u32 %v1815, 23
    %v1817 = vor.u32 4788187, %v1816
    %v1818 = vand.u32 2147483647, %v1817
    %v1820 = vcvt.s32.f32 %v1813
    %v1821 = vmul.f32 %v1820, %v1818
    %v1822 = vxor.u32 %v1821, 2147483648
    %v1823 = vsel %vm1740, %v1822, %v1821
    %v1824 = vsub.s32 4, %v1800
    %v1825 = vsel %vm1740, %v1824, %v1800
    %v1826 = vsel %vm1739, %v1298, %v1823
    %v1827 = vsel %vm1739, 0, %v1825
    %v1828 = vcosq.f32.pop %v1826
    %v1829 = vsinq.f32.pop %v1826
    %vm1830 = vweird.f32 %v1298
    %v1831 = vand.u32 %v1827, 3
    %vm1832 = vcmp.lt.s32.totalorder %v1831, 2
    %vm1833 = vcmp.eq.s32.totalorder %v1831, 0
    %v1834 = vxor.u32 %v1829, 2147483648
    %v1835 = vsel %vm1833, %v1828, %v1834
    %vm1836 = vcmp.eq.s32.totalorder %v1831, 2
    %v1837 = vxor.u32 %v1828, 2147483648
    %v1838 = vsel %vm1836, %v1837, %v1829
    %v1839 = vsel %vm1832, %v1835, %v1838
    %v1840 = vsel %vm1830, nan, %v1839
    %v1841 = vand.u32 2147483647, %v1299
    %vm1842 = vcmp.le.f32.partialorder %v1841, 0.7853982
    %vm1843 = vcmp.lt.s32.totalorder %v1299, 0
    %v1844 = vand.u32 %v1299, 2139095040
    %v1845 = vshrl.u32 %v1844, 23
    %v1846 = vsub.s32 %v1845, 127
    %v1847 = vand.u32 2147483647, %v1299
    %v1848 = vand.u32 %v1847, 8388607
    %v1849 = vor.u32 %v1848, 8388608
    %v1850 = vsub.s32 0, %v1849
    %v1851 = vadd.s32 %v1846, 1
    %vm1852 = vcmp.gt.s32.totalorder %v1851, 0
    %v1853 = vsel %vm1852, %v1851, 0
    %v1854 = vshrl.u32 %v1853, 5
    %v1855 = vand.u32 %v1853, 31
    %v1856 = vsub.s32 32, %v1855
    %v1857 = vshrl.u32 683565275, %v1856
    %v1858 = vshll.u32 683565275, %v1855
    %v1859 = vshrl.u32 2475754826, %v1856
    %v1860 = vor.u32 %v1858, %v1859
    %v1861 = vshll.u32 2475754826, %v1855
    %v1862 = vshrl.u32 2131351028, %v1856
    %v1863 = vor.u32 %v1861, %v1862
    %v1864 = vshll.u32 2131351028, %v1855
    %v1865 = vshrl.u32 2102212464, %v1856
    %v1866 = vor.u32 %v1864, %v1865
    %v1867 = vshll.u32 2102212464, %v1855
    %v1868 = vshrl.u32 920167782, %v1856
    %v1869 = vor.u32 %v1867, %v1868
    %v1870 = vshll.u32 920167782, %v1855
    %v1871 = vshrl.u32 1326507024, %v1856
    %v1872 = vor.u32 %v1870, %v1871
    %vm1873 = vcmp.lt.s32.totalorder %v1854, 1
    %vm1874 = vcmp.lt.s32.totalorder %v1854, 2
    %vm1875 = vcmp.lt.s32.totalorder %v1854, 3
    %vm1876 = vcmp.lt.s32.totalorder %v1854, 4
    %v1877 = vsel %vm1873, %v1857, %v1860
    %v1878 = vsel %vm1876, %v1866, 2102212464
    %v1879 = vsel %vm1875, %v1863, %v1878
    %v1880 = vsel %vm1874, %v1877, %v1879
    %v1881 = vsel %vm1873, %v1860, %v1863
    %v1882 = vsel %vm1876, %v1869, 920167782
    %v1883 = vsel %vm1875, %v1866, %v1882
    %v1884 = vsel %vm1874, %v1881, %v1883
    %v1885 = vsel %vm1873, %v1863, %v1866
    %v1886 = vsel %vm1876, %v1872, 1326507024
    %v1887 = vsel %vm1875, %v1869, %v1886
    %v1888 = vsel %vm1874, %v1885, %v1887
    %v1889 = vshll.u32 %v1849, 8
    %v1890 = vmul.u32.u64.compose %v1889, %v1888
    %v1891 = vextract.low.u32 %v1890
    %v1892 = vextract.high.u32 %v1890
    %v1893 = vmul.u32.u64.compose %v1889, %v1884
    %v1894 = vextract.low.u32 %v1893
    %v1895 = vextract.high.u32 %v1893
    %v1896 = vmul.u32 %v1889, %v1880
    %v1897 = vadd.s32 %v1892, %v1894
    %vm1898 = vc.u32 %v1892, %v1894
    %v1899 = vadd.s32 %v1895, 1
    %v1900 = vsel %vm1898, %v1899, %v1895
    %v1901 = vadd.s32 %v1896, %v1900
    %v1902 = vadd.s32 %v1901, 536870912
    %v1903 = vshrl.u32 %v1902, 30
    %v1904 = vshll.u32 %v1903, 30
    %v1905 = vsub.s32 %v1901, %v1904
    %vm1906 = vcmp.lt.s32.totalorder %v1905, 0
    %v1907 = vsub.s32 0, %v1905
    %v1908 = vsel %vm1906, %v1907, %v1905
    %v1909 = vclz %v1908
    %v1910 = vsub.s32 %v1909, 2
    %vm1911 = vcmp.gt.s32.totalorder 0, %v1910
    %v1912 = vsel %vm1911, 0, %v1910
    %v1913 = vsub.s32 32, %v1912
    %v1914 = vshll.u32 %v1905, %v1912
    %v1915 = vshrl.u32 %v1897, %v1913
    %v1916 = vor.u32 %v1914, %v1915
    %v1917 = vsub.s32 4294967266, %v1912
    %v1918 = vadd.s32 %v1917, 127
    %v1919 = vshll.u32 %v1918, 23
    %v1920 = vor.u32 4788187, %v1919
    %v1921 = vand.u32 2147483647, %v1920
    %v1923 = vcvt.s32.f32 %v1916
    %v1924 = vmul.f32 %v1923, %v1921
    %v1925 = vxor.u32 %v1924, 2147483648
    %v1926 = vsel %vm1843, %v1925, %v1924
    %v1927 = vsub.s32 4, %v1903
    %v1928 = vsel %vm1843, %v1927, %v1903
    %v1929 = vsel %vm1842, %v1299, %v1926
    %v1930 = vsel %vm1842, 0, %v1928
    %v1931 = vcosq.f32.pop %v1929
    %v1932 = vsinq.f32.pop %v1929
    %vm1933 = vweird.f32 %v1299
    %v1934 = vand.u32 %v1930, 3
    %vm1935 = vcmp.lt.s32.totalorder %v1934, 2
    %vm1936 = vcmp.eq.s32.totalorder %v1934, 0
    %v1937 = vxor.u32 %v1932, 2147483648
    %v1938 = vsel %vm1936, %v1931, %v1937
    %vm1939 = vcmp.eq.s32.totalorder %v1934, 2
    %v1940 = vxor.u32 %v1931, 2147483648
    %v1941 = vsel %vm1939, %v1940, %v1932
    %v1942 = vsel %vm1935, %v1938, %v1941
    %v1943 = vsel %vm1933, nan, %v1942
    %v1944 = vand.u32 2147483647, %v1300
    %vm1945 = vcmp.le.f32.partialorder %v1944, 0.7853982
    %vm1946 = vcmp.lt.s32.totalorder %v1300, 0
    %v1947 = vand.u32 %v1300, 2139095040
    %v1948 = vshrl.u32 %v1947, 23
    %v1949 = vsub.s32 %v1948, 127
    %v1950 = vand.u32 2147483647, %v1300
    %v1951 = vand.u32 %v1950, 8388607
    %v1952 = vor.u32 %v1951, 8388608
    %v1953 = vsub.s32 0, %v1952
    %v1954 = vadd.s32 %v1949, 1
    %vm1955 = vcmp.gt.s32.totalorder %v1954, 0
    %v1956 = vsel %vm1955, %v1954, 0
    %v1957 = vshrl.u32 %v1956, 5
    %v1958 = vand.u32 %v1956, 31
    %v1959 = vsub.s32 32, %v1958
    %v1960 = vshrl.u32 683565275, %v1959
    %v1961 = vshll.u32 683565275, %v1958
    %v1962 = vshrl.u32 2475754826, %v1959
    %v1963 = vor.u32 %v1961, %v1962
    %v1964 = vshll.u32 2475754826, %v1958
    %v1965 = vshrl.u32 2131351028, %v1959
    %v1966 = vor.u32 %v1964, %v1965
    %v1967 = vshll.u32 2131351028, %v1958
    %v1968 = vshrl.u32 2102212464, %v1959
    %v1969 = vor.u32 %v1967, %v1968
    %v1970 = vshll.u32 2102212464, %v1958
    %v1971 = vshrl.u32 920167782, %v1959
    %v1972 = vor.u32 %v1970, %v1971
    %v1973 = vshll.u32 920167782, %v1958
    %v1974 = vshrl.u32 1326507024, %v1959
    %v1975 = vor.u32 %v1973, %v1974
    %vm1976 = vcmp.lt.s32.totalorder %v1957, 1
    %vm1977 = vcmp.lt.s32.totalorder %v1957, 2
    %vm1978 = vcmp.lt.s32.totalorder %v1957, 3
    %vm1979 = vcmp.lt.s32.totalorder %v1957, 4
    %v1980 = vsel %vm1976, %v1960, %v1963
    %v1981 = vsel %vm1979, %v1969, 2102212464
    %v1982 = vsel %vm1978, %v1966, %v1981
    %v1983 = vsel %vm1977, %v1980, %v1982
    %v1984 = vsel %vm1976, %v1963, %v1966
    %v1985 = vsel %vm1979, %v1972, 920167782
    %v1986 = vsel %vm1978, %v1969, %v1985
    %v1987 = vsel %vm1977, %v1984, %v1986
    %v1988 = vsel %vm1976, %v1966, %v1969
    %v1989 = vsel %vm1979, %v1975, 1326507024
    %v1990 = vsel %vm1978, %v1972, %v1989
    %v1991 = vsel %vm1977, %v1988, %v1990
    %v1992 = vshll.u32 %v1952, 8
    %v1993 = vmul.u32.u64.compose %v1992, %v1991
    %v1994 = vextract.low.u32 %v1993
    %v1995 = vextract.high.u32 %v1993
    %v1996 = vmul.u32.u64.compose %v1992, %v1987
    %v1997 = vextract.low.u32 %v1996
    %v1998 = vextract.high.u32 %v1996
    %v1999 = vmul.u32 %v1992, %v1983
    %v2000 = vadd.s32 %v1995, %v1997
    %vm2001 = vc.u32 %v1995, %v1997
    %v2002 = vadd.s32 %v1998, 1
    %v2003 = vsel %vm2001, %v2002, %v1998
    %v2004 = vadd.s32 %v1999, %v2003
    %v2005 = vadd.s32 %v2004, 536870912
    %v2006 = vshrl.u32 %v2005, 30
    %v2007 = vshll.u32 %v2006, 30
    %v2008 = vsub.s32 %v2004, %v2007
    %vm2009 = vcmp.lt.s32.totalorder %v2008, 0
    %v2010 = vsub.s32 0, %v2008
    %v2011 = vsel %vm2009, %v2010, %v2008
    %v2012 = vclz %v2011
    %v2013 = vsub.s32 %v2012, 2
    %vm2014 = vcmp.gt.s32.totalorder 0, %v2013
    %v2015 = vsel %vm2014, 0, %v2013
    %v2016 = vsub.s32 32, %v2015
    %v2017 = vshll.u32 %v2008, %v2015
    %v2018 = vshrl.u32 %v2000, %v2016
    %v2019 = vor.u32 %v2017, %v2018
    %v2020 = vsub.s32 4294967266, %v2015
    %v2021 = vadd.s32 %v2020, 127
    %v2022 = vshll.u32 %v2021, 23
    %v2023 = vor.u32 4788187, %v2022
    %v2024 = vand.u32 2147483647, %v2023
    %v2026 = vcvt.s32.f32 %v2019
    %v2027 = vmul.f32 %v2026, %v2024
    %v2028 = vxor.u32 %v2027, 2147483648
    %v2029 = vsel %vm1946, %v2028, %v2027
    %v2030 = vsub.s32 4, %v2006
    %v2031 = vsel %vm1946, %v2030, %v2006
    %v2032 = vsel %vm1945, %v1300, %v2029
    %v2033 = vsel %vm1945, 0, %v2031
    %v2034 = vcosq.f32.pop %v2032
    %v2035 = vsinq.f32.pop %v2032
    %vm2036 = vweird.f32 %v1300
    %v2037 = vand.u32 %v2033, 3
    %vm2038 = vcmp.lt.s32.totalorder %v2037, 2
    %vm2039 = vcmp.eq.s32.totalorder %v2037, 0
    %v2040 = vxor.u32 %v2035, 2147483648
    %v2041 = vsel %vm2039, %v2034, %v2040
    %vm2042 = vcmp.eq.s32.totalorder %v2037, 2
    %v2043 = vxor.u32 %v2034, 2147483648
    %v2044 = vsel %vm2042, %v2043, %v2035
    %v2045 = vsel %vm2038, %v2041, %v2044
    %v2046 = vsel %vm2036, nan, %v2045
    %v2047 = vand.u32 2147483647, %v1301
    %vm2048 = vcmp.le.f32.partialorder %v2047, 0.7853982
    %vm2049 = vcmp.lt.s32.totalorder %v1301, 0
    %v2050 = vand.u32 %v1301, 2139095040
    %v2051 = vshrl.u32 %v2050, 23
    %v2052 = vsub.s32 %v2051, 127
    %v2053 = vand.u32 2147483647, %v1301
    %v2054 = vand.u32 %v2053, 8388607
    %v2055 = vor.u32 %v2054, 8388608
    %v2056 = vsub.s32 0, %v2055
    %v2057 = vadd.s32 %v2052, 1
    %vm2058 = vcmp.gt.s32.totalorder %v2057, 0
    %v2059 = vsel %vm2058, %v2057, 0
    %v2060 = vshrl.u32 %v2059, 5
    %v2061 = vand.u32 %v2059, 31
    %v2062 = vsub.s32 32, %v2061
    %v2063 = vshrl.u32 683565275, %v2062
    %v2064 = vshll.u32 683565275, %v2061
    %v2065 = vshrl.u32 2475754826, %v2062
    %v2066 = vor.u32 %v2064, %v2065
    %v2067 = vshll.u32 2475754826, %v2061
    %v2068 = vshrl.u32 2131351028, %v2062
    %v2069 = vor.u32 %v2067, %v2068
    %v2070 = vshll.u32 2131351028, %v2061
    %v2071 = vshrl.u32 2102212464, %v2062
    %v2072 = vor.u32 %v2070, %v2071
    %v2073 = vshll.u32 2102212464, %v2061
    %v2074 = vshrl.u32 920167782, %v2062
    %v2075 = vor.u32 %v2073, %v2074
    %v2076 = vshll.u32 920167782, %v2061
    %v2077 = vshrl.u32 1326507024, %v2062
    %v2078 = vor.u32 %v2076, %v2077
    %vm2079 = vcmp.lt.s32.totalorder %v2060, 1
    %vm2080 = vcmp.lt.s32.totalorder %v2060, 2
    %vm2081 = vcmp.lt.s32.totalorder %v2060, 3
    %vm2082 = vcmp.lt.s32.totalorder %v2060, 4
    %v2083 = vsel %vm2079, %v2063, %v2066
    %v2084 = vsel %vm2082, %v2072, 2102212464
    %v2085 = vsel %vm2081, %v2069, %v2084
    %v2086 = vsel %vm2080, %v2083, %v2085
    %v2087 = vsel %vm2079, %v2066, %v2069
    %v2088 = vsel %vm2082, %v2075, 920167782
    %v2089 = vsel %vm2081, %v2072, %v2088
    %v2090 = vsel %vm2080, %v2087, %v2089
    %v2091 = vsel %vm2079, %v2069, %v2072
    %v2092 = vsel %vm2082, %v2078, 1326507024
    %v2093 = vsel %vm2081, %v2075, %v2092
    %v2094 = vsel %vm2080, %v2091, %v2093
    %v2095 = vshll.u32 %v2055, 8
    %v2096 = vmul.u32.u64.compose %v2095, %v2094
    %v2097 = vextract.low.u32 %v2096
    %v2098 = vextract.high.u32 %v2096
    %v2099 = vmul.u32.u64.compose %v2095, %v2090
    %v2100 = vextract.low.u32 %v2099
    %v2101 = vextract.high.u32 %v2099
    %v2102 = vmul.u32 %v2095, %v2086
    %v2103 = vadd.s32 %v2098, %v2100
    %vm2104 = vc.u32 %v2098, %v2100
    %v2105 = vadd.s32 %v2101, 1
    %v2106 = vsel %vm2104, %v2105, %v2101
    %v2107 = vadd.s32 %v2102, %v2106
    %v2108 = vadd.s32 %v2107, 536870912
    %v2109 = vshrl.u32 %v2108, 30
    %v2110 = vshll.u32 %v2109, 30
    %v2111 = vsub.s32 %v2107, %v2110
    %vm2112 = vcmp.lt.s32.totalorder %v2111, 0
    %v2113 = vsub.s32 0, %v2111
    %v2114 = vsel %vm2112, %v2113, %v2111
    %v2115 = vclz %v2114
    %v2116 = vsub.s32 %v2115, 2
    %vm2117 = vcmp.gt.s32.totalorder 0, %v2116
    %v2118 = vsel %vm2117, 0, %v2116
    %v2119 = vsub.s32 32, %v2118
    %v2120 = vshll.u32 %v2111, %v2118
    %v2121 = vshrl.u32 %v2103, %v2119
    %v2122 = vor.u32 %v2120, %v2121
    %v2123 = vsub.s32 4294967266, %v2118
    %v2124 = vadd.s32 %v2123, 127
    %v2125 = vshll.u32 %v2124, 23
    %v2126 = vor.u32 4788187, %v2125
    %v2127 = vand.u32 2147483647, %v2126
    %v2129 = vcvt.s32.f32 %v2122
    %v2130 = vmul.f32 %v2129, %v2127
    %v2131 = vxor.u32 %v2130, 2147483648
    %v2132 = vsel %vm2049, %v2131, %v2130
    %v2133 = vsub.s32 4, %v2109
    %v2134 = vsel %vm2049, %v2133, %v2109
    %v2135 = vsel %vm2048, %v1301, %v2132
    %v2136 = vsel %vm2048, 0, %v2134
    %v2137 = vcosq.f32.pop %v2135
    %v2138 = vsinq.f32.pop %v2135
    %vm2139 = vweird.f32 %v1301
    %v2140 = vand.u32 %v2136, 3
    %vm2141 = vcmp.lt.s32.totalorder %v2140, 2
    %vm2142 = vcmp.eq.s32.totalorder %v2140, 0
    %v2143 = vxor.u32 %v2138, 2147483648
    %v2144 = vsel %vm2142, %v2137, %v2143
    %vm2145 = vcmp.eq.s32.totalorder %v2140, 2
    %v2146 = vxor.u32 %v2137, 2147483648
    %v2147 = vsel %vm2145, %v2146, %v2138
    %v2148 = vsel %vm2141, %v2144, %v2147
    %v2149 = vsel %vm2139, nan, %v2148
    %v2150 = vand.u32 2147483647, %v1302
    %vm2151 = vcmp.le.f32.partialorder %v2150, 0.7853982
    %vm2152 = vcmp.lt.s32.totalorder %v1302, 0
    %v2153 = vand.u32 %v1302, 2139095040
    %v2154 = vshrl.u32 %v2153, 23
    %v2155 = vsub.s32 %v2154, 127
    %v2156 = vand.u32 2147483647, %v1302
    %v2157 = vand.u32 %v2156, 8388607
    %v2158 = vor.u32 %v2157, 8388608
    %v2159 = vsub.s32 0, %v2158
    %v2160 = vadd.s32 %v2155, 1
    %vm2161 = vcmp.gt.s32.totalorder %v2160, 0
    %v2162 = vsel %vm2161, %v2160, 0
    %v2163 = vshrl.u32 %v2162, 5
    %v2164 = vand.u32 %v2162, 31
    %v2165 = vsub.s32 32, %v2164
    %v2166 = vshrl.u32 683565275, %v2165
    %v2167 = vshll.u32 683565275, %v2164
    %v2168 = vshrl.u32 2475754826, %v2165
    %v2169 = vor.u32 %v2167, %v2168
    %v2170 = vshll.u32 2475754826, %v2164
    %v2171 = vshrl.u32 2131351028, %v2165
    %v2172 = vor.u32 %v2170, %v2171
    %v2173 = vshll.u32 2131351028, %v2164
    %v2174 = vshrl.u32 2102212464, %v2165
    %v2175 = vor.u32 %v2173, %v2174
    %v2176 = vshll.u32 2102212464, %v2164
    %v2177 = vshrl.u32 920167782, %v2165
    %v2178 = vor.u32 %v2176, %v2177
    %v2179 = vshll.u32 920167782, %v2164
    %v2180 = vshrl.u32 1326507024, %v2165
    %v2181 = vor.u32 %v2179, %v2180
    %vm2182 = vcmp.lt.s32.totalorder %v2163, 1
    %vm2183 = vcmp.lt.s32.totalorder %v2163, 2
    %vm2184 = vcmp.lt.s32.totalorder %v2163, 3
    %vm2185 = vcmp.lt.s32.totalorder %v2163, 4
    %v2186 = vsel %vm2182, %v2166, %v2169
    %v2187 = vsel %vm2185, %v2175, 2102212464
    %v2188 = vsel %vm2184, %v2172, %v2187
    %v2189 = vsel %vm2183, %v2186, %v2188
    %v2190 = vsel %vm2182, %v2169, %v2172
    %v2191 = vsel %vm2185, %v2178, 920167782
    %v2192 = vsel %vm2184, %v2175, %v2191
    %v2193 = vsel %vm2183, %v2190, %v2192
    %v2194 = vsel %vm2182, %v2172, %v2175
    %v2195 = vsel %vm2185, %v2181, 1326507024
    %v2196 = vsel %vm2184, %v2178, %v2195
    %v2197 = vsel %vm2183, %v2194, %v2196
    %v2198 = vshll.u32 %v2158, 8
    %v2199 = vmul.u32.u64.compose %v2198, %v2197
    %v2200 = vextract.low.u32 %v2199
    %v2201 = vextract.high.u32 %v2199
    %v2202 = vmul.u32.u64.compose %v2198, %v2193
    %v2203 = vextract.low.u32 %v2202
    %v2204 = vextract.high.u32 %v2202
    %v2205 = vmul.u32 %v2198, %v2189
    %v2206 = vadd.s32 %v2201, %v2203
    %vm2207 = vc.u32 %v2201, %v2203
    %v2208 = vadd.s32 %v2204, 1
    %v2209 = vsel %vm2207, %v2208, %v2204
    %v2210 = vadd.s32 %v2205, %v2209
    %v2211 = vadd.s32 %v2210, 536870912
    %v2212 = vshrl.u32 %v2211, 30
    %v2213 = vshll.u32 %v2212, 30
    %v2214 = vsub.s32 %v2210, %v2213
    %vm2215 = vcmp.lt.s32.totalorder %v2214, 0
    %v2216 = vsub.s32 0, %v2214
    %v2217 = vsel %vm2215, %v2216, %v2214
    %v2218 = vclz %v2217
    %v2219 = vsub.s32 %v2218, 2
    %vm2220 = vcmp.gt.s32.totalorder 0, %v2219
    %v2221 = vsel %vm2220, 0, %v2219
    %v2222 = vsub.s32 32, %v2221
    %v2223 = vshll.u32 %v2214, %v2221
    %v2224 = vshrl.u32 %v2206, %v2222
    %v2225 = vor.u32 %v2223, %v2224
    %v2226 = vsub.s32 4294967266, %v2221
    %v2227 = vadd.s32 %v2226, 127
    %v2228 = vshll.u32 %v2227, 23
    %v2229 = vor.u32 4788187, %v2228
    %v2230 = vand.u32 2147483647, %v2229
    %v2232 = vcvt.s32.f32 %v2225
    %v2233 = vmul.f32 %v2232, %v2230
    %v2234 = vxor.u32 %v2233, 2147483648
    %v2235 = vsel %vm2152, %v2234, %v2233
    %v2236 = vsub.s32 4, %v2212
    %v2237 = vsel %vm2152, %v2236, %v2212
    %v2238 = vsel %vm2151, %v1302, %v2235
    %v2239 = vsel %vm2151, 0, %v2237
    %v2240 = vcosq.f32.pop %v2238
    %v2241 = vsinq.f32.pop %v2238
    %vm2242 = vweird.f32 %v1302
    %v2243 = vand.u32 %v2239, 3
    %vm2244 = vcmp.lt.s32.totalorder %v2243, 2
    %vm2245 = vcmp.eq.s32.totalorder %v2243, 0
    %v2246 = vxor.u32 %v2241, 2147483648
    %v2247 = vsel %vm2245, %v2240, %v2246
    %vm2248 = vcmp.eq.s32.totalorder %v2243, 2
    %v2249 = vxor.u32 %v2240, 2147483648
    %v2250 = vsel %vm2248, %v2249, %v2241
    %v2251 = vsel %vm2244, %v2247, %v2250
    %v2252 = vsel %vm2242, nan, %v2251
    %v2253 = vand.u32 2147483647, %v1303
    %vm2254 = vcmp.le.f32.partialorder %v2253, 0.7853982
    %vm2255 = vcmp.lt.s32.totalorder %v1303, 0
    %v2256 = vand.u32 %v1303, 2139095040
    %v2257 = vshrl.u32 %v2256, 23
    %v2258 = vsub.s32 %v2257, 127
    %v2259 = vand.u32 2147483647, %v1303
    %v2260 = vand.u32 %v2259, 8388607
    %v2261 = vor.u32 %v2260, 8388608
    %v2262 = vsub.s32 0, %v2261
    %v2263 = vadd.s32 %v2258, 1
    %vm2264 = vcmp.gt.s32.totalorder %v2263, 0
    %v2265 = vsel %vm2264, %v2263, 0
    %v2266 = vshrl.u32 %v2265, 5
    %v2267 = vand.u32 %v2265, 31
    %v2268 = vsub.s32 32, %v2267
    %v2269 = vshrl.u32 683565275, %v2268
    %v2270 = vshll.u32 683565275, %v2267
    %v2271 = vshrl.u32 2475754826, %v2268
    %v2272 = vor.u32 %v2270, %v2271
    %v2273 = vshll.u32 2475754826, %v2267
    %v2274 = vshrl.u32 2131351028, %v2268
    %v2275 = vor.u32 %v2273, %v2274
    %v2276 = vshll.u32 2131351028, %v2267
    %v2277 = vshrl.u32 2102212464, %v2268
    %v2278 = vor.u32 %v2276, %v2277
    %v2279 = vshll.u32 2102212464, %v2267
    %v2280 = vshrl.u32 920167782, %v2268
    %v2281 = vor.u32 %v2279, %v2280
    %v2282 = vshll.u32 920167782, %v2267
    %v2283 = vshrl.u32 1326507024, %v2268
    %v2284 = vor.u32 %v2282, %v2283
    %vm2285 = vcmp.lt.s32.totalorder %v2266, 1
    %vm2286 = vcmp.lt.s32.totalorder %v2266, 2
    %vm2287 = vcmp.lt.s32.totalorder %v2266, 3
    %vm2288 = vcmp.lt.s32.totalorder %v2266, 4
    %v2289 = vsel %vm2285, %v2269, %v2272
    %v2290 = vsel %vm2288, %v2278, 2102212464
    %v2291 = vsel %vm2287, %v2275, %v2290
    %v2292 = vsel %vm2286, %v2289, %v2291
    %v2293 = vsel %vm2285, %v2272, %v2275
    %v2294 = vsel %vm2288, %v2281, 920167782
    %v2295 = vsel %vm2287, %v2278, %v2294
    %v2296 = vsel %vm2286, %v2293, %v2295
    %v2297 = vsel %vm2285, %v2275, %v2278
    %v2298 = vsel %vm2288, %v2284, 1326507024
    %v2299 = vsel %vm2287, %v2281, %v2298
    %v2300 = vsel %vm2286, %v2297, %v2299
    %v2301 = vshll.u32 %v2261, 8
    %v2302 = vmul.u32.u64.compose %v2301, %v2300
    %v2303 = vextract.low.u32 %v2302
    %v2304 = vextract.high.u32 %v2302
    %v2305 = vmul.u32.u64.compose %v2301, %v2296
    %v2306 = vextract.low.u32 %v2305
    %v2307 = vextract.high.u32 %v2305
    %v2308 = vmul.u32 %v2301, %v2292
    %v2309 = vadd.s32 %v2304, %v2306
    %vm2310 = vc.u32 %v2304, %v2306
    %v2311 = vadd.s32 %v2307, 1
    %v2312 = vsel %vm2310, %v2311, %v2307
    %v2313 = vadd.s32 %v2308, %v2312
    %v2314 = vadd.s32 %v2313, 536870912
    %v2315 = vshrl.u32 %v2314, 30
    %v2316 = vshll.u32 %v2315, 30
    %v2317 = vsub.s32 %v2313, %v2316
    %vm2318 = vcmp.lt.s32.totalorder %v2317, 0
    %v2319 = vsub.s32 0, %v2317
    %v2320 = vsel %vm2318, %v2319, %v2317
    %v2321 = vclz %v2320
    %v2322 = vsub.s32 %v2321, 2
    %vm2323 = vcmp.gt.s32.totalorder 0, %v2322
    %v2324 = vsel %vm2323, 0, %v2322
    %v2325 = vsub.s32 32, %v2324
    %v2326 = vshll.u32 %v2317, %v2324
    %v2327 = vshrl.u32 %v2309, %v2325
    %v2328 = vor.u32 %v2326, %v2327
    %v2329 = vsub.s32 4294967266, %v2324
    %v2330 = vadd.s32 %v2329, 127
    %v2331 = vshll.u32 %v2330, 23
    %v2332 = vor.u32 4788187, %v2331
    %v2333 = vand.u32 2147483647, %v2332
    %v2335 = vcvt.s32.f32 %v2328
    %v2336 = vmul.f32 %v2335, %v2333
    %v2337 = vxor.u32 %v2336, 2147483648
    %v2338 = vsel %vm2255, %v2337, %v2336
    %v2339 = vsub.s32 4, %v2315
    %v2340 = vsel %vm2255, %v2339, %v2315
    %v2341 = vsel %vm2254, %v1303, %v2338
    %v2342 = vsel %vm2254, 0, %v2340
    %v2343 = vcosq.f32.pop %v2341
    %v2344 = vsinq.f32.pop %v2341
    %vm2345 = vweird.f32 %v1303
    %v2346 = vand.u32 %v2342, 3
    %vm2347 = vcmp.lt.s32.totalorder %v2346, 2
    %vm2348 = vcmp.eq.s32.totalorder %v2346, 0
    %v2349 = vxor.u32 %v2344, 2147483648
    %v2350 = vsel %vm2348, %v2343, %v2349
    %vm2351 = vcmp.eq.s32.totalorder %v2346, 2
    %v2352 = vxor.u32 %v2343, 2147483648
    %v2353 = vsel %vm2351, %v2352, %v2344
    %v2354 = vsel %vm2347, %v2350, %v2353
    %v2355 = vsel %vm2345, nan, %v2354
    %v2356 = vand.u32 2147483647, %v1304
    %vm2357 = vcmp.le.f32.partialorder %v2356, 0.7853982
    %vm2358 = vcmp.lt.s32.totalorder %v1304, 0
    %v2359 = vand.u32 %v1304, 2139095040
    %v2360 = vshrl.u32 %v2359, 23
    %v2361 = vsub.s32 %v2360, 127
    %v2362 = vand.u32 2147483647, %v1304
    %v2363 = vand.u32 %v2362, 8388607
    %v2364 = vor.u32 %v2363, 8388608
    %v2365 = vsub.s32 0, %v2364
    %v2366 = vadd.s32 %v2361, 1
    %vm2367 = vcmp.gt.s32.totalorder %v2366, 0
    %v2368 = vsel %vm2367, %v2366, 0
    %v2369 = vshrl.u32 %v2368, 5
    %v2370 = vand.u32 %v2368, 31
    %v2371 = vsub.s32 32, %v2370
    %v2372 = vshrl.u32 683565275, %v2371
    %v2373 = vshll.u32 683565275, %v2370
    %v2374 = vshrl.u32 2475754826, %v2371
    %v2375 = vor.u32 %v2373, %v2374
    %v2376 = vshll.u32 2475754826, %v2370
    %v2377 = vshrl.u32 2131351028, %v2371
    %v2378 = vor.u32 %v2376, %v2377
    %v2379 = vshll.u32 2131351028, %v2370
    %v2380 = vshrl.u32 2102212464, %v2371
    %v2381 = vor.u32 %v2379, %v2380
    %v2382 = vshll.u32 2102212464, %v2370
    %v2383 = vshrl.u32 920167782, %v2371
    %v2384 = vor.u32 %v2382, %v2383
    %v2385 = vshll.u32 920167782, %v2370
    %v2386 = vshrl.u32 1326507024, %v2371
    %v2387 = vor.u32 %v2385, %v2386
    %vm2388 = vcmp.lt.s32.totalorder %v2369, 1
    %vm2389 = vcmp.lt.s32.totalorder %v2369, 2
    %vm2390 = vcmp.lt.s32.totalorder %v2369, 3
    %vm2391 = vcmp.lt.s32.totalorder %v2369, 4
    %v2392 = vsel %vm2388, %v2372, %v2375
    %v2393 = vsel %vm2391, %v2381, 2102212464
    %v2394 = vsel %vm2390, %v2378, %v2393
    %v2395 = vsel %vm2389, %v2392, %v2394
    %v2396 = vsel %vm2388, %v2375, %v2378
    %v2397 = vsel %vm2391, %v2384, 920167782
    %v2398 = vsel %vm2390, %v2381, %v2397
    %v2399 = vsel %vm2389, %v2396, %v2398
    %v2400 = vsel %vm2388, %v2378, %v2381
    %v2401 = vsel %vm2391, %v2387, 1326507024
    %v2402 = vsel %vm2390, %v2384, %v2401
    %v2403 = vsel %vm2389, %v2400, %v2402
    %v2404 = vshll.u32 %v2364, 8
    %v2405 = vmul.u32.u64.compose %v2404, %v2403
    %v2406 = vextract.low.u32 %v2405
    %v2407 = vextract.high.u32 %v2405
    %v2408 = vmul.u32.u64.compose %v2404, %v2399
    %v2409 = vextract.low.u32 %v2408
    %v2410 = vextract.high.u32 %v2408
    %v2411 = vmul.u32 %v2404, %v2395
    %v2412 = vadd.s32 %v2407, %v2409
    %vm2413 = vc.u32 %v2407, %v2409
    %v2414 = vadd.s32 %v2410, 1
    %v2415 = vsel %vm2413, %v2414, %v2410
    %v2416 = vadd.s32 %v2411, %v2415
    %v2417 = vadd.s32 %v2416, 536870912
    %v2418 = vshrl.u32 %v2417, 30
    %v2419 = vshll.u32 %v2418, 30
    %v2420 = vsub.s32 %v2416, %v2419
    %vm2421 = vcmp.lt.s32.totalorder %v2420, 0
    %v2422 = vsub.s32 0, %v2420
    %v2423 = vsel %vm2421, %v2422, %v2420
    %v2424 = vclz %v2423
    %v2425 = vsub.s32 %v2424, 2
    %vm2426 = vcmp.gt.s32.totalorder 0, %v2425
    %v2427 = vsel %vm2426, 0, %v2425
    %v2428 = vsub.s32 32, %v2427
    %v2429 = vshll.u32 %v2420, %v2427
    %v2430 = vshrl.u32 %v2412, %v2428
    %v2431 = vor.u32 %v2429, %v2430
    %v2432 = vsub.s32 4294967266, %v2427
    %v2433 = vadd.s32 %v2432, 127
    %v2434 = vshll.u32 %v2433, 23
    %v2435 = vor.u32 4788187, %v2434
    %v2436 = vand.u32 2147483647, %v2435
    %v2438 = vcvt.s32.f32 %v2431
    %v2439 = vmul.f32 %v2438, %v2436
    %v2440 = vxor.u32 %v2439, 2147483648
    %v2441 = vsel %vm2358, %v2440, %v2439
    %v2442 = vsub.s32 4, %v2418
    %v2443 = vsel %vm2358, %v2442, %v2418
    %v2444 = vsel %vm2357, %v1304, %v2441
    %v2445 = vsel %vm2357, 0, %v2443
    %v2446 = vcosq.f32.pop %v2444
    %v2447 = vsinq.f32.pop %v2444
    %vm2448 = vweird.f32 %v1304
    %v2449 = vand.u32 %v2445, 3
    %vm2450 = vcmp.lt.s32.totalorder %v2449, 2
    %vm2451 = vcmp.eq.s32.totalorder %v2449, 0
    %v2452 = vxor.u32 %v2447, 2147483648
    %v2453 = vsel %vm2451, %v2446, %v2452
    %vm2454 = vcmp.eq.s32.totalorder %v2449, 2
    %v2455 = vxor.u32 %v2446, 2147483648
    %v2456 = vsel %vm2454, %v2455, %v2447
    %v2457 = vsel %vm2450, %v2453, %v2456
    %v2458 = vsel %vm2448, nan, %v2457
    %v2459 = vand.u32 2147483647, %v1305
    %vm2460 = vcmp.le.f32.partialorder %v2459, 0.7853982
    %vm2461 = vcmp.lt.s32.totalorder %v1305, 0
    %v2462 = vand.u32 %v1305, 2139095040
    %v2463 = vshrl.u32 %v2462, 23
    %v2464 = vsub.s32 %v2463, 127
    %v2465 = vand.u32 2147483647, %v1305
    %v2466 = vand.u32 %v2465, 8388607
    %v2467 = vor.u32 %v2466, 8388608
    %v2468 = vsub.s32 0, %v2467
    %v2469 = vadd.s32 %v2464, 1
    %vm2470 = vcmp.gt.s32.totalorder %v2469, 0
    %v2471 = vsel %vm2470, %v2469, 0
    %v2472 = vshrl.u32 %v2471, 5
    %v2473 = vand.u32 %v2471, 31
    %v2474 = vsub.s32 32, %v2473
    %v2475 = vshrl.u32 683565275, %v2474
    %v2476 = vshll.u32 683565275, %v2473
    %v2477 = vshrl.u32 2475754826, %v2474
    %v2478 = vor.u32 %v2476, %v2477
    %v2479 = vshll.u32 2475754826, %v2473
    %v2480 = vshrl.u32 2131351028, %v2474
    %v2481 = vor.u32 %v2479, %v2480
    %v2482 = vshll.u32 2131351028, %v2473
    %v2483 = vshrl.u32 2102212464, %v2474
    %v2484 = vor.u32 %v2482, %v2483
    %v2485 = vshll.u32 2102212464, %v2473
    %v2486 = vshrl.u32 920167782, %v2474
    %v2487 = vor.u32 %v2485, %v2486
    %v2488 = vshll.u32 920167782, %v2473
    %v2489 = vshrl.u32 1326507024, %v2474
    %v2490 = vor.u32 %v2488, %v2489
    %vm2491 = vcmp.lt.s32.totalorder %v2472, 1
    %vm2492 = vcmp.lt.s32.totalorder %v2472, 2
    %vm2493 = vcmp.lt.s32.totalorder %v2472, 3
    %vm2494 = vcmp.lt.s32.totalorder %v2472, 4
    %v2495 = vsel %vm2491, %v2475, %v2478
    %v2496 = vsel %vm2494, %v2484, 2102212464
    %v2497 = vsel %vm2493, %v2481, %v2496
    %v2498 = vsel %vm2492, %v2495, %v2497
    %v2499 = vsel %vm2491, %v2478, %v2481
    %v2500 = vsel %vm2494, %v2487, 920167782
    %v2501 = vsel %vm2493, %v2484, %v2500
    %v2502 = vsel %vm2492, %v2499, %v2501
    %v2503 = vsel %vm2491, %v2481, %v2484
    %v2504 = vsel %vm2494, %v2490, 1326507024
    %v2505 = vsel %vm2493, %v2487, %v2504
    %v2506 = vsel %vm2492, %v2503, %v2505
    %v2507 = vshll.u32 %v2467, 8
    %v2508 = vmul.u32.u64.compose %v2507, %v2506
    %v2509 = vextract.low.u32 %v2508
    %v2510 = vextract.high.u32 %v2508
    %v2511 = vmul.u32.u64.compose %v2507, %v2502
    %v2512 = vextract.low.u32 %v2511
    %v2513 = vextract.high.u32 %v2511
    %v2514 = vmul.u32 %v2507, %v2498
    %v2515 = vadd.s32 %v2510, %v2512
    %vm2516 = vc.u32 %v2510, %v2512
    %v2517 = vadd.s32 %v2513, 1
    %v2518 = vsel %vm2516, %v2517, %v2513
    %v2519 = vadd.s32 %v2514, %v2518
    %v2520 = vadd.s32 %v2519, 536870912
    %v2521 = vshrl.u32 %v2520, 30
    %v2522 = vshll.u32 %v2521, 30
    %v2523 = vsub.s32 %v2519, %v2522
    %vm2524 = vcmp.lt.s32.totalorder %v2523, 0
    %v2525 = vsub.s32 0, %v2523
    %v2526 = vsel %vm2524, %v2525, %v2523
    %v2527 = vclz %v2526
    %v2528 = vsub.s32 %v2527, 2
    %vm2529 = vcmp.gt.s32.totalorder 0, %v2528
    %v2530 = vsel %vm2529, 0, %v2528
    %v2531 = vsub.s32 32, %v2530
    %v2532 = vshll.u32 %v2523, %v2530
    %v2533 = vshrl.u32 %v2515, %v2531
    %v2534 = vor.u32 %v2532, %v2533
    %v2535 = vsub.s32 4294967266, %v2530
    %v2536 = vadd.s32 %v2535, 127
    %v2537 = vshll.u32 %v2536, 23
    %v2538 = vor.u32 4788187, %v2537
    %v2539 = vand.u32 2147483647, %v2538
    %v2541 = vcvt.s32.f32 %v2534
    %v2542 = vmul.f32 %v2541, %v2539
    %v2543 = vxor.u32 %v2542, 2147483648
    %v2544 = vsel %vm2461, %v2543, %v2542
    %v2545 = vsub.s32 4, %v2521
    %v2546 = vsel %vm2461, %v2545, %v2521
    %v2547 = vsel %vm2460, %v1305, %v2544
    %v2548 = vsel %vm2460, 0, %v2546
    %v2549 = vcosq.f32.pop %v2547
    %v2550 = vsinq.f32.pop %v2547
    %vm2551 = vweird.f32 %v1305
    %v2552 = vand.u32 %v2548, 3
    %vm2553 = vcmp.lt.s32.totalorder %v2552, 2
    %vm2554 = vcmp.eq.s32.totalorder %v2552, 0
    %v2555 = vxor.u32 %v2550, 2147483648
    %v2556 = vsel %vm2554, %v2549, %v2555
    %vm2557 = vcmp.eq.s32.totalorder %v2552, 2
    %v2558 = vxor.u32 %v2549, 2147483648
    %v2559 = vsel %vm2557, %v2558, %v2550
    %v2560 = vsel %vm2553, %v2556, %v2559
    %v2561 = vsel %vm2551, nan, %v2560
    %v2562 = vand.u32 2147483647, %v1306
    %vm2563 = vcmp.le.f32.partialorder %v2562, 0.7853982
    %vm2564 = vcmp.lt.s32.totalorder %v1306, 0
    %v2565 = vand.u32 %v1306, 2139095040
    %v2566 = vshrl.u32 %v2565, 23
    %v2567 = vsub.s32 %v2566, 127
    %v2568 = vand.u32 2147483647, %v1306
    %v2569 = vand.u32 %v2568, 8388607
    %v2570 = vor.u32 %v2569, 8388608
    %v2571 = vsub.s32 0, %v2570
    %v2572 = vadd.s32 %v2567, 1
    %vm2573 = vcmp.gt.s32.totalorder %v2572, 0
    %v2574 = vsel %vm2573, %v2572, 0
    %v2575 = vshrl.u32 %v2574, 5
    %v2576 = vand.u32 %v2574, 31
    %v2577 = vsub.s32 32, %v2576
    %v2578 = vshrl.u32 683565275, %v2577
    %v2579 = vshll.u32 683565275, %v2576
    %v2580 = vshrl.u32 2475754826, %v2577
    %v2581 = vor.u32 %v2579, %v2580
    %v2582 = vshll.u32 2475754826, %v2576
    %v2583 = vshrl.u32 2131351028, %v2577
    %v2584 = vor.u32 %v2582, %v2583
    %v2585 = vshll.u32 2131351028, %v2576
    %v2586 = vshrl.u32 2102212464, %v2577
    %v2587 = vor.u32 %v2585, %v2586
    %v2588 = vshll.u32 2102212464, %v2576
    %v2589 = vshrl.u32 920167782, %v2577
    %v2590 = vor.u32 %v2588, %v2589
    %v2591 = vshll.u32 920167782, %v2576
    %v2592 = vshrl.u32 1326507024, %v2577
    %v2593 = vor.u32 %v2591, %v2592
    %vm2594 = vcmp.lt.s32.totalorder %v2575, 1
    %vm2595 = vcmp.lt.s32.totalorder %v2575, 2
    %vm2596 = vcmp.lt.s32.totalorder %v2575, 3
    %vm2597 = vcmp.lt.s32.totalorder %v2575, 4
    %v2598 = vsel %vm2594, %v2578, %v2581
    %v2599 = vsel %vm2597, %v2587, 2102212464
    %v2600 = vsel %vm2596, %v2584, %v2599
    %v2601 = vsel %vm2595, %v2598, %v2600
    %v2602 = vsel %vm2594, %v2581, %v2584
    %v2603 = vsel %vm2597, %v2590, 920167782
    %v2604 = vsel %vm2596, %v2587, %v2603
    %v2605 = vsel %vm2595, %v2602, %v2604
    %v2606 = vsel %vm2594, %v2584, %v2587
    %v2607 = vsel %vm2597, %v2593, 1326507024
    %v2608 = vsel %vm2596, %v2590, %v2607
    %v2609 = vsel %vm2595, %v2606, %v2608
    %v2610 = vshll.u32 %v2570, 8
    %v2611 = vmul.u32.u64.compose %v2610, %v2609
    %v2612 = vextract.low.u32 %v2611
    %v2613 = vextract.high.u32 %v2611
    %v2614 = vmul.u32.u64.compose %v2610, %v2605
    %v2615 = vextract.low.u32 %v2614
    %v2616 = vextract.high.u32 %v2614
    %v2617 = vmul.u32 %v2610, %v2601
    %v2618 = vadd.s32 %v2613, %v2615
    %vm2619 = vc.u32 %v2613, %v2615
    %v2620 = vadd.s32 %v2616, 1
    %v2621 = vsel %vm2619, %v2620, %v2616
    %v2622 = vadd.s32 %v2617, %v2621
    %v2623 = vadd.s32 %v2622, 536870912
    %v2624 = vshrl.u32 %v2623, 30
    %v2625 = vshll.u32 %v2624, 30
    %v2626 = vsub.s32 %v2622, %v2625
    %vm2627 = vcmp.lt.s32.totalorder %v2626, 0
    %v2628 = vsub.s32 0, %v2626
    %v2629 = vsel %vm2627, %v2628, %v2626
    %v2630 = vclz %v2629
    %v2631 = vsub.s32 %v2630, 2
    %vm2632 = vcmp.gt.s32.totalorder 0, %v2631
    %v2633 = vsel %vm2632, 0, %v2631
    %v2634 = vsub.s32 32, %v2633
    %v2635 = vshll.u32 %v2626, %v2633
    %v2636 = vshrl.u32 %v2618, %v2634
    %v2637 = vor.u32 %v2635, %v2636
    %v2638 = vsub.s32 4294967266, %v2633
    %v2639 = vadd.s32 %v2638, 127
    %v2640 = vshll.u32 %v2639, 23
    %v2641 = vor.u32 4788187, %v2640
    %v2642 = vand.u32 2147483647, %v2641
    %v2644 = vcvt.s32.f32 %v2637
    %v2645 = vmul.f32 %v2644, %v2642
    %v2646 = vxor.u32 %v2645, 2147483648
    %v2647 = vsel %vm2564, %v2646, %v2645
    %v2648 = vsub.s32 4, %v2624
    %v2649 = vsel %vm2564, %v2648, %v2624
    %v2650 = vsel %vm2563, %v1306, %v2647
    %v2651 = vsel %vm2563, 0, %v2649
    %v2652 = vcosq.f32.pop %v2650
    %v2653 = vsinq.f32.pop %v2650
    %vm2654 = vweird.f32 %v1306
    %v2655 = vand.u32 %v2651, 3
    %vm2656 = vcmp.lt.s32.totalorder %v2655, 2
    %vm2657 = vcmp.eq.s32.totalorder %v2655, 0
    %v2658 = vxor.u32 %v2653, 2147483648
    %v2659 = vsel %vm2657, %v2652, %v2658
    %vm2660 = vcmp.eq.s32.totalorder %v2655, 2
    %v2661 = vxor.u32 %v2652, 2147483648
    %v2662 = vsel %vm2660, %v2661, %v2653
    %v2663 = vsel %vm2656, %v2659, %v2662
    %v2664 = vsel %vm2654, nan, %v2663
    %v2665 = vand.u32 2147483647, %v1307
    %vm2666 = vcmp.le.f32.partialorder %v2665, 0.7853982
    %vm2667 = vcmp.lt.s32.totalorder %v1307, 0
    %v2668 = vand.u32 %v1307, 2139095040
    %v2669 = vshrl.u32 %v2668, 23
    %v2670 = vsub.s32 %v2669, 127
    %v2671 = vand.u32 2147483647, %v1307
    %v2672 = vand.u32 %v2671, 8388607
    %v2673 = vor.u32 %v2672, 8388608
    %v2674 = vsub.s32 0, %v2673
    %v2675 = vadd.s32 %v2670, 1
    %vm2676 = vcmp.gt.s32.totalorder %v2675, 0
    %v2677 = vsel %vm2676, %v2675, 0
    %v2678 = vshrl.u32 %v2677, 5
    %v2679 = vand.u32 %v2677, 31
    %v2680 = vsub.s32 32, %v2679
    %v2681 = vshrl.u32 683565275, %v2680
    %v2682 = vshll.u32 683565275, %v2679
    %v2683 = vshrl.u32 2475754826, %v2680
    %v2684 = vor.u32 %v2682, %v2683
    %v2685 = vshll.u32 2475754826, %v2679
    %v2686 = vshrl.u32 2131351028, %v2680
    %v2687 = vor.u32 %v2685, %v2686
    %v2688 = vshll.u32 2131351028, %v2679
    %v2689 = vshrl.u32 2102212464, %v2680
    %v2690 = vor.u32 %v2688, %v2689
    %v2691 = vshll.u32 2102212464, %v2679
    %v2692 = vshrl.u32 920167782, %v2680
    %v2693 = vor.u32 %v2691, %v2692
    %v2694 = vshll.u32 920167782, %v2679
    %v2695 = vshrl.u32 1326507024, %v2680
    %v2696 = vor.u32 %v2694, %v2695
    %vm2697 = vcmp.lt.s32.totalorder %v2678, 1
    %vm2698 = vcmp.lt.s32.totalorder %v2678, 2
    %vm2699 = vcmp.lt.s32.totalorder %v2678, 3
    %vm2700 = vcmp.lt.s32.totalorder %v2678, 4
    %v2701 = vsel %vm2697, %v2681, %v2684
    %v2702 = vsel %vm2700, %v2690, 2102212464
    %v2703 = vsel %vm2699, %v2687, %v2702
    %v2704 = vsel %vm2698, %v2701, %v2703
    %v2705 = vsel %vm2697, %v2684, %v2687
    %v2706 = vsel %vm2700, %v2693, 920167782
    %v2707 = vsel %vm2699, %v2690, %v2706
    %v2708 = vsel %vm2698, %v2705, %v2707
    %v2709 = vsel %vm2697, %v2687, %v2690
    %v2710 = vsel %vm2700, %v2696, 1326507024
    %v2711 = vsel %vm2699, %v2693, %v2710
    %v2712 = vsel %vm2698, %v2709, %v2711
    %v2713 = vshll.u32 %v2673, 8
    %v2714 = vmul.u32.u64.compose %v2713, %v2712
    %v2715 = vextract.low.u32 %v2714
    %v2716 = vextract.high.u32 %v2714
    %v2717 = vmul.u32.u64.compose %v2713, %v2708
    %v2718 = vextract.low.u32 %v2717
    %v2719 = vextract.high.u32 %v2717
    %v2720 = vmul.u32 %v2713, %v2704
    %v2721 = vadd.s32 %v2716, %v2718
    %vm2722 = vc.u32 %v2716, %v2718
    %v2723 = vadd.s32 %v2719, 1
    %v2724 = vsel %vm2722, %v2723, %v2719
    %v2725 = vadd.s32 %v2720, %v2724
    %v2726 = vadd.s32 %v2725, 536870912
    %v2727 = vshrl.u32 %v2726, 30
    %v2728 = vshll.u32 %v2727, 30
    %v2729 = vsub.s32 %v2725, %v2728
    %vm2730 = vcmp.lt.s32.totalorder %v2729, 0
    %v2731 = vsub.s32 0, %v2729
    %v2732 = vsel %vm2730, %v2731, %v2729
    %v2733 = vclz %v2732
    %v2734 = vsub.s32 %v2733, 2
    %vm2735 = vcmp.gt.s32.totalorder 0, %v2734
    %v2736 = vsel %vm2735, 0, %v2734
    %v2737 = vsub.s32 32, %v2736
    %v2738 = vshll.u32 %v2729, %v2736
    %v2739 = vshrl.u32 %v2721, %v2737
    %v2740 = vor.u32 %v2738, %v2739
    %v2741 = vsub.s32 4294967266, %v2736
    %v2742 = vadd.s32 %v2741, 127
    %v2743 = vshll.u32 %v2742, 23
    %v2744 = vor.u32 4788187, %v2743
    %v2745 = vand.u32 2147483647, %v2744
    %v2747 = vcvt.s32.f32 %v2740
    %v2748 = vmul.f32 %v2747, %v2745
    %v2749 = vxor.u32 %v2748, 2147483648
    %v2750 = vsel %vm2667, %v2749, %v2748
    %v2751 = vsub.s32 4, %v2727
    %v2752 = vsel %vm2667, %v2751, %v2727
    %v2753 = vsel %vm2666, %v1307, %v2750
    %v2754 = vsel %vm2666, 0, %v2752
    %v2755 = vcosq.f32.pop %v2753
    %v2756 = vsinq.f32.pop %v2753
    %vm2757 = vweird.f32 %v1307
    %v2758 = vand.u32 %v2754, 3
    %vm2759 = vcmp.lt.s32.totalorder %v2758, 2
    %vm2760 = vcmp.eq.s32.totalorder %v2758, 0
    %v2761 = vxor.u32 %v2756, 2147483648
    %v2762 = vsel %vm2760, %v2755, %v2761
    %vm2763 = vcmp.eq.s32.totalorder %v2758, 2
    %v2764 = vxor.u32 %v2755, 2147483648
    %v2765 = vsel %vm2763, %v2764, %v2756
    %v2766 = vsel %vm2759, %v2762, %v2765
    %v2767 = vsel %vm2757, nan, %v2766
    %v2768 = vand.u32 2147483647, %v1308
    %vm2769 = vcmp.le.f32.partialorder %v2768, 0.7853982
    %vm2770 = vcmp.lt.s32.totalorder %v1308, 0
    %v2771 = vand.u32 %v1308, 2139095040
    %v2772 = vshrl.u32 %v2771, 23
    %v2773 = vsub.s32 %v2772, 127
    %v2774 = vand.u32 2147483647, %v1308
    %v2775 = vand.u32 %v2774, 8388607
    %v2776 = vor.u32 %v2775, 8388608
    %v2777 = vsub.s32 0, %v2776
    %v2778 = vadd.s32 %v2773, 1
    %vm2779 = vcmp.gt.s32.totalorder %v2778, 0
    %v2780 = vsel %vm2779, %v2778, 0
    %v2781 = vshrl.u32 %v2780, 5
    %v2782 = vand.u32 %v2780, 31
    %v2783 = vsub.s32 32, %v2782
    %v2784 = vshrl.u32 683565275, %v2783
    %v2785 = vshll.u32 683565275, %v2782
    %v2786 = vshrl.u32 2475754826, %v2783
    %v2787 = vor.u32 %v2785, %v2786
    %v2788 = vshll.u32 2475754826, %v2782
    %v2789 = vshrl.u32 2131351028, %v2783
    %v2790 = vor.u32 %v2788, %v2789
    %v2791 = vshll.u32 2131351028, %v2782
    %v2792 = vshrl.u32 2102212464, %v2783
    %v2793 = vor.u32 %v2791, %v2792
    %v2794 = vshll.u32 2102212464, %v2782
    %v2795 = vshrl.u32 920167782, %v2783
    %v2796 = vor.u32 %v2794, %v2795
    %v2797 = vshll.u32 920167782, %v2782
    %v2798 = vshrl.u32 1326507024, %v2783
    %v2799 = vor.u32 %v2797, %v2798
    %vm2800 = vcmp.lt.s32.totalorder %v2781, 1
    %vm2801 = vcmp.lt.s32.totalorder %v2781, 2
    %vm2802 = vcmp.lt.s32.totalorder %v2781, 3
    %vm2803 = vcmp.lt.s32.totalorder %v2781, 4
    %v2804 = vsel %vm2800, %v2784, %v2787
    %v2805 = vsel %vm2803, %v2793, 2102212464
    %v2806 = vsel %vm2802, %v2790, %v2805
    %v2807 = vsel %vm2801, %v2804, %v2806
    %v2808 = vsel %vm2800, %v2787, %v2790
    %v2809 = vsel %vm2803, %v2796, 920167782
    %v2810 = vsel %vm2802, %v2793, %v2809
    %v2811 = vsel %vm2801, %v2808, %v2810
    %v2812 = vsel %vm2800, %v2790, %v2793
    %v2813 = vsel %vm2803, %v2799, 1326507024
    %v2814 = vsel %vm2802, %v2796, %v2813
    %v2815 = vsel %vm2801, %v2812, %v2814
    %v2816 = vshll.u32 %v2776, 8
    %v2817 = vmul.u32.u64.compose %v2816, %v2815
    %v2818 = vextract.low.u32 %v2817
    %v2819 = vextract.high.u32 %v2817
    %v2820 = vmul.u32.u64.compose %v2816, %v2811
    %v2821 = vextract.low.u32 %v2820
    %v2822 = vextract.high.u32 %v2820
    %v2823 = vmul.u32 %v2816, %v2807
    %v2824 = vadd.s32 %v2819, %v2821
    %vm2825 = vc.u32 %v2819, %v2821
    %v2826 = vadd.s32 %v2822, 1
    %v2827 = vsel %vm2825, %v2826, %v2822
    %v2828 = vadd.s32 %v2823, %v2827
    %v2829 = vadd.s32 %v2828, 536870912
    %v2830 = vshrl.u32 %v2829, 30
    %v2831 = vshll.u32 %v2830, 30
    %v2832 = vsub.s32 %v2828, %v2831
    %vm2833 = vcmp.lt.s32.totalorder %v2832, 0
    %v2834 = vsub.s32 0, %v2832
    %v2835 = vsel %vm2833, %v2834, %v2832
    %v2836 = vclz %v2835
    %v2837 = vsub.s32 %v2836, 2
    %vm2838 = vcmp.gt.s32.totalorder 0, %v2837
    %v2839 = vsel %vm2838, 0, %v2837
    %v2840 = vsub.s32 32, %v2839
    %v2841 = vshll.u32 %v2832, %v2839
    %v2842 = vshrl.u32 %v2824, %v2840
    %v2843 = vor.u32 %v2841, %v2842
    %v2844 = vsub.s32 4294967266, %v2839
    %v2845 = vadd.s32 %v2844, 127
    %v2846 = vshll.u32 %v2845, 23
    %v2847 = vor.u32 4788187, %v2846
    %v2848 = vand.u32 2147483647, %v2847
    %v2850 = vcvt.s32.f32 %v2843
    %v2851 = vmul.f32 %v2850, %v2848
    %v2852 = vxor.u32 %v2851, 2147483648
    %v2853 = vsel %vm2770, %v2852, %v2851
    %v2854 = vsub.s32 4, %v2830
    %v2855 = vsel %vm2770, %v2854, %v2830
    %v2856 = vsel %vm2769, %v1308, %v2853
    %v2857 = vsel %vm2769, 0, %v2855
    %v2858 = vcosq.f32.pop %v2856
    %v2859 = vsinq.f32.pop %v2856
    %vm2860 = vweird.f32 %v1308
    %v2861 = vand.u32 %v2857, 3
    %vm2862 = vcmp.lt.s32.totalorder %v2861, 2
    %vm2863 = vcmp.eq.s32.totalorder %v2861, 0
    %v2864 = vxor.u32 %v2859, 2147483648
    %v2865 = vsel %vm2863, %v2858, %v2864
    %vm2866 = vcmp.eq.s32.totalorder %v2861, 2
    %v2867 = vxor.u32 %v2858, 2147483648
    %v2868 = vsel %vm2866, %v2867, %v2859
    %v2869 = vsel %vm2862, %v2865, %v2868
    %v2870 = vsel %vm2860, nan, %v2869
    %v2871 = vand.u32 2147483647, %v1309
    %vm2872 = vcmp.le.f32.partialorder %v2871, 0.7853982
    %vm2873 = vcmp.lt.s32.totalorder %v1309, 0
    %v2874 = vand.u32 %v1309, 2139095040
    %v2875 = vshrl.u32 %v2874, 23
    %v2876 = vsub.s32 %v2875, 127
    %v2877 = vand.u32 2147483647, %v1309
    %v2878 = vand.u32 %v2877, 8388607
    %v2879 = vor.u32 %v2878, 8388608
    %v2880 = vsub.s32 0, %v2879
    %v2881 = vadd.s32 %v2876, 1
    %vm2882 = vcmp.gt.s32.totalorder %v2881, 0
    %v2883 = vsel %vm2882, %v2881, 0
    %v2884 = vshrl.u32 %v2883, 5
    %v2885 = vand.u32 %v2883, 31
    %v2886 = vsub.s32 32, %v2885
    %v2887 = vshrl.u32 683565275, %v2886
    %v2888 = vshll.u32 683565275, %v2885
    %v2889 = vshrl.u32 2475754826, %v2886
    %v2890 = vor.u32 %v2888, %v2889
    %v2891 = vshll.u32 2475754826, %v2885
    %v2892 = vshrl.u32 2131351028, %v2886
    %v2893 = vor.u32 %v2891, %v2892
    %v2894 = vshll.u32 2131351028, %v2885
    %v2895 = vshrl.u32 2102212464, %v2886
    %v2896 = vor.u32 %v2894, %v2895
    %v2897 = vshll.u32 2102212464, %v2885
    %v2898 = vshrl.u32 920167782, %v2886
    %v2899 = vor.u32 %v2897, %v2898
    %v2900 = vshll.u32 920167782, %v2885
    %v2901 = vshrl.u32 1326507024, %v2886
    %v2902 = vor.u32 %v2900, %v2901
    %vm2903 = vcmp.lt.s32.totalorder %v2884, 1
    %vm2904 = vcmp.lt.s32.totalorder %v2884, 2
    %vm2905 = vcmp.lt.s32.totalorder %v2884, 3
    %vm2906 = vcmp.lt.s32.totalorder %v2884, 4
    %v2907 = vsel %vm2903, %v2887, %v2890
    %v2908 = vsel %vm2906, %v2896, 2102212464
    %v2909 = vsel %vm2905, %v2893, %v2908
    %v2910 = vsel %vm2904, %v2907, %v2909
    %v2911 = vsel %vm2903, %v2890, %v2893
    %v2912 = vsel %vm2906, %v2899, 920167782
    %v2913 = vsel %vm2905, %v2896, %v2912
    %v2914 = vsel %vm2904, %v2911, %v2913
    %v2915 = vsel %vm2903, %v2893, %v2896
    %v2916 = vsel %vm2906, %v2902, 1326507024
    %v2917 = vsel %vm2905, %v2899, %v2916
    %v2918 = vsel %vm2904, %v2915, %v2917
    %v2919 = vshll.u32 %v2879, 8
    %v2920 = vmul.u32.u64.compose %v2919, %v2918
    %v2921 = vextract.low.u32 %v2920
    %v2922 = vextract.high.u32 %v2920
    %v2923 = vmul.u32.u64.compose %v2919, %v2914
    %v2924 = vextract.low.u32 %v2923
    %v2925 = vextract.high.u32 %v2923
    %v2926 = vmul.u32 %v2919, %v2910
    %v2927 = vadd.s32 %v2922, %v2924
    %vm2928 = vc.u32 %v2922, %v2924
    %v2929 = vadd.s32 %v2925, 1
    %v2930 = vsel %vm2928, %v2929, %v2925
    %v2931 = vadd.s32 %v2926, %v2930
    %v2932 = vadd.s32 %v2931, 536870912
    %v2933 = vshrl.u32 %v2932, 30
    %v2934 = vshll.u32 %v2933, 30
    %v2935 = vsub.s32 %v2931, %v2934
    %vm2936 = vcmp.lt.s32.totalorder %v2935, 0
    %v2937 = vsub.s32 0, %v2935
    %v2938 = vsel %vm2936, %v2937, %v2935
    %v2939 = vclz %v2938
    %v2940 = vsub.s32 %v2939, 2
    %vm2941 = vcmp.gt.s32.totalorder 0, %v2940
    %v2942 = vsel %vm2941, 0, %v2940
    %v2943 = vsub.s32 32, %v2942
    %v2944 = vshll.u32 %v2935, %v2942
    %v2945 = vshrl.u32 %v2927, %v2943
    %v2946 = vor.u32 %v2944, %v2945
    %v2947 = vsub.s32 4294967266, %v2942
    %v2948 = vadd.s32 %v2947, 127
    %v2949 = vshll.u32 %v2948, 23
    %v2950 = vor.u32 4788187, %v2949
    %v2951 = vand.u32 2147483647, %v2950
    %v2953 = vcvt.s32.f32 %v2946
    %v2954 = vmul.f32 %v2953, %v2951
    %v2955 = vxor.u32 %v2954, 2147483648
    %v2956 = vsel %vm2873, %v2955, %v2954
    %v2957 = vsub.s32 4, %v2933
    %v2958 = vsel %vm2873, %v2957, %v2933
    %v2959 = vsel %vm2872, %v1309, %v2956
    %v2960 = vsel %vm2872, 0, %v2958
    %v2961 = vcosq.f32.pop %v2959
    %v2962 = vsinq.f32.pop %v2959
    %vm2963 = vweird.f32 %v1309
    %v2964 = vand.u32 %v2960, 3
    %vm2965 = vcmp.lt.s32.totalorder %v2964, 2
    %vm2966 = vcmp.eq.s32.totalorder %v2964, 0
    %v2967 = vxor.u32 %v2962, 2147483648
    %v2968 = vsel %vm2966, %v2961, %v2967
    %vm2969 = vcmp.eq.s32.totalorder %v2964, 2
    %v2970 = vxor.u32 %v2961, 2147483648
    %v2971 = vsel %vm2969, %v2970, %v2962
    %v2972 = vsel %vm2965, %v2968, %v2971
    %v2973 = vsel %vm2963, nan, %v2972
    %v2974 = vand.u32 2147483647, %v1310
    %vm2975 = vcmp.le.f32.partialorder %v2974, 0.7853982
    %vm2976 = vcmp.lt.s32.totalorder %v1310, 0
    %v2977 = vand.u32 %v1310, 2139095040
    %v2978 = vshrl.u32 %v2977, 23
    %v2979 = vsub.s32 %v2978, 127
    %v2980 = vand.u32 2147483647, %v1310
    %v2981 = vand.u32 %v2980, 8388607
    %v2982 = vor.u32 %v2981, 8388608
    %v2983 = vsub.s32 0, %v2982
    %v2984 = vadd.s32 %v2979, 1
    %vm2985 = vcmp.gt.s32.totalorder %v2984, 0
    %v2986 = vsel %vm2985, %v2984, 0
    %v2987 = vshrl.u32 %v2986, 5
    %v2988 = vand.u32 %v2986, 31
    %v2989 = vsub.s32 32, %v2988
    %v2990 = vshrl.u32 683565275, %v2989
    %v2991 = vshll.u32 683565275, %v2988
    %v2992 = vshrl.u32 2475754826, %v2989
    %v2993 = vor.u32 %v2991, %v2992
    %v2994 = vshll.u32 2475754826, %v2988
    %v2995 = vshrl.u32 2131351028, %v2989
    %v2996 = vor.u32 %v2994, %v2995
    %v2997 = vshll.u32 2131351028, %v2988
    %v2998 = vshrl.u32 2102212464, %v2989
    %v2999 = vor.u32 %v2997, %v2998
    %v3000 = vshll.u32 2102212464, %v2988
    %v3001 = vshrl.u32 920167782, %v2989
    %v3002 = vor.u32 %v3000, %v3001
    %v3003 = vshll.u32 920167782, %v2988
    %v3004 = vshrl.u32 1326507024, %v2989
    %v3005 = vor.u32 %v3003, %v3004
    %vm3006 = vcmp.lt.s32.totalorder %v2987, 1
    %vm3007 = vcmp.lt.s32.totalorder %v2987, 2
    %vm3008 = vcmp.lt.s32.totalorder %v2987, 3
    %vm3009 = vcmp.lt.s32.totalorder %v2987, 4
    %v3010 = vsel %vm3006, %v2990, %v2993
    %v3011 = vsel %vm3009, %v2999, 2102212464
    %v3012 = vsel %vm3008, %v2996, %v3011
    %v3013 = vsel %vm3007, %v3010, %v3012
    %v3014 = vsel %vm3006, %v2993, %v2996
    %v3015 = vsel %vm3009, %v3002, 920167782
    %v3016 = vsel %vm3008, %v2999, %v3015
    %v3017 = vsel %vm3007, %v3014, %v3016
    %v3018 = vsel %vm3006, %v2996, %v2999
    %v3019 = vsel %vm3009, %v3005, 1326507024
    %v3020 = vsel %vm3008, %v3002, %v3019
    %v3021 = vsel %vm3007, %v3018, %v3020
    %v3022 = vshll.u32 %v2982, 8
    %v3023 = vmul.u32.u64.compose %v3022, %v3021
    %v3024 = vextract.low.u32 %v3023
    %v3025 = vextract.high.u32 %v3023
    %v3026 = vmul.u32.u64.compose %v3022, %v3017
    %v3027 = vextract.low.u32 %v3026
    %v3028 = vextract.high.u32 %v3026
    %v3029 = vmul.u32 %v3022, %v3013
    %v3030 = vadd.s32 %v3025, %v3027
    %vm3031 = vc.u32 %v3025, %v3027
    %v3032 = vadd.s32 %v3028, 1
    %v3033 = vsel %vm3031, %v3032, %v3028
    %v3034 = vadd.s32 %v3029, %v3033
    %v3035 = vadd.s32 %v3034, 536870912
    %v3036 = vshrl.u32 %v3035, 30
    %v3037 = vshll.u32 %v3036, 30
    %v3038 = vsub.s32 %v3034, %v3037
    %vm3039 = vcmp.lt.s32.totalorder %v3038, 0
    %v3040 = vsub.s32 0, %v3038
    %v3041 = vsel %vm3039, %v3040, %v3038
    %v3042 = vclz %v3041
    %v3043 = vsub.s32 %v3042, 2
    %vm3044 = vcmp.gt.s32.totalorder 0, %v3043
    %v3045 = vsel %vm3044, 0, %v3043
    %v3046 = vsub.s32 32, %v3045
    %v3047 = vshll.u32 %v3038, %v3045
    %v3048 = vshrl.u32 %v3030, %v3046
    %v3049 = vor.u32 %v3047, %v3048
    %v3050 = vsub.s32 4294967266, %v3045
    %v3051 = vadd.s32 %v3050, 127
    %v3052 = vshll.u32 %v3051, 23
    %v3053 = vor.u32 4788187, %v3052
    %v3054 = vand.u32 2147483647, %v3053
    %v3056 = vcvt.s32.f32 %v3049
    %v3057 = vmul.f32 %v3056, %v3054
    %v3058 = vxor.u32 %v3057, 2147483648
    %v3059 = vsel %vm2976, %v3058, %v3057
    %v3060 = vsub.s32 4, %v3036
    %v3061 = vsel %vm2976, %v3060, %v3036
    %v3062 = vsel %vm2975, %v1310, %v3059
    %v3063 = vsel %vm2975, 0, %v3061
    %v3064 = vcosq.f32.pop %v3062
    %v3065 = vsinq.f32.pop %v3062
    %vm3066 = vweird.f32 %v1310
    %v3067 = vand.u32 %v3063, 3
    %vm3068 = vcmp.lt.s32.totalorder %v3067, 2
    %vm3069 = vcmp.eq.s32.totalorder %v3067, 0
    %v3070 = vxor.u32 %v3065, 2147483648
    %v3071 = vsel %vm3069, %v3064, %v3070
    %vm3072 = vcmp.eq.s32.totalorder %v3067, 2
    %v3073 = vxor.u32 %v3064, 2147483648
    %v3074 = vsel %vm3072, %v3073, %v3065
    %v3075 = vsel %vm3068, %v3071, %v3074
    %v3076 = vsel %vm3066, nan, %v3075
    %v3077 = vand.u32 2147483647, %v1311
    %vm3078 = vcmp.le.f32.partialorder %v3077, 0.7853982
    %vm3079 = vcmp.lt.s32.totalorder %v1311, 0
    %v3080 = vand.u32 %v1311, 2139095040
    %v3081 = vshrl.u32 %v3080, 23
    %v3082 = vsub.s32 %v3081, 127
    %v3083 = vand.u32 2147483647, %v1311
    %v3084 = vand.u32 %v3083, 8388607
    %v3085 = vor.u32 %v3084, 8388608
    %v3086 = vsub.s32 0, %v3085
    %v3087 = vadd.s32 %v3082, 1
    %vm3088 = vcmp.gt.s32.totalorder %v3087, 0
    %v3089 = vsel %vm3088, %v3087, 0
    %v3090 = vshrl.u32 %v3089, 5
    %v3091 = vand.u32 %v3089, 31
    %v3092 = vsub.s32 32, %v3091
    %v3093 = vshrl.u32 683565275, %v3092
    %v3094 = vshll.u32 683565275, %v3091
    %v3095 = vshrl.u32 2475754826, %v3092
    %v3096 = vor.u32 %v3094, %v3095
    %v3097 = vshll.u32 2475754826, %v3091
    %v3098 = vshrl.u32 2131351028, %v3092
    %v3099 = vor.u32 %v3097, %v3098
    %v3100 = vshll.u32 2131351028, %v3091
    %v3101 = vshrl.u32 2102212464, %v3092
    %v3102 = vor.u32 %v3100, %v3101
    %v3103 = vshll.u32 2102212464, %v3091
    %v3104 = vshrl.u32 920167782, %v3092
    %v3105 = vor.u32 %v3103, %v3104
    %v3106 = vshll.u32 920167782, %v3091
    %v3107 = vshrl.u32 1326507024, %v3092
    %v3108 = vor.u32 %v3106, %v3107
    %vm3109 = vcmp.lt.s32.totalorder %v3090, 1
    %vm3110 = vcmp.lt.s32.totalorder %v3090, 2
    %vm3111 = vcmp.lt.s32.totalorder %v3090, 3
    %vm3112 = vcmp.lt.s32.totalorder %v3090, 4
    %v3113 = vsel %vm3109, %v3093, %v3096
    %v3114 = vsel %vm3112, %v3102, 2102212464
    %v3115 = vsel %vm3111, %v3099, %v3114
    %v3116 = vsel %vm3110, %v3113, %v3115
    %v3117 = vsel %vm3109, %v3096, %v3099
    %v3118 = vsel %vm3112, %v3105, 920167782
    %v3119 = vsel %vm3111, %v3102, %v3118
    %v3120 = vsel %vm3110, %v3117, %v3119
    %v3121 = vsel %vm3109, %v3099, %v3102
    %v3122 = vsel %vm3112, %v3108, 1326507024
    %v3123 = vsel %vm3111, %v3105, %v3122
    %v3124 = vsel %vm3110, %v3121, %v3123
    %v3125 = vshll.u32 %v3085, 8
    %v3126 = vmul.u32.u64.compose %v3125, %v3124
    %v3127 = vextract.low.u32 %v3126
    %v3128 = vextract.high.u32 %v3126
    %v3129 = vmul.u32.u64.compose %v3125, %v3120
    %v3130 = vextract.low.u32 %v3129
    %v3131 = vextract.high.u32 %v3129
    %v3132 = vmul.u32 %v3125, %v3116
    %v3133 = vadd.s32 %v3128, %v3130
    %vm3134 = vc.u32 %v3128, %v3130
    %v3135 = vadd.s32 %v3131, 1
    %v3136 = vsel %vm3134, %v3135, %v3131
    %v3137 = vadd.s32 %v3132, %v3136
    %v3138 = vadd.s32 %v3137, 536870912
    %v3139 = vshrl.u32 %v3138, 30
    %v3140 = vshll.u32 %v3139, 30
    %v3141 = vsub.s32 %v3137, %v3140
    %vm3142 = vcmp.lt.s32.totalorder %v3141, 0
    %v3143 = vsub.s32 0, %v3141
    %v3144 = vsel %vm3142, %v3143, %v3141
    %v3145 = vclz %v3144
    %v3146 = vsub.s32 %v3145, 2
    %vm3147 = vcmp.gt.s32.totalorder 0, %v3146
    %v3148 = vsel %vm3147, 0, %v3146
    %v3149 = vsub.s32 32, %v3148
    %v3150 = vshll.u32 %v3141, %v3148
    %v3151 = vshrl.u32 %v3133, %v3149
    %v3152 = vor.u32 %v3150, %v3151
    %v3153 = vsub.s32 4294967266, %v3148
    %v3154 = vadd.s32 %v3153, 127
    %v3155 = vshll.u32 %v3154, 23
    %v3156 = vor.u32 4788187, %v3155
    %v3157 = vand.u32 2147483647, %v3156
    %v3159 = vcvt.s32.f32 %v3152
    %v3160 = vmul.f32 %v3159, %v3157
    %v3161 = vxor.u32 %v3160, 2147483648
    %v3162 = vsel %vm3079, %v3161, %v3160
    %v3163 = vsub.s32 4, %v3139
    %v3164 = vsel %vm3079, %v3163, %v3139
    %v3165 = vsel %vm3078, %v1311, %v3162
    %v3166 = vsel %vm3078, 0, %v3164
    %v3167 = vcosq.f32.pop %v3165
    %v3168 = vsinq.f32.pop %v3165
    %vm3169 = vweird.f32 %v1311
    %v3170 = vand.u32 %v3166, 3
    %vm3171 = vcmp.lt.s32.totalorder %v3170, 2
    %vm3172 = vcmp.eq.s32.totalorder %v3170, 0
    %v3173 = vxor.u32 %v3168, 2147483648
    %v3174 = vsel %vm3172, %v3167, %v3173
    %vm3175 = vcmp.eq.s32.totalorder %v3170, 2
    %v3176 = vxor.u32 %v3167, 2147483648
    %v3177 = vsel %vm3175, %v3176, %v3168
    %v3178 = vsel %vm3171, %v3174, %v3177
    %v3179 = vsel %vm3169, nan, %v3178
    %v3180 = vand.u32 2147483647, %v1312
    %vm3181 = vcmp.le.f32.partialorder %v3180, 0.7853982
    %vm3182 = vcmp.lt.s32.totalorder %v1312, 0
    %v3183 = vand.u32 %v1312, 2139095040
    %v3184 = vshrl.u32 %v3183, 23
    %v3185 = vsub.s32 %v3184, 127
    %v3186 = vand.u32 2147483647, %v1312
    %v3187 = vand.u32 %v3186, 8388607
    %v3188 = vor.u32 %v3187, 8388608
    %v3189 = vsub.s32 0, %v3188
    %v3190 = vadd.s32 %v3185, 1
    %vm3191 = vcmp.gt.s32.totalorder %v3190, 0
    %v3192 = vsel %vm3191, %v3190, 0
    %v3193 = vshrl.u32 %v3192, 5
    %v3194 = vand.u32 %v3192, 31
    %v3195 = vsub.s32 32, %v3194
    %v3196 = vshrl.u32 683565275, %v3195
    %v3197 = vshll.u32 683565275, %v3194
    %v3198 = vshrl.u32 2475754826, %v3195
    %v3199 = vor.u32 %v3197, %v3198
    %v3200 = vshll.u32 2475754826, %v3194
    %v3201 = vshrl.u32 2131351028, %v3195
    %v3202 = vor.u32 %v3200, %v3201
    %v3203 = vshll.u32 2131351028, %v3194
    %v3204 = vshrl.u32 2102212464, %v3195
    %v3205 = vor.u32 %v3203, %v3204
    %v3206 = vshll.u32 2102212464, %v3194
    %v3207 = vshrl.u32 920167782, %v3195
    %v3208 = vor.u32 %v3206, %v3207
    %v3209 = vshll.u32 920167782, %v3194
    %v3210 = vshrl.u32 1326507024, %v3195
    %v3211 = vor.u32 %v3209, %v3210
    %vm3212 = vcmp.lt.s32.totalorder %v3193, 1
    %vm3213 = vcmp.lt.s32.totalorder %v3193, 2
    %vm3214 = vcmp.lt.s32.totalorder %v3193, 3
    %vm3215 = vcmp.lt.s32.totalorder %v3193, 4
    %v3216 = vsel %vm3212, %v3196, %v3199
    %v3217 = vsel %vm3215, %v3205, 2102212464
    %v3218 = vsel %vm3214, %v3202, %v3217
    %v3219 = vsel %vm3213, %v3216, %v3218
    %v3220 = vsel %vm3212, %v3199, %v3202
    %v3221 = vsel %vm3215, %v3208, 920167782
    %v3222 = vsel %vm3214, %v3205, %v3221
    %v3223 = vsel %vm3213, %v3220, %v3222
    %v3224 = vsel %vm3212, %v3202, %v3205
    %v3225 = vsel %vm3215, %v3211, 1326507024
    %v3226 = vsel %vm3214, %v3208, %v3225
    %v3227 = vsel %vm3213, %v3224, %v3226
    %v3228 = vshll.u32 %v3188, 8
    %v3229 = vmul.u32.u64.compose %v3228, %v3227
    %v3230 = vextract.low.u32 %v3229
    %v3231 = vextract.high.u32 %v3229
    %v3232 = vmul.u32.u64.compose %v3228, %v3223
    %v3233 = vextract.low.u32 %v3232
    %v3234 = vextract.high.u32 %v3232
    %v3235 = vmul.u32 %v3228, %v3219
    %v3236 = vadd.s32 %v3231, %v3233
    %vm3237 = vc.u32 %v3231, %v3233
    %v3238 = vadd.s32 %v3234, 1
    %v3239 = vsel %vm3237, %v3238, %v3234
    %v3240 = vadd.s32 %v3235, %v3239
    %v3241 = vadd.s32 %v3240, 536870912
    %v3242 = vshrl.u32 %v3241, 30
    %v3243 = vshll.u32 %v3242, 30
    %v3244 = vsub.s32 %v3240, %v3243
    %vm3245 = vcmp.lt.s32.totalorder %v3244, 0
    %v3246 = vsub.s32 0, %v3244
    %v3247 = vsel %vm3245, %v3246, %v3244
    %v3248 = vclz %v3247
    %v3249 = vsub.s32 %v3248, 2
    %vm3250 = vcmp.gt.s32.totalorder 0, %v3249
    %v3251 = vsel %vm3250, 0, %v3249
    %v3252 = vsub.s32 32, %v3251
    %v3253 = vshll.u32 %v3244, %v3251
    %v3254 = vshrl.u32 %v3236, %v3252
    %v3255 = vor.u32 %v3253, %v3254
    %v3256 = vsub.s32 4294967266, %v3251
    %v3257 = vadd.s32 %v3256, 127
    %v3258 = vshll.u32 %v3257, 23
    %v3259 = vor.u32 4788187, %v3258
    %v3260 = vand.u32 2147483647, %v3259
    %v3262 = vcvt.s32.f32 %v3255
    %v3263 = vmul.f32 %v3262, %v3260
    %v3264 = vxor.u32 %v3263, 2147483648
    %v3265 = vsel %vm3182, %v3264, %v3263
    %v3266 = vsub.s32 4, %v3242
    %v3267 = vsel %vm3182, %v3266, %v3242
    %v3268 = vsel %vm3181, %v1312, %v3265
    %v3269 = vsel %vm3181, 0, %v3267
    %v3270 = vcosq.f32.pop %v3268
    %v3271 = vsinq.f32.pop %v3268
    %vm3272 = vweird.f32 %v1312
    %v3273 = vand.u32 %v3269, 3
    %vm3274 = vcmp.lt.s32.totalorder %v3273, 2
    %vm3275 = vcmp.eq.s32.totalorder %v3273, 0
    %v3276 = vxor.u32 %v3271, 2147483648
    %v3277 = vsel %vm3275, %v3270, %v3276
    %vm3278 = vcmp.eq.s32.totalorder %v3273, 2
    %v3279 = vxor.u32 %v3270, 2147483648
    %v3280 = vsel %vm3278, %v3279, %v3271
    %v3281 = vsel %vm3274, %v3277, %v3280
    %v3282 = vsel %vm3272, nan, %v3281
    %v3283 = vand.u32 2147483647, %v1313
    %vm3284 = vcmp.le.f32.partialorder %v3283, 0.7853982
    %vm3285 = vcmp.lt.s32.totalorder %v1313, 0
    %v3286 = vand.u32 %v1313, 2139095040
    %v3287 = vshrl.u32 %v3286, 23
    %v3288 = vsub.s32 %v3287, 127
    %v3289 = vand.u32 2147483647, %v1313
    %v3290 = vand.u32 %v3289, 8388607
    %v3291 = vor.u32 %v3290, 8388608
    %v3292 = vsub.s32 0, %v3291
    %v3293 = vadd.s32 %v3288, 1
    %vm3294 = vcmp.gt.s32.totalorder %v3293, 0
    %v3295 = vsel %vm3294, %v3293, 0
    %v3296 = vshrl.u32 %v3295, 5
    %v3297 = vand.u32 %v3295, 31
    %v3298 = vsub.s32 32, %v3297
    %v3299 = vshrl.u32 683565275, %v3298
    %v3300 = vshll.u32 683565275, %v3297
    %v3301 = vshrl.u32 2475754826, %v3298
    %v3302 = vor.u32 %v3300, %v3301
    %v3303 = vshll.u32 2475754826, %v3297
    %v3304 = vshrl.u32 2131351028, %v3298
    %v3305 = vor.u32 %v3303, %v3304
    %v3306 = vshll.u32 2131351028, %v3297
    %v3307 = vshrl.u32 2102212464, %v3298
    %v3308 = vor.u32 %v3306, %v3307
    %v3309 = vshll.u32 2102212464, %v3297
    %v3310 = vshrl.u32 920167782, %v3298
    %v3311 = vor.u32 %v3309, %v3310
    %v3312 = vshll.u32 920167782, %v3297
    %v3313 = vshrl.u32 1326507024, %v3298
    %v3314 = vor.u32 %v3312, %v3313
    %vm3315 = vcmp.lt.s32.totalorder %v3296, 1
    %vm3316 = vcmp.lt.s32.totalorder %v3296, 2
    %vm3317 = vcmp.lt.s32.totalorder %v3296, 3
    %vm3318 = vcmp.lt.s32.totalorder %v3296, 4
    %v3319 = vsel %vm3315, %v3299, %v3302
    %v3320 = vsel %vm3318, %v3308, 2102212464
    %v3321 = vsel %vm3317, %v3305, %v3320
    %v3322 = vsel %vm3316, %v3319, %v3321
    %v3323 = vsel %vm3315, %v3302, %v3305
    %v3324 = vsel %vm3318, %v3311, 920167782
    %v3325 = vsel %vm3317, %v3308, %v3324
    %v3326 = vsel %vm3316, %v3323, %v3325
    %v3327 = vsel %vm3315, %v3305, %v3308
    %v3328 = vsel %vm3318, %v3314, 1326507024
    %v3329 = vsel %vm3317, %v3311, %v3328
    %v3330 = vsel %vm3316, %v3327, %v3329
    %v3331 = vshll.u32 %v3291, 8
    %v3332 = vmul.u32.u64.compose %v3331, %v3330
    %v3333 = vextract.low.u32 %v3332
    %v3334 = vextract.high.u32 %v3332
    %v3335 = vmul.u32.u64.compose %v3331, %v3326
    %v3336 = vextract.low.u32 %v3335
    %v3337 = vextract.high.u32 %v3335
    %v3338 = vmul.u32 %v3331, %v3322
    %v3339 = vadd.s32 %v3334, %v3336
    %vm3340 = vc.u32 %v3334, %v3336
    %v3341 = vadd.s32 %v3337, 1
    %v3342 = vsel %vm3340, %v3341, %v3337
    %v3343 = vadd.s32 %v3338, %v3342
    %v3344 = vadd.s32 %v3343, 536870912
    %v3345 = vshrl.u32 %v3344, 30
    %v3346 = vshll.u32 %v3345, 30
    %v3347 = vsub.s32 %v3343, %v3346
    %vm3348 = vcmp.lt.s32.totalorder %v3347, 0
    %v3349 = vsub.s32 0, %v3347
    %v3350 = vsel %vm3348, %v3349, %v3347
    %v3351 = vclz %v3350
    %v3352 = vsub.s32 %v3351, 2
    %vm3353 = vcmp.gt.s32.totalorder 0, %v3352
    %v3354 = vsel %vm3353, 0, %v3352
    %v3355 = vsub.s32 32, %v3354
    %v3356 = vshll.u32 %v3347, %v3354
    %v3357 = vshrl.u32 %v3339, %v3355
    %v3358 = vor.u32 %v3356, %v3357
    %v3359 = vsub.s32 4294967266, %v3354
    %v3360 = vadd.s32 %v3359, 127
    %v3361 = vshll.u32 %v3360, 23
    %v3362 = vor.u32 4788187, %v3361
    %v3363 = vand.u32 2147483647, %v3362
    %v3365 = vcvt.s32.f32 %v3358
    %v3366 = vmul.f32 %v3365, %v3363
    %v3367 = vxor.u32 %v3366, 2147483648
    %v3368 = vsel %vm3285, %v3367, %v3366
    %v3369 = vsub.s32 4, %v3345
    %v3370 = vsel %vm3285, %v3369, %v3345
    %v3371 = vsel %vm3284, %v1313, %v3368
    %v3372 = vsel %vm3284, 0, %v3370
    %v3373 = vcosq.f32.pop %v3371
    %v3374 = vsinq.f32.pop %v3371
    %vm3375 = vweird.f32 %v1313
    %v3376 = vand.u32 %v3372, 3
    %vm3377 = vcmp.lt.s32.totalorder %v3376, 2
    %vm3378 = vcmp.eq.s32.totalorder %v3376, 0
    %v3379 = vxor.u32 %v3374, 2147483648
    %v3380 = vsel %vm3378, %v3373, %v3379
    %vm3381 = vcmp.eq.s32.totalorder %v3376, 2
    %v3382 = vxor.u32 %v3373, 2147483648
    %v3383 = vsel %vm3381, %v3382, %v3374
    %v3384 = vsel %vm3377, %v3380, %v3383
    %v3385 = vsel %vm3375, nan, %v3384
    %v3386 = vand.u32 2147483647, %v1314
    %vm3387 = vcmp.le.f32.partialorder %v3386, 0.7853982
    %vm3388 = vcmp.lt.s32.totalorder %v1314, 0
    %v3389 = vand.u32 %v1314, 2139095040
    %v3390 = vshrl.u32 %v3389, 23
    %v3391 = vsub.s32 %v3390, 127
    %v3392 = vand.u32 2147483647, %v1314
    %v3393 = vand.u32 %v3392, 8388607
    %v3394 = vor.u32 %v3393, 8388608
    %v3395 = vsub.s32 0, %v3394
    %v3396 = vadd.s32 %v3391, 1
    %vm3397 = vcmp.gt.s32.totalorder %v3396, 0
    %v3398 = vsel %vm3397, %v3396, 0
    %v3399 = vshrl.u32 %v3398, 5
    %v3400 = vand.u32 %v3398, 31
    %v3401 = vsub.s32 32, %v3400
    %v3402 = vshrl.u32 683565275, %v3401
    %v3403 = vshll.u32 683565275, %v3400
    %v3404 = vshrl.u32 2475754826, %v3401
    %v3405 = vor.u32 %v3403, %v3404
    %v3406 = vshll.u32 2475754826, %v3400
    %v3407 = vshrl.u32 2131351028, %v3401
    %v3408 = vor.u32 %v3406, %v3407
    %v3409 = vshll.u32 2131351028, %v3400
    %v3410 = vshrl.u32 2102212464, %v3401
    %v3411 = vor.u32 %v3409, %v3410
    %v3412 = vshll.u32 2102212464, %v3400
    %v3413 = vshrl.u32 920167782, %v3401
    %v3414 = vor.u32 %v3412, %v3413
    %v3415 = vshll.u32 920167782, %v3400
    %v3416 = vshrl.u32 1326507024, %v3401
    %v3417 = vor.u32 %v3415, %v3416
    %vm3418 = vcmp.lt.s32.totalorder %v3399, 1
    %vm3419 = vcmp.lt.s32.totalorder %v3399, 2
    %vm3420 = vcmp.lt.s32.totalorder %v3399, 3
    %vm3421 = vcmp.lt.s32.totalorder %v3399, 4
    %v3422 = vsel %vm3418, %v3402, %v3405
    %v3423 = vsel %vm3421, %v3411, 2102212464
    %v3424 = vsel %vm3420, %v3408, %v3423
    %v3425 = vsel %vm3419, %v3422, %v3424
    %v3426 = vsel %vm3418, %v3405, %v3408
    %v3427 = vsel %vm3421, %v3414, 920167782
    %v3428 = vsel %vm3420, %v3411, %v3427
    %v3429 = vsel %vm3419, %v3426, %v3428
    %v3430 = vsel %vm3418, %v3408, %v3411
    %v3431 = vsel %vm3421, %v3417, 1326507024
    %v3432 = vsel %vm3420, %v3414, %v3431
    %v3433 = vsel %vm3419, %v3430, %v3432
    %v3434 = vshll.u32 %v3394, 8
    %v3435 = vmul.u32.u64.compose %v3434, %v3433
    %v3436 = vextract.low.u32 %v3435
    %v3437 = vextract.high.u32 %v3435
    %v3438 = vmul.u32.u64.compose %v3434, %v3429
    %v3439 = vextract.low.u32 %v3438
    %v3440 = vextract.high.u32 %v3438
    %v3441 = vmul.u32 %v3434, %v3425
    %v3442 = vadd.s32 %v3437, %v3439
    %vm3443 = vc.u32 %v3437, %v3439
    %v3444 = vadd.s32 %v3440, 1
    %v3445 = vsel %vm3443, %v3444, %v3440
    %v3446 = vadd.s32 %v3441, %v3445
    %v3447 = vadd.s32 %v3446, 536870912
    %v3448 = vshrl.u32 %v3447, 30
    %v3449 = vshll.u32 %v3448, 30
    %v3450 = vsub.s32 %v3446, %v3449
    %vm3451 = vcmp.lt.s32.totalorder %v3450, 0
    %v3452 = vsub.s32 0, %v3450
    %v3453 = vsel %vm3451, %v3452, %v3450
    %v3454 = vclz %v3453
    %v3455 = vsub.s32 %v3454, 2
    %vm3456 = vcmp.gt.s32.totalorder 0, %v3455
    %v3457 = vsel %vm3456, 0, %v3455
    %v3458 = vsub.s32 32, %v3457
    %v3459 = vshll.u32 %v3450, %v3457
    %v3460 = vshrl.u32 %v3442, %v3458
    %v3461 = vor.u32 %v3459, %v3460
    %v3462 = vsub.s32 4294967266, %v3457
    %v3463 = vadd.s32 %v3462, 127
    %v3464 = vshll.u32 %v3463, 23
    %v3465 = vor.u32 4788187, %v3464
    %v3466 = vand.u32 2147483647, %v3465
    %v3468 = vcvt.s32.f32 %v3461
    %v3469 = vmul.f32 %v3468, %v3466
    %v3470 = vxor.u32 %v3469, 2147483648
    %v3471 = vsel %vm3388, %v3470, %v3469
    %v3472 = vsub.s32 4, %v3448
    %v3473 = vsel %vm3388, %v3472, %v3448
    %v3474 = vsel %vm3387, %v1314, %v3471
    %v3475 = vsel %vm3387, 0, %v3473
    %v3476 = vcosq.f32.pop %v3474
    %v3477 = vsinq.f32.pop %v3474
    %vm3478 = vweird.f32 %v1314
    %v3479 = vand.u32 %v3475, 3
    %vm3480 = vcmp.lt.s32.totalorder %v3479, 2
    %vm3481 = vcmp.eq.s32.totalorder %v3479, 0
    %v3482 = vxor.u32 %v3477, 2147483648
    %v3483 = vsel %vm3481, %v3476, %v3482
    %vm3484 = vcmp.eq.s32.totalorder %v3479, 2
    %v3485 = vxor.u32 %v3476, 2147483648
    %v3486 = vsel %vm3484, %v3485, %v3477
    %v3487 = vsel %vm3480, %v3483, %v3486
    %v3488 = vsel %vm3478, nan, %v3487
    %v3489 = vand.u32 2147483647, %v1315
    %vm3490 = vcmp.le.f32.partialorder %v3489, 0.7853982
    %vm3491 = vcmp.lt.s32.totalorder %v1315, 0
    %v3492 = vand.u32 %v1315, 2139095040
    %v3493 = vshrl.u32 %v3492, 23
    %v3494 = vsub.s32 %v3493, 127
    %v3495 = vand.u32 2147483647, %v1315
    %v3496 = vand.u32 %v3495, 8388607
    %v3497 = vor.u32 %v3496, 8388608
    %v3498 = vsub.s32 0, %v3497
    %v3499 = vadd.s32 %v3494, 1
    %vm3500 = vcmp.gt.s32.totalorder %v3499, 0
    %v3501 = vsel %vm3500, %v3499, 0
    %v3502 = vshrl.u32 %v3501, 5
    %v3503 = vand.u32 %v3501, 31
    %v3504 = vsub.s32 32, %v3503
    %v3505 = vshrl.u32 683565275, %v3504
    %v3506 = vshll.u32 683565275, %v3503
    %v3507 = vshrl.u32 2475754826, %v3504
    %v3508 = vor.u32 %v3506, %v3507
    %v3509 = vshll.u32 2475754826, %v3503
    %v3510 = vshrl.u32 2131351028, %v3504
    %v3511 = vor.u32 %v3509, %v3510
    %v3512 = vshll.u32 2131351028, %v3503
    %v3513 = vshrl.u32 2102212464, %v3504
    %v3514 = vor.u32 %v3512, %v3513
    %v3515 = vshll.u32 2102212464, %v3503
    %v3516 = vshrl.u32 920167782, %v3504
    %v3517 = vor.u32 %v3515, %v3516
    %v3518 = vshll.u32 920167782, %v3503
    %v3519 = vshrl.u32 1326507024, %v3504
    %v3520 = vor.u32 %v3518, %v3519
    %vm3521 = vcmp.lt.s32.totalorder %v3502, 1
    %vm3522 = vcmp.lt.s32.totalorder %v3502, 2
    %vm3523 = vcmp.lt.s32.totalorder %v3502, 3
    %vm3524 = vcmp.lt.s32.totalorder %v3502, 4
    %v3525 = vsel %vm3521, %v3505, %v3508
    %v3526 = vsel %vm3524, %v3514, 2102212464
    %v3527 = vsel %vm3523, %v3511, %v3526
    %v3528 = vsel %vm3522, %v3525, %v3527
    %v3529 = vsel %vm3521, %v3508, %v3511
    %v3530 = vsel %vm3524, %v3517, 920167782
    %v3531 = vsel %vm3523, %v3514, %v3530
    %v3532 = vsel %vm3522, %v3529, %v3531
    %v3533 = vsel %vm3521, %v3511, %v3514
    %v3534 = vsel %vm3524, %v3520, 1326507024
    %v3535 = vsel %vm3523, %v3517, %v3534
    %v3536 = vsel %vm3522, %v3533, %v3535
    %v3537 = vshll.u32 %v3497, 8
    %v3538 = vmul.u32.u64.compose %v3537, %v3536
    %v3539 = vextract.low.u32 %v3538
    %v3540 = vextract.high.u32 %v3538
    %v3541 = vmul.u32.u64.compose %v3537, %v3532
    %v3542 = vextract.low.u32 %v3541
    %v3543 = vextract.high.u32 %v3541
    %v3544 = vmul.u32 %v3537, %v3528
    %v3545 = vadd.s32 %v3540, %v3542
    %vm3546 = vc.u32 %v3540, %v3542
    %v3547 = vadd.s32 %v3543, 1
    %v3548 = vsel %vm3546, %v3547, %v3543
    %v3549 = vadd.s32 %v3544, %v3548
    %v3550 = vadd.s32 %v3549, 536870912
    %v3551 = vshrl.u32 %v3550, 30
    %v3552 = vshll.u32 %v3551, 30
    %v3553 = vsub.s32 %v3549, %v3552
    %vm3554 = vcmp.lt.s32.totalorder %v3553, 0
    %v3555 = vsub.s32 0, %v3553
    %v3556 = vsel %vm3554, %v3555, %v3553
    %v3557 = vclz %v3556
    %v3558 = vsub.s32 %v3557, 2
    %vm3559 = vcmp.gt.s32.totalorder 0, %v3558
    %v3560 = vsel %vm3559, 0, %v3558
    %v3561 = vsub.s32 32, %v3560
    %v3562 = vshll.u32 %v3553, %v3560
    %v3563 = vshrl.u32 %v3545, %v3561
    %v3564 = vor.u32 %v3562, %v3563
    %v3565 = vsub.s32 4294967266, %v3560
    %v3566 = vadd.s32 %v3565, 127
    %v3567 = vshll.u32 %v3566, 23
    %v3568 = vor.u32 4788187, %v3567
    %v3569 = vand.u32 2147483647, %v3568
    %v3571 = vcvt.s32.f32 %v3564
    %v3572 = vmul.f32 %v3571, %v3569
    %v3573 = vxor.u32 %v3572, 2147483648
    %v3574 = vsel %vm3491, %v3573, %v3572
    %v3575 = vsub.s32 4, %v3551
    %v3576 = vsel %vm3491, %v3575, %v3551
    %v3577 = vsel %vm3490, %v1315, %v3574
    %v3578 = vsel %vm3490, 0, %v3576
    %v3579 = vcosq.f32.pop %v3577
    %v3580 = vsinq.f32.pop %v3577
    %vm3581 = vweird.f32 %v1315
    %v3582 = vand.u32 %v3578, 3
    %vm3583 = vcmp.lt.s32.totalorder %v3582, 2
    %vm3584 = vcmp.eq.s32.totalorder %v3582, 0
    %v3585 = vxor.u32 %v3580, 2147483648
    %v3586 = vsel %vm3584, %v3579, %v3585
    %vm3587 = vcmp.eq.s32.totalorder %v3582, 2
    %v3588 = vxor.u32 %v3579, 2147483648
    %v3589 = vsel %vm3587, %v3588, %v3580
    %v3590 = vsel %vm3583, %v3586, %v3589
    %v3591 = vsel %vm3581, nan, %v3590
    %v3592 = vand.u32 2147483647, %v1316
    %vm3593 = vcmp.le.f32.partialorder %v3592, 0.7853982
    %vm3594 = vcmp.lt.s32.totalorder %v1316, 0
    %v3595 = vand.u32 %v1316, 2139095040
    %v3596 = vshrl.u32 %v3595, 23
    %v3597 = vsub.s32 %v3596, 127
    %v3598 = vand.u32 2147483647, %v1316
    %v3599 = vand.u32 %v3598, 8388607
    %v3600 = vor.u32 %v3599, 8388608
    %v3601 = vsub.s32 0, %v3600
    %v3602 = vadd.s32 %v3597, 1
    %vm3603 = vcmp.gt.s32.totalorder %v3602, 0
    %v3604 = vsel %vm3603, %v3602, 0
    %v3605 = vshrl.u32 %v3604, 5
    %v3606 = vand.u32 %v3604, 31
    %v3607 = vsub.s32 32, %v3606
    %v3608 = vshrl.u32 683565275, %v3607
    %v3609 = vshll.u32 683565275, %v3606
    %v3610 = vshrl.u32 2475754826, %v3607
    %v3611 = vor.u32 %v3609, %v3610
    %v3612 = vshll.u32 2475754826, %v3606
    %v3613 = vshrl.u32 2131351028, %v3607
    %v3614 = vor.u32 %v3612, %v3613
    %v3615 = vshll.u32 2131351028, %v3606
    %v3616 = vshrl.u32 2102212464, %v3607
    %v3617 = vor.u32 %v3615, %v3616
    %v3618 = vshll.u32 2102212464, %v3606
    %v3619 = vshrl.u32 920167782, %v3607
    %v3620 = vor.u32 %v3618, %v3619
    %v3621 = vshll.u32 920167782, %v3606
    %v3622 = vshrl.u32 1326507024, %v3607
    %v3623 = vor.u32 %v3621, %v3622
    %vm3624 = vcmp.lt.s32.totalorder %v3605, 1
    %vm3625 = vcmp.lt.s32.totalorder %v3605, 2
    %vm3626 = vcmp.lt.s32.totalorder %v3605, 3
    %vm3627 = vcmp.lt.s32.totalorder %v3605, 4
    %v3628 = vsel %vm3624, %v3608, %v3611
    %v3629 = vsel %vm3627, %v3617, 2102212464
    %v3630 = vsel %vm3626, %v3614, %v3629
    %v3631 = vsel %vm3625, %v3628, %v3630
    %v3632 = vsel %vm3624, %v3611, %v3614
    %v3633 = vsel %vm3627, %v3620, 920167782
    %v3634 = vsel %vm3626, %v3617, %v3633
    %v3635 = vsel %vm3625, %v3632, %v3634
    %v3636 = vsel %vm3624, %v3614, %v3617
    %v3637 = vsel %vm3627, %v3623, 1326507024
    %v3638 = vsel %vm3626, %v3620, %v3637
    %v3639 = vsel %vm3625, %v3636, %v3638
    %v3640 = vshll.u32 %v3600, 8
    %v3641 = vmul.u32.u64.compose %v3640, %v3639
    %v3642 = vextract.low.u32 %v3641
    %v3643 = vextract.high.u32 %v3641
    %v3644 = vmul.u32.u64.compose %v3640, %v3635
    %v3645 = vextract.low.u32 %v3644
    %v3646 = vextract.high.u32 %v3644
    %v3647 = vmul.u32 %v3640, %v3631
    %v3648 = vadd.s32 %v3643, %v3645
    %vm3649 = vc.u32 %v3643, %v3645
    %v3650 = vadd.s32 %v3646, 1
    %v3651 = vsel %vm3649, %v3650, %v3646
    %v3652 = vadd.s32 %v3647, %v3651
    %v3653 = vadd.s32 %v3652, 536870912
    %v3654 = vshrl.u32 %v3653, 30
    %v3655 = vshll.u32 %v3654, 30
    %v3656 = vsub.s32 %v3652, %v3655
    %vm3657 = vcmp.lt.s32.totalorder %v3656, 0
    %v3658 = vsub.s32 0, %v3656
    %v3659 = vsel %vm3657, %v3658, %v3656
    %v3660 = vclz %v3659
    %v3661 = vsub.s32 %v3660, 2
    %vm3662 = vcmp.gt.s32.totalorder 0, %v3661
    %v3663 = vsel %vm3662, 0, %v3661
    %v3664 = vsub.s32 32, %v3663
    %v3665 = vshll.u32 %v3656, %v3663
    %v3666 = vshrl.u32 %v3648, %v3664
    %v3667 = vor.u32 %v3665, %v3666
    %v3668 = vsub.s32 4294967266, %v3663
    %v3669 = vadd.s32 %v3668, 127
    %v3670 = vshll.u32 %v3669, 23
    %v3671 = vor.u32 4788187, %v3670
    %v3672 = vand.u32 2147483647, %v3671
    %v3674 = vcvt.s32.f32 %v3667
    %v3675 = vmul.f32 %v3674, %v3672
    %v3676 = vxor.u32 %v3675, 2147483648
    %v3677 = vsel %vm3594, %v3676, %v3675
    %v3678 = vsub.s32 4, %v3654
    %v3679 = vsel %vm3594, %v3678, %v3654
    %v3680 = vsel %vm3593, %v1316, %v3677
    %v3681 = vsel %vm3593, 0, %v3679
    %v3682 = vcosq.f32.pop %v3680
    %v3683 = vsinq.f32.pop %v3680
    %vm3684 = vweird.f32 %v1316
    %v3685 = vand.u32 %v3681, 3
    %vm3686 = vcmp.lt.s32.totalorder %v3685, 2
    %vm3687 = vcmp.eq.s32.totalorder %v3685, 0
    %v3688 = vxor.u32 %v3683, 2147483648
    %v3689 = vsel %vm3687, %v3682, %v3688
    %vm3690 = vcmp.eq.s32.totalorder %v3685, 2
    %v3691 = vxor.u32 %v3682, 2147483648
    %v3692 = vsel %vm3690, %v3691, %v3683
    %v3693 = vsel %vm3686, %v3689, %v3692
    %v3694 = vsel %vm3684, nan, %v3693
    %v3695 = vand.u32 2147483647, %v1317
    %vm3696 = vcmp.le.f32.partialorder %v3695, 0.7853982
    %vm3697 = vcmp.lt.s32.totalorder %v1317, 0
    %v3698 = vand.u32 %v1317, 2139095040
    %v3699 = vshrl.u32 %v3698, 23
    %v3700 = vsub.s32 %v3699, 127
    %v3701 = vand.u32 2147483647, %v1317
    %v3702 = vand.u32 %v3701, 8388607
    %v3703 = vor.u32 %v3702, 8388608
    %v3704 = vsub.s32 0, %v3703
    %v3705 = vadd.s32 %v3700, 1
    %vm3706 = vcmp.gt.s32.totalorder %v3705, 0
    %v3707 = vsel %vm3706, %v3705, 0
    %v3708 = vshrl.u32 %v3707, 5
    %v3709 = vand.u32 %v3707, 31
    %v3710 = vsub.s32 32, %v3709
    %v3711 = vshrl.u32 683565275, %v3710
    %v3712 = vshll.u32 683565275, %v3709
    %v3713 = vshrl.u32 2475754826, %v3710
    %v3714 = vor.u32 %v3712, %v3713
    %v3715 = vshll.u32 2475754826, %v3709
    %v3716 = vshrl.u32 2131351028, %v3710
    %v3717 = vor.u32 %v3715, %v3716
    %v3718 = vshll.u32 2131351028, %v3709
    %v3719 = vshrl.u32 2102212464, %v3710
    %v3720 = vor.u32 %v3718, %v3719
    %v3721 = vshll.u32 2102212464, %v3709
    %v3722 = vshrl.u32 920167782, %v3710
    %v3723 = vor.u32 %v3721, %v3722
    %v3724 = vshll.u32 920167782, %v3709
    %v3725 = vshrl.u32 1326507024, %v3710
    %v3726 = vor.u32 %v3724, %v3725
    %vm3727 = vcmp.lt.s32.totalorder %v3708, 1
    %vm3728 = vcmp.lt.s32.totalorder %v3708, 2
    %vm3729 = vcmp.lt.s32.totalorder %v3708, 3
    %vm3730 = vcmp.lt.s32.totalorder %v3708, 4
    %v3731 = vsel %vm3727, %v3711, %v3714
    %v3732 = vsel %vm3730, %v3720, 2102212464
    %v3733 = vsel %vm3729, %v3717, %v3732
    %v3734 = vsel %vm3728, %v3731, %v3733
    %v3735 = vsel %vm3727, %v3714, %v3717
    %v3736 = vsel %vm3730, %v3723, 920167782
    %v3737 = vsel %vm3729, %v3720, %v3736
    %v3738 = vsel %vm3728, %v3735, %v3737
    %v3739 = vsel %vm3727, %v3717, %v3720
    %v3740 = vsel %vm3730, %v3726, 1326507024
    %v3741 = vsel %vm3729, %v3723, %v3740
    %v3742 = vsel %vm3728, %v3739, %v3741
    %v3743 = vshll.u32 %v3703, 8
    %v3744 = vmul.u32.u64.compose %v3743, %v3742
    %v3745 = vextract.low.u32 %v3744
    %v3746 = vextract.high.u32 %v3744
    %v3747 = vmul.u32.u64.compose %v3743, %v3738
    %v3748 = vextract.low.u32 %v3747
    %v3749 = vextract.high.u32 %v3747
    %v3750 = vmul.u32 %v3743, %v3734
    %v3751 = vadd.s32 %v3746, %v3748
    %vm3752 = vc.u32 %v3746, %v3748
    %v3753 = vadd.s32 %v3749, 1
    %v3754 = vsel %vm3752, %v3753, %v3749
    %v3755 = vadd.s32 %v3750, %v3754
    %v3756 = vadd.s32 %v3755, 536870912
    %v3757 = vshrl.u32 %v3756, 30
    %v3758 = vshll.u32 %v3757, 30
    %v3759 = vsub.s32 %v3755, %v3758
    %vm3760 = vcmp.lt.s32.totalorder %v3759, 0
    %v3761 = vsub.s32 0, %v3759
    %v3762 = vsel %vm3760, %v3761, %v3759
    %v3763 = vclz %v3762
    %v3764 = vsub.s32 %v3763, 2
    %vm3765 = vcmp.gt.s32.totalorder 0, %v3764
    %v3766 = vsel %vm3765, 0, %v3764
    %v3767 = vsub.s32 32, %v3766
    %v3768 = vshll.u32 %v3759, %v3766
    %v3769 = vshrl.u32 %v3751, %v3767
    %v3770 = vor.u32 %v3768, %v3769
    %v3771 = vsub.s32 4294967266, %v3766
    %v3772 = vadd.s32 %v3771, 127
    %v3773 = vshll.u32 %v3772, 23
    %v3774 = vor.u32 4788187, %v3773
    %v3775 = vand.u32 2147483647, %v3774
    %v3777 = vcvt.s32.f32 %v3770
    %v3778 = vmul.f32 %v3777, %v3775
    %v3779 = vxor.u32 %v3778, 2147483648
    %v3780 = vsel %vm3697, %v3779, %v3778
    %v3781 = vsub.s32 4, %v3757
    %v3782 = vsel %vm3697, %v3781, %v3757
    %v3783 = vsel %vm3696, %v1317, %v3780
    %v3784 = vsel %vm3696, 0, %v3782
    %v3785 = vcosq.f32.pop %v3783
    %v3786 = vsinq.f32.pop %v3783
    %vm3787 = vweird.f32 %v1317
    %v3788 = vand.u32 %v3784, 3
    %vm3789 = vcmp.lt.s32.totalorder %v3788, 2
    %vm3790 = vcmp.eq.s32.totalorder %v3788, 0
    %v3791 = vxor.u32 %v3786, 2147483648
    %v3792 = vsel %vm3790, %v3785, %v3791
    %vm3793 = vcmp.eq.s32.totalorder %v3788, 2
    %v3794 = vxor.u32 %v3785, 2147483648
    %v3795 = vsel %vm3793, %v3794, %v3786
    %v3796 = vsel %vm3789, %v3792, %v3795
    %v3797 = vsel %vm3787, nan, %v3796
    %v3798 = vand.u32 2147483647, %v1318
    %vm3799 = vcmp.le.f32.partialorder %v3798, 0.7853982
    %vm3800 = vcmp.lt.s32.totalorder %v1318, 0
    %v3801 = vand.u32 %v1318, 2139095040
    %v3802 = vshrl.u32 %v3801, 23
    %v3803 = vsub.s32 %v3802, 127
    %v3804 = vand.u32 2147483647, %v1318
    %v3805 = vand.u32 %v3804, 8388607
    %v3806 = vor.u32 %v3805, 8388608
    %v3807 = vsub.s32 0, %v3806
    %v3808 = vadd.s32 %v3803, 1
    %vm3809 = vcmp.gt.s32.totalorder %v3808, 0
    %v3810 = vsel %vm3809, %v3808, 0
    %v3811 = vshrl.u32 %v3810, 5
    %v3812 = vand.u32 %v3810, 31
    %v3813 = vsub.s32 32, %v3812
    %v3814 = vshrl.u32 683565275, %v3813
    %v3815 = vshll.u32 683565275, %v3812
    %v3816 = vshrl.u32 2475754826, %v3813
    %v3817 = vor.u32 %v3815, %v3816
    %v3818 = vshll.u32 2475754826, %v3812
    %v3819 = vshrl.u32 2131351028, %v3813
    %v3820 = vor.u32 %v3818, %v3819
    %v3821 = vshll.u32 2131351028, %v3812
    %v3822 = vshrl.u32 2102212464, %v3813
    %v3823 = vor.u32 %v3821, %v3822
    %v3824 = vshll.u32 2102212464, %v3812
    %v3825 = vshrl.u32 920167782, %v3813
    %v3826 = vor.u32 %v3824, %v3825
    %v3827 = vshll.u32 920167782, %v3812
    %v3828 = vshrl.u32 1326507024, %v3813
    %v3829 = vor.u32 %v3827, %v3828
    %vm3830 = vcmp.lt.s32.totalorder %v3811, 1
    %vm3831 = vcmp.lt.s32.totalorder %v3811, 2
    %vm3832 = vcmp.lt.s32.totalorder %v3811, 3
    %vm3833 = vcmp.lt.s32.totalorder %v3811, 4
    %v3834 = vsel %vm3830, %v3814, %v3817
    %v3835 = vsel %vm3833, %v3823, 2102212464
    %v3836 = vsel %vm3832, %v3820, %v3835
    %v3837 = vsel %vm3831, %v3834, %v3836
    %v3838 = vsel %vm3830, %v3817, %v3820
    %v3839 = vsel %vm3833, %v3826, 920167782
    %v3840 = vsel %vm3832, %v3823, %v3839
    %v3841 = vsel %vm3831, %v3838, %v3840
    %v3842 = vsel %vm3830, %v3820, %v3823
    %v3843 = vsel %vm3833, %v3829, 1326507024
    %v3844 = vsel %vm3832, %v3826, %v3843
    %v3845 = vsel %vm3831, %v3842, %v3844
    %v3846 = vshll.u32 %v3806, 8
    %v3847 = vmul.u32.u64.compose %v3846, %v3845
    %v3848 = vextract.low.u32 %v3847
    %v3849 = vextract.high.u32 %v3847
    %v3850 = vmul.u32.u64.compose %v3846, %v3841
    %v3851 = vextract.low.u32 %v3850
    %v3852 = vextract.high.u32 %v3850
    %v3853 = vmul.u32 %v3846, %v3837
    %v3854 = vadd.s32 %v3849, %v3851
    %vm3855 = vc.u32 %v3849, %v3851
    %v3856 = vadd.s32 %v3852, 1
    %v3857 = vsel %vm3855, %v3856, %v3852
    %v3858 = vadd.s32 %v3853, %v3857
    %v3859 = vadd.s32 %v3858, 536870912
    %v3860 = vshrl.u32 %v3859, 30
    %v3861 = vshll.u32 %v3860, 30
    %v3862 = vsub.s32 %v3858, %v3861
    %vm3863 = vcmp.lt.s32.totalorder %v3862, 0
    %v3864 = vsub.s32 0, %v3862
    %v3865 = vsel %vm3863, %v3864, %v3862
    %v3866 = vclz %v3865
    %v3867 = vsub.s32 %v3866, 2
    %vm3868 = vcmp.gt.s32.totalorder 0, %v3867
    %v3869 = vsel %vm3868, 0, %v3867
    %v3870 = vsub.s32 32, %v3869
    %v3871 = vshll.u32 %v3862, %v3869
    %v3872 = vshrl.u32 %v3854, %v3870
    %v3873 = vor.u32 %v3871, %v3872
    %v3874 = vsub.s32 4294967266, %v3869
    %v3875 = vadd.s32 %v3874, 127
    %v3876 = vshll.u32 %v3875, 23
    %v3877 = vor.u32 4788187, %v3876
    %v3878 = vand.u32 2147483647, %v3877
    %v3880 = vcvt.s32.f32 %v3873
    %v3881 = vmul.f32 %v3880, %v3878
    %v3882 = vxor.u32 %v3881, 2147483648
    %v3883 = vsel %vm3800, %v3882, %v3881
    %v3884 = vsub.s32 4, %v3860
    %v3885 = vsel %vm3800, %v3884, %v3860
    %v3886 = vsel %vm3799, %v1318, %v3883
    %v3887 = vsel %vm3799, 0, %v3885
    %v3888 = vcosq.f32.pop %v3886
    %v3889 = vsinq.f32.pop %v3886
    %vm3890 = vweird.f32 %v1318
    %v3891 = vand.u32 %v3887, 3
    %vm3892 = vcmp.lt.s32.totalorder %v3891, 2
    %vm3893 = vcmp.eq.s32.totalorder %v3891, 0
    %v3894 = vxor.u32 %v3889, 2147483648
    %v3895 = vsel %vm3893, %v3888, %v3894
    %vm3896 = vcmp.eq.s32.totalorder %v3891, 2
    %v3897 = vxor.u32 %v3888, 2147483648
    %v3898 = vsel %vm3896, %v3897, %v3889
    %v3899 = vsel %vm3892, %v3895, %v3898
    %v3900 = vsel %vm3890, nan, %v3899
    %v3901 = vand.u32 2147483647, %v1319
    %vm3902 = vcmp.le.f32.partialorder %v3901, 0.7853982
    %vm3903 = vcmp.lt.s32.totalorder %v1319, 0
    %v3904 = vand.u32 %v1319, 2139095040
    %v3905 = vshrl.u32 %v3904, 23
    %v3906 = vsub.s32 %v3905, 127
    %v3907 = vand.u32 2147483647, %v1319
    %v3908 = vand.u32 %v3907, 8388607
    %v3909 = vor.u32 %v3908, 8388608
    %v3910 = vsub.s32 0, %v3909
    %v3911 = vadd.s32 %v3906, 1
    %vm3912 = vcmp.gt.s32.totalorder %v3911, 0
    %v3913 = vsel %vm3912, %v3911, 0
    %v3914 = vshrl.u32 %v3913, 5
    %v3915 = vand.u32 %v3913, 31
    %v3916 = vsub.s32 32, %v3915
    %v3917 = vshrl.u32 683565275, %v3916
    %v3918 = vshll.u32 683565275, %v3915
    %v3919 = vshrl.u32 2475754826, %v3916
    %v3920 = vor.u32 %v3918, %v3919
    %v3921 = vshll.u32 2475754826, %v3915
    %v3922 = vshrl.u32 2131351028, %v3916
    %v3923 = vor.u32 %v3921, %v3922
    %v3924 = vshll.u32 2131351028, %v3915
    %v3925 = vshrl.u32 2102212464, %v3916
    %v3926 = vor.u32 %v3924, %v3925
    %v3927 = vshll.u32 2102212464, %v3915
    %v3928 = vshrl.u32 920167782, %v3916
    %v3929 = vor.u32 %v3927, %v3928
    %v3930 = vshll.u32 920167782, %v3915
    %v3931 = vshrl.u32 1326507024, %v3916
    %v3932 = vor.u32 %v3930, %v3931
    %vm3933 = vcmp.lt.s32.totalorder %v3914, 1
    %vm3934 = vcmp.lt.s32.totalorder %v3914, 2
    %vm3935 = vcmp.lt.s32.totalorder %v3914, 3
    %vm3936 = vcmp.lt.s32.totalorder %v3914, 4
    %v3937 = vsel %vm3933, %v3917, %v3920
    %v3938 = vsel %vm3936, %v3926, 2102212464
    %v3939 = vsel %vm3935, %v3923, %v3938
    %v3940 = vsel %vm3934, %v3937, %v3939
    %v3941 = vsel %vm3933, %v3920, %v3923
    %v3942 = vsel %vm3936, %v3929, 920167782
    %v3943 = vsel %vm3935, %v3926, %v3942
    %v3944 = vsel %vm3934, %v3941, %v3943
    %v3945 = vsel %vm3933, %v3923, %v3926
    %v3946 = vsel %vm3936, %v3932, 1326507024
    %v3947 = vsel %vm3935, %v3929, %v3946
    %v3948 = vsel %vm3934, %v3945, %v3947
    %v3949 = vshll.u32 %v3909, 8
    %v3950 = vmul.u32.u64.compose %v3949, %v3948
    %v3951 = vextract.low.u32 %v3950
    %v3952 = vextract.high.u32 %v3950
    %v3953 = vmul.u32.u64.compose %v3949, %v3944
    %v3954 = vextract.low.u32 %v3953
    %v3955 = vextract.high.u32 %v3953
    %v3956 = vmul.u32 %v3949, %v3940
    %v3957 = vadd.s32 %v3952, %v3954
    %vm3958 = vc.u32 %v3952, %v3954
    %v3959 = vadd.s32 %v3955, 1
    %v3960 = vsel %vm3958, %v3959, %v3955
    %v3961 = vadd.s32 %v3956, %v3960
    %v3962 = vadd.s32 %v3961, 536870912
    %v3963 = vshrl.u32 %v3962, 30
    %v3964 = vshll.u32 %v3963, 30
    %v3965 = vsub.s32 %v3961, %v3964
    %vm3966 = vcmp.lt.s32.totalorder %v3965, 0
    %v3967 = vsub.s32 0, %v3965
    %v3968 = vsel %vm3966, %v3967, %v3965
    %v3969 = vclz %v3968
    %v3970 = vsub.s32 %v3969, 2
    %vm3971 = vcmp.gt.s32.totalorder 0, %v3970
    %v3972 = vsel %vm3971, 0, %v3970
    %v3973 = vsub.s32 32, %v3972
    %v3974 = vshll.u32 %v3965, %v3972
    %v3975 = vshrl.u32 %v3957, %v3973
    %v3976 = vor.u32 %v3974, %v3975
    %v3977 = vsub.s32 4294967266, %v3972
    %v3978 = vadd.s32 %v3977, 127
    %v3979 = vshll.u32 %v3978, 23
    %v3980 = vor.u32 4788187, %v3979
    %v3981 = vand.u32 2147483647, %v3980
    %v3983 = vcvt.s32.f32 %v3976
    %v3984 = vmul.f32 %v3983, %v3981
    %v3985 = vxor.u32 %v3984, 2147483648
    %v3986 = vsel %vm3903, %v3985, %v3984
    %v3987 = vsub.s32 4, %v3963
    %v3988 = vsel %vm3903, %v3987, %v3963
    %v3989 = vsel %vm3902, %v1319, %v3986
    %v3990 = vsel %vm3902, 0, %v3988
    %v3991 = vcosq.f32.pop %v3989
    %v3992 = vsinq.f32.pop %v3989
    %vm3993 = vweird.f32 %v1319
    %v3994 = vand.u32 %v3990, 3
    %vm3995 = vcmp.lt.s32.totalorder %v3994, 2
    %vm3996 = vcmp.eq.s32.totalorder %v3994, 0
    %v3997 = vxor.u32 %v3992, 2147483648
    %v3998 = vsel %vm3996, %v3991, %v3997
    %vm3999 = vcmp.eq.s32.totalorder %v3994, 2
    %v4000 = vxor.u32 %v3991, 2147483648
    %v4001 = vsel %vm3999, %v4000, %v3992
    %v4002 = vsel %vm3995, %v3998, %v4001
    %v4003 = vsel %vm3993, nan, %v4002
    %v4004 = vand.u32 2147483647, %v1320
    %vm4005 = vcmp.le.f32.partialorder %v4004, 0.7853982
    %vm4006 = vcmp.lt.s32.totalorder %v1320, 0
    %v4007 = vand.u32 %v1320, 2139095040
    %v4008 = vshrl.u32 %v4007, 23
    %v4009 = vsub.s32 %v4008, 127
    %v4010 = vand.u32 2147483647, %v1320
    %v4011 = vand.u32 %v4010, 8388607
    %v4012 = vor.u32 %v4011, 8388608
    %v4013 = vsub.s32 0, %v4012
    %v4014 = vadd.s32 %v4009, 1
    %vm4015 = vcmp.gt.s32.totalorder %v4014, 0
    %v4016 = vsel %vm4015, %v4014, 0
    %v4017 = vshrl.u32 %v4016, 5
    %v4018 = vand.u32 %v4016, 31
    %v4019 = vsub.s32 32, %v4018
    %v4020 = vshrl.u32 683565275, %v4019
    %v4021 = vshll.u32 683565275, %v4018
    %v4022 = vshrl.u32 2475754826, %v4019
    %v4023 = vor.u32 %v4021, %v4022
    %v4024 = vshll.u32 2475754826, %v4018
    %v4025 = vshrl.u32 2131351028, %v4019
    %v4026 = vor.u32 %v4024, %v4025
    %v4027 = vshll.u32 2131351028, %v4018
    %v4028 = vshrl.u32 2102212464, %v4019
    %v4029 = vor.u32 %v4027, %v4028
    %v4030 = vshll.u32 2102212464, %v4018
    %v4031 = vshrl.u32 920167782, %v4019
    %v4032 = vor.u32 %v4030, %v4031
    %v4033 = vshll.u32 920167782, %v4018
    %v4034 = vshrl.u32 1326507024, %v4019
    %v4035 = vor.u32 %v4033, %v4034
    %vm4036 = vcmp.lt.s32.totalorder %v4017, 1
    %vm4037 = vcmp.lt.s32.totalorder %v4017, 2
    %vm4038 = vcmp.lt.s32.totalorder %v4017, 3
    %vm4039 = vcmp.lt.s32.totalorder %v4017, 4
    %v4040 = vsel %vm4036, %v4020, %v4023
    %v4041 = vsel %vm4039, %v4029, 2102212464
    %v4042 = vsel %vm4038, %v4026, %v4041
    %v4043 = vsel %vm4037, %v4040, %v4042
    %v4044 = vsel %vm4036, %v4023, %v4026
    %v4045 = vsel %vm4039, %v4032, 920167782
    %v4046 = vsel %vm4038, %v4029, %v4045
    %v4047 = vsel %vm4037, %v4044, %v4046
    %v4048 = vsel %vm4036, %v4026, %v4029
    %v4049 = vsel %vm4039, %v4035, 1326507024
    %v4050 = vsel %vm4038, %v4032, %v4049
    %v4051 = vsel %vm4037, %v4048, %v4050
    %v4052 = vshll.u32 %v4012, 8
    %v4053 = vmul.u32.u64.compose %v4052, %v4051
    %v4054 = vextract.low.u32 %v4053
    %v4055 = vextract.high.u32 %v4053
    %v4056 = vmul.u32.u64.compose %v4052, %v4047
    %v4057 = vextract.low.u32 %v4056
    %v4058 = vextract.high.u32 %v4056
    %v4059 = vmul.u32 %v4052, %v4043
    %v4060 = vadd.s32 %v4055, %v4057
    %vm4061 = vc.u32 %v4055, %v4057
    %v4062 = vadd.s32 %v4058, 1
    %v4063 = vsel %vm4061, %v4062, %v4058
    %v4064 = vadd.s32 %v4059, %v4063
    %v4065 = vadd.s32 %v4064, 536870912
    %v4066 = vshrl.u32 %v4065, 30
    %v4067 = vshll.u32 %v4066, 30
    %v4068 = vsub.s32 %v4064, %v4067
    %vm4069 = vcmp.lt.s32.totalorder %v4068, 0
    %v4070 = vsub.s32 0, %v4068
    %v4071 = vsel %vm4069, %v4070, %v4068
    %v4072 = vclz %v4071
    %v4073 = vsub.s32 %v4072, 2
    %vm4074 = vcmp.gt.s32.totalorder 0, %v4073
    %v4075 = vsel %vm4074, 0, %v4073
    %v4076 = vsub.s32 32, %v4075
    %v4077 = vshll.u32 %v4068, %v4075
    %v4078 = vshrl.u32 %v4060, %v4076
    %v4079 = vor.u32 %v4077, %v4078
    %v4080 = vsub.s32 4294967266, %v4075
    %v4081 = vadd.s32 %v4080, 127
    %v4082 = vshll.u32 %v4081, 23
    %v4083 = vor.u32 4788187, %v4082
    %v4084 = vand.u32 2147483647, %v4083
    %v4086 = vcvt.s32.f32 %v4079
    %v4087 = vmul.f32 %v4086, %v4084
    %v4088 = vxor.u32 %v4087, 2147483648
    %v4089 = vsel %vm4006, %v4088, %v4087
    %v4090 = vsub.s32 4, %v4066
    %v4091 = vsel %vm4006, %v4090, %v4066
    %v4092 = vsel %vm4005, %v1320, %v4089
    %v4093 = vsel %vm4005, 0, %v4091
    %v4094 = vcosq.f32.pop %v4092
    %v4095 = vsinq.f32.pop %v4092
    %vm4096 = vweird.f32 %v1320
    %v4097 = vand.u32 %v4093, 3
    %vm4098 = vcmp.lt.s32.totalorder %v4097, 2
    %vm4099 = vcmp.eq.s32.totalorder %v4097, 0
    %v4100 = vxor.u32 %v4095, 2147483648
    %v4101 = vsel %vm4099, %v4094, %v4100
    %vm4102 = vcmp.eq.s32.totalorder %v4097, 2
    %v4103 = vxor.u32 %v4094, 2147483648
    %v4104 = vsel %vm4102, %v4103, %v4095
    %v4105 = vsel %vm4098, %v4101, %v4104
    %v4106 = vsel %vm4096, nan, %v4105
    %v4107 = vand.u32 2147483647, %v1321
    %vm4108 = vcmp.le.f32.partialorder %v4107, 0.7853982
    %vm4109 = vcmp.lt.s32.totalorder %v1321, 0
    %v4110 = vand.u32 %v1321, 2139095040
    %v4111 = vshrl.u32 %v4110, 23
    %v4112 = vsub.s32 %v4111, 127
    %v4113 = vand.u32 2147483647, %v1321
    %v4114 = vand.u32 %v4113, 8388607
    %v4115 = vor.u32 %v4114, 8388608
    %v4116 = vsub.s32 0, %v4115
    %v4117 = vadd.s32 %v4112, 1
    %vm4118 = vcmp.gt.s32.totalorder %v4117, 0
    %v4119 = vsel %vm4118, %v4117, 0
    %v4120 = vshrl.u32 %v4119, 5
    %v4121 = vand.u32 %v4119, 31
    %v4122 = vsub.s32 32, %v4121
    %v4123 = vshrl.u32 683565275, %v4122
    %v4124 = vshll.u32 683565275, %v4121
    %v4125 = vshrl.u32 2475754826, %v4122
    %v4126 = vor.u32 %v4124, %v4125
    %v4127 = vshll.u32 2475754826, %v4121
    %v4128 = vshrl.u32 2131351028, %v4122
    %v4129 = vor.u32 %v4127, %v4128
    %v4130 = vshll.u32 2131351028, %v4121
    %v4131 = vshrl.u32 2102212464, %v4122
    %v4132 = vor.u32 %v4130, %v4131
    %v4133 = vshll.u32 2102212464, %v4121
    %v4134 = vshrl.u32 920167782, %v4122
    %v4135 = vor.u32 %v4133, %v4134
    %v4136 = vshll.u32 920167782, %v4121
    %v4137 = vshrl.u32 1326507024, %v4122
    %v4138 = vor.u32 %v4136, %v4137
    %vm4139 = vcmp.lt.s32.totalorder %v4120, 1
    %vm4140 = vcmp.lt.s32.totalorder %v4120, 2
    %vm4141 = vcmp.lt.s32.totalorder %v4120, 3
    %vm4142 = vcmp.lt.s32.totalorder %v4120, 4
    %v4143 = vsel %vm4139, %v4123, %v4126
    %v4144 = vsel %vm4142, %v4132, 2102212464
    %v4145 = vsel %vm4141, %v4129, %v4144
    %v4146 = vsel %vm4140, %v4143, %v4145
    %v4147 = vsel %vm4139, %v4126, %v4129
    %v4148 = vsel %vm4142, %v4135, 920167782
    %v4149 = vsel %vm4141, %v4132, %v4148
    %v4150 = vsel %vm4140, %v4147, %v4149
    %v4151 = vsel %vm4139, %v4129, %v4132
    %v4152 = vsel %vm4142, %v4138, 1326507024
    %v4153 = vsel %vm4141, %v4135, %v4152
    %v4154 = vsel %vm4140, %v4151, %v4153
    %v4155 = vshll.u32 %v4115, 8
    %v4156 = vmul.u32.u64.compose %v4155, %v4154
    %v4157 = vextract.low.u32 %v4156
    %v4158 = vextract.high.u32 %v4156
    %v4159 = vmul.u32.u64.compose %v4155, %v4150
    %v4160 = vextract.low.u32 %v4159
    %v4161 = vextract.high.u32 %v4159
    %v4162 = vmul.u32 %v4155, %v4146
    %v4163 = vadd.s32 %v4158, %v4160
    %vm4164 = vc.u32 %v4158, %v4160
    %v4165 = vadd.s32 %v4161, 1
    %v4166 = vsel %vm4164, %v4165, %v4161
    %v4167 = vadd.s32 %v4162, %v4166
    %v4168 = vadd.s32 %v4167, 536870912
    %v4169 = vshrl.u32 %v4168, 30
    %v4170 = vshll.u32 %v4169, 30
    %v4171 = vsub.s32 %v4167, %v4170
    %vm4172 = vcmp.lt.s32.totalorder %v4171, 0
    %v4173 = vsub.s32 0, %v4171
    %v4174 = vsel %vm4172, %v4173, %v4171
    %v4175 = vclz %v4174
    %v4176 = vsub.s32 %v4175, 2
    %vm4177 = vcmp.gt.s32.totalorder 0, %v4176
    %v4178 = vsel %vm4177, 0, %v4176
    %v4179 = vsub.s32 32, %v4178
    %v4180 = vshll.u32 %v4171, %v4178
    %v4181 = vshrl.u32 %v4163, %v4179
    %v4182 = vor.u32 %v4180, %v4181
    %v4183 = vsub.s32 4294967266, %v4178
    %v4184 = vadd.s32 %v4183, 127
    %v4185 = vshll.u32 %v4184, 23
    %v4186 = vor.u32 4788187, %v4185
    %v4187 = vand.u32 2147483647, %v4186
    %v4189 = vcvt.s32.f32 %v4182
    %v4190 = vmul.f32 %v4189, %v4187
    %v4191 = vxor.u32 %v4190, 2147483648
    %v4192 = vsel %vm4109, %v4191, %v4190
    %v4193 = vsub.s32 4, %v4169
    %v4194 = vsel %vm4109, %v4193, %v4169
    %v4195 = vsel %vm4108, %v1321, %v4192
    %v4196 = vsel %vm4108, 0, %v4194
    %v4197 = vcosq.f32.pop %v4195
    %v4198 = vsinq.f32.pop %v4195
    %vm4199 = vweird.f32 %v1321
    %v4200 = vand.u32 %v4196, 3
    %vm4201 = vcmp.lt.s32.totalorder %v4200, 2
    %vm4202 = vcmp.eq.s32.totalorder %v4200, 0
    %v4203 = vxor.u32 %v4198, 2147483648
    %v4204 = vsel %vm4202, %v4197, %v4203
    %vm4205 = vcmp.eq.s32.totalorder %v4200, 2
    %v4206 = vxor.u32 %v4197, 2147483648
    %v4207 = vsel %vm4205, %v4206, %v4198
    %v4208 = vsel %vm4201, %v4204, %v4207
    %v4209 = vsel %vm4199, nan, %v4208
    %v4210 = vand.u32 2147483647, %v1322
    %vm4211 = vcmp.le.f32.partialorder %v4210, 0.7853982
    %vm4212 = vcmp.lt.s32.totalorder %v1322, 0
    %v4213 = vand.u32 %v1322, 2139095040
    %v4214 = vshrl.u32 %v4213, 23
    %v4215 = vsub.s32 %v4214, 127
    %v4216 = vand.u32 2147483647, %v1322
    %v4217 = vand.u32 %v4216, 8388607
    %v4218 = vor.u32 %v4217, 8388608
    %v4219 = vsub.s32 0, %v4218
    %v4220 = vadd.s32 %v4215, 1
    %vm4221 = vcmp.gt.s32.totalorder %v4220, 0
    %v4222 = vsel %vm4221, %v4220, 0
    %v4223 = vshrl.u32 %v4222, 5
    %v4224 = vand.u32 %v4222, 31
    %v4225 = vsub.s32 32, %v4224
    %v4226 = vshrl.u32 683565275, %v4225
    %v4227 = vshll.u32 683565275, %v4224
    %v4228 = vshrl.u32 2475754826, %v4225
    %v4229 = vor.u32 %v4227, %v4228
    %v4230 = vshll.u32 2475754826, %v4224
    %v4231 = vshrl.u32 2131351028, %v4225
    %v4232 = vor.u32 %v4230, %v4231
    %v4233 = vshll.u32 2131351028, %v4224
    %v4234 = vshrl.u32 2102212464, %v4225
    %v4235 = vor.u32 %v4233, %v4234
    %v4236 = vshll.u32 2102212464, %v4224
    %v4237 = vshrl.u32 920167782, %v4225
    %v4238 = vor.u32 %v4236, %v4237
    %v4239 = vshll.u32 920167782, %v4224
    %v4240 = vshrl.u32 1326507024, %v4225
    %v4241 = vor.u32 %v4239, %v4240
    %vm4242 = vcmp.lt.s32.totalorder %v4223, 1
    %vm4243 = vcmp.lt.s32.totalorder %v4223, 2
    %vm4244 = vcmp.lt.s32.totalorder %v4223, 3
    %vm4245 = vcmp.lt.s32.totalorder %v4223, 4
    %v4246 = vsel %vm4242, %v4226, %v4229
    %v4247 = vsel %vm4245, %v4235, 2102212464
    %v4248 = vsel %vm4244, %v4232, %v4247
    %v4249 = vsel %vm4243, %v4246, %v4248
    %v4250 = vsel %vm4242, %v4229, %v4232
    %v4251 = vsel %vm4245, %v4238, 920167782
    %v4252 = vsel %vm4244, %v4235, %v4251
    %v4253 = vsel %vm4243, %v4250, %v4252
    %v4254 = vsel %vm4242, %v4232, %v4235
    %v4255 = vsel %vm4245, %v4241, 1326507024
    %v4256 = vsel %vm4244, %v4238, %v4255
    %v4257 = vsel %vm4243, %v4254, %v4256
    %v4258 = vshll.u32 %v4218, 8
    %v4259 = vmul.u32.u64.compose %v4258, %v4257
    %v4260 = vextract.low.u32 %v4259
    %v4261 = vextract.high.u32 %v4259
    %v4262 = vmul.u32.u64.compose %v4258, %v4253
    %v4263 = vextract.low.u32 %v4262
    %v4264 = vextract.high.u32 %v4262
    %v4265 = vmul.u32 %v4258, %v4249
    %v4266 = vadd.s32 %v4261, %v4263
    %vm4267 = vc.u32 %v4261, %v4263
    %v4268 = vadd.s32 %v4264, 1
    %v4269 = vsel %vm4267, %v4268, %v4264
    %v4270 = vadd.s32 %v4265, %v4269
    %v4271 = vadd.s32 %v4270, 536870912
    %v4272 = vshrl.u32 %v4271, 30
    %v4273 = vshll.u32 %v4272, 30
    %v4274 = vsub.s32 %v4270, %v4273
    %vm4275 = vcmp.lt.s32.totalorder %v4274, 0
    %v4276 = vsub.s32 0, %v4274
    %v4277 = vsel %vm4275, %v4276, %v4274
    %v4278 = vclz %v4277
    %v4279 = vsub.s32 %v4278, 2
    %vm4280 = vcmp.gt.s32.totalorder 0, %v4279
    %v4281 = vsel %vm4280, 0, %v4279
    %v4282 = vsub.s32 32, %v4281
    %v4283 = vshll.u32 %v4274, %v4281
    %v4284 = vshrl.u32 %v4266, %v4282
    %v4285 = vor.u32 %v4283, %v4284
    %v4286 = vsub.s32 4294967266, %v4281
    %v4287 = vadd.s32 %v4286, 127
    %v4288 = vshll.u32 %v4287, 23
    %v4289 = vor.u32 4788187, %v4288
    %v4290 = vand.u32 2147483647, %v4289
    %v4292 = vcvt.s32.f32 %v4285
    %v4293 = vmul.f32 %v4292, %v4290
    %v4294 = vxor.u32 %v4293, 2147483648
    %v4295 = vsel %vm4212, %v4294, %v4293
    %v4296 = vsub.s32 4, %v4272
    %v4297 = vsel %vm4212, %v4296, %v4272
    %v4298 = vsel %vm4211, %v1322, %v4295
    %v4299 = vsel %vm4211, 0, %v4297
    %v4300 = vcosq.f32.pop %v4298
    %v4301 = vsinq.f32.pop %v4298
    %vm4302 = vweird.f32 %v1322
    %v4303 = vand.u32 %v4299, 3
    %vm4304 = vcmp.lt.s32.totalorder %v4303, 2
    %vm4305 = vcmp.eq.s32.totalorder %v4303, 0
    %v4306 = vxor.u32 %v4301, 2147483648
    %v4307 = vsel %vm4305, %v4300, %v4306
    %vm4308 = vcmp.eq.s32.totalorder %v4303, 2
    %v4309 = vxor.u32 %v4300, 2147483648
    %v4310 = vsel %vm4308, %v4309, %v4301
    %v4311 = vsel %vm4304, %v4307, %v4310
    %v4312 = vsel %vm4302, nan, %v4311
    %v4313 = vand.u32 2147483647, %v1323
    %vm4314 = vcmp.le.f32.partialorder %v4313, 0.7853982
    %vm4315 = vcmp.lt.s32.totalorder %v1323, 0
    %v4316 = vand.u32 %v1323, 2139095040
    %v4317 = vshrl.u32 %v4316, 23
    %v4318 = vsub.s32 %v4317, 127
    %v4319 = vand.u32 2147483647, %v1323
    %v4320 = vand.u32 %v4319, 8388607
    %v4321 = vor.u32 %v4320, 8388608
    %v4322 = vsub.s32 0, %v4321
    %v4323 = vadd.s32 %v4318, 1
    %vm4324 = vcmp.gt.s32.totalorder %v4323, 0
    %v4325 = vsel %vm4324, %v4323, 0
    %v4326 = vshrl.u32 %v4325, 5
    %v4327 = vand.u32 %v4325, 31
    %v4328 = vsub.s32 32, %v4327
    %v4329 = vshrl.u32 683565275, %v4328
    %v4330 = vshll.u32 683565275, %v4327
    %v4331 = vshrl.u32 2475754826, %v4328
    %v4332 = vor.u32 %v4330, %v4331
    %v4333 = vshll.u32 2475754826, %v4327
    %v4334 = vshrl.u32 2131351028, %v4328
    %v4335 = vor.u32 %v4333, %v4334
    %v4336 = vshll.u32 2131351028, %v4327
    %v4337 = vshrl.u32 2102212464, %v4328
    %v4338 = vor.u32 %v4336, %v4337
    %v4339 = vshll.u32 2102212464, %v4327
    %v4340 = vshrl.u32 920167782, %v4328
    %v4341 = vor.u32 %v4339, %v4340
    %v4342 = vshll.u32 920167782, %v4327
    %v4343 = vshrl.u32 1326507024, %v4328
    %v4344 = vor.u32 %v4342, %v4343
    %vm4345 = vcmp.lt.s32.totalorder %v4326, 1
    %vm4346 = vcmp.lt.s32.totalorder %v4326, 2
    %vm4347 = vcmp.lt.s32.totalorder %v4326, 3
    %vm4348 = vcmp.lt.s32.totalorder %v4326, 4
    %v4349 = vsel %vm4345, %v4329, %v4332
    %v4350 = vsel %vm4348, %v4338, 2102212464
    %v4351 = vsel %vm4347, %v4335, %v4350
    %v4352 = vsel %vm4346, %v4349, %v4351
    %v4353 = vsel %vm4345, %v4332, %v4335
    %v4354 = vsel %vm4348, %v4341, 920167782
    %v4355 = vsel %vm4347, %v4338, %v4354
    %v4356 = vsel %vm4346, %v4353, %v4355
    %v4357 = vsel %vm4345, %v4335, %v4338
    %v4358 = vsel %vm4348, %v4344, 1326507024
    %v4359 = vsel %vm4347, %v4341, %v4358
    %v4360 = vsel %vm4346, %v4357, %v4359
    %v4361 = vshll.u32 %v4321, 8
    %v4362 = vmul.u32.u64.compose %v4361, %v4360
    %v4363 = vextract.low.u32 %v4362
    %v4364 = vextract.high.u32 %v4362
    %v4365 = vmul.u32.u64.compose %v4361, %v4356
    %v4366 = vextract.low.u32 %v4365
    %v4367 = vextract.high.u32 %v4365
    %v4368 = vmul.u32 %v4361, %v4352
    %v4369 = vadd.s32 %v4364, %v4366
    %vm4370 = vc.u32 %v4364, %v4366
    %v4371 = vadd.s32 %v4367, 1
    %v4372 = vsel %vm4370, %v4371, %v4367
    %v4373 = vadd.s32 %v4368, %v4372
    %v4374 = vadd.s32 %v4373, 536870912
    %v4375 = vshrl.u32 %v4374, 30
    %v4376 = vshll.u32 %v4375, 30
    %v4377 = vsub.s32 %v4373, %v4376
    %vm4378 = vcmp.lt.s32.totalorder %v4377, 0
    %v4379 = vsub.s32 0, %v4377
    %v4380 = vsel %vm4378, %v4379, %v4377
    %v4381 = vclz %v4380
    %v4382 = vsub.s32 %v4381, 2
    %vm4383 = vcmp.gt.s32.totalorder 0, %v4382
    %v4384 = vsel %vm4383, 0, %v4382
    %v4385 = vsub.s32 32, %v4384
    %v4386 = vshll.u32 %v4377, %v4384
    %v4387 = vshrl.u32 %v4369, %v4385
    %v4388 = vor.u32 %v4386, %v4387
    %v4389 = vsub.s32 4294967266, %v4384
    %v4390 = vadd.s32 %v4389, 127
    %v4391 = vshll.u32 %v4390, 23
    %v4392 = vor.u32 4788187, %v4391
    %v4393 = vand.u32 2147483647, %v4392
    %v4395 = vcvt.s32.f32 %v4388
    %v4396 = vmul.f32 %v4395, %v4393
    %v4397 = vxor.u32 %v4396, 2147483648
    %v4398 = vsel %vm4315, %v4397, %v4396
    %v4399 = vsub.s32 4, %v4375
    %v4400 = vsel %vm4315, %v4399, %v4375
    %v4401 = vsel %vm4314, %v1323, %v4398
    %v4402 = vsel %vm4314, 0, %v4400
    %v4403 = vcosq.f32.pop %v4401
    %v4404 = vsinq.f32.pop %v4401
    %vm4405 = vweird.f32 %v1323
    %v4406 = vand.u32 %v4402, 3
    %vm4407 = vcmp.lt.s32.totalorder %v4406, 2
    %vm4408 = vcmp.eq.s32.totalorder %v4406, 0
    %v4409 = vxor.u32 %v4404, 2147483648
    %v4410 = vsel %vm4408, %v4403, %v4409
    %vm4411 = vcmp.eq.s32.totalorder %v4406, 2
    %v4412 = vxor.u32 %v4403, 2147483648
    %v4413 = vsel %vm4411, %v4412, %v4404
    %v4414 = vsel %vm4407, %v4410, %v4413
    %v4415 = vsel %vm4405, nan, %v4414
    %v4416 = vand.u32 2147483647, %v1324
    %vm4417 = vcmp.le.f32.partialorder %v4416, 0.7853982
    %vm4418 = vcmp.lt.s32.totalorder %v1324, 0
    %v4419 = vand.u32 %v1324, 2139095040
    %v4420 = vshrl.u32 %v4419, 23
    %v4421 = vsub.s32 %v4420, 127
    %v4422 = vand.u32 2147483647, %v1324
    %v4423 = vand.u32 %v4422, 8388607
    %v4424 = vor.u32 %v4423, 8388608
    %v4425 = vsub.s32 0, %v4424
    %v4426 = vadd.s32 %v4421, 1
    %vm4427 = vcmp.gt.s32.totalorder %v4426, 0
    %v4428 = vsel %vm4427, %v4426, 0
    %v4429 = vshrl.u32 %v4428, 5
    %v4430 = vand.u32 %v4428, 31
    %v4431 = vsub.s32 32, %v4430
    %v4432 = vshrl.u32 683565275, %v4431
    %v4433 = vshll.u32 683565275, %v4430
    %v4434 = vshrl.u32 2475754826, %v4431
    %v4435 = vor.u32 %v4433, %v4434
    %v4436 = vshll.u32 2475754826, %v4430
    %v4437 = vshrl.u32 2131351028, %v4431
    %v4438 = vor.u32 %v4436, %v4437
    %v4439 = vshll.u32 2131351028, %v4430
    %v4440 = vshrl.u32 2102212464, %v4431
    %v4441 = vor.u32 %v4439, %v4440
    %v4442 = vshll.u32 2102212464, %v4430
    %v4443 = vshrl.u32 920167782, %v4431
    %v4444 = vor.u32 %v4442, %v4443
    %v4445 = vshll.u32 920167782, %v4430
    %v4446 = vshrl.u32 1326507024, %v4431
    %v4447 = vor.u32 %v4445, %v4446
    %vm4448 = vcmp.lt.s32.totalorder %v4429, 1
    %vm4449 = vcmp.lt.s32.totalorder %v4429, 2
    %vm4450 = vcmp.lt.s32.totalorder %v4429, 3
    %vm4451 = vcmp.lt.s32.totalorder %v4429, 4
    %v4452 = vsel %vm4448, %v4432, %v4435
    %v4453 = vsel %vm4451, %v4441, 2102212464
    %v4454 = vsel %vm4450, %v4438, %v4453
    %v4455 = vsel %vm4449, %v4452, %v4454
    %v4456 = vsel %vm4448, %v4435, %v4438
    %v4457 = vsel %vm4451, %v4444, 920167782
    %v4458 = vsel %vm4450, %v4441, %v4457
    %v4459 = vsel %vm4449, %v4456, %v4458
    %v4460 = vsel %vm4448, %v4438, %v4441
    %v4461 = vsel %vm4451, %v4447, 1326507024
    %v4462 = vsel %vm4450, %v4444, %v4461
    %v4463 = vsel %vm4449, %v4460, %v4462
    %v4464 = vshll.u32 %v4424, 8
    %v4465 = vmul.u32.u64.compose %v4464, %v4463
    %v4466 = vextract.low.u32 %v4465
    %v4467 = vextract.high.u32 %v4465
    %v4468 = vmul.u32.u64.compose %v4464, %v4459
    %v4469 = vextract.low.u32 %v4468
    %v4470 = vextract.high.u32 %v4468
    %v4471 = vmul.u32 %v4464, %v4455
    %v4472 = vadd.s32 %v4467, %v4469
    %vm4473 = vc.u32 %v4467, %v4469
    %v4474 = vadd.s32 %v4470, 1
    %v4475 = vsel %vm4473, %v4474, %v4470
    %v4476 = vadd.s32 %v4471, %v4475
    %v4477 = vadd.s32 %v4476, 536870912
    %v4478 = vshrl.u32 %v4477, 30
    %v4479 = vshll.u32 %v4478, 30
    %v4480 = vsub.s32 %v4476, %v4479
    %vm4481 = vcmp.lt.s32.totalorder %v4480, 0
    %v4482 = vsub.s32 0, %v4480
    %v4483 = vsel %vm4481, %v4482, %v4480
    %v4484 = vclz %v4483
    %v4485 = vsub.s32 %v4484, 2
    %vm4486 = vcmp.gt.s32.totalorder 0, %v4485
    %v4487 = vsel %vm4486, 0, %v4485
    %v4488 = vsub.s32 32, %v4487
    %v4489 = vshll.u32 %v4480, %v4487
    %v4490 = vshrl.u32 %v4472, %v4488
    %v4491 = vor.u32 %v4489, %v4490
    %v4492 = vsub.s32 4294967266, %v4487
    %v4493 = vadd.s32 %v4492, 127
    %v4494 = vshll.u32 %v4493, 23
    %v4495 = vor.u32 4788187, %v4494
    %v4496 = vand.u32 2147483647, %v4495
    %v4498 = vcvt.s32.f32 %v4491
    %v4499 = vmul.f32 %v4498, %v4496
    %v4500 = vxor.u32 %v4499, 2147483648
    %v4501 = vsel %vm4418, %v4500, %v4499
    %v4502 = vsub.s32 4, %v4478
    %v4503 = vsel %vm4418, %v4502, %v4478
    %v4504 = vsel %vm4417, %v1324, %v4501
    %v4505 = vsel %vm4417, 0, %v4503
    %v4506 = vcosq.f32.pop %v4504
    %v4507 = vsinq.f32.pop %v4504
    %vm4508 = vweird.f32 %v1324
    %v4509 = vand.u32 %v4505, 3
    %vm4510 = vcmp.lt.s32.totalorder %v4509, 2
    %vm4511 = vcmp.eq.s32.totalorder %v4509, 0
    %v4512 = vxor.u32 %v4507, 2147483648
    %v4513 = vsel %vm4511, %v4506, %v4512
    %vm4514 = vcmp.eq.s32.totalorder %v4509, 2
    %v4515 = vxor.u32 %v4506, 2147483648
    %v4516 = vsel %vm4514, %v4515, %v4507
    %v4517 = vsel %vm4510, %v4513, %v4516
    %v4518 = vsel %vm4508, nan, %v4517
    %v4519 = vand.u32 2147483647, %v1325
    %vm4520 = vcmp.le.f32.partialorder %v4519, 0.7853982
    %vm4521 = vcmp.lt.s32.totalorder %v1325, 0
    %v4522 = vand.u32 %v1325, 2139095040
    %v4523 = vshrl.u32 %v4522, 23
    %v4524 = vsub.s32 %v4523, 127
    %v4525 = vand.u32 2147483647, %v1325
    %v4526 = vand.u32 %v4525, 8388607
    %v4527 = vor.u32 %v4526, 8388608
    %v4528 = vsub.s32 0, %v4527
    %v4529 = vadd.s32 %v4524, 1
    %vm4530 = vcmp.gt.s32.totalorder %v4529, 0
    %v4531 = vsel %vm4530, %v4529, 0
    %v4532 = vshrl.u32 %v4531, 5
    %v4533 = vand.u32 %v4531, 31
    %v4534 = vsub.s32 32, %v4533
    %v4535 = vshrl.u32 683565275, %v4534
    %v4536 = vshll.u32 683565275, %v4533
    %v4537 = vshrl.u32 2475754826, %v4534
    %v4538 = vor.u32 %v4536, %v4537
    %v4539 = vshll.u32 2475754826, %v4533
    %v4540 = vshrl.u32 2131351028, %v4534
    %v4541 = vor.u32 %v4539, %v4540
    %v4542 = vshll.u32 2131351028, %v4533
    %v4543 = vshrl.u32 2102212464, %v4534
    %v4544 = vor.u32 %v4542, %v4543
    %v4545 = vshll.u32 2102212464, %v4533
    %v4546 = vshrl.u32 920167782, %v4534
    %v4547 = vor.u32 %v4545, %v4546
    %v4548 = vshll.u32 920167782, %v4533
    %v4549 = vshrl.u32 1326507024, %v4534
    %v4550 = vor.u32 %v4548, %v4549
    %vm4551 = vcmp.lt.s32.totalorder %v4532, 1
    %vm4552 = vcmp.lt.s32.totalorder %v4532, 2
    %vm4553 = vcmp.lt.s32.totalorder %v4532, 3
    %vm4554 = vcmp.lt.s32.totalorder %v4532, 4
    %v4555 = vsel %vm4551, %v4535, %v4538
    %v4556 = vsel %vm4554, %v4544, 2102212464
    %v4557 = vsel %vm4553, %v4541, %v4556
    %v4558 = vsel %vm4552, %v4555, %v4557
    %v4559 = vsel %vm4551, %v4538, %v4541
    %v4560 = vsel %vm4554, %v4547, 920167782
    %v4561 = vsel %vm4553, %v4544, %v4560
    %v4562 = vsel %vm4552, %v4559, %v4561
    %v4563 = vsel %vm4551, %v4541, %v4544
    %v4564 = vsel %vm4554, %v4550, 1326507024
    %v4565 = vsel %vm4553, %v4547, %v4564
    %v4566 = vsel %vm4552, %v4563, %v4565
    %v4567 = vshll.u32 %v4527, 8
    %v4568 = vmul.u32.u64.compose %v4567, %v4566
    %v4569 = vextract.low.u32 %v4568
    %v4570 = vextract.high.u32 %v4568
    %v4571 = vmul.u32.u64.compose %v4567, %v4562
    %v4572 = vextract.low.u32 %v4571
    %v4573 = vextract.high.u32 %v4571
    %v4574 = vmul.u32 %v4567, %v4558
    %v4575 = vadd.s32 %v4570, %v4572
    %vm4576 = vc.u32 %v4570, %v4572
    %v4577 = vadd.s32 %v4573, 1
    %v4578 = vsel %vm4576, %v4577, %v4573
    %v4579 = vadd.s32 %v4574, %v4578
    %v4580 = vadd.s32 %v4579, 536870912
    %v4581 = vshrl.u32 %v4580, 30
    %v4582 = vshll.u32 %v4581, 30
    %v4583 = vsub.s32 %v4579, %v4582
    %vm4584 = vcmp.lt.s32.totalorder %v4583, 0
    %v4585 = vsub.s32 0, %v4583
    %v4586 = vsel %vm4584, %v4585, %v4583
    %v4587 = vclz %v4586
    %v4588 = vsub.s32 %v4587, 2
    %vm4589 = vcmp.gt.s32.totalorder 0, %v4588
    %v4590 = vsel %vm4589, 0, %v4588
    %v4591 = vsub.s32 32, %v4590
    %v4592 = vshll.u32 %v4583, %v4590
    %v4593 = vshrl.u32 %v4575, %v4591
    %v4594 = vor.u32 %v4592, %v4593
    %v4595 = vsub.s32 4294967266, %v4590
    %v4596 = vadd.s32 %v4595, 127
    %v4597 = vshll.u32 %v4596, 23
    %v4598 = vor.u32 4788187, %v4597
    %v4599 = vand.u32 2147483647, %v4598
    %v4601 = vcvt.s32.f32 %v4594
    %v4602 = vmul.f32 %v4601, %v4599
    %v4603 = vxor.u32 %v4602, 2147483648
    %v4604 = vsel %vm4521, %v4603, %v4602
    %v4605 = vsub.s32 4, %v4581
    %v4606 = vsel %vm4521, %v4605, %v4581
    %v4607 = vsel %vm4520, %v1325, %v4604
    %v4608 = vsel %vm4520, 0, %v4606
    %v4609 = vcosq.f32.pop %v4607
    %v4610 = vsinq.f32.pop %v4607
    %vm4611 = vweird.f32 %v1325
    %v4612 = vand.u32 %v4608, 3
    %vm4613 = vcmp.lt.s32.totalorder %v4612, 2
    %vm4614 = vcmp.eq.s32.totalorder %v4612, 0
    %v4615 = vxor.u32 %v4610, 2147483648
    %v4616 = vsel %vm4614, %v4609, %v4615
    %vm4617 = vcmp.eq.s32.totalorder %v4612, 2
    %v4618 = vxor.u32 %v4609, 2147483648
    %v4619 = vsel %vm4617, %v4618, %v4610
    %v4620 = vsel %vm4613, %v4616, %v4619
    %v4621 = vsel %vm4611, nan, %v4620
    %v4622 = vand.u32 2147483647, %v1294
    %vm4623 = vcmp.le.f32.partialorder %v4622, 0.7853982
    %vm4624 = vcmp.lt.s32.totalorder %v1294, 0
    %v4625 = vand.u32 %v1294, 2139095040
    %v4626 = vshrl.u32 %v4625, 23
    %v4627 = vsub.s32 %v4626, 127
    %v4628 = vand.u32 2147483647, %v1294
    %v4629 = vand.u32 %v4628, 8388607
    %v4630 = vor.u32 %v4629, 8388608
    %v4631 = vsub.s32 0, %v4630
    %v4632 = vadd.s32 %v4627, 1
    %vm4633 = vcmp.gt.s32.totalorder %v4632, 0
    %v4634 = vsel %vm4633, %v4632, 0
    %v4635 = vshrl.u32 %v4634, 5
    %v4636 = vand.u32 %v4634, 31
    %v4637 = vsub.s32 32, %v4636
    %v4638 = vshrl.u32 683565275, %v4637
    %v4639 = vshll.u32 683565275, %v4636
    %v4640 = vshrl.u32 2475754826, %v4637
    %v4641 = vor.u32 %v4639, %v4640
    %v4642 = vshll.u32 2475754826, %v4636
    %v4643 = vshrl.u32 2131351028, %v4637
    %v4644 = vor.u32 %v4642, %v4643
    %v4645 = vshll.u32 2131351028, %v4636
    %v4646 = vshrl.u32 2102212464, %v4637
    %v4647 = vor.u32 %v4645, %v4646
    %v4648 = vshll.u32 2102212464, %v4636
    %v4649 = vshrl.u32 920167782, %v4637
    %v4650 = vor.u32 %v4648, %v4649
    %v4651 = vshll.u32 920167782, %v4636
    %v4652 = vshrl.u32 1326507024, %v4637
    %v4653 = vor.u32 %v4651, %v4652
    %vm4654 = vcmp.lt.s32.totalorder %v4635, 1
    %vm4655 = vcmp.lt.s32.totalorder %v4635, 2
    %vm4656 = vcmp.lt.s32.totalorder %v4635, 3
    %vm4657 = vcmp.lt.s32.totalorder %v4635, 4
    %v4658 = vsel %vm4654, %v4638, %v4641
    %v4659 = vsel %vm4657, %v4647, 2102212464
    %v4660 = vsel %vm4656, %v4644, %v4659
    %v4661 = vsel %vm4655, %v4658, %v4660
    %v4662 = vsel %vm4654, %v4641, %v4644
    %v4663 = vsel %vm4657, %v4650, 920167782
    %v4664 = vsel %vm4656, %v4647, %v4663
    %v4665 = vsel %vm4655, %v4662, %v4664
    %v4666 = vsel %vm4654, %v4644, %v4647
    %v4667 = vsel %vm4657, %v4653, 1326507024
    %v4668 = vsel %vm4656, %v4650, %v4667
    %v4669 = vsel %vm4655, %v4666, %v4668
    %v4670 = vshll.u32 %v4630, 8
    %v4671 = vmul.u32.u64.compose %v4670, %v4669
    %v4672 = vextract.low.u32 %v4671
    %v4673 = vextract.high.u32 %v4671
    %v4674 = vmul.u32.u64.compose %v4670, %v4665
    %v4675 = vextract.low.u32 %v4674
    %v4676 = vextract.high.u32 %v4674
    %v4677 = vmul.u32 %v4670, %v4661
    %v4678 = vadd.s32 %v4673, %v4675
    %vm4679 = vc.u32 %v4673, %v4675
    %v4680 = vadd.s32 %v4676, 1
    %v4681 = vsel %vm4679, %v4680, %v4676
    %v4682 = vadd.s32 %v4677, %v4681
    %v4683 = vadd.s32 %v4682, 536870912
    %v4684 = vshrl.u32 %v4683, 30
    %v4685 = vshll.u32 %v4684, 30
    %v4686 = vsub.s32 %v4682, %v4685
    %vm4687 = vcmp.lt.s32.totalorder %v4686, 0
    %v4688 = vsub.s32 0, %v4686
    %v4689 = vsel %vm4687, %v4688, %v4686
    %v4690 = vclz %v4689
    %v4691 = vsub.s32 %v4690, 2
    %vm4692 = vcmp.gt.s32.totalorder 0, %v4691
    %v4693 = vsel %vm4692, 0, %v4691
    %v4694 = vsub.s32 32, %v4693
    %v4695 = vshll.u32 %v4686, %v4693
    %v4696 = vshrl.u32 %v4678, %v4694
    %v4697 = vor.u32 %v4695, %v4696
    %v4698 = vsub.s32 4294967266, %v4693
    %v4699 = vadd.s32 %v4698, 127
    %v4700 = vshll.u32 %v4699, 23
    %v4701 = vor.u32 4788187, %v4700
    %v4702 = vand.u32 2147483647, %v4701
    %v4704 = vcvt.s32.f32 %v4697
    %v4705 = vmul.f32 %v4704, %v4702
    %v4706 = vxor.u32 %v4705, 2147483648
    %v4707 = vsel %vm4624, %v4706, %v4705
    %v4708 = vsub.s32 4, %v4684
    %v4709 = vsel %vm4624, %v4708, %v4684
    %v4710 = vsel %vm4623, %v1294, %v4707
    %v4711 = vsel %vm4623, 0, %v4709
    %v4712 = vcosq.f32.pop %v4710
    %v4713 = vsinq.f32.pop %v4710
    %vm4714 = vweird.f32 %v1294
    %v4715 = vadd.s32 %v4711, 3
    %v4716 = vand.u32 %v4715, 3
    %vm4717 = vcmp.lt.s32.totalorder %v4716, 2
    %vm4718 = vcmp.eq.s32.totalorder %v4716, 0
    %v4719 = vxor.u32 %v4713, 2147483648
    %v4720 = vsel %vm4718, %v4712, %v4719
    %vm4721 = vcmp.eq.s32.totalorder %v4716, 2
    %v4722 = vxor.u32 %v4712, 2147483648
    %v4723 = vsel %vm4721, %v4722, %v4713
    %v4724 = vsel %vm4717, %v4720, %v4723
    %v4725 = vsel %vm4714, nan, %v4724
    %v4726 = vand.u32 2147483647, %v1295
    %vm4727 = vcmp.le.f32.partialorder %v4726, 0.7853982
    %vm4728 = vcmp.lt.s32.totalorder %v1295, 0
    %v4729 = vand.u32 %v1295, 2139095040
    %v4730 = vshrl.u32 %v4729, 23
    %v4731 = vsub.s32 %v4730, 127
    %v4732 = vand.u32 2147483647, %v1295
    %v4733 = vand.u32 %v4732, 8388607
    %v4734 = vor.u32 %v4733, 8388608
    %v4735 = vsub.s32 0, %v4734
    %v4736 = vadd.s32 %v4731, 1
    %vm4737 = vcmp.gt.s32.totalorder %v4736, 0
    %v4738 = vsel %vm4737, %v4736, 0
    %v4739 = vshrl.u32 %v4738, 5
    %v4740 = vand.u32 %v4738, 31
    %v4741 = vsub.s32 32, %v4740
    %v4742 = vshrl.u32 683565275, %v4741
    %v4743 = vshll.u32 683565275, %v4740
    %v4744 = vshrl.u32 2475754826, %v4741
    %v4745 = vor.u32 %v4743, %v4744
    %v4746 = vshll.u32 2475754826, %v4740
    %v4747 = vshrl.u32 2131351028, %v4741
    %v4748 = vor.u32 %v4746, %v4747
    %v4749 = vshll.u32 2131351028, %v4740
    %v4750 = vshrl.u32 2102212464, %v4741
    %v4751 = vor.u32 %v4749, %v4750
    %v4752 = vshll.u32 2102212464, %v4740
    %v4753 = vshrl.u32 920167782, %v4741
    %v4754 = vor.u32 %v4752, %v4753
    %v4755 = vshll.u32 920167782, %v4740
    %v4756 = vshrl.u32 1326507024, %v4741
    %v4757 = vor.u32 %v4755, %v4756
    %vm4758 = vcmp.lt.s32.totalorder %v4739, 1
    %vm4759 = vcmp.lt.s32.totalorder %v4739, 2
    %vm4760 = vcmp.lt.s32.totalorder %v4739, 3
    %vm4761 = vcmp.lt.s32.totalorder %v4739, 4
    %v4762 = vsel %vm4758, %v4742, %v4745
    %v4763 = vsel %vm4761, %v4751, 2102212464
    %v4764 = vsel %vm4760, %v4748, %v4763
    %v4765 = vsel %vm4759, %v4762, %v4764
    %v4766 = vsel %vm4758, %v4745, %v4748
    %v4767 = vsel %vm4761, %v4754, 920167782
    %v4768 = vsel %vm4760, %v4751, %v4767
    %v4769 = vsel %vm4759, %v4766, %v4768
    %v4770 = vsel %vm4758, %v4748, %v4751
    %v4771 = vsel %vm4761, %v4757, 1326507024
    %v4772 = vsel %vm4760, %v4754, %v4771
    %v4773 = vsel %vm4759, %v4770, %v4772
    %v4774 = vshll.u32 %v4734, 8
    %v4775 = vmul.u32.u64.compose %v4774, %v4773
    %v4776 = vextract.low.u32 %v4775
    %v4777 = vextract.high.u32 %v4775
    %v4778 = vmul.u32.u64.compose %v4774, %v4769
    %v4779 = vextract.low.u32 %v4778
    %v4780 = vextract.high.u32 %v4778
    %v4781 = vmul.u32 %v4774, %v4765
    %v4782 = vadd.s32 %v4777, %v4779
    %vm4783 = vc.u32 %v4777, %v4779
    %v4784 = vadd.s32 %v4780, 1
    %v4785 = vsel %vm4783, %v4784, %v4780
    %v4786 = vadd.s32 %v4781, %v4785
    %v4787 = vadd.s32 %v4786, 536870912
    %v4788 = vshrl.u32 %v4787, 30
    %v4789 = vshll.u32 %v4788, 30
    %v4790 = vsub.s32 %v4786, %v4789
    %vm4791 = vcmp.lt.s32.totalorder %v4790, 0
    %v4792 = vsub.s32 0, %v4790
    %v4793 = vsel %vm4791, %v4792, %v4790
    %v4794 = vclz %v4793
    %v4795 = vsub.s32 %v4794, 2
    %vm4796 = vcmp.gt.s32.totalorder 0, %v4795
    %v4797 = vsel %vm4796, 0, %v4795
    %v4798 = vsub.s32 32, %v4797
    %v4799 = vshll.u32 %v4790, %v4797
    %v4800 = vshrl.u32 %v4782, %v4798
    %v4801 = vor.u32 %v4799, %v4800
    %v4802 = vsub.s32 4294967266, %v4797
    %v4803 = vadd.s32 %v4802, 127
    %v4804 = vshll.u32 %v4803, 23
    %v4805 = vor.u32 4788187, %v4804
    %v4806 = vand.u32 2147483647, %v4805
    %v4808 = vcvt.s32.f32 %v4801
    %v4809 = vmul.f32 %v4808, %v4806
    %v4810 = vxor.u32 %v4809, 2147483648
    %v4811 = vsel %vm4728, %v4810, %v4809
    %v4812 = vsub.s32 4, %v4788
    %v4813 = vsel %vm4728, %v4812, %v4788
    %v4814 = vsel %vm4727, %v1295, %v4811
    %v4815 = vsel %vm4727, 0, %v4813
    %v4816 = vcosq.f32.pop %v4814
    %v4817 = vsinq.f32.pop %v4814
    %vm4818 = vweird.f32 %v1295
    %v4819 = vadd.s32 %v4815, 3
    %v4820 = vand.u32 %v4819, 3
    %vm4821 = vcmp.lt.s32.totalorder %v4820, 2
    %vm4822 = vcmp.eq.s32.totalorder %v4820, 0
    %v4823 = vxor.u32 %v4817, 2147483648
    %v4824 = vsel %vm4822, %v4816, %v4823
    %vm4825 = vcmp.eq.s32.totalorder %v4820, 2
    %v4826 = vxor.u32 %v4816, 2147483648
    %v4827 = vsel %vm4825, %v4826, %v4817
    %v4828 = vsel %vm4821, %v4824, %v4827
    %v4829 = vsel %vm4818, nan, %v4828
    %v4830 = vand.u32 2147483647, %v1296
    %vm4831 = vcmp.le.f32.partialorder %v4830, 0.7853982
    %vm4832 = vcmp.lt.s32.totalorder %v1296, 0
    %v4833 = vand.u32 %v1296, 2139095040
    %v4834 = vshrl.u32 %v4833, 23
    %v4835 = vsub.s32 %v4834, 127
    %v4836 = vand.u32 2147483647, %v1296
    %v4837 = vand.u32 %v4836, 8388607
    %v4838 = vor.u32 %v4837, 8388608
    %v4839 = vsub.s32 0, %v4838
    %v4840 = vadd.s32 %v4835, 1
    %vm4841 = vcmp.gt.s32.totalorder %v4840, 0
    %v4842 = vsel %vm4841, %v4840, 0
    %v4843 = vshrl.u32 %v4842, 5
    %v4844 = vand.u32 %v4842, 31
    %v4845 = vsub.s32 32, %v4844
    %v4846 = vshrl.u32 683565275, %v4845
    %v4847 = vshll.u32 683565275, %v4844
    %v4848 = vshrl.u32 2475754826, %v4845
    %v4849 = vor.u32 %v4847, %v4848
    %v4850 = vshll.u32 2475754826, %v4844
    %v4851 = vshrl.u32 2131351028, %v4845
    %v4852 = vor.u32 %v4850, %v4851
    %v4853 = vshll.u32 2131351028, %v4844
    %v4854 = vshrl.u32 2102212464, %v4845
    %v4855 = vor.u32 %v4853, %v4854
    %v4856 = vshll.u32 2102212464, %v4844
    %v4857 = vshrl.u32 920167782, %v4845
    %v4858 = vor.u32 %v4856, %v4857
    %v4859 = vshll.u32 920167782, %v4844
    %v4860 = vshrl.u32 1326507024, %v4845
    %v4861 = vor.u32 %v4859, %v4860
    %vm4862 = vcmp.lt.s32.totalorder %v4843, 1
    %vm4863 = vcmp.lt.s32.totalorder %v4843, 2
    %vm4864 = vcmp.lt.s32.totalorder %v4843, 3
    %vm4865 = vcmp.lt.s32.totalorder %v4843, 4
    %v4866 = vsel %vm4862, %v4846, %v4849
    %v4867 = vsel %vm4865, %v4855, 2102212464
    %v4868 = vsel %vm4864, %v4852, %v4867
    %v4869 = vsel %vm4863, %v4866, %v4868
    %v4870 = vsel %vm4862, %v4849, %v4852
    %v4871 = vsel %vm4865, %v4858, 920167782
    %v4872 = vsel %vm4864, %v4855, %v4871
    %v4873 = vsel %vm4863, %v4870, %v4872
    %v4874 = vsel %vm4862, %v4852, %v4855
    %v4875 = vsel %vm4865, %v4861, 1326507024
    %v4876 = vsel %vm4864, %v4858, %v4875
    %v4877 = vsel %vm4863, %v4874, %v4876
    %v4878 = vshll.u32 %v4838, 8
    %v4879 = vmul.u32.u64.compose %v4878, %v4877
    %v4880 = vextract.low.u32 %v4879
    %v4881 = vextract.high.u32 %v4879
    %v4882 = vmul.u32.u64.compose %v4878, %v4873
    %v4883 = vextract.low.u32 %v4882
    %v4884 = vextract.high.u32 %v4882
    %v4885 = vmul.u32 %v4878, %v4869
    %v4886 = vadd.s32 %v4881, %v4883
    %vm4887 = vc.u32 %v4881, %v4883
    %v4888 = vadd.s32 %v4884, 1
    %v4889 = vsel %vm4887, %v4888, %v4884
    %v4890 = vadd.s32 %v4885, %v4889
    %v4891 = vadd.s32 %v4890, 536870912
    %v4892 = vshrl.u32 %v4891, 30
    %v4893 = vshll.u32 %v4892, 30
    %v4894 = vsub.s32 %v4890, %v4893
    %vm4895 = vcmp.lt.s32.totalorder %v4894, 0
    %v4896 = vsub.s32 0, %v4894
    %v4897 = vsel %vm4895, %v4896, %v4894
    %v4898 = vclz %v4897
    %v4899 = vsub.s32 %v4898, 2
    %vm4900 = vcmp.gt.s32.totalorder 0, %v4899
    %v4901 = vsel %vm4900, 0, %v4899
    %v4902 = vsub.s32 32, %v4901
    %v4903 = vshll.u32 %v4894, %v4901
    %v4904 = vshrl.u32 %v4886, %v4902
    %v4905 = vor.u32 %v4903, %v4904
    %v4906 = vsub.s32 4294967266, %v4901
    %v4907 = vadd.s32 %v4906, 127
    %v4908 = vshll.u32 %v4907, 23
    %v4909 = vor.u32 4788187, %v4908
    %v4910 = vand.u32 2147483647, %v4909
    %v4912 = vcvt.s32.f32 %v4905
    %v4913 = vmul.f32 %v4912, %v4910
    %v4914 = vxor.u32 %v4913, 2147483648
    %v4915 = vsel %vm4832, %v4914, %v4913
    %v4916 = vsub.s32 4, %v4892
    %v4917 = vsel %vm4832, %v4916, %v4892
    %v4918 = vsel %vm4831, %v1296, %v4915
    %v4919 = vsel %vm4831, 0, %v4917
    %v4920 = vcosq.f32.pop %v4918
    %v4921 = vsinq.f32.pop %v4918
    %vm4922 = vweird.f32 %v1296
    %v4923 = vadd.s32 %v4919, 3
    %v4924 = vand.u32 %v4923, 3
    %vm4925 = vcmp.lt.s32.totalorder %v4924, 2
    %vm4926 = vcmp.eq.s32.totalorder %v4924, 0
    %v4927 = vxor.u32 %v4921, 2147483648
    %v4928 = vsel %vm4926, %v4920, %v4927
    %vm4929 = vcmp.eq.s32.totalorder %v4924, 2
    %v4930 = vxor.u32 %v4920, 2147483648
    %v4931 = vsel %vm4929, %v4930, %v4921
    %v4932 = vsel %vm4925, %v4928, %v4931
    %v4933 = vsel %vm4922, nan, %v4932
    %v4934 = vand.u32 2147483647, %v1297
    %vm4935 = vcmp.le.f32.partialorder %v4934, 0.7853982
    %vm4936 = vcmp.lt.s32.totalorder %v1297, 0
    %v4937 = vand.u32 %v1297, 2139095040
    %v4938 = vshrl.u32 %v4937, 23
    %v4939 = vsub.s32 %v4938, 127
    %v4940 = vand.u32 2147483647, %v1297
    %v4941 = vand.u32 %v4940, 8388607
    %v4942 = vor.u32 %v4941, 8388608
    %v4943 = vsub.s32 0, %v4942
    %v4944 = vadd.s32 %v4939, 1
    %vm4945 = vcmp.gt.s32.totalorder %v4944, 0
    %v4946 = vsel %vm4945, %v4944, 0
    %v4947 = vshrl.u32 %v4946, 5
    %v4948 = vand.u32 %v4946, 31
    %v4949 = vsub.s32 32, %v4948
    %v4950 = vshrl.u32 683565275, %v4949
    %v4951 = vshll.u32 683565275, %v4948
    %v4952 = vshrl.u32 2475754826, %v4949
    %v4953 = vor.u32 %v4951, %v4952
    %v4954 = vshll.u32 2475754826, %v4948
    %v4955 = vshrl.u32 2131351028, %v4949
    %v4956 = vor.u32 %v4954, %v4955
    %v4957 = vshll.u32 2131351028, %v4948
    %v4958 = vshrl.u32 2102212464, %v4949
    %v4959 = vor.u32 %v4957, %v4958
    %v4960 = vshll.u32 2102212464, %v4948
    %v4961 = vshrl.u32 920167782, %v4949
    %v4962 = vor.u32 %v4960, %v4961
    %v4963 = vshll.u32 920167782, %v4948
    %v4964 = vshrl.u32 1326507024, %v4949
    %v4965 = vor.u32 %v4963, %v4964
    %vm4966 = vcmp.lt.s32.totalorder %v4947, 1
    %vm4967 = vcmp.lt.s32.totalorder %v4947, 2
    %vm4968 = vcmp.lt.s32.totalorder %v4947, 3
    %vm4969 = vcmp.lt.s32.totalorder %v4947, 4
    %v4970 = vsel %vm4966, %v4950, %v4953
    %v4971 = vsel %vm4969, %v4959, 2102212464
    %v4972 = vsel %vm4968, %v4956, %v4971
    %v4973 = vsel %vm4967, %v4970, %v4972
    %v4974 = vsel %vm4966, %v4953, %v4956
    %v4975 = vsel %vm4969, %v4962, 920167782
    %v4976 = vsel %vm4968, %v4959, %v4975
    %v4977 = vsel %vm4967, %v4974, %v4976
    %v4978 = vsel %vm4966, %v4956, %v4959
    %v4979 = vsel %vm4969, %v4965, 1326507024
    %v4980 = vsel %vm4968, %v4962, %v4979
    %v4981 = vsel %vm4967, %v4978, %v4980
    %v4982 = vshll.u32 %v4942, 8
    %v4983 = vmul.u32.u64.compose %v4982, %v4981
    %v4984 = vextract.low.u32 %v4983
    %v4985 = vextract.high.u32 %v4983
    %v4986 = vmul.u32.u64.compose %v4982, %v4977
    %v4987 = vextract.low.u32 %v4986
    %v4988 = vextract.high.u32 %v4986
    %v4989 = vmul.u32 %v4982, %v4973
    %v4990 = vadd.s32 %v4985, %v4987
    %vm4991 = vc.u32 %v4985, %v4987
    %v4992 = vadd.s32 %v4988, 1
    %v4993 = vsel %vm4991, %v4992, %v4988
    %v4994 = vadd.s32 %v4989, %v4993
    %v4995 = vadd.s32 %v4994, 536870912
    %v4996 = vshrl.u32 %v4995, 30
    %v4997 = vshll.u32 %v4996, 30
    %v4998 = vsub.s32 %v4994, %v4997
    %vm4999 = vcmp.lt.s32.totalorder %v4998, 0
    %v5000 = vsub.s32 0, %v4998
    %v5001 = vsel %vm4999, %v5000, %v4998
    %v5002 = vclz %v5001
    %v5003 = vsub.s32 %v5002, 2
    %vm5004 = vcmp.gt.s32.totalorder 0, %v5003
    %v5005 = vsel %vm5004, 0, %v5003
    %v5006 = vsub.s32 32, %v5005
    %v5007 = vshll.u32 %v4998, %v5005
    %v5008 = vshrl.u32 %v4990, %v5006
    %v5009 = vor.u32 %v5007, %v5008
    %v5010 = vsub.s32 4294967266, %v5005
    %v5011 = vadd.s32 %v5010, 127
    %v5012 = vshll.u32 %v5011, 23
    %v5013 = vor.u32 4788187, %v5012
    %v5014 = vand.u32 2147483647, %v5013
    %v5016 = vcvt.s32.f32 %v5009
    %v5017 = vmul.f32 %v5016, %v5014
    %v5018 = vxor.u32 %v5017, 2147483648
    %v5019 = vsel %vm4936, %v5018, %v5017
    %v5020 = vsub.s32 4, %v4996
    %v5021 = vsel %vm4936, %v5020, %v4996
    %v5022 = vsel %vm4935, %v1297, %v5019
    %v5023 = vsel %vm4935, 0, %v5021
    %v5024 = vcosq.f32.pop %v5022
    %v5025 = vsinq.f32.pop %v5022
    %vm5026 = vweird.f32 %v1297
    %v5027 = vadd.s32 %v5023, 3
    %v5028 = vand.u32 %v5027, 3
    %vm5029 = vcmp.lt.s32.totalorder %v5028, 2
    %vm5030 = vcmp.eq.s32.totalorder %v5028, 0
    %v5031 = vxor.u32 %v5025, 2147483648
    %v5032 = vsel %vm5030, %v5024, %v5031
    %vm5033 = vcmp.eq.s32.totalorder %v5028, 2
    %v5034 = vxor.u32 %v5024, 2147483648
    %v5035 = vsel %vm5033, %v5034, %v5025
    %v5036 = vsel %vm5029, %v5032, %v5035
    %v5037 = vsel %vm5026, nan, %v5036
    %v5038 = vand.u32 2147483647, %v1298
    %vm5039 = vcmp.le.f32.partialorder %v5038, 0.7853982
    %vm5040 = vcmp.lt.s32.totalorder %v1298, 0
    %v5041 = vand.u32 %v1298, 2139095040
    %v5042 = vshrl.u32 %v5041, 23
    %v5043 = vsub.s32 %v5042, 127
    %v5044 = vand.u32 2147483647, %v1298
    %v5045 = vand.u32 %v5044, 8388607
    %v5046 = vor.u32 %v5045, 8388608
    %v5047 = vsub.s32 0, %v5046
    %v5048 = vadd.s32 %v5043, 1
    %vm5049 = vcmp.gt.s32.totalorder %v5048, 0
    %v5050 = vsel %vm5049, %v5048, 0
    %v5051 = vshrl.u32 %v5050, 5
    %v5052 = vand.u32 %v5050, 31
    %v5053 = vsub.s32 32, %v5052
    %v5054 = vshrl.u32 683565275, %v5053
    %v5055 = vshll.u32 683565275, %v5052
    %v5056 = vshrl.u32 2475754826, %v5053
    %v5057 = vor.u32 %v5055, %v5056
    %v5058 = vshll.u32 2475754826, %v5052
    %v5059 = vshrl.u32 2131351028, %v5053
    %v5060 = vor.u32 %v5058, %v5059
    %v5061 = vshll.u32 2131351028, %v5052
    %v5062 = vshrl.u32 2102212464, %v5053
    %v5063 = vor.u32 %v5061, %v5062
    %v5064 = vshll.u32 2102212464, %v5052
    %v5065 = vshrl.u32 920167782, %v5053
    %v5066 = vor.u32 %v5064, %v5065
    %v5067 = vshll.u32 920167782, %v5052
    %v5068 = vshrl.u32 1326507024, %v5053
    %v5069 = vor.u32 %v5067, %v5068
    %vm5070 = vcmp.lt.s32.totalorder %v5051, 1
    %vm5071 = vcmp.lt.s32.totalorder %v5051, 2
    %vm5072 = vcmp.lt.s32.totalorder %v5051, 3
    %vm5073 = vcmp.lt.s32.totalorder %v5051, 4
    %v5074 = vsel %vm5070, %v5054, %v5057
    %v5075 = vsel %vm5073, %v5063, 2102212464
    %v5076 = vsel %vm5072, %v5060, %v5075
    %v5077 = vsel %vm5071, %v5074, %v5076
    %v5078 = vsel %vm5070, %v5057, %v5060
    %v5079 = vsel %vm5073, %v5066, 920167782
    %v5080 = vsel %vm5072, %v5063, %v5079
    %v5081 = vsel %vm5071, %v5078, %v5080
    %v5082 = vsel %vm5070, %v5060, %v5063
    %v5083 = vsel %vm5073, %v5069, 1326507024
    %v5084 = vsel %vm5072, %v5066, %v5083
    %v5085 = vsel %vm5071, %v5082, %v5084
    %v5086 = vshll.u32 %v5046, 8
    %v5087 = vmul.u32.u64.compose %v5086, %v5085
    %v5088 = vextract.low.u32 %v5087
    %v5089 = vextract.high.u32 %v5087
    %v5090 = vmul.u32.u64.compose %v5086, %v5081
    %v5091 = vextract.low.u32 %v5090
    %v5092 = vextract.high.u32 %v5090
    %v5093 = vmul.u32 %v5086, %v5077
    %v5094 = vadd.s32 %v5089, %v5091
    %vm5095 = vc.u32 %v5089, %v5091
    %v5096 = vadd.s32 %v5092, 1
    %v5097 = vsel %vm5095, %v5096, %v5092
    %v5098 = vadd.s32 %v5093, %v5097
    %v5099 = vadd.s32 %v5098, 536870912
    %v5100 = vshrl.u32 %v5099, 30
    %v5101 = vshll.u32 %v5100, 30
    %v5102 = vsub.s32 %v5098, %v5101
    %vm5103 = vcmp.lt.s32.totalorder %v5102, 0
    %v5104 = vsub.s32 0, %v5102
    %v5105 = vsel %vm5103, %v5104, %v5102
    %v5106 = vclz %v5105
    %v5107 = vsub.s32 %v5106, 2
    %vm5108 = vcmp.gt.s32.totalorder 0, %v5107
    %v5109 = vsel %vm5108, 0, %v5107
    %v5110 = vsub.s32 32, %v5109
    %v5111 = vshll.u32 %v5102, %v5109
    %v5112 = vshrl.u32 %v5094, %v5110
    %v5113 = vor.u32 %v5111, %v5112
    %v5114 = vsub.s32 4294967266, %v5109
    %v5115 = vadd.s32 %v5114, 127
    %v5116 = vshll.u32 %v5115, 23
    %v5117 = vor.u32 4788187, %v5116
    %v5118 = vand.u32 2147483647, %v5117
    %v5120 = vcvt.s32.f32 %v5113
    %v5121 = vmul.f32 %v5120, %v5118
    %v5122 = vxor.u32 %v5121, 2147483648
    %v5123 = vsel %vm5040, %v5122, %v5121
    %v5124 = vsub.s32 4, %v5100
    %v5125 = vsel %vm5040, %v5124, %v5100
    %v5126 = vsel %vm5039, %v1298, %v5123
    %v5127 = vsel %vm5039, 0, %v5125
    %v5128 = vcosq.f32.pop %v5126
    %v5129 = vsinq.f32.pop %v5126
    %vm5130 = vweird.f32 %v1298
    %v5131 = vadd.s32 %v5127, 3
    %v5132 = vand.u32 %v5131, 3
    %vm5133 = vcmp.lt.s32.totalorder %v5132, 2
    %vm5134 = vcmp.eq.s32.totalorder %v5132, 0
    %v5135 = vxor.u32 %v5129, 2147483648
    %v5136 = vsel %vm5134, %v5128, %v5135
    %vm5137 = vcmp.eq.s32.totalorder %v5132, 2
    %v5138 = vxor.u32 %v5128, 2147483648
    %v5139 = vsel %vm5137, %v5138, %v5129
    %v5140 = vsel %vm5133, %v5136, %v5139
    %v5141 = vsel %vm5130, nan, %v5140
    %v5142 = vand.u32 2147483647, %v1299
    %vm5143 = vcmp.le.f32.partialorder %v5142, 0.7853982
    %vm5144 = vcmp.lt.s32.totalorder %v1299, 0
    %v5145 = vand.u32 %v1299, 2139095040
    %v5146 = vshrl.u32 %v5145, 23
    %v5147 = vsub.s32 %v5146, 127
    %v5148 = vand.u32 2147483647, %v1299
    %v5149 = vand.u32 %v5148, 8388607
    %v5150 = vor.u32 %v5149, 8388608
    %v5151 = vsub.s32 0, %v5150
    %v5152 = vadd.s32 %v5147, 1
    %vm5153 = vcmp.gt.s32.totalorder %v5152, 0
    %v5154 = vsel %vm5153, %v5152, 0
    %v5155 = vshrl.u32 %v5154, 5
    %v5156 = vand.u32 %v5154, 31
    %v5157 = vsub.s32 32, %v5156
    %v5158 = vshrl.u32 683565275, %v5157
    %v5159 = vshll.u32 683565275, %v5156
    %v5160 = vshrl.u32 2475754826, %v5157
    %v5161 = vor.u32 %v5159, %v5160
    %v5162 = vshll.u32 2475754826, %v5156
    %v5163 = vshrl.u32 2131351028, %v5157
    %v5164 = vor.u32 %v5162, %v5163
    %v5165 = vshll.u32 2131351028, %v5156
    %v5166 = vshrl.u32 2102212464, %v5157
    %v5167 = vor.u32 %v5165, %v5166
    %v5168 = vshll.u32 2102212464, %v5156
    %v5169 = vshrl.u32 920167782, %v5157
    %v5170 = vor.u32 %v5168, %v5169
    %v5171 = vshll.u32 920167782, %v5156
    %v5172 = vshrl.u32 1326507024, %v5157
    %v5173 = vor.u32 %v5171, %v5172
    %vm5174 = vcmp.lt.s32.totalorder %v5155, 1
    %vm5175 = vcmp.lt.s32.totalorder %v5155, 2
    %vm5176 = vcmp.lt.s32.totalorder %v5155, 3
    %vm5177 = vcmp.lt.s32.totalorder %v5155, 4
    %v5178 = vsel %vm5174, %v5158, %v5161
    %v5179 = vsel %vm5177, %v5167, 2102212464
    %v5180 = vsel %vm5176, %v5164, %v5179
    %v5181 = vsel %vm5175, %v5178, %v5180
    %v5182 = vsel %vm5174, %v5161, %v5164
    %v5183 = vsel %vm5177, %v5170, 920167782
    %v5184 = vsel %vm5176, %v5167, %v5183
    %v5185 = vsel %vm5175, %v5182, %v5184
    %v5186 = vsel %vm5174, %v5164, %v5167
    %v5187 = vsel %vm5177, %v5173, 1326507024
    %v5188 = vsel %vm5176, %v5170, %v5187
    %v5189 = vsel %vm5175, %v5186, %v5188
    %v5190 = vshll.u32 %v5150, 8
    %v5191 = vmul.u32.u64.compose %v5190, %v5189
    %v5192 = vextract.low.u32 %v5191
    %v5193 = vextract.high.u32 %v5191
    %v5194 = vmul.u32.u64.compose %v5190, %v5185
    %v5195 = vextract.low.u32 %v5194
    %v5196 = vextract.high.u32 %v5194
    %v5197 = vmul.u32 %v5190, %v5181
    %v5198 = vadd.s32 %v5193, %v5195
    %vm5199 = vc.u32 %v5193, %v5195
    %v5200 = vadd.s32 %v5196, 1
    %v5201 = vsel %vm5199, %v5200, %v5196
    %v5202 = vadd.s32 %v5197, %v5201
    %v5203 = vadd.s32 %v5202, 536870912
    %v5204 = vshrl.u32 %v5203, 30
    %v5205 = vshll.u32 %v5204, 30
    %v5206 = vsub.s32 %v5202, %v5205
    %vm5207 = vcmp.lt.s32.totalorder %v5206, 0
    %v5208 = vsub.s32 0, %v5206
    %v5209 = vsel %vm5207, %v5208, %v5206
    %v5210 = vclz %v5209
    %v5211 = vsub.s32 %v5210, 2
    %vm5212 = vcmp.gt.s32.totalorder 0, %v5211
    %v5213 = vsel %vm5212, 0, %v5211
    %v5214 = vsub.s32 32, %v5213
    %v5215 = vshll.u32 %v5206, %v5213
    %v5216 = vshrl.u32 %v5198, %v5214
    %v5217 = vor.u32 %v5215, %v5216
    %v5218 = vsub.s32 4294967266, %v5213
    %v5219 = vadd.s32 %v5218, 127
    %v5220 = vshll.u32 %v5219, 23
    %v5221 = vor.u32 4788187, %v5220
    %v5222 = vand.u32 2147483647, %v5221
    %v5224 = vcvt.s32.f32 %v5217
    %v5225 = vmul.f32 %v5224, %v5222
    %v5226 = vxor.u32 %v5225, 2147483648
    %v5227 = vsel %vm5144, %v5226, %v5225
    %v5228 = vsub.s32 4, %v5204
    %v5229 = vsel %vm5144, %v5228, %v5204
    %v5230 = vsel %vm5143, %v1299, %v5227
    %v5231 = vsel %vm5143, 0, %v5229
    %v5232 = vcosq.f32.pop %v5230
    %v5233 = vsinq.f32.pop %v5230
    %vm5234 = vweird.f32 %v1299
    %v5235 = vadd.s32 %v5231, 3
    %v5236 = vand.u32 %v5235, 3
    %vm5237 = vcmp.lt.s32.totalorder %v5236, 2
    %vm5238 = vcmp.eq.s32.totalorder %v5236, 0
    %v5239 = vxor.u32 %v5233, 2147483648
    %v5240 = vsel %vm5238, %v5232, %v5239
    %vm5241 = vcmp.eq.s32.totalorder %v5236, 2
    %v5242 = vxor.u32 %v5232, 2147483648
    %v5243 = vsel %vm5241, %v5242, %v5233
    %v5244 = vsel %vm5237, %v5240, %v5243
    %v5245 = vsel %vm5234, nan, %v5244
    %v5246 = vand.u32 2147483647, %v1300
    %vm5247 = vcmp.le.f32.partialorder %v5246, 0.7853982
    %vm5248 = vcmp.lt.s32.totalorder %v1300, 0
    %v5249 = vand.u32 %v1300, 2139095040
    %v5250 = vshrl.u32 %v5249, 23
    %v5251 = vsub.s32 %v5250, 127
    %v5252 = vand.u32 2147483647, %v1300
    %v5253 = vand.u32 %v5252, 8388607
    %v5254 = vor.u32 %v5253, 8388608
    %v5255 = vsub.s32 0, %v5254
    %v5256 = vadd.s32 %v5251, 1
    %vm5257 = vcmp.gt.s32.totalorder %v5256, 0
    %v5258 = vsel %vm5257, %v5256, 0
    %v5259 = vshrl.u32 %v5258, 5
    %v5260 = vand.u32 %v5258, 31
    %v5261 = vsub.s32 32, %v5260
    %v5262 = vshrl.u32 683565275, %v5261
    %v5263 = vshll.u32 683565275, %v5260
    %v5264 = vshrl.u32 2475754826, %v5261
    %v5265 = vor.u32 %v5263, %v5264
    %v5266 = vshll.u32 2475754826, %v5260
    %v5267 = vshrl.u32 2131351028, %v5261
    %v5268 = vor.u32 %v5266, %v5267
    %v5269 = vshll.u32 2131351028, %v5260
    %v5270 = vshrl.u32 2102212464, %v5261
    %v5271 = vor.u32 %v5269, %v5270
    %v5272 = vshll.u32 2102212464, %v5260
    %v5273 = vshrl.u32 920167782, %v5261
    %v5274 = vor.u32 %v5272, %v5273
    %v5275 = vshll.u32 920167782, %v5260
    %v5276 = vshrl.u32 1326507024, %v5261
    %v5277 = vor.u32 %v5275, %v5276
    %vm5278 = vcmp.lt.s32.totalorder %v5259, 1
    %vm5279 = vcmp.lt.s32.totalorder %v5259, 2
    %vm5280 = vcmp.lt.s32.totalorder %v5259, 3
    %vm5281 = vcmp.lt.s32.totalorder %v5259, 4
    %v5282 = vsel %vm5278, %v5262, %v5265
    %v5283 = vsel %vm5281, %v5271, 2102212464
    %v5284 = vsel %vm5280, %v5268, %v5283
    %v5285 = vsel %vm5279, %v5282, %v5284
    %v5286 = vsel %vm5278, %v5265, %v5268
    %v5287 = vsel %vm5281, %v5274, 920167782
    %v5288 = vsel %vm5280, %v5271, %v5287
    %v5289 = vsel %vm5279, %v5286, %v5288
    %v5290 = vsel %vm5278, %v5268, %v5271
    %v5291 = vsel %vm5281, %v5277, 1326507024
    %v5292 = vsel %vm5280, %v5274, %v5291
    %v5293 = vsel %vm5279, %v5290, %v5292
    %v5294 = vshll.u32 %v5254, 8
    %v5295 = vmul.u32.u64.compose %v5294, %v5293
    %v5296 = vextract.low.u32 %v5295
    %v5297 = vextract.high.u32 %v5295
    %v5298 = vmul.u32.u64.compose %v5294, %v5289
    %v5299 = vextract.low.u32 %v5298
    %v5300 = vextract.high.u32 %v5298
    %v5301 = vmul.u32 %v5294, %v5285
    %v5302 = vadd.s32 %v5297, %v5299
    %vm5303 = vc.u32 %v5297, %v5299
    %v5304 = vadd.s32 %v5300, 1
    %v5305 = vsel %vm5303, %v5304, %v5300
    %v5306 = vadd.s32 %v5301, %v5305
    %v5307 = vadd.s32 %v5306, 536870912
    %v5308 = vshrl.u32 %v5307, 30
    %v5309 = vshll.u32 %v5308, 30
    %v5310 = vsub.s32 %v5306, %v5309
    %vm5311 = vcmp.lt.s32.totalorder %v5310, 0
    %v5312 = vsub.s32 0, %v5310
    %v5313 = vsel %vm5311, %v5312, %v5310
    %v5314 = vclz %v5313
    %v5315 = vsub.s32 %v5314, 2
    %vm5316 = vcmp.gt.s32.totalorder 0, %v5315
    %v5317 = vsel %vm5316, 0, %v5315
    %v5318 = vsub.s32 32, %v5317
    %v5319 = vshll.u32 %v5310, %v5317
    %v5320 = vshrl.u32 %v5302, %v5318
    %v5321 = vor.u32 %v5319, %v5320
    %v5322 = vsub.s32 4294967266, %v5317
    %v5323 = vadd.s32 %v5322, 127
    %v5324 = vshll.u32 %v5323, 23
    %v5325 = vor.u32 4788187, %v5324
    %v5326 = vand.u32 2147483647, %v5325
    %v5328 = vcvt.s32.f32 %v5321
    %v5329 = vmul.f32 %v5328, %v5326
    %v5330 = vxor.u32 %v5329, 2147483648
    %v5331 = vsel %vm5248, %v5330, %v5329
    %v5332 = vsub.s32 4, %v5308
    %v5333 = vsel %vm5248, %v5332, %v5308
    %v5334 = vsel %vm5247, %v1300, %v5331
    %v5335 = vsel %vm5247, 0, %v5333
    %v5336 = vcosq.f32.pop %v5334
    %v5337 = vsinq.f32.pop %v5334
    %vm5338 = vweird.f32 %v1300
    %v5339 = vadd.s32 %v5335, 3
    %v5340 = vand.u32 %v5339, 3
    %vm5341 = vcmp.lt.s32.totalorder %v5340, 2
    %vm5342 = vcmp.eq.s32.totalorder %v5340, 0
    %v5343 = vxor.u32 %v5337, 2147483648
    %v5344 = vsel %vm5342, %v5336, %v5343
    %vm5345 = vcmp.eq.s32.totalorder %v5340, 2
    %v5346 = vxor.u32 %v5336, 2147483648
    %v5347 = vsel %vm5345, %v5346, %v5337
    %v5348 = vsel %vm5341, %v5344, %v5347
    %v5349 = vsel %vm5338, nan, %v5348
    %v5350 = vand.u32 2147483647, %v1301
    %vm5351 = vcmp.le.f32.partialorder %v5350, 0.7853982
    %vm5352 = vcmp.lt.s32.totalorder %v1301, 0
    %v5353 = vand.u32 %v1301, 2139095040
    %v5354 = vshrl.u32 %v5353, 23
    %v5355 = vsub.s32 %v5354, 127
    %v5356 = vand.u32 2147483647, %v1301
    %v5357 = vand.u32 %v5356, 8388607
    %v5358 = vor.u32 %v5357, 8388608
    %v5359 = vsub.s32 0, %v5358
    %v5360 = vadd.s32 %v5355, 1
    %vm5361 = vcmp.gt.s32.totalorder %v5360, 0
    %v5362 = vsel %vm5361, %v5360, 0
    %v5363 = vshrl.u32 %v5362, 5
    %v5364 = vand.u32 %v5362, 31
    %v5365 = vsub.s32 32, %v5364
    %v5366 = vshrl.u32 683565275, %v5365
    %v5367 = vshll.u32 683565275, %v5364
    %v5368 = vshrl.u32 2475754826, %v5365
    %v5369 = vor.u32 %v5367, %v5368
    %v5370 = vshll.u32 2475754826, %v5364
    %v5371 = vshrl.u32 2131351028, %v5365
    %v5372 = vor.u32 %v5370, %v5371
    %v5373 = vshll.u32 2131351028, %v5364
    %v5374 = vshrl.u32 2102212464, %v5365
    %v5375 = vor.u32 %v5373, %v5374
    %v5376 = vshll.u32 2102212464, %v5364
    %v5377 = vshrl.u32 920167782, %v5365
    %v5378 = vor.u32 %v5376, %v5377
    %v5379 = vshll.u32 920167782, %v5364
    %v5380 = vshrl.u32 1326507024, %v5365
    %v5381 = vor.u32 %v5379, %v5380
    %vm5382 = vcmp.lt.s32.totalorder %v5363, 1
    %vm5383 = vcmp.lt.s32.totalorder %v5363, 2
    %vm5384 = vcmp.lt.s32.totalorder %v5363, 3
    %vm5385 = vcmp.lt.s32.totalorder %v5363, 4
    %v5386 = vsel %vm5382, %v5366, %v5369
    %v5387 = vsel %vm5385, %v5375, 2102212464
    %v5388 = vsel %vm5384, %v5372, %v5387
    %v5389 = vsel %vm5383, %v5386, %v5388
    %v5390 = vsel %vm5382, %v5369, %v5372
    %v5391 = vsel %vm5385, %v5378, 920167782
    %v5392 = vsel %vm5384, %v5375, %v5391
    %v5393 = vsel %vm5383, %v5390, %v5392
    %v5394 = vsel %vm5382, %v5372, %v5375
    %v5395 = vsel %vm5385, %v5381, 1326507024
    %v5396 = vsel %vm5384, %v5378, %v5395
    %v5397 = vsel %vm5383, %v5394, %v5396
    %v5398 = vshll.u32 %v5358, 8
    %v5399 = vmul.u32.u64.compose %v5398, %v5397
    %v5400 = vextract.low.u32 %v5399
    %v5401 = vextract.high.u32 %v5399
    %v5402 = vmul.u32.u64.compose %v5398, %v5393
    %v5403 = vextract.low.u32 %v5402
    %v5404 = vextract.high.u32 %v5402
    %v5405 = vmul.u32 %v5398, %v5389
    %v5406 = vadd.s32 %v5401, %v5403
    %vm5407 = vc.u32 %v5401, %v5403
    %v5408 = vadd.s32 %v5404, 1
    %v5409 = vsel %vm5407, %v5408, %v5404
    %v5410 = vadd.s32 %v5405, %v5409
    %v5411 = vadd.s32 %v5410, 536870912
    %v5412 = vshrl.u32 %v5411, 30
    %v5413 = vshll.u32 %v5412, 30
    %v5414 = vsub.s32 %v5410, %v5413
    %vm5415 = vcmp.lt.s32.totalorder %v5414, 0
    %v5416 = vsub.s32 0, %v5414
    %v5417 = vsel %vm5415, %v5416, %v5414
    %v5418 = vclz %v5417
    %v5419 = vsub.s32 %v5418, 2
    %vm5420 = vcmp.gt.s32.totalorder 0, %v5419
    %v5421 = vsel %vm5420, 0, %v5419
    %v5422 = vsub.s32 32, %v5421
    %v5423 = vshll.u32 %v5414, %v5421
    %v5424 = vshrl.u32 %v5406, %v5422
    %v5425 = vor.u32 %v5423, %v5424
    %v5426 = vsub.s32 4294967266, %v5421
    %v5427 = vadd.s32 %v5426, 127
    %v5428 = vshll.u32 %v5427, 23
    %v5429 = vor.u32 4788187, %v5428
    %v5430 = vand.u32 2147483647, %v5429
    %v5432 = vcvt.s32.f32 %v5425
    %v5433 = vmul.f32 %v5432, %v5430
    %v5434 = vxor.u32 %v5433, 2147483648
    %v5435 = vsel %vm5352, %v5434, %v5433
    %v5436 = vsub.s32 4, %v5412
    %v5437 = vsel %vm5352, %v5436, %v5412
    %v5438 = vsel %vm5351, %v1301, %v5435
    %v5439 = vsel %vm5351, 0, %v5437
    %v5440 = vcosq.f32.pop %v5438
    %v5441 = vsinq.f32.pop %v5438
    %vm5442 = vweird.f32 %v1301
    %v5443 = vadd.s32 %v5439, 3
    %v5444 = vand.u32 %v5443, 3
    %vm5445 = vcmp.lt.s32.totalorder %v5444, 2
    %vm5446 = vcmp.eq.s32.totalorder %v5444, 0
    %v5447 = vxor.u32 %v5441, 2147483648
    %v5448 = vsel %vm5446, %v5440, %v5447
    %vm5449 = vcmp.eq.s32.totalorder %v5444, 2
    %v5450 = vxor.u32 %v5440, 2147483648
    %v5451 = vsel %vm5449, %v5450, %v5441
    %v5452 = vsel %vm5445, %v5448, %v5451
    %v5453 = vsel %vm5442, nan, %v5452
    %v5454 = vand.u32 2147483647, %v1302
    %vm5455 = vcmp.le.f32.partialorder %v5454, 0.7853982
    %vm5456 = vcmp.lt.s32.totalorder %v1302, 0
    %v5457 = vand.u32 %v1302, 2139095040
    %v5458 = vshrl.u32 %v5457, 23
    %v5459 = vsub.s32 %v5458, 127
    %v5460 = vand.u32 2147483647, %v1302
    %v5461 = vand.u32 %v5460, 8388607
    %v5462 = vor.u32 %v5461, 8388608
    %v5463 = vsub.s32 0, %v5462
    %v5464 = vadd.s32 %v5459, 1
    %vm5465 = vcmp.gt.s32.totalorder %v5464, 0
    %v5466 = vsel %vm5465, %v5464, 0
    %v5467 = vshrl.u32 %v5466, 5
    %v5468 = vand.u32 %v5466, 31
    %v5469 = vsub.s32 32, %v5468
    %v5470 = vshrl.u32 683565275, %v5469
    %v5471 = vshll.u32 683565275, %v5468
    %v5472 = vshrl.u32 2475754826, %v5469
    %v5473 = vor.u32 %v5471, %v5472
    %v5474 = vshll.u32 2475754826, %v5468
    %v5475 = vshrl.u32 2131351028, %v5469
    %v5476 = vor.u32 %v5474, %v5475
    %v5477 = vshll.u32 2131351028, %v5468
    %v5478 = vshrl.u32 2102212464, %v5469
    %v5479 = vor.u32 %v5477, %v5478
    %v5480 = vshll.u32 2102212464, %v5468
    %v5481 = vshrl.u32 920167782, %v5469
    %v5482 = vor.u32 %v5480, %v5481
    %v5483 = vshll.u32 920167782, %v5468
    %v5484 = vshrl.u32 1326507024, %v5469
    %v5485 = vor.u32 %v5483, %v5484
    %vm5486 = vcmp.lt.s32.totalorder %v5467, 1
    %vm5487 = vcmp.lt.s32.totalorder %v5467, 2
    %vm5488 = vcmp.lt.s32.totalorder %v5467, 3
    %vm5489 = vcmp.lt.s32.totalorder %v5467, 4
    %v5490 = vsel %vm5486, %v5470, %v5473
    %v5491 = vsel %vm5489, %v5479, 2102212464
    %v5492 = vsel %vm5488, %v5476, %v5491
    %v5493 = vsel %vm5487, %v5490, %v5492
    %v5494 = vsel %vm5486, %v5473, %v5476
    %v5495 = vsel %vm5489, %v5482, 920167782
    %v5496 = vsel %vm5488, %v5479, %v5495
    %v5497 = vsel %vm5487, %v5494, %v5496
    %v5498 = vsel %vm5486, %v5476, %v5479
    %v5499 = vsel %vm5489, %v5485, 1326507024
    %v5500 = vsel %vm5488, %v5482, %v5499
    %v5501 = vsel %vm5487, %v5498, %v5500
    %v5502 = vshll.u32 %v5462, 8
    %v5503 = vmul.u32.u64.compose %v5502, %v5501
    %v5504 = vextract.low.u32 %v5503
    %v5505 = vextract.high.u32 %v5503
    %v5506 = vmul.u32.u64.compose %v5502, %v5497
    %v5507 = vextract.low.u32 %v5506
    %v5508 = vextract.high.u32 %v5506
    %v5509 = vmul.u32 %v5502, %v5493
    %v5510 = vadd.s32 %v5505, %v5507
    %vm5511 = vc.u32 %v5505, %v5507
    %v5512 = vadd.s32 %v5508, 1
    %v5513 = vsel %vm5511, %v5512, %v5508
    %v5514 = vadd.s32 %v5509, %v5513
    %v5515 = vadd.s32 %v5514, 536870912
    %v5516 = vshrl.u32 %v5515, 30
    %v5517 = vshll.u32 %v5516, 30
    %v5518 = vsub.s32 %v5514, %v5517
    %vm5519 = vcmp.lt.s32.totalorder %v5518, 0
    %v5520 = vsub.s32 0, %v5518
    %v5521 = vsel %vm5519, %v5520, %v5518
    %v5522 = vclz %v5521
    %v5523 = vsub.s32 %v5522, 2
    %vm5524 = vcmp.gt.s32.totalorder 0, %v5523
    %v5525 = vsel %vm5524, 0, %v5523
    %v5526 = vsub.s32 32, %v5525
    %v5527 = vshll.u32 %v5518, %v5525
    %v5528 = vshrl.u32 %v5510, %v5526
    %v5529 = vor.u32 %v5527, %v5528
    %v5530 = vsub.s32 4294967266, %v5525
    %v5531 = vadd.s32 %v5530, 127
    %v5532 = vshll.u32 %v5531, 23
    %v5533 = vor.u32 4788187, %v5532
    %v5534 = vand.u32 2147483647, %v5533
    %v5536 = vcvt.s32.f32 %v5529
    %v5537 = vmul.f32 %v5536, %v5534
    %v5538 = vxor.u32 %v5537, 2147483648
    %v5539 = vsel %vm5456, %v5538, %v5537
    %v5540 = vsub.s32 4, %v5516
    %v5541 = vsel %vm5456, %v5540, %v5516
    %v5542 = vsel %vm5455, %v1302, %v5539
    %v5543 = vsel %vm5455, 0, %v5541
    %v5544 = vcosq.f32.pop %v5542
    %v5545 = vsinq.f32.pop %v5542
    %vm5546 = vweird.f32 %v1302
    %v5547 = vadd.s32 %v5543, 3
    %v5548 = vand.u32 %v5547, 3
    %vm5549 = vcmp.lt.s32.totalorder %v5548, 2
    %vm5550 = vcmp.eq.s32.totalorder %v5548, 0
    %v5551 = vxor.u32 %v5545, 2147483648
    %v5552 = vsel %vm5550, %v5544, %v5551
    %vm5553 = vcmp.eq.s32.totalorder %v5548, 2
    %v5554 = vxor.u32 %v5544, 2147483648
    %v5555 = vsel %vm5553, %v5554, %v5545
    %v5556 = vsel %vm5549, %v5552, %v5555
    %v5557 = vsel %vm5546, nan, %v5556
    %v5558 = vand.u32 2147483647, %v1303
    %vm5559 = vcmp.le.f32.partialorder %v5558, 0.7853982
    %vm5560 = vcmp.lt.s32.totalorder %v1303, 0
    %v5561 = vand.u32 %v1303, 2139095040
    %v5562 = vshrl.u32 %v5561, 23
    %v5563 = vsub.s32 %v5562, 127
    %v5564 = vand.u32 2147483647, %v1303
    %v5565 = vand.u32 %v5564, 8388607
    %v5566 = vor.u32 %v5565, 8388608
    %v5567 = vsub.s32 0, %v5566
    %v5568 = vadd.s32 %v5563, 1
    %vm5569 = vcmp.gt.s32.totalorder %v5568, 0
    %v5570 = vsel %vm5569, %v5568, 0
    %v5571 = vshrl.u32 %v5570, 5
    %v5572 = vand.u32 %v5570, 31
    %v5573 = vsub.s32 32, %v5572
    %v5574 = vshrl.u32 683565275, %v5573
    %v5575 = vshll.u32 683565275, %v5572
    %v5576 = vshrl.u32 2475754826, %v5573
    %v5577 = vor.u32 %v5575, %v5576
    %v5578 = vshll.u32 2475754826, %v5572
    %v5579 = vshrl.u32 2131351028, %v5573
    %v5580 = vor.u32 %v5578, %v5579
    %v5581 = vshll.u32 2131351028, %v5572
    %v5582 = vshrl.u32 2102212464, %v5573
    %v5583 = vor.u32 %v5581, %v5582
    %v5584 = vshll.u32 2102212464, %v5572
    %v5585 = vshrl.u32 920167782, %v5573
    %v5586 = vor.u32 %v5584, %v5585
    %v5587 = vshll.u32 920167782, %v5572
    %v5588 = vshrl.u32 1326507024, %v5573
    %v5589 = vor.u32 %v5587, %v5588
    %vm5590 = vcmp.lt.s32.totalorder %v5571, 1
    %vm5591 = vcmp.lt.s32.totalorder %v5571, 2
    %vm5592 = vcmp.lt.s32.totalorder %v5571, 3
    %vm5593 = vcmp.lt.s32.totalorder %v5571, 4
    %v5594 = vsel %vm5590, %v5574, %v5577
    %v5595 = vsel %vm5593, %v5583, 2102212464
    %v5596 = vsel %vm5592, %v5580, %v5595
    %v5597 = vsel %vm5591, %v5594, %v5596
    %v5598 = vsel %vm5590, %v5577, %v5580
    %v5599 = vsel %vm5593, %v5586, 920167782
    %v5600 = vsel %vm5592, %v5583, %v5599
    %v5601 = vsel %vm5591, %v5598, %v5600
    %v5602 = vsel %vm5590, %v5580, %v5583
    %v5603 = vsel %vm5593, %v5589, 1326507024
    %v5604 = vsel %vm5592, %v5586, %v5603
    %v5605 = vsel %vm5591, %v5602, %v5604
    %v5606 = vshll.u32 %v5566, 8
    %v5607 = vmul.u32.u64.compose %v5606, %v5605
    %v5608 = vextract.low.u32 %v5607
    %v5609 = vextract.high.u32 %v5607
    %v5610 = vmul.u32.u64.compose %v5606, %v5601
    %v5611 = vextract.low.u32 %v5610
    %v5612 = vextract.high.u32 %v5610
    %v5613 = vmul.u32 %v5606, %v5597
    %v5614 = vadd.s32 %v5609, %v5611
    %vm5615 = vc.u32 %v5609, %v5611
    %v5616 = vadd.s32 %v5612, 1
    %v5617 = vsel %vm5615, %v5616, %v5612
    %v5618 = vadd.s32 %v5613, %v5617
    %v5619 = vadd.s32 %v5618, 536870912
    %v5620 = vshrl.u32 %v5619, 30
    %v5621 = vshll.u32 %v5620, 30
    %v5622 = vsub.s32 %v5618, %v5621
    %vm5623 = vcmp.lt.s32.totalorder %v5622, 0
    %v5624 = vsub.s32 0, %v5622
    %v5625 = vsel %vm5623, %v5624, %v5622
    %v5626 = vclz %v5625
    %v5627 = vsub.s32 %v5626, 2
    %vm5628 = vcmp.gt.s32.totalorder 0, %v5627
    %v5629 = vsel %vm5628, 0, %v5627
    %v5630 = vsub.s32 32, %v5629
    %v5631 = vshll.u32 %v5622, %v5629
    %v5632 = vshrl.u32 %v5614, %v5630
    %v5633 = vor.u32 %v5631, %v5632
    %v5634 = vsub.s32 4294967266, %v5629
    %v5635 = vadd.s32 %v5634, 127
    %v5636 = vshll.u32 %v5635, 23
    %v5637 = vor.u32 4788187, %v5636
    %v5638 = vand.u32 2147483647, %v5637
    %v5640 = vcvt.s32.f32 %v5633
    %v5641 = vmul.f32 %v5640, %v5638
    %v5642 = vxor.u32 %v5641, 2147483648
    %v5643 = vsel %vm5560, %v5642, %v5641
    %v5644 = vsub.s32 4, %v5620
    %v5645 = vsel %vm5560, %v5644, %v5620
    %v5646 = vsel %vm5559, %v1303, %v5643
    %v5647 = vsel %vm5559, 0, %v5645
    %v5648 = vcosq.f32.pop %v5646
    %v5649 = vsinq.f32.pop %v5646
    %vm5650 = vweird.f32 %v1303
    %v5651 = vadd.s32 %v5647, 3
    %v5652 = vand.u32 %v5651, 3
    %vm5653 = vcmp.lt.s32.totalorder %v5652, 2
    %vm5654 = vcmp.eq.s32.totalorder %v5652, 0
    %v5655 = vxor.u32 %v5649, 2147483648
    %v5656 = vsel %vm5654, %v5648, %v5655
    %vm5657 = vcmp.eq.s32.totalorder %v5652, 2
    %v5658 = vxor.u32 %v5648, 2147483648
    %v5659 = vsel %vm5657, %v5658, %v5649
    %v5660 = vsel %vm5653, %v5656, %v5659
    %v5661 = vsel %vm5650, nan, %v5660
    %v5662 = vand.u32 2147483647, %v1304
    %vm5663 = vcmp.le.f32.partialorder %v5662, 0.7853982
    %vm5664 = vcmp.lt.s32.totalorder %v1304, 0
    %v5665 = vand.u32 %v1304, 2139095040
    %v5666 = vshrl.u32 %v5665, 23
    %v5667 = vsub.s32 %v5666, 127
    %v5668 = vand.u32 2147483647, %v1304
    %v5669 = vand.u32 %v5668, 8388607
    %v5670 = vor.u32 %v5669, 8388608
    %v5671 = vsub.s32 0, %v5670
    %v5672 = vadd.s32 %v5667, 1
    %vm5673 = vcmp.gt.s32.totalorder %v5672, 0
    %v5674 = vsel %vm5673, %v5672, 0
    %v5675 = vshrl.u32 %v5674, 5
    %v5676 = vand.u32 %v5674, 31
    %v5677 = vsub.s32 32, %v5676
    %v5678 = vshrl.u32 683565275, %v5677
    %v5679 = vshll.u32 683565275, %v5676
    %v5680 = vshrl.u32 2475754826, %v5677
    %v5681 = vor.u32 %v5679, %v5680
    %v5682 = vshll.u32 2475754826, %v5676
    %v5683 = vshrl.u32 2131351028, %v5677
    %v5684 = vor.u32 %v5682, %v5683
    %v5685 = vshll.u32 2131351028, %v5676
    %v5686 = vshrl.u32 2102212464, %v5677
    %v5687 = vor.u32 %v5685, %v5686
    %v5688 = vshll.u32 2102212464, %v5676
    %v5689 = vshrl.u32 920167782, %v5677
    %v5690 = vor.u32 %v5688, %v5689
    %v5691 = vshll.u32 920167782, %v5676
    %v5692 = vshrl.u32 1326507024, %v5677
    %v5693 = vor.u32 %v5691, %v5692
    %vm5694 = vcmp.lt.s32.totalorder %v5675, 1
    %vm5695 = vcmp.lt.s32.totalorder %v5675, 2
    %vm5696 = vcmp.lt.s32.totalorder %v5675, 3
    %vm5697 = vcmp.lt.s32.totalorder %v5675, 4
    %v5698 = vsel %vm5694, %v5678, %v5681
    %v5699 = vsel %vm5697, %v5687, 2102212464
    %v5700 = vsel %vm5696, %v5684, %v5699
    %v5701 = vsel %vm5695, %v5698, %v5700
    %v5702 = vsel %vm5694, %v5681, %v5684
    %v5703 = vsel %vm5697, %v5690, 920167782
    %v5704 = vsel %vm5696, %v5687, %v5703
    %v5705 = vsel %vm5695, %v5702, %v5704
    %v5706 = vsel %vm5694, %v5684, %v5687
    %v5707 = vsel %vm5697, %v5693, 1326507024
    %v5708 = vsel %vm5696, %v5690, %v5707
    %v5709 = vsel %vm5695, %v5706, %v5708
    %v5710 = vshll.u32 %v5670, 8
    %v5711 = vmul.u32.u64.compose %v5710, %v5709
    %v5712 = vextract.low.u32 %v5711
    %v5713 = vextract.high.u32 %v5711
    %v5714 = vmul.u32.u64.compose %v5710, %v5705
    %v5715 = vextract.low.u32 %v5714
    %v5716 = vextract.high.u32 %v5714
    %v5717 = vmul.u32 %v5710, %v5701
    %v5718 = vadd.s32 %v5713, %v5715
    %vm5719 = vc.u32 %v5713, %v5715
    %v5720 = vadd.s32 %v5716, 1
    %v5721 = vsel %vm5719, %v5720, %v5716
    %v5722 = vadd.s32 %v5717, %v5721
    %v5723 = vadd.s32 %v5722, 536870912
    %v5724 = vshrl.u32 %v5723, 30
    %v5725 = vshll.u32 %v5724, 30
    %v5726 = vsub.s32 %v5722, %v5725
    %vm5727 = vcmp.lt.s32.totalorder %v5726, 0
    %v5728 = vsub.s32 0, %v5726
    %v5729 = vsel %vm5727, %v5728, %v5726
    %v5730 = vclz %v5729
    %v5731 = vsub.s32 %v5730, 2
    %vm5732 = vcmp.gt.s32.totalorder 0, %v5731
    %v5733 = vsel %vm5732, 0, %v5731
    %v5734 = vsub.s32 32, %v5733
    %v5735 = vshll.u32 %v5726, %v5733
    %v5736 = vshrl.u32 %v5718, %v5734
    %v5737 = vor.u32 %v5735, %v5736
    %v5738 = vsub.s32 4294967266, %v5733
    %v5739 = vadd.s32 %v5738, 127
    %v5740 = vshll.u32 %v5739, 23
    %v5741 = vor.u32 4788187, %v5740
    %v5742 = vand.u32 2147483647, %v5741
    %v5744 = vcvt.s32.f32 %v5737
    %v5745 = vmul.f32 %v5744, %v5742
    %v5746 = vxor.u32 %v5745, 2147483648
    %v5747 = vsel %vm5664, %v5746, %v5745
    %v5748 = vsub.s32 4, %v5724
    %v5749 = vsel %vm5664, %v5748, %v5724
    %v5750 = vsel %vm5663, %v1304, %v5747
    %v5751 = vsel %vm5663, 0, %v5749
    %v5752 = vcosq.f32.pop %v5750
    %v5753 = vsinq.f32.pop %v5750
    %vm5754 = vweird.f32 %v1304
    %v5755 = vadd.s32 %v5751, 3
    %v5756 = vand.u32 %v5755, 3
    %vm5757 = vcmp.lt.s32.totalorder %v5756, 2
    %vm5758 = vcmp.eq.s32.totalorder %v5756, 0
    %v5759 = vxor.u32 %v5753, 2147483648
    %v5760 = vsel %vm5758, %v5752, %v5759
    %vm5761 = vcmp.eq.s32.totalorder %v5756, 2
    %v5762 = vxor.u32 %v5752, 2147483648
    %v5763 = vsel %vm5761, %v5762, %v5753
    %v5764 = vsel %vm5757, %v5760, %v5763
    %v5765 = vsel %vm5754, nan, %v5764
    %v5766 = vand.u32 2147483647, %v1305
    %vm5767 = vcmp.le.f32.partialorder %v5766, 0.7853982
    %vm5768 = vcmp.lt.s32.totalorder %v1305, 0
    %v5769 = vand.u32 %v1305, 2139095040
    %v5770 = vshrl.u32 %v5769, 23
    %v5771 = vsub.s32 %v5770, 127
    %v5772 = vand.u32 2147483647, %v1305
    %v5773 = vand.u32 %v5772, 8388607
    %v5774 = vor.u32 %v5773, 8388608
    %v5775 = vsub.s32 0, %v5774
    %v5776 = vadd.s32 %v5771, 1
    %vm5777 = vcmp.gt.s32.totalorder %v5776, 0
    %v5778 = vsel %vm5777, %v5776, 0
    %v5779 = vshrl.u32 %v5778, 5
    %v5780 = vand.u32 %v5778, 31
    %v5781 = vsub.s32 32, %v5780
    %v5782 = vshrl.u32 683565275, %v5781
    %v5783 = vshll.u32 683565275, %v5780
    %v5784 = vshrl.u32 2475754826, %v5781
    %v5785 = vor.u32 %v5783, %v5784
    %v5786 = vshll.u32 2475754826, %v5780
    %v5787 = vshrl.u32 2131351028, %v5781
    %v5788 = vor.u32 %v5786, %v5787
    %v5789 = vshll.u32 2131351028, %v5780
    %v5790 = vshrl.u32 2102212464, %v5781
    %v5791 = vor.u32 %v5789, %v5790
    %v5792 = vshll.u32 2102212464, %v5780
    %v5793 = vshrl.u32 920167782, %v5781
    %v5794 = vor.u32 %v5792, %v5793
    %v5795 = vshll.u32 920167782, %v5780
    %v5796 = vshrl.u32 1326507024, %v5781
    %v5797 = vor.u32 %v5795, %v5796
    %vm5798 = vcmp.lt.s32.totalorder %v5779, 1
    %vm5799 = vcmp.lt.s32.totalorder %v5779, 2
    %vm5800 = vcmp.lt.s32.totalorder %v5779, 3
    %vm5801 = vcmp.lt.s32.totalorder %v5779, 4
    %v5802 = vsel %vm5798, %v5782, %v5785
    %v5803 = vsel %vm5801, %v5791, 2102212464
    %v5804 = vsel %vm5800, %v5788, %v5803
    %v5805 = vsel %vm5799, %v5802, %v5804
    %v5806 = vsel %vm5798, %v5785, %v5788
    %v5807 = vsel %vm5801, %v5794, 920167782
    %v5808 = vsel %vm5800, %v5791, %v5807
    %v5809 = vsel %vm5799, %v5806, %v5808
    %v5810 = vsel %vm5798, %v5788, %v5791
    %v5811 = vsel %vm5801, %v5797, 1326507024
    %v5812 = vsel %vm5800, %v5794, %v5811
    %v5813 = vsel %vm5799, %v5810, %v5812
    %v5814 = vshll.u32 %v5774, 8
    %v5815 = vmul.u32.u64.compose %v5814, %v5813
    %v5816 = vextract.low.u32 %v5815
    %v5817 = vextract.high.u32 %v5815
    %v5818 = vmul.u32.u64.compose %v5814, %v5809
    %v5819 = vextract.low.u32 %v5818
    %v5820 = vextract.high.u32 %v5818
    %v5821 = vmul.u32 %v5814, %v5805
    %v5822 = vadd.s32 %v5817, %v5819
    %vm5823 = vc.u32 %v5817, %v5819
    %v5824 = vadd.s32 %v5820, 1
    %v5825 = vsel %vm5823, %v5824, %v5820
    %v5826 = vadd.s32 %v5821, %v5825
    %v5827 = vadd.s32 %v5826, 536870912
    %v5828 = vshrl.u32 %v5827, 30
    %v5829 = vshll.u32 %v5828, 30
    %v5830 = vsub.s32 %v5826, %v5829
    %vm5831 = vcmp.lt.s32.totalorder %v5830, 0
    %v5832 = vsub.s32 0, %v5830
    %v5833 = vsel %vm5831, %v5832, %v5830
    %v5834 = vclz %v5833
    %v5835 = vsub.s32 %v5834, 2
    %vm5836 = vcmp.gt.s32.totalorder 0, %v5835
    %v5837 = vsel %vm5836, 0, %v5835
    %v5838 = vsub.s32 32, %v5837
    %v5839 = vshll.u32 %v5830, %v5837
    %v5840 = vshrl.u32 %v5822, %v5838
    %v5841 = vor.u32 %v5839, %v5840
    %v5842 = vsub.s32 4294967266, %v5837
    %v5843 = vadd.s32 %v5842, 127
    %v5844 = vshll.u32 %v5843, 23
    %v5845 = vor.u32 4788187, %v5844
    %v5846 = vand.u32 2147483647, %v5845
    %v5848 = vcvt.s32.f32 %v5841
    %v5849 = vmul.f32 %v5848, %v5846
    %v5850 = vxor.u32 %v5849, 2147483648
    %v5851 = vsel %vm5768, %v5850, %v5849
    %v5852 = vsub.s32 4, %v5828
    %v5853 = vsel %vm5768, %v5852, %v5828
    %v5854 = vsel %vm5767, %v1305, %v5851
    %v5855 = vsel %vm5767, 0, %v5853
    %v5856 = vcosq.f32.pop %v5854
    %v5857 = vsinq.f32.pop %v5854
    %vm5858 = vweird.f32 %v1305
    %v5859 = vadd.s32 %v5855, 3
    %v5860 = vand.u32 %v5859, 3
    %vm5861 = vcmp.lt.s32.totalorder %v5860, 2
    %vm5862 = vcmp.eq.s32.totalorder %v5860, 0
    %v5863 = vxor.u32 %v5857, 2147483648
    %v5864 = vsel %vm5862, %v5856, %v5863
    %vm5865 = vcmp.eq.s32.totalorder %v5860, 2
    %v5866 = vxor.u32 %v5856, 2147483648
    %v5867 = vsel %vm5865, %v5866, %v5857
    %v5868 = vsel %vm5861, %v5864, %v5867
    %v5869 = vsel %vm5858, nan, %v5868
    %v5870 = vand.u32 2147483647, %v1306
    %vm5871 = vcmp.le.f32.partialorder %v5870, 0.7853982
    %vm5872 = vcmp.lt.s32.totalorder %v1306, 0
    %v5873 = vand.u32 %v1306, 2139095040
    %v5874 = vshrl.u32 %v5873, 23
    %v5875 = vsub.s32 %v5874, 127
    %v5876 = vand.u32 2147483647, %v1306
    %v5877 = vand.u32 %v5876, 8388607
    %v5878 = vor.u32 %v5877, 8388608
    %v5879 = vsub.s32 0, %v5878
    %v5880 = vadd.s32 %v5875, 1
    %vm5881 = vcmp.gt.s32.totalorder %v5880, 0
    %v5882 = vsel %vm5881, %v5880, 0
    %v5883 = vshrl.u32 %v5882, 5
    %v5884 = vand.u32 %v5882, 31
    %v5885 = vsub.s32 32, %v5884
    %v5886 = vshrl.u32 683565275, %v5885
    %v5887 = vshll.u32 683565275, %v5884
    %v5888 = vshrl.u32 2475754826, %v5885
    %v5889 = vor.u32 %v5887, %v5888
    %v5890 = vshll.u32 2475754826, %v5884
    %v5891 = vshrl.u32 2131351028, %v5885
    %v5892 = vor.u32 %v5890, %v5891
    %v5893 = vshll.u32 2131351028, %v5884
    %v5894 = vshrl.u32 2102212464, %v5885
    %v5895 = vor.u32 %v5893, %v5894
    %v5896 = vshll.u32 2102212464, %v5884
    %v5897 = vshrl.u32 920167782, %v5885
    %v5898 = vor.u32 %v5896, %v5897
    %v5899 = vshll.u32 920167782, %v5884
    %v5900 = vshrl.u32 1326507024, %v5885
    %v5901 = vor.u32 %v5899, %v5900
    %vm5902 = vcmp.lt.s32.totalorder %v5883, 1
    %vm5903 = vcmp.lt.s32.totalorder %v5883, 2
    %vm5904 = vcmp.lt.s32.totalorder %v5883, 3
    %vm5905 = vcmp.lt.s32.totalorder %v5883, 4
    %v5906 = vsel %vm5902, %v5886, %v5889
    %v5907 = vsel %vm5905, %v5895, 2102212464
    %v5908 = vsel %vm5904, %v5892, %v5907
    %v5909 = vsel %vm5903, %v5906, %v5908
    %v5910 = vsel %vm5902, %v5889, %v5892
    %v5911 = vsel %vm5905, %v5898, 920167782
    %v5912 = vsel %vm5904, %v5895, %v5911
    %v5913 = vsel %vm5903, %v5910, %v5912
    %v5914 = vsel %vm5902, %v5892, %v5895
    %v5915 = vsel %vm5905, %v5901, 1326507024
    %v5916 = vsel %vm5904, %v5898, %v5915
    %v5917 = vsel %vm5903, %v5914, %v5916
    %v5918 = vshll.u32 %v5878, 8
    %v5919 = vmul.u32.u64.compose %v5918, %v5917
    %v5920 = vextract.low.u32 %v5919
    %v5921 = vextract.high.u32 %v5919
    %v5922 = vmul.u32.u64.compose %v5918, %v5913
    %v5923 = vextract.low.u32 %v5922
    %v5924 = vextract.high.u32 %v5922
    %v5925 = vmul.u32 %v5918, %v5909
    %v5926 = vadd.s32 %v5921, %v5923
    %vm5927 = vc.u32 %v5921, %v5923
    %v5928 = vadd.s32 %v5924, 1
    %v5929 = vsel %vm5927, %v5928, %v5924
    %v5930 = vadd.s32 %v5925, %v5929
    %v5931 = vadd.s32 %v5930, 536870912
    %v5932 = vshrl.u32 %v5931, 30
    %v5933 = vshll.u32 %v5932, 30
    %v5934 = vsub.s32 %v5930, %v5933
    %vm5935 = vcmp.lt.s32.totalorder %v5934, 0
    %v5936 = vsub.s32 0, %v5934
    %v5937 = vsel %vm5935, %v5936, %v5934
    %v5938 = vclz %v5937
    %v5939 = vsub.s32 %v5938, 2
    %vm5940 = vcmp.gt.s32.totalorder 0, %v5939
    %v5941 = vsel %vm5940, 0, %v5939
    %v5942 = vsub.s32 32, %v5941
    %v5943 = vshll.u32 %v5934, %v5941
    %v5944 = vshrl.u32 %v5926, %v5942
    %v5945 = vor.u32 %v5943, %v5944
    %v5946 = vsub.s32 4294967266, %v5941
    %v5947 = vadd.s32 %v5946, 127
    %v5948 = vshll.u32 %v5947, 23
    %v5949 = vor.u32 4788187, %v5948
    %v5950 = vand.u32 2147483647, %v5949
    %v5952 = vcvt.s32.f32 %v5945
    %v5953 = vmul.f32 %v5952, %v5950
    %v5954 = vxor.u32 %v5953, 2147483648
    %v5955 = vsel %vm5872, %v5954, %v5953
    %v5956 = vsub.s32 4, %v5932
    %v5957 = vsel %vm5872, %v5956, %v5932
    %v5958 = vsel %vm5871, %v1306, %v5955
    %v5959 = vsel %vm5871, 0, %v5957
    %v5960 = vcosq.f32.pop %v5958
    %v5961 = vsinq.f32.pop %v5958
    %vm5962 = vweird.f32 %v1306
    %v5963 = vadd.s32 %v5959, 3
    %v5964 = vand.u32 %v5963, 3
    %vm5965 = vcmp.lt.s32.totalorder %v5964, 2
    %vm5966 = vcmp.eq.s32.totalorder %v5964, 0
    %v5967 = vxor.u32 %v5961, 2147483648
    %v5968 = vsel %vm5966, %v5960, %v5967
    %vm5969 = vcmp.eq.s32.totalorder %v5964, 2
    %v5970 = vxor.u32 %v5960, 2147483648
    %v5971 = vsel %vm5969, %v5970, %v5961
    %v5972 = vsel %vm5965, %v5968, %v5971
    %v5973 = vsel %vm5962, nan, %v5972
    %v5974 = vand.u32 2147483647, %v1307
    %vm5975 = vcmp.le.f32.partialorder %v5974, 0.7853982
    %vm5976 = vcmp.lt.s32.totalorder %v1307, 0
    %v5977 = vand.u32 %v1307, 2139095040
    %v5978 = vshrl.u32 %v5977, 23
    %v5979 = vsub.s32 %v5978, 127
    %v5980 = vand.u32 2147483647, %v1307
    %v5981 = vand.u32 %v5980, 8388607
    %v5982 = vor.u32 %v5981, 8388608
    %v5983 = vsub.s32 0, %v5982
    %v5984 = vadd.s32 %v5979, 1
    %vm5985 = vcmp.gt.s32.totalorder %v5984, 0
    %v5986 = vsel %vm5985, %v5984, 0
    %v5987 = vshrl.u32 %v5986, 5
    %v5988 = vand.u32 %v5986, 31
    %v5989 = vsub.s32 32, %v5988
    %v5990 = vshrl.u32 683565275, %v5989
    %v5991 = vshll.u32 683565275, %v5988
    %v5992 = vshrl.u32 2475754826, %v5989
    %v5993 = vor.u32 %v5991, %v5992
    %v5994 = vshll.u32 2475754826, %v5988
    %v5995 = vshrl.u32 2131351028, %v5989
    %v5996 = vor.u32 %v5994, %v5995
    %v5997 = vshll.u32 2131351028, %v5988
    %v5998 = vshrl.u32 2102212464, %v5989
    %v5999 = vor.u32 %v5997, %v5998
    %v6000 = vshll.u32 2102212464, %v5988
    %v6001 = vshrl.u32 920167782, %v5989
    %v6002 = vor.u32 %v6000, %v6001
    %v6003 = vshll.u32 920167782, %v5988
    %v6004 = vshrl.u32 1326507024, %v5989
    %v6005 = vor.u32 %v6003, %v6004
    %vm6006 = vcmp.lt.s32.totalorder %v5987, 1
    %vm6007 = vcmp.lt.s32.totalorder %v5987, 2
    %vm6008 = vcmp.lt.s32.totalorder %v5987, 3
    %vm6009 = vcmp.lt.s32.totalorder %v5987, 4
    %v6010 = vsel %vm6006, %v5990, %v5993
    %v6011 = vsel %vm6009, %v5999, 2102212464
    %v6012 = vsel %vm6008, %v5996, %v6011
    %v6013 = vsel %vm6007, %v6010, %v6012
    %v6014 = vsel %vm6006, %v5993, %v5996
    %v6015 = vsel %vm6009, %v6002, 920167782
    %v6016 = vsel %vm6008, %v5999, %v6015
    %v6017 = vsel %vm6007, %v6014, %v6016
    %v6018 = vsel %vm6006, %v5996, %v5999
    %v6019 = vsel %vm6009, %v6005, 1326507024
    %v6020 = vsel %vm6008, %v6002, %v6019
    %v6021 = vsel %vm6007, %v6018, %v6020
    %v6022 = vshll.u32 %v5982, 8
    %v6023 = vmul.u32.u64.compose %v6022, %v6021
    %v6024 = vextract.low.u32 %v6023
    %v6025 = vextract.high.u32 %v6023
    %v6026 = vmul.u32.u64.compose %v6022, %v6017
    %v6027 = vextract.low.u32 %v6026
    %v6028 = vextract.high.u32 %v6026
    %v6029 = vmul.u32 %v6022, %v6013
    %v6030 = vadd.s32 %v6025, %v6027
    %vm6031 = vc.u32 %v6025, %v6027
    %v6032 = vadd.s32 %v6028, 1
    %v6033 = vsel %vm6031, %v6032, %v6028
    %v6034 = vadd.s32 %v6029, %v6033
    %v6035 = vadd.s32 %v6034, 536870912
    %v6036 = vshrl.u32 %v6035, 30
    %v6037 = vshll.u32 %v6036, 30
    %v6038 = vsub.s32 %v6034, %v6037
    %vm6039 = vcmp.lt.s32.totalorder %v6038, 0
    %v6040 = vsub.s32 0, %v6038
    %v6041 = vsel %vm6039, %v6040, %v6038
    %v6042 = vclz %v6041
    %v6043 = vsub.s32 %v6042, 2
    %vm6044 = vcmp.gt.s32.totalorder 0, %v6043
    %v6045 = vsel %vm6044, 0, %v6043
    %v6046 = vsub.s32 32, %v6045
    %v6047 = vshll.u32 %v6038, %v6045
    %v6048 = vshrl.u32 %v6030, %v6046
    %v6049 = vor.u32 %v6047, %v6048
    %v6050 = vsub.s32 4294967266, %v6045
    %v6051 = vadd.s32 %v6050, 127
    %v6052 = vshll.u32 %v6051, 23
    %v6053 = vor.u32 4788187, %v6052
    %v6054 = vand.u32 2147483647, %v6053
    %v6056 = vcvt.s32.f32 %v6049
    %v6057 = vmul.f32 %v6056, %v6054
    %v6058 = vxor.u32 %v6057, 2147483648
    %v6059 = vsel %vm5976, %v6058, %v6057
    %v6060 = vsub.s32 4, %v6036
    %v6061 = vsel %vm5976, %v6060, %v6036
    %v6062 = vsel %vm5975, %v1307, %v6059
    %v6063 = vsel %vm5975, 0, %v6061
    %v6064 = vcosq.f32.pop %v6062
    %v6065 = vsinq.f32.pop %v6062
    %vm6066 = vweird.f32 %v1307
    %v6067 = vadd.s32 %v6063, 3
    %v6068 = vand.u32 %v6067, 3
    %vm6069 = vcmp.lt.s32.totalorder %v6068, 2
    %vm6070 = vcmp.eq.s32.totalorder %v6068, 0
    %v6071 = vxor.u32 %v6065, 2147483648
    %v6072 = vsel %vm6070, %v6064, %v6071
    %vm6073 = vcmp.eq.s32.totalorder %v6068, 2
    %v6074 = vxor.u32 %v6064, 2147483648
    %v6075 = vsel %vm6073, %v6074, %v6065
    %v6076 = vsel %vm6069, %v6072, %v6075
    %v6077 = vsel %vm6066, nan, %v6076
    %v6078 = vand.u32 2147483647, %v1308
    %vm6079 = vcmp.le.f32.partialorder %v6078, 0.7853982
    %vm6080 = vcmp.lt.s32.totalorder %v1308, 0
    %v6081 = vand.u32 %v1308, 2139095040
    %v6082 = vshrl.u32 %v6081, 23
    %v6083 = vsub.s32 %v6082, 127
    %v6084 = vand.u32 2147483647, %v1308
    %v6085 = vand.u32 %v6084, 8388607
    %v6086 = vor.u32 %v6085, 8388608
    %v6087 = vsub.s32 0, %v6086
    %v6088 = vadd.s32 %v6083, 1
    %vm6089 = vcmp.gt.s32.totalorder %v6088, 0
    %v6090 = vsel %vm6089, %v6088, 0
    %v6091 = vshrl.u32 %v6090, 5
    %v6092 = vand.u32 %v6090, 31
    %v6093 = vsub.s32 32, %v6092
    %v6094 = vshrl.u32 683565275, %v6093
    %v6095 = vshll.u32 683565275, %v6092
    %v6096 = vshrl.u32 2475754826, %v6093
    %v6097 = vor.u32 %v6095, %v6096
    %v6098 = vshll.u32 2475754826, %v6092
    %v6099 = vshrl.u32 2131351028, %v6093
    %v6100 = vor.u32 %v6098, %v6099
    %v6101 = vshll.u32 2131351028, %v6092
    %v6102 = vshrl.u32 2102212464, %v6093
    %v6103 = vor.u32 %v6101, %v6102
    %v6104 = vshll.u32 2102212464, %v6092
    %v6105 = vshrl.u32 920167782, %v6093
    %v6106 = vor.u32 %v6104, %v6105
    %v6107 = vshll.u32 920167782, %v6092
    %v6108 = vshrl.u32 1326507024, %v6093
    %v6109 = vor.u32 %v6107, %v6108
    %vm6110 = vcmp.lt.s32.totalorder %v6091, 1
    %vm6111 = vcmp.lt.s32.totalorder %v6091, 2
    %vm6112 = vcmp.lt.s32.totalorder %v6091, 3
    %vm6113 = vcmp.lt.s32.totalorder %v6091, 4
    %v6114 = vsel %vm6110, %v6094, %v6097
    %v6115 = vsel %vm6113, %v6103, 2102212464
    %v6116 = vsel %vm6112, %v6100, %v6115
    %v6117 = vsel %vm6111, %v6114, %v6116
    %v6118 = vsel %vm6110, %v6097, %v6100
    %v6119 = vsel %vm6113, %v6106, 920167782
    %v6120 = vsel %vm6112, %v6103, %v6119
    %v6121 = vsel %vm6111, %v6118, %v6120
    %v6122 = vsel %vm6110, %v6100, %v6103
    %v6123 = vsel %vm6113, %v6109, 1326507024
    %v6124 = vsel %vm6112, %v6106, %v6123
    %v6125 = vsel %vm6111, %v6122, %v6124
    %v6126 = vshll.u32 %v6086, 8
    %v6127 = vmul.u32.u64.compose %v6126, %v6125
    %v6128 = vextract.low.u32 %v6127
    %v6129 = vextract.high.u32 %v6127
    %v6130 = vmul.u32.u64.compose %v6126, %v6121
    %v6131 = vextract.low.u32 %v6130
    %v6132 = vextract.high.u32 %v6130
    %v6133 = vmul.u32 %v6126, %v6117
    %v6134 = vadd.s32 %v6129, %v6131
    %vm6135 = vc.u32 %v6129, %v6131
    %v6136 = vadd.s32 %v6132, 1
    %v6137 = vsel %vm6135, %v6136, %v6132
    %v6138 = vadd.s32 %v6133, %v6137
    %v6139 = vadd.s32 %v6138, 536870912
    %v6140 = vshrl.u32 %v6139, 30
    %v6141 = vshll.u32 %v6140, 30
    %v6142 = vsub.s32 %v6138, %v6141
    %vm6143 = vcmp.lt.s32.totalorder %v6142, 0
    %v6144 = vsub.s32 0, %v6142
    %v6145 = vsel %vm6143, %v6144, %v6142
    %v6146 = vclz %v6145
    %v6147 = vsub.s32 %v6146, 2
    %vm6148 = vcmp.gt.s32.totalorder 0, %v6147
    %v6149 = vsel %vm6148, 0, %v6147
    %v6150 = vsub.s32 32, %v6149
    %v6151 = vshll.u32 %v6142, %v6149
    %v6152 = vshrl.u32 %v6134, %v6150
    %v6153 = vor.u32 %v6151, %v6152
    %v6154 = vsub.s32 4294967266, %v6149
    %v6155 = vadd.s32 %v6154, 127
    %v6156 = vshll.u32 %v6155, 23
    %v6157 = vor.u32 4788187, %v6156
    %v6158 = vand.u32 2147483647, %v6157
    %v6160 = vcvt.s32.f32 %v6153
    %v6161 = vmul.f32 %v6160, %v6158
    %v6162 = vxor.u32 %v6161, 2147483648
    %v6163 = vsel %vm6080, %v6162, %v6161
    %v6164 = vsub.s32 4, %v6140
    %v6165 = vsel %vm6080, %v6164, %v6140
    %v6166 = vsel %vm6079, %v1308, %v6163
    %v6167 = vsel %vm6079, 0, %v6165
    %v6168 = vcosq.f32.pop %v6166
    %v6169 = vsinq.f32.pop %v6166
    %vm6170 = vweird.f32 %v1308
    %v6171 = vadd.s32 %v6167, 3
    %v6172 = vand.u32 %v6171, 3
    %vm6173 = vcmp.lt.s32.totalorder %v6172, 2
    %vm6174 = vcmp.eq.s32.totalorder %v6172, 0
    %v6175 = vxor.u32 %v6169, 2147483648
    %v6176 = vsel %vm6174, %v6168, %v6175
    %vm6177 = vcmp.eq.s32.totalorder %v6172, 2
    %v6178 = vxor.u32 %v6168, 2147483648
    %v6179 = vsel %vm6177, %v6178, %v6169
    %v6180 = vsel %vm6173, %v6176, %v6179
    %v6181 = vsel %vm6170, nan, %v6180
    %v6182 = vand.u32 2147483647, %v1309
    %vm6183 = vcmp.le.f32.partialorder %v6182, 0.7853982
    %vm6184 = vcmp.lt.s32.totalorder %v1309, 0
    %v6185 = vand.u32 %v1309, 2139095040
    %v6186 = vshrl.u32 %v6185, 23
    %v6187 = vsub.s32 %v6186, 127
    %v6188 = vand.u32 2147483647, %v1309
    %v6189 = vand.u32 %v6188, 8388607
    %v6190 = vor.u32 %v6189, 8388608
    %v6191 = vsub.s32 0, %v6190
    %v6192 = vadd.s32 %v6187, 1
    %vm6193 = vcmp.gt.s32.totalorder %v6192, 0
    %v6194 = vsel %vm6193, %v6192, 0
    %v6195 = vshrl.u32 %v6194, 5
    %v6196 = vand.u32 %v6194, 31
    %v6197 = vsub.s32 32, %v6196
    %v6198 = vshrl.u32 683565275, %v6197
    %v6199 = vshll.u32 683565275, %v6196
    %v6200 = vshrl.u32 2475754826, %v6197
    %v6201 = vor.u32 %v6199, %v6200
    %v6202 = vshll.u32 2475754826, %v6196
    %v6203 = vshrl.u32 2131351028, %v6197
    %v6204 = vor.u32 %v6202, %v6203
    %v6205 = vshll.u32 2131351028, %v6196
    %v6206 = vshrl.u32 2102212464, %v6197
    %v6207 = vor.u32 %v6205, %v6206
    %v6208 = vshll.u32 2102212464, %v6196
    %v6209 = vshrl.u32 920167782, %v6197
    %v6210 = vor.u32 %v6208, %v6209
    %v6211 = vshll.u32 920167782, %v6196
    %v6212 = vshrl.u32 1326507024, %v6197
    %v6213 = vor.u32 %v6211, %v6212
    %vm6214 = vcmp.lt.s32.totalorder %v6195, 1
    %vm6215 = vcmp.lt.s32.totalorder %v6195, 2
    %vm6216 = vcmp.lt.s32.totalorder %v6195, 3
    %vm6217 = vcmp.lt.s32.totalorder %v6195, 4
    %v6218 = vsel %vm6214, %v6198, %v6201
    %v6219 = vsel %vm6217, %v6207, 2102212464
    %v6220 = vsel %vm6216, %v6204, %v6219
    %v6221 = vsel %vm6215, %v6218, %v6220
    %v6222 = vsel %vm6214, %v6201, %v6204
    %v6223 = vsel %vm6217, %v6210, 920167782
    %v6224 = vsel %vm6216, %v6207, %v6223
    %v6225 = vsel %vm6215, %v6222, %v6224
    %v6226 = vsel %vm6214, %v6204, %v6207
    %v6227 = vsel %vm6217, %v6213, 1326507024
    %v6228 = vsel %vm6216, %v6210, %v6227
    %v6229 = vsel %vm6215, %v6226, %v6228
    %v6230 = vshll.u32 %v6190, 8
    %v6231 = vmul.u32.u64.compose %v6230, %v6229
    %v6232 = vextract.low.u32 %v6231
    %v6233 = vextract.high.u32 %v6231
    %v6234 = vmul.u32.u64.compose %v6230, %v6225
    %v6235 = vextract.low.u32 %v6234
    %v6236 = vextract.high.u32 %v6234
    %v6237 = vmul.u32 %v6230, %v6221
    %v6238 = vadd.s32 %v6233, %v6235
    %vm6239 = vc.u32 %v6233, %v6235
    %v6240 = vadd.s32 %v6236, 1
    %v6241 = vsel %vm6239, %v6240, %v6236
    %v6242 = vadd.s32 %v6237, %v6241
    %v6243 = vadd.s32 %v6242, 536870912
    %v6244 = vshrl.u32 %v6243, 30
    %v6245 = vshll.u32 %v6244, 30
    %v6246 = vsub.s32 %v6242, %v6245
    %vm6247 = vcmp.lt.s32.totalorder %v6246, 0
    %v6248 = vsub.s32 0, %v6246
    %v6249 = vsel %vm6247, %v6248, %v6246
    %v6250 = vclz %v6249
    %v6251 = vsub.s32 %v6250, 2
    %vm6252 = vcmp.gt.s32.totalorder 0, %v6251
    %v6253 = vsel %vm6252, 0, %v6251
    %v6254 = vsub.s32 32, %v6253
    %v6255 = vshll.u32 %v6246, %v6253
    %v6256 = vshrl.u32 %v6238, %v6254
    %v6257 = vor.u32 %v6255, %v6256
    %v6258 = vsub.s32 4294967266, %v6253
    %v6259 = vadd.s32 %v6258, 127
    %v6260 = vshll.u32 %v6259, 23
    %v6261 = vor.u32 4788187, %v6260
    %v6262 = vand.u32 2147483647, %v6261
    %v6264 = vcvt.s32.f32 %v6257
    %v6265 = vmul.f32 %v6264, %v6262
    %v6266 = vxor.u32 %v6265, 2147483648
    %v6267 = vsel %vm6184, %v6266, %v6265
    %v6268 = vsub.s32 4, %v6244
    %v6269 = vsel %vm6184, %v6268, %v6244
    %v6270 = vsel %vm6183, %v1309, %v6267
    %v6271 = vsel %vm6183, 0, %v6269
    %v6272 = vcosq.f32.pop %v6270
    %v6273 = vsinq.f32.pop %v6270
    %vm6274 = vweird.f32 %v1309
    %v6275 = vadd.s32 %v6271, 3
    %v6276 = vand.u32 %v6275, 3
    %vm6277 = vcmp.lt.s32.totalorder %v6276, 2
    %vm6278 = vcmp.eq.s32.totalorder %v6276, 0
    %v6279 = vxor.u32 %v6273, 2147483648
    %v6280 = vsel %vm6278, %v6272, %v6279
    %vm6281 = vcmp.eq.s32.totalorder %v6276, 2
    %v6282 = vxor.u32 %v6272, 2147483648
    %v6283 = vsel %vm6281, %v6282, %v6273
    %v6284 = vsel %vm6277, %v6280, %v6283
    %v6285 = vsel %vm6274, nan, %v6284
    %v6286 = vand.u32 2147483647, %v1310
    %vm6287 = vcmp.le.f32.partialorder %v6286, 0.7853982
    %vm6288 = vcmp.lt.s32.totalorder %v1310, 0
    %v6289 = vand.u32 %v1310, 2139095040
    %v6290 = vshrl.u32 %v6289, 23
    %v6291 = vsub.s32 %v6290, 127
    %v6292 = vand.u32 2147483647, %v1310
    %v6293 = vand.u32 %v6292, 8388607
    %v6294 = vor.u32 %v6293, 8388608
    %v6295 = vsub.s32 0, %v6294
    %v6296 = vadd.s32 %v6291, 1
    %vm6297 = vcmp.gt.s32.totalorder %v6296, 0
    %v6298 = vsel %vm6297, %v6296, 0
    %v6299 = vshrl.u32 %v6298, 5
    %v6300 = vand.u32 %v6298, 31
    %v6301 = vsub.s32 32, %v6300
    %v6302 = vshrl.u32 683565275, %v6301
    %v6303 = vshll.u32 683565275, %v6300
    %v6304 = vshrl.u32 2475754826, %v6301
    %v6305 = vor.u32 %v6303, %v6304
    %v6306 = vshll.u32 2475754826, %v6300
    %v6307 = vshrl.u32 2131351028, %v6301
    %v6308 = vor.u32 %v6306, %v6307
    %v6309 = vshll.u32 2131351028, %v6300
    %v6310 = vshrl.u32 2102212464, %v6301
    %v6311 = vor.u32 %v6309, %v6310
    %v6312 = vshll.u32 2102212464, %v6300
    %v6313 = vshrl.u32 920167782, %v6301
    %v6314 = vor.u32 %v6312, %v6313
    %v6315 = vshll.u32 920167782, %v6300
    %v6316 = vshrl.u32 1326507024, %v6301
    %v6317 = vor.u32 %v6315, %v6316
    %vm6318 = vcmp.lt.s32.totalorder %v6299, 1
    %vm6319 = vcmp.lt.s32.totalorder %v6299, 2
    %vm6320 = vcmp.lt.s32.totalorder %v6299, 3
    %vm6321 = vcmp.lt.s32.totalorder %v6299, 4
    %v6322 = vsel %vm6318, %v6302, %v6305
    %v6323 = vsel %vm6321, %v6311, 2102212464
    %v6324 = vsel %vm6320, %v6308, %v6323
    %v6325 = vsel %vm6319, %v6322, %v6324
    %v6326 = vsel %vm6318, %v6305, %v6308
    %v6327 = vsel %vm6321, %v6314, 920167782
    %v6328 = vsel %vm6320, %v6311, %v6327
    %v6329 = vsel %vm6319, %v6326, %v6328
    %v6330 = vsel %vm6318, %v6308, %v6311
    %v6331 = vsel %vm6321, %v6317, 1326507024
    %v6332 = vsel %vm6320, %v6314, %v6331
    %v6333 = vsel %vm6319, %v6330, %v6332
    %v6334 = vshll.u32 %v6294, 8
    %v6335 = vmul.u32.u64.compose %v6334, %v6333
    %v6336 = vextract.low.u32 %v6335
    %v6337 = vextract.high.u32 %v6335
    %v6338 = vmul.u32.u64.compose %v6334, %v6329
    %v6339 = vextract.low.u32 %v6338
    %v6340 = vextract.high.u32 %v6338
    %v6341 = vmul.u32 %v6334, %v6325
    %v6342 = vadd.s32 %v6337, %v6339
    %vm6343 = vc.u32 %v6337, %v6339
    %v6344 = vadd.s32 %v6340, 1
    %v6345 = vsel %vm6343, %v6344, %v6340
    %v6346 = vadd.s32 %v6341, %v6345
    %v6347 = vadd.s32 %v6346, 536870912
    %v6348 = vshrl.u32 %v6347, 30
    %v6349 = vshll.u32 %v6348, 30
    %v6350 = vsub.s32 %v6346, %v6349
    %vm6351 = vcmp.lt.s32.totalorder %v6350, 0
    %v6352 = vsub.s32 0, %v6350
    %v6353 = vsel %vm6351, %v6352, %v6350
    %v6354 = vclz %v6353
    %v6355 = vsub.s32 %v6354, 2
    %vm6356 = vcmp.gt.s32.totalorder 0, %v6355
    %v6357 = vsel %vm6356, 0, %v6355
    %v6358 = vsub.s32 32, %v6357
    %v6359 = vshll.u32 %v6350, %v6357
    %v6360 = vshrl.u32 %v6342, %v6358
    %v6361 = vor.u32 %v6359, %v6360
    %v6362 = vsub.s32 4294967266, %v6357
    %v6363 = vadd.s32 %v6362, 127
    %v6364 = vshll.u32 %v6363, 23
    %v6365 = vor.u32 4788187, %v6364
    %v6366 = vand.u32 2147483647, %v6365
    %v6368 = vcvt.s32.f32 %v6361
    %v6369 = vmul.f32 %v6368, %v6366
    %v6370 = vxor.u32 %v6369, 2147483648
    %v6371 = vsel %vm6288, %v6370, %v6369
    %v6372 = vsub.s32 4, %v6348
    %v6373 = vsel %vm6288, %v6372, %v6348
    %v6374 = vsel %vm6287, %v1310, %v6371
    %v6375 = vsel %vm6287, 0, %v6373
    %v6376 = vcosq.f32.pop %v6374
    %v6377 = vsinq.f32.pop %v6374
    %vm6378 = vweird.f32 %v1310
    %v6379 = vadd.s32 %v6375, 3
    %v6380 = vand.u32 %v6379, 3
    %vm6381 = vcmp.lt.s32.totalorder %v6380, 2
    %vm6382 = vcmp.eq.s32.totalorder %v6380, 0
    %v6383 = vxor.u32 %v6377, 2147483648
    %v6384 = vsel %vm6382, %v6376, %v6383
    %vm6385 = vcmp.eq.s32.totalorder %v6380, 2
    %v6386 = vxor.u32 %v6376, 2147483648
    %v6387 = vsel %vm6385, %v6386, %v6377
    %v6388 = vsel %vm6381, %v6384, %v6387
    %v6389 = vsel %vm6378, nan, %v6388
    %v6390 = vand.u32 2147483647, %v1311
    %vm6391 = vcmp.le.f32.partialorder %v6390, 0.7853982
    %vm6392 = vcmp.lt.s32.totalorder %v1311, 0
    %v6393 = vand.u32 %v1311, 2139095040
    %v6394 = vshrl.u32 %v6393, 23
    %v6395 = vsub.s32 %v6394, 127
    %v6396 = vand.u32 2147483647, %v1311
    %v6397 = vand.u32 %v6396, 8388607
    %v6398 = vor.u32 %v6397, 8388608
    %v6399 = vsub.s32 0, %v6398
    %v6400 = vadd.s32 %v6395, 1
    %vm6401 = vcmp.gt.s32.totalorder %v6400, 0
    %v6402 = vsel %vm6401, %v6400, 0
    %v6403 = vshrl.u32 %v6402, 5
    %v6404 = vand.u32 %v6402, 31
    %v6405 = vsub.s32 32, %v6404
    %v6406 = vshrl.u32 683565275, %v6405
    %v6407 = vshll.u32 683565275, %v6404
    %v6408 = vshrl.u32 2475754826, %v6405
    %v6409 = vor.u32 %v6407, %v6408
    %v6410 = vshll.u32 2475754826, %v6404
    %v6411 = vshrl.u32 2131351028, %v6405
    %v6412 = vor.u32 %v6410, %v6411
    %v6413 = vshll.u32 2131351028, %v6404
    %v6414 = vshrl.u32 2102212464, %v6405
    %v6415 = vor.u32 %v6413, %v6414
    %v6416 = vshll.u32 2102212464, %v6404
    %v6417 = vshrl.u32 920167782, %v6405
    %v6418 = vor.u32 %v6416, %v6417
    %v6419 = vshll.u32 920167782, %v6404
    %v6420 = vshrl.u32 1326507024, %v6405
    %v6421 = vor.u32 %v6419, %v6420
    %vm6422 = vcmp.lt.s32.totalorder %v6403, 1
    %vm6423 = vcmp.lt.s32.totalorder %v6403, 2
    %vm6424 = vcmp.lt.s32.totalorder %v6403, 3
    %vm6425 = vcmp.lt.s32.totalorder %v6403, 4
    %v6426 = vsel %vm6422, %v6406, %v6409
    %v6427 = vsel %vm6425, %v6415, 2102212464
    %v6428 = vsel %vm6424, %v6412, %v6427
    %v6429 = vsel %vm6423, %v6426, %v6428
    %v6430 = vsel %vm6422, %v6409, %v6412
    %v6431 = vsel %vm6425, %v6418, 920167782
    %v6432 = vsel %vm6424, %v6415, %v6431
    %v6433 = vsel %vm6423, %v6430, %v6432
    %v6434 = vsel %vm6422, %v6412, %v6415
    %v6435 = vsel %vm6425, %v6421, 1326507024
    %v6436 = vsel %vm6424, %v6418, %v6435
    %v6437 = vsel %vm6423, %v6434, %v6436
    %v6438 = vshll.u32 %v6398, 8
    %v6439 = vmul.u32.u64.compose %v6438, %v6437
    %v6440 = vextract.low.u32 %v6439
    %v6441 = vextract.high.u32 %v6439
    %v6442 = vmul.u32.u64.compose %v6438, %v6433
    %v6443 = vextract.low.u32 %v6442
    %v6444 = vextract.high.u32 %v6442
    %v6445 = vmul.u32 %v6438, %v6429
    %v6446 = vadd.s32 %v6441, %v6443
    %vm6447 = vc.u32 %v6441, %v6443
    %v6448 = vadd.s32 %v6444, 1
    %v6449 = vsel %vm6447, %v6448, %v6444
    %v6450 = vadd.s32 %v6445, %v6449
    %v6451 = vadd.s32 %v6450, 536870912
    %v6452 = vshrl.u32 %v6451, 30
    %v6453 = vshll.u32 %v6452, 30
    %v6454 = vsub.s32 %v6450, %v6453
    %vm6455 = vcmp.lt.s32.totalorder %v6454, 0
    %v6456 = vsub.s32 0, %v6454
    %v6457 = vsel %vm6455, %v6456, %v6454
    %v6458 = vclz %v6457
    %v6459 = vsub.s32 %v6458, 2
    %vm6460 = vcmp.gt.s32.totalorder 0, %v6459
    %v6461 = vsel %vm6460, 0, %v6459
    %v6462 = vsub.s32 32, %v6461
    %v6463 = vshll.u32 %v6454, %v6461
    %v6464 = vshrl.u32 %v6446, %v6462
    %v6465 = vor.u32 %v6463, %v6464
    %v6466 = vsub.s32 4294967266, %v6461
    %v6467 = vadd.s32 %v6466, 127
    %v6468 = vshll.u32 %v6467, 23
    %v6469 = vor.u32 4788187, %v6468
    %v6470 = vand.u32 2147483647, %v6469
    %v6472 = vcvt.s32.f32 %v6465
    %v6473 = vmul.f32 %v6472, %v6470
    %v6474 = vxor.u32 %v6473, 2147483648
    %v6475 = vsel %vm6392, %v6474, %v6473
    %v6476 = vsub.s32 4, %v6452
    %v6477 = vsel %vm6392, %v6476, %v6452
    %v6478 = vsel %vm6391, %v1311, %v6475
    %v6479 = vsel %vm6391, 0, %v6477
    %v6480 = vcosq.f32.pop %v6478
    %v6481 = vsinq.f32.pop %v6478
    %vm6482 = vweird.f32 %v1311
    %v6483 = vadd.s32 %v6479, 3
    %v6484 = vand.u32 %v6483, 3
    %vm6485 = vcmp.lt.s32.totalorder %v6484, 2
    %vm6486 = vcmp.eq.s32.totalorder %v6484, 0
    %v6487 = vxor.u32 %v6481, 2147483648
    %v6488 = vsel %vm6486, %v6480, %v6487
    %vm6489 = vcmp.eq.s32.totalorder %v6484, 2
    %v6490 = vxor.u32 %v6480, 2147483648
    %v6491 = vsel %vm6489, %v6490, %v6481
    %v6492 = vsel %vm6485, %v6488, %v6491
    %v6493 = vsel %vm6482, nan, %v6492
    %v6494 = vand.u32 2147483647, %v1312
    %vm6495 = vcmp.le.f32.partialorder %v6494, 0.7853982
    %vm6496 = vcmp.lt.s32.totalorder %v1312, 0
    %v6497 = vand.u32 %v1312, 2139095040
    %v6498 = vshrl.u32 %v6497, 23
    %v6499 = vsub.s32 %v6498, 127
    %v6500 = vand.u32 2147483647, %v1312
    %v6501 = vand.u32 %v6500, 8388607
    %v6502 = vor.u32 %v6501, 8388608
    %v6503 = vsub.s32 0, %v6502
    %v6504 = vadd.s32 %v6499, 1
    %vm6505 = vcmp.gt.s32.totalorder %v6504, 0
    %v6506 = vsel %vm6505, %v6504, 0
    %v6507 = vshrl.u32 %v6506, 5
    %v6508 = vand.u32 %v6506, 31
    %v6509 = vsub.s32 32, %v6508
    %v6510 = vshrl.u32 683565275, %v6509
    %v6511 = vshll.u32 683565275, %v6508
    %v6512 = vshrl.u32 2475754826, %v6509
    %v6513 = vor.u32 %v6511, %v6512
    %v6514 = vshll.u32 2475754826, %v6508
    %v6515 = vshrl.u32 2131351028, %v6509
    %v6516 = vor.u32 %v6514, %v6515
    %v6517 = vshll.u32 2131351028, %v6508
    %v6518 = vshrl.u32 2102212464, %v6509
    %v6519 = vor.u32 %v6517, %v6518
    %v6520 = vshll.u32 2102212464, %v6508
    %v6521 = vshrl.u32 920167782, %v6509
    %v6522 = vor.u32 %v6520, %v6521
    %v6523 = vshll.u32 920167782, %v6508
    %v6524 = vshrl.u32 1326507024, %v6509
    %v6525 = vor.u32 %v6523, %v6524
    %vm6526 = vcmp.lt.s32.totalorder %v6507, 1
    %vm6527 = vcmp.lt.s32.totalorder %v6507, 2
    %vm6528 = vcmp.lt.s32.totalorder %v6507, 3
    %vm6529 = vcmp.lt.s32.totalorder %v6507, 4
    %v6530 = vsel %vm6526, %v6510, %v6513
    %v6531 = vsel %vm6529, %v6519, 2102212464
    %v6532 = vsel %vm6528, %v6516, %v6531
    %v6533 = vsel %vm6527, %v6530, %v6532
    %v6534 = vsel %vm6526, %v6513, %v6516
    %v6535 = vsel %vm6529, %v6522, 920167782
    %v6536 = vsel %vm6528, %v6519, %v6535
    %v6537 = vsel %vm6527, %v6534, %v6536
    %v6538 = vsel %vm6526, %v6516, %v6519
    %v6539 = vsel %vm6529, %v6525, 1326507024
    %v6540 = vsel %vm6528, %v6522, %v6539
    %v6541 = vsel %vm6527, %v6538, %v6540
    %v6542 = vshll.u32 %v6502, 8
    %v6543 = vmul.u32.u64.compose %v6542, %v6541
    %v6544 = vextract.low.u32 %v6543
    %v6545 = vextract.high.u32 %v6543
    %v6546 = vmul.u32.u64.compose %v6542, %v6537
    %v6547 = vextract.low.u32 %v6546
    %v6548 = vextract.high.u32 %v6546
    %v6549 = vmul.u32 %v6542, %v6533
    %v6550 = vadd.s32 %v6545, %v6547
    %vm6551 = vc.u32 %v6545, %v6547
    %v6552 = vadd.s32 %v6548, 1
    %v6553 = vsel %vm6551, %v6552, %v6548
    %v6554 = vadd.s32 %v6549, %v6553
    %v6555 = vadd.s32 %v6554, 536870912
    %v6556 = vshrl.u32 %v6555, 30
    %v6557 = vshll.u32 %v6556, 30
    %v6558 = vsub.s32 %v6554, %v6557
    %vm6559 = vcmp.lt.s32.totalorder %v6558, 0
    %v6560 = vsub.s32 0, %v6558
    %v6561 = vsel %vm6559, %v6560, %v6558
    %v6562 = vclz %v6561
    %v6563 = vsub.s32 %v6562, 2
    %vm6564 = vcmp.gt.s32.totalorder 0, %v6563
    %v6565 = vsel %vm6564, 0, %v6563
    %v6566 = vsub.s32 32, %v6565
    %v6567 = vshll.u32 %v6558, %v6565
    %v6568 = vshrl.u32 %v6550, %v6566
    %v6569 = vor.u32 %v6567, %v6568
    %v6570 = vsub.s32 4294967266, %v6565
    %v6571 = vadd.s32 %v6570, 127
    %v6572 = vshll.u32 %v6571, 23
    %v6573 = vor.u32 4788187, %v6572
    %v6574 = vand.u32 2147483647, %v6573
    %v6576 = vcvt.s32.f32 %v6569
    %v6577 = vmul.f32 %v6576, %v6574
    %v6578 = vxor.u32 %v6577, 2147483648
    %v6579 = vsel %vm6496, %v6578, %v6577
    %v6580 = vsub.s32 4, %v6556
    %v6581 = vsel %vm6496, %v6580, %v6556
    %v6582 = vsel %vm6495, %v1312, %v6579
    %v6583 = vsel %vm6495, 0, %v6581
    %v6584 = vcosq.f32.pop %v6582
    %v6585 = vsinq.f32.pop %v6582
    %vm6586 = vweird.f32 %v1312
    %v6587 = vadd.s32 %v6583, 3
    %v6588 = vand.u32 %v6587, 3
    %vm6589 = vcmp.lt.s32.totalorder %v6588, 2
    %vm6590 = vcmp.eq.s32.totalorder %v6588, 0
    %v6591 = vxor.u32 %v6585, 2147483648
    %v6592 = vsel %vm6590, %v6584, %v6591
    %vm6593 = vcmp.eq.s32.totalorder %v6588, 2
    %v6594 = vxor.u32 %v6584, 2147483648
    %v6595 = vsel %vm6593, %v6594, %v6585
    %v6596 = vsel %vm6589, %v6592, %v6595
    %v6597 = vsel %vm6586, nan, %v6596
    %v6598 = vand.u32 2147483647, %v1313
    %vm6599 = vcmp.le.f32.partialorder %v6598, 0.7853982
    %vm6600 = vcmp.lt.s32.totalorder %v1313, 0
    %v6601 = vand.u32 %v1313, 2139095040
    %v6602 = vshrl.u32 %v6601, 23
    %v6603 = vsub.s32 %v6602, 127
    %v6604 = vand.u32 2147483647, %v1313
    %v6605 = vand.u32 %v6604, 8388607
    %v6606 = vor.u32 %v6605, 8388608
    %v6607 = vsub.s32 0, %v6606
    %v6608 = vadd.s32 %v6603, 1
    %vm6609 = vcmp.gt.s32.totalorder %v6608, 0
    %v6610 = vsel %vm6609, %v6608, 0
    %v6611 = vshrl.u32 %v6610, 5
    %v6612 = vand.u32 %v6610, 31
    %v6613 = vsub.s32 32, %v6612
    %v6614 = vshrl.u32 683565275, %v6613
    %v6615 = vshll.u32 683565275, %v6612
    %v6616 = vshrl.u32 2475754826, %v6613
    %v6617 = vor.u32 %v6615, %v6616
    %v6618 = vshll.u32 2475754826, %v6612
    %v6619 = vshrl.u32 2131351028, %v6613
    %v6620 = vor.u32 %v6618, %v6619
    %v6621 = vshll.u32 2131351028, %v6612
    %v6622 = vshrl.u32 2102212464, %v6613
    %v6623 = vor.u32 %v6621, %v6622
    %v6624 = vshll.u32 2102212464, %v6612
    %v6625 = vshrl.u32 920167782, %v6613
    %v6626 = vor.u32 %v6624, %v6625
    %v6627 = vshll.u32 920167782, %v6612
    %v6628 = vshrl.u32 1326507024, %v6613
    %v6629 = vor.u32 %v6627, %v6628
    %vm6630 = vcmp.lt.s32.totalorder %v6611, 1
    %vm6631 = vcmp.lt.s32.totalorder %v6611, 2
    %vm6632 = vcmp.lt.s32.totalorder %v6611, 3
    %vm6633 = vcmp.lt.s32.totalorder %v6611, 4
    %v6634 = vsel %vm6630, %v6614, %v6617
    %v6635 = vsel %vm6633, %v6623, 2102212464
    %v6636 = vsel %vm6632, %v6620, %v6635
    %v6637 = vsel %vm6631, %v6634, %v6636
    %v6638 = vsel %vm6630, %v6617, %v6620
    %v6639 = vsel %vm6633, %v6626, 920167782
    %v6640 = vsel %vm6632, %v6623, %v6639
    %v6641 = vsel %vm6631, %v6638, %v6640
    %v6642 = vsel %vm6630, %v6620, %v6623
    %v6643 = vsel %vm6633, %v6629, 1326507024
    %v6644 = vsel %vm6632, %v6626, %v6643
    %v6645 = vsel %vm6631, %v6642, %v6644
    %v6646 = vshll.u32 %v6606, 8
    %v6647 = vmul.u32.u64.compose %v6646, %v6645
    %v6648 = vextract.low.u32 %v6647
    %v6649 = vextract.high.u32 %v6647
    %v6650 = vmul.u32.u64.compose %v6646, %v6641
    %v6651 = vextract.low.u32 %v6650
    %v6652 = vextract.high.u32 %v6650
    %v6653 = vmul.u32 %v6646, %v6637
    %v6654 = vadd.s32 %v6649, %v6651
    %vm6655 = vc.u32 %v6649, %v6651
    %v6656 = vadd.s32 %v6652, 1
    %v6657 = vsel %vm6655, %v6656, %v6652
    %v6658 = vadd.s32 %v6653, %v6657
    %v6659 = vadd.s32 %v6658, 536870912
    %v6660 = vshrl.u32 %v6659, 30
    %v6661 = vshll.u32 %v6660, 30
    %v6662 = vsub.s32 %v6658, %v6661
    %vm6663 = vcmp.lt.s32.totalorder %v6662, 0
    %v6664 = vsub.s32 0, %v6662
    %v6665 = vsel %vm6663, %v6664, %v6662
    %v6666 = vclz %v6665
    %v6667 = vsub.s32 %v6666, 2
    %vm6668 = vcmp.gt.s32.totalorder 0, %v6667
    %v6669 = vsel %vm6668, 0, %v6667
    %v6670 = vsub.s32 32, %v6669
    %v6671 = vshll.u32 %v6662, %v6669
    %v6672 = vshrl.u32 %v6654, %v6670
    %v6673 = vor.u32 %v6671, %v6672
    %v6674 = vsub.s32 4294967266, %v6669
    %v6675 = vadd.s32 %v6674, 127
    %v6676 = vshll.u32 %v6675, 23
    %v6677 = vor.u32 4788187, %v6676
    %v6678 = vand.u32 2147483647, %v6677
    %v6680 = vcvt.s32.f32 %v6673
    %v6681 = vmul.f32 %v6680, %v6678
    %v6682 = vxor.u32 %v6681, 2147483648
    %v6683 = vsel %vm6600, %v6682, %v6681
    %v6684 = vsub.s32 4, %v6660
    %v6685 = vsel %vm6600, %v6684, %v6660
    %v6686 = vsel %vm6599, %v1313, %v6683
    %v6687 = vsel %vm6599, 0, %v6685
    %v6688 = vcosq.f32.pop %v6686
    %v6689 = vsinq.f32.pop %v6686
    %vm6690 = vweird.f32 %v1313
    %v6691 = vadd.s32 %v6687, 3
    %v6692 = vand.u32 %v6691, 3
    %vm6693 = vcmp.lt.s32.totalorder %v6692, 2
    %vm6694 = vcmp.eq.s32.totalorder %v6692, 0
    %v6695 = vxor.u32 %v6689, 2147483648
    %v6696 = vsel %vm6694, %v6688, %v6695
    %vm6697 = vcmp.eq.s32.totalorder %v6692, 2
    %v6698 = vxor.u32 %v6688, 2147483648
    %v6699 = vsel %vm6697, %v6698, %v6689
    %v6700 = vsel %vm6693, %v6696, %v6699
    %v6701 = vsel %vm6690, nan, %v6700
    %v6702 = vand.u32 2147483647, %v1314
    %vm6703 = vcmp.le.f32.partialorder %v6702, 0.7853982
    %vm6704 = vcmp.lt.s32.totalorder %v1314, 0
    %v6705 = vand.u32 %v1314, 2139095040
    %v6706 = vshrl.u32 %v6705, 23
    %v6707 = vsub.s32 %v6706, 127
    %v6708 = vand.u32 2147483647, %v1314
    %v6709 = vand.u32 %v6708, 8388607
    %v6710 = vor.u32 %v6709, 8388608
    %v6711 = vsub.s32 0, %v6710
    %v6712 = vadd.s32 %v6707, 1
    %vm6713 = vcmp.gt.s32.totalorder %v6712, 0
    %v6714 = vsel %vm6713, %v6712, 0
    %v6715 = vshrl.u32 %v6714, 5
    %v6716 = vand.u32 %v6714, 31
    %v6717 = vsub.s32 32, %v6716
    %v6718 = vshrl.u32 683565275, %v6717
    %v6719 = vshll.u32 683565275, %v6716
    %v6720 = vshrl.u32 2475754826, %v6717
    %v6721 = vor.u32 %v6719, %v6720
    %v6722 = vshll.u32 2475754826, %v6716
    %v6723 = vshrl.u32 2131351028, %v6717
    %v6724 = vor.u32 %v6722, %v6723
    %v6725 = vshll.u32 2131351028, %v6716
    %v6726 = vshrl.u32 2102212464, %v6717
    %v6727 = vor.u32 %v6725, %v6726
    %v6728 = vshll.u32 2102212464, %v6716
    %v6729 = vshrl.u32 920167782, %v6717
    %v6730 = vor.u32 %v6728, %v6729
    %v6731 = vshll.u32 920167782, %v6716
    %v6732 = vshrl.u32 1326507024, %v6717
    %v6733 = vor.u32 %v6731, %v6732
    %vm6734 = vcmp.lt.s32.totalorder %v6715, 1
    %vm6735 = vcmp.lt.s32.totalorder %v6715, 2
    %vm6736 = vcmp.lt.s32.totalorder %v6715, 3
    %vm6737 = vcmp.lt.s32.totalorder %v6715, 4
    %v6738 = vsel %vm6734, %v6718, %v6721
    %v6739 = vsel %vm6737, %v6727, 2102212464
    %v6740 = vsel %vm6736, %v6724, %v6739
    %v6741 = vsel %vm6735, %v6738, %v6740
    %v6742 = vsel %vm6734, %v6721, %v6724
    %v6743 = vsel %vm6737, %v6730, 920167782
    %v6744 = vsel %vm6736, %v6727, %v6743
    %v6745 = vsel %vm6735, %v6742, %v6744
    %v6746 = vsel %vm6734, %v6724, %v6727
    %v6747 = vsel %vm6737, %v6733, 1326507024
    %v6748 = vsel %vm6736, %v6730, %v6747
    %v6749 = vsel %vm6735, %v6746, %v6748
    %v6750 = vshll.u32 %v6710, 8
    %v6751 = vmul.u32.u64.compose %v6750, %v6749
    %v6752 = vextract.low.u32 %v6751
    %v6753 = vextract.high.u32 %v6751
    %v6754 = vmul.u32.u64.compose %v6750, %v6745
    %v6755 = vextract.low.u32 %v6754
    %v6756 = vextract.high.u32 %v6754
    %v6757 = vmul.u32 %v6750, %v6741
    %v6758 = vadd.s32 %v6753, %v6755
    %vm6759 = vc.u32 %v6753, %v6755
    %v6760 = vadd.s32 %v6756, 1
    %v6761 = vsel %vm6759, %v6760, %v6756
    %v6762 = vadd.s32 %v6757, %v6761
    %v6763 = vadd.s32 %v6762, 536870912
    %v6764 = vshrl.u32 %v6763, 30
    %v6765 = vshll.u32 %v6764, 30
    %v6766 = vsub.s32 %v6762, %v6765
    %vm6767 = vcmp.lt.s32.totalorder %v6766, 0
    %v6768 = vsub.s32 0, %v6766
    %v6769 = vsel %vm6767, %v6768, %v6766
    %v6770 = vclz %v6769
    %v6771 = vsub.s32 %v6770, 2
    %vm6772 = vcmp.gt.s32.totalorder 0, %v6771
    %v6773 = vsel %vm6772, 0, %v6771
    %v6774 = vsub.s32 32, %v6773
    %v6775 = vshll.u32 %v6766, %v6773
    %v6776 = vshrl.u32 %v6758, %v6774
    %v6777 = vor.u32 %v6775, %v6776
    %v6778 = vsub.s32 4294967266, %v6773
    %v6779 = vadd.s32 %v6778, 127
    %v6780 = vshll.u32 %v6779, 23
    %v6781 = vor.u32 4788187, %v6780
    %v6782 = vand.u32 2147483647, %v6781
    %v6784 = vcvt.s32.f32 %v6777
    %v6785 = vmul.f32 %v6784, %v6782
    %v6786 = vxor.u32 %v6785, 2147483648
    %v6787 = vsel %vm6704, %v6786, %v6785
    %v6788 = vsub.s32 4, %v6764
    %v6789 = vsel %vm6704, %v6788, %v6764
    %v6790 = vsel %vm6703, %v1314, %v6787
    %v6791 = vsel %vm6703, 0, %v6789
    %v6792 = vcosq.f32.pop %v6790
    %v6793 = vsinq.f32.pop %v6790
    %vm6794 = vweird.f32 %v1314
    %v6795 = vadd.s32 %v6791, 3
    %v6796 = vand.u32 %v6795, 3
    %vm6797 = vcmp.lt.s32.totalorder %v6796, 2
    %vm6798 = vcmp.eq.s32.totalorder %v6796, 0
    %v6799 = vxor.u32 %v6793, 2147483648
    %v6800 = vsel %vm6798, %v6792, %v6799
    %vm6801 = vcmp.eq.s32.totalorder %v6796, 2
    %v6802 = vxor.u32 %v6792, 2147483648
    %v6803 = vsel %vm6801, %v6802, %v6793
    %v6804 = vsel %vm6797, %v6800, %v6803
    %v6805 = vsel %vm6794, nan, %v6804
    %v6806 = vand.u32 2147483647, %v1315
    %vm6807 = vcmp.le.f32.partialorder %v6806, 0.7853982
    %vm6808 = vcmp.lt.s32.totalorder %v1315, 0
    %v6809 = vand.u32 %v1315, 2139095040
    %v6810 = vshrl.u32 %v6809, 23
    %v6811 = vsub.s32 %v6810, 127
    %v6812 = vand.u32 2147483647, %v1315
    %v6813 = vand.u32 %v6812, 8388607
    %v6814 = vor.u32 %v6813, 8388608
    %v6815 = vsub.s32 0, %v6814
    %v6816 = vadd.s32 %v6811, 1
    %vm6817 = vcmp.gt.s32.totalorder %v6816, 0
    %v6818 = vsel %vm6817, %v6816, 0
    %v6819 = vshrl.u32 %v6818, 5
    %v6820 = vand.u32 %v6818, 31
    %v6821 = vsub.s32 32, %v6820
    %v6822 = vshrl.u32 683565275, %v6821
    %v6823 = vshll.u32 683565275, %v6820
    %v6824 = vshrl.u32 2475754826, %v6821
    %v6825 = vor.u32 %v6823, %v6824
    %v6826 = vshll.u32 2475754826, %v6820
    %v6827 = vshrl.u32 2131351028, %v6821
    %v6828 = vor.u32 %v6826, %v6827
    %v6829 = vshll.u32 2131351028, %v6820
    %v6830 = vshrl.u32 2102212464, %v6821
    %v6831 = vor.u32 %v6829, %v6830
    %v6832 = vshll.u32 2102212464, %v6820
    %v6833 = vshrl.u32 920167782, %v6821
    %v6834 = vor.u32 %v6832, %v6833
    %v6835 = vshll.u32 920167782, %v6820
    %v6836 = vshrl.u32 1326507024, %v6821
    %v6837 = vor.u32 %v6835, %v6836
    %vm6838 = vcmp.lt.s32.totalorder %v6819, 1
    %vm6839 = vcmp.lt.s32.totalorder %v6819, 2
    %vm6840 = vcmp.lt.s32.totalorder %v6819, 3
    %vm6841 = vcmp.lt.s32.totalorder %v6819, 4
    %v6842 = vsel %vm6838, %v6822, %v6825
    %v6843 = vsel %vm6841, %v6831, 2102212464
    %v6844 = vsel %vm6840, %v6828, %v6843
    %v6845 = vsel %vm6839, %v6842, %v6844
    %v6846 = vsel %vm6838, %v6825, %v6828
    %v6847 = vsel %vm6841, %v6834, 920167782
    %v6848 = vsel %vm6840, %v6831, %v6847
    %v6849 = vsel %vm6839, %v6846, %v6848
    %v6850 = vsel %vm6838, %v6828, %v6831
    %v6851 = vsel %vm6841, %v6837, 1326507024
    %v6852 = vsel %vm6840, %v6834, %v6851
    %v6853 = vsel %vm6839, %v6850, %v6852
    %v6854 = vshll.u32 %v6814, 8
    %v6855 = vmul.u32.u64.compose %v6854, %v6853
    %v6856 = vextract.low.u32 %v6855
    %v6857 = vextract.high.u32 %v6855
    %v6858 = vmul.u32.u64.compose %v6854, %v6849
    %v6859 = vextract.low.u32 %v6858
    %v6860 = vextract.high.u32 %v6858
    %v6861 = vmul.u32 %v6854, %v6845
    %v6862 = vadd.s32 %v6857, %v6859
    %vm6863 = vc.u32 %v6857, %v6859
    %v6864 = vadd.s32 %v6860, 1
    %v6865 = vsel %vm6863, %v6864, %v6860
    %v6866 = vadd.s32 %v6861, %v6865
    %v6867 = vadd.s32 %v6866, 536870912
    %v6868 = vshrl.u32 %v6867, 30
    %v6869 = vshll.u32 %v6868, 30
    %v6870 = vsub.s32 %v6866, %v6869
    %vm6871 = vcmp.lt.s32.totalorder %v6870, 0
    %v6872 = vsub.s32 0, %v6870
    %v6873 = vsel %vm6871, %v6872, %v6870
    %v6874 = vclz %v6873
    %v6875 = vsub.s32 %v6874, 2
    %vm6876 = vcmp.gt.s32.totalorder 0, %v6875
    %v6877 = vsel %vm6876, 0, %v6875
    %v6878 = vsub.s32 32, %v6877
    %v6879 = vshll.u32 %v6870, %v6877
    %v6880 = vshrl.u32 %v6862, %v6878
    %v6881 = vor.u32 %v6879, %v6880
    %v6882 = vsub.s32 4294967266, %v6877
    %v6883 = vadd.s32 %v6882, 127
    %v6884 = vshll.u32 %v6883, 23
    %v6885 = vor.u32 4788187, %v6884
    %v6886 = vand.u32 2147483647, %v6885
    %v6888 = vcvt.s32.f32 %v6881
    %v6889 = vmul.f32 %v6888, %v6886
    %v6890 = vxor.u32 %v6889, 2147483648
    %v6891 = vsel %vm6808, %v6890, %v6889
    %v6892 = vsub.s32 4, %v6868
    %v6893 = vsel %vm6808, %v6892, %v6868
    %v6894 = vsel %vm6807, %v1315, %v6891
    %v6895 = vsel %vm6807, 0, %v6893
    %v6896 = vcosq.f32.pop %v6894
    %v6897 = vsinq.f32.pop %v6894
    %vm6898 = vweird.f32 %v1315
    %v6899 = vadd.s32 %v6895, 3
    %v6900 = vand.u32 %v6899, 3
    %vm6901 = vcmp.lt.s32.totalorder %v6900, 2
    %vm6902 = vcmp.eq.s32.totalorder %v6900, 0
    %v6903 = vxor.u32 %v6897, 2147483648
    %v6904 = vsel %vm6902, %v6896, %v6903
    %vm6905 = vcmp.eq.s32.totalorder %v6900, 2
    %v6906 = vxor.u32 %v6896, 2147483648
    %v6907 = vsel %vm6905, %v6906, %v6897
    %v6908 = vsel %vm6901, %v6904, %v6907
    %v6909 = vsel %vm6898, nan, %v6908
    %v6910 = vand.u32 2147483647, %v1316
    %vm6911 = vcmp.le.f32.partialorder %v6910, 0.7853982
    %vm6912 = vcmp.lt.s32.totalorder %v1316, 0
    %v6913 = vand.u32 %v1316, 2139095040
    %v6914 = vshrl.u32 %v6913, 23
    %v6915 = vsub.s32 %v6914, 127
    %v6916 = vand.u32 2147483647, %v1316
    %v6917 = vand.u32 %v6916, 8388607
    %v6918 = vor.u32 %v6917, 8388608
    %v6919 = vsub.s32 0, %v6918
    %v6920 = vadd.s32 %v6915, 1
    %vm6921 = vcmp.gt.s32.totalorder %v6920, 0
    %v6922 = vsel %vm6921, %v6920, 0
    %v6923 = vshrl.u32 %v6922, 5
    %v6924 = vand.u32 %v6922, 31
    %v6925 = vsub.s32 32, %v6924
    %v6926 = vshrl.u32 683565275, %v6925
    %v6927 = vshll.u32 683565275, %v6924
    %v6928 = vshrl.u32 2475754826, %v6925
    %v6929 = vor.u32 %v6927, %v6928
    %v6930 = vshll.u32 2475754826, %v6924
    %v6931 = vshrl.u32 2131351028, %v6925
    %v6932 = vor.u32 %v6930, %v6931
    %v6933 = vshll.u32 2131351028, %v6924
    %v6934 = vshrl.u32 2102212464, %v6925
    %v6935 = vor.u32 %v6933, %v6934
    %v6936 = vshll.u32 2102212464, %v6924
    %v6937 = vshrl.u32 920167782, %v6925
    %v6938 = vor.u32 %v6936, %v6937
    %v6939 = vshll.u32 920167782, %v6924
    %v6940 = vshrl.u32 1326507024, %v6925
    %v6941 = vor.u32 %v6939, %v6940
    %vm6942 = vcmp.lt.s32.totalorder %v6923, 1
    %vm6943 = vcmp.lt.s32.totalorder %v6923, 2
    %vm6944 = vcmp.lt.s32.totalorder %v6923, 3
    %vm6945 = vcmp.lt.s32.totalorder %v6923, 4
    %v6946 = vsel %vm6942, %v6926, %v6929
    %v6947 = vsel %vm6945, %v6935, 2102212464
    %v6948 = vsel %vm6944, %v6932, %v6947
    %v6949 = vsel %vm6943, %v6946, %v6948
    %v6950 = vsel %vm6942, %v6929, %v6932
    %v6951 = vsel %vm6945, %v6938, 920167782
    %v6952 = vsel %vm6944, %v6935, %v6951
    %v6953 = vsel %vm6943, %v6950, %v6952
    %v6954 = vsel %vm6942, %v6932, %v6935
    %v6955 = vsel %vm6945, %v6941, 1326507024
    %v6956 = vsel %vm6944, %v6938, %v6955
    %v6957 = vsel %vm6943, %v6954, %v6956
    %v6958 = vshll.u32 %v6918, 8
    %v6959 = vmul.u32.u64.compose %v6958, %v6957
    %v6960 = vextract.low.u32 %v6959
    %v6961 = vextract.high.u32 %v6959
    %v6962 = vmul.u32.u64.compose %v6958, %v6953
    %v6963 = vextract.low.u32 %v6962
    %v6964 = vextract.high.u32 %v6962
    %v6965 = vmul.u32 %v6958, %v6949
    %v6966 = vadd.s32 %v6961, %v6963
    %vm6967 = vc.u32 %v6961, %v6963
    %v6968 = vadd.s32 %v6964, 1
    %v6969 = vsel %vm6967, %v6968, %v6964
    %v6970 = vadd.s32 %v6965, %v6969
    %v6971 = vadd.s32 %v6970, 536870912
    %v6972 = vshrl.u32 %v6971, 30
    %v6973 = vshll.u32 %v6972, 30
    %v6974 = vsub.s32 %v6970, %v6973
    %vm6975 = vcmp.lt.s32.totalorder %v6974, 0
    %v6976 = vsub.s32 0, %v6974
    %v6977 = vsel %vm6975, %v6976, %v6974
    %v6978 = vclz %v6977
    %v6979 = vsub.s32 %v6978, 2
    %vm6980 = vcmp.gt.s32.totalorder 0, %v6979
    %v6981 = vsel %vm6980, 0, %v6979
    %v6982 = vsub.s32 32, %v6981
    %v6983 = vshll.u32 %v6974, %v6981
    %v6984 = vshrl.u32 %v6966, %v6982
    %v6985 = vor.u32 %v6983, %v6984
    %v6986 = vsub.s32 4294967266, %v6981
    %v6987 = vadd.s32 %v6986, 127
    %v6988 = vshll.u32 %v6987, 23
    %v6989 = vor.u32 4788187, %v6988
    %v6990 = vand.u32 2147483647, %v6989
    %v6992 = vcvt.s32.f32 %v6985
    %v6993 = vmul.f32 %v6992, %v6990
    %v6994 = vxor.u32 %v6993, 2147483648
    %v6995 = vsel %vm6912, %v6994, %v6993
    %v6996 = vsub.s32 4, %v6972
    %v6997 = vsel %vm6912, %v6996, %v6972
    %v6998 = vsel %vm6911, %v1316, %v6995
    %v6999 = vsel %vm6911, 0, %v6997
    %v7000 = vcosq.f32.pop %v6998
    %v7001 = vsinq.f32.pop %v6998
    %vm7002 = vweird.f32 %v1316
    %v7003 = vadd.s32 %v6999, 3
    %v7004 = vand.u32 %v7003, 3
    %vm7005 = vcmp.lt.s32.totalorder %v7004, 2
    %vm7006 = vcmp.eq.s32.totalorder %v7004, 0
    %v7007 = vxor.u32 %v7001, 2147483648
    %v7008 = vsel %vm7006, %v7000, %v7007
    %vm7009 = vcmp.eq.s32.totalorder %v7004, 2
    %v7010 = vxor.u32 %v7000, 2147483648
    %v7011 = vsel %vm7009, %v7010, %v7001
    %v7012 = vsel %vm7005, %v7008, %v7011
    %v7013 = vsel %vm7002, nan, %v7012
    %v7014 = vand.u32 2147483647, %v1317
    %vm7015 = vcmp.le.f32.partialorder %v7014, 0.7853982
    %vm7016 = vcmp.lt.s32.totalorder %v1317, 0
    %v7017 = vand.u32 %v1317, 2139095040
    %v7018 = vshrl.u32 %v7017, 23
    %v7019 = vsub.s32 %v7018, 127
    %v7020 = vand.u32 2147483647, %v1317
    %v7021 = vand.u32 %v7020, 8388607
    %v7022 = vor.u32 %v7021, 8388608
    %v7023 = vsub.s32 0, %v7022
    %v7024 = vadd.s32 %v7019, 1
    %vm7025 = vcmp.gt.s32.totalorder %v7024, 0
    %v7026 = vsel %vm7025, %v7024, 0
    %v7027 = vshrl.u32 %v7026, 5
    %v7028 = vand.u32 %v7026, 31
    %v7029 = vsub.s32 32, %v7028
    %v7030 = vshrl.u32 683565275, %v7029
    %v7031 = vshll.u32 683565275, %v7028
    %v7032 = vshrl.u32 2475754826, %v7029
    %v7033 = vor.u32 %v7031, %v7032
    %v7034 = vshll.u32 2475754826, %v7028
    %v7035 = vshrl.u32 2131351028, %v7029
    %v7036 = vor.u32 %v7034, %v7035
    %v7037 = vshll.u32 2131351028, %v7028
    %v7038 = vshrl.u32 2102212464, %v7029
    %v7039 = vor.u32 %v7037, %v7038
    %v7040 = vshll.u32 2102212464, %v7028
    %v7041 = vshrl.u32 920167782, %v7029
    %v7042 = vor.u32 %v7040, %v7041
    %v7043 = vshll.u32 920167782, %v7028
    %v7044 = vshrl.u32 1326507024, %v7029
    %v7045 = vor.u32 %v7043, %v7044
    %vm7046 = vcmp.lt.s32.totalorder %v7027, 1
    %vm7047 = vcmp.lt.s32.totalorder %v7027, 2
    %vm7048 = vcmp.lt.s32.totalorder %v7027, 3
    %vm7049 = vcmp.lt.s32.totalorder %v7027, 4
    %v7050 = vsel %vm7046, %v7030, %v7033
    %v7051 = vsel %vm7049, %v7039, 2102212464
    %v7052 = vsel %vm7048, %v7036, %v7051
    %v7053 = vsel %vm7047, %v7050, %v7052
    %v7054 = vsel %vm7046, %v7033, %v7036
    %v7055 = vsel %vm7049, %v7042, 920167782
    %v7056 = vsel %vm7048, %v7039, %v7055
    %v7057 = vsel %vm7047, %v7054, %v7056
    %v7058 = vsel %vm7046, %v7036, %v7039
    %v7059 = vsel %vm7049, %v7045, 1326507024
    %v7060 = vsel %vm7048, %v7042, %v7059
    %v7061 = vsel %vm7047, %v7058, %v7060
    %v7062 = vshll.u32 %v7022, 8
    %v7063 = vmul.u32.u64.compose %v7062, %v7061
    %v7064 = vextract.low.u32 %v7063
    %v7065 = vextract.high.u32 %v7063
    %v7066 = vmul.u32.u64.compose %v7062, %v7057
    %v7067 = vextract.low.u32 %v7066
    %v7068 = vextract.high.u32 %v7066
    %v7069 = vmul.u32 %v7062, %v7053
    %v7070 = vadd.s32 %v7065, %v7067
    %vm7071 = vc.u32 %v7065, %v7067
    %v7072 = vadd.s32 %v7068, 1
    %v7073 = vsel %vm7071, %v7072, %v7068
    %v7074 = vadd.s32 %v7069, %v7073
    %v7075 = vadd.s32 %v7074, 536870912
    %v7076 = vshrl.u32 %v7075, 30
    %v7077 = vshll.u32 %v7076, 30
    %v7078 = vsub.s32 %v7074, %v7077
    %vm7079 = vcmp.lt.s32.totalorder %v7078, 0
    %v7080 = vsub.s32 0, %v7078
    %v7081 = vsel %vm7079, %v7080, %v7078
    %v7082 = vclz %v7081
    %v7083 = vsub.s32 %v7082, 2
    %vm7084 = vcmp.gt.s32.totalorder 0, %v7083
    %v7085 = vsel %vm7084, 0, %v7083
    %v7086 = vsub.s32 32, %v7085
    %v7087 = vshll.u32 %v7078, %v7085
    %v7088 = vshrl.u32 %v7070, %v7086
    %v7089 = vor.u32 %v7087, %v7088
    %v7090 = vsub.s32 4294967266, %v7085
    %v7091 = vadd.s32 %v7090, 127
    %v7092 = vshll.u32 %v7091, 23
    %v7093 = vor.u32 4788187, %v7092
    %v7094 = vand.u32 2147483647, %v7093
    %v7096 = vcvt.s32.f32 %v7089
    %v7097 = vmul.f32 %v7096, %v7094
    %v7098 = vxor.u32 %v7097, 2147483648
    %v7099 = vsel %vm7016, %v7098, %v7097
    %v7100 = vsub.s32 4, %v7076
    %v7101 = vsel %vm7016, %v7100, %v7076
    %v7102 = vsel %vm7015, %v1317, %v7099
    %v7103 = vsel %vm7015, 0, %v7101
    %v7104 = vcosq.f32.pop %v7102
    %v7105 = vsinq.f32.pop %v7102
    %vm7106 = vweird.f32 %v1317
    %v7107 = vadd.s32 %v7103, 3
    %v7108 = vand.u32 %v7107, 3
    %vm7109 = vcmp.lt.s32.totalorder %v7108, 2
    %vm7110 = vcmp.eq.s32.totalorder %v7108, 0
    %v7111 = vxor.u32 %v7105, 2147483648
    %v7112 = vsel %vm7110, %v7104, %v7111
    %vm7113 = vcmp.eq.s32.totalorder %v7108, 2
    %v7114 = vxor.u32 %v7104, 2147483648
    %v7115 = vsel %vm7113, %v7114, %v7105
    %v7116 = vsel %vm7109, %v7112, %v7115
    %v7117 = vsel %vm7106, nan, %v7116
    %v7118 = vand.u32 2147483647, %v1318
    %vm7119 = vcmp.le.f32.partialorder %v7118, 0.7853982
    %vm7120 = vcmp.lt.s32.totalorder %v1318, 0
    %v7121 = vand.u32 %v1318, 2139095040
    %v7122 = vshrl.u32 %v7121, 23
    %v7123 = vsub.s32 %v7122, 127
    %v7124 = vand.u32 2147483647, %v1318
    %v7125 = vand.u32 %v7124, 8388607
    %v7126 = vor.u32 %v7125, 8388608
    %v7127 = vsub.s32 0, %v7126
    %v7128 = vadd.s32 %v7123, 1
    %vm7129 = vcmp.gt.s32.totalorder %v7128, 0
    %v7130 = vsel %vm7129, %v7128, 0
    %v7131 = vshrl.u32 %v7130, 5
    %v7132 = vand.u32 %v7130, 31
    %v7133 = vsub.s32 32, %v7132
    %v7134 = vshrl.u32 683565275, %v7133
    %v7135 = vshll.u32 683565275, %v7132
    %v7136 = vshrl.u32 2475754826, %v7133
    %v7137 = vor.u32 %v7135, %v7136
    %v7138 = vshll.u32 2475754826, %v7132
    %v7139 = vshrl.u32 2131351028, %v7133
    %v7140 = vor.u32 %v7138, %v7139
    %v7141 = vshll.u32 2131351028, %v7132
    %v7142 = vshrl.u32 2102212464, %v7133
    %v7143 = vor.u32 %v7141, %v7142
    %v7144 = vshll.u32 2102212464, %v7132
    %v7145 = vshrl.u32 920167782, %v7133
    %v7146 = vor.u32 %v7144, %v7145
    %v7147 = vshll.u32 920167782, %v7132
    %v7148 = vshrl.u32 1326507024, %v7133
    %v7149 = vor.u32 %v7147, %v7148
    %vm7150 = vcmp.lt.s32.totalorder %v7131, 1
    %vm7151 = vcmp.lt.s32.totalorder %v7131, 2
    %vm7152 = vcmp.lt.s32.totalorder %v7131, 3
    %vm7153 = vcmp.lt.s32.totalorder %v7131, 4
    %v7154 = vsel %vm7150, %v7134, %v7137
    %v7155 = vsel %vm7153, %v7143, 2102212464
    %v7156 = vsel %vm7152, %v7140, %v7155
    %v7157 = vsel %vm7151, %v7154, %v7156
    %v7158 = vsel %vm7150, %v7137, %v7140
    %v7159 = vsel %vm7153, %v7146, 920167782
    %v7160 = vsel %vm7152, %v7143, %v7159
    %v7161 = vsel %vm7151, %v7158, %v7160
    %v7162 = vsel %vm7150, %v7140, %v7143
    %v7163 = vsel %vm7153, %v7149, 1326507024
    %v7164 = vsel %vm7152, %v7146, %v7163
    %v7165 = vsel %vm7151, %v7162, %v7164
    %v7166 = vshll.u32 %v7126, 8
    %v7167 = vmul.u32.u64.compose %v7166, %v7165
    %v7168 = vextract.low.u32 %v7167
    %v7169 = vextract.high.u32 %v7167
    %v7170 = vmul.u32.u64.compose %v7166, %v7161
    %v7171 = vextract.low.u32 %v7170
    %v7172 = vextract.high.u32 %v7170
    %v7173 = vmul.u32 %v7166, %v7157
    %v7174 = vadd.s32 %v7169, %v7171
    %vm7175 = vc.u32 %v7169, %v7171
    %v7176 = vadd.s32 %v7172, 1
    %v7177 = vsel %vm7175, %v7176, %v7172
    %v7178 = vadd.s32 %v7173, %v7177
    %v7179 = vadd.s32 %v7178, 536870912
    %v7180 = vshrl.u32 %v7179, 30
    %v7181 = vshll.u32 %v7180, 30
    %v7182 = vsub.s32 %v7178, %v7181
    %vm7183 = vcmp.lt.s32.totalorder %v7182, 0
    %v7184 = vsub.s32 0, %v7182
    %v7185 = vsel %vm7183, %v7184, %v7182
    %v7186 = vclz %v7185
    %v7187 = vsub.s32 %v7186, 2
    %vm7188 = vcmp.gt.s32.totalorder 0, %v7187
    %v7189 = vsel %vm7188, 0, %v7187
    %v7190 = vsub.s32 32, %v7189
    %v7191 = vshll.u32 %v7182, %v7189
    %v7192 = vshrl.u32 %v7174, %v7190
    %v7193 = vor.u32 %v7191, %v7192
    %v7194 = vsub.s32 4294967266, %v7189
    %v7195 = vadd.s32 %v7194, 127
    %v7196 = vshll.u32 %v7195, 23
    %v7197 = vor.u32 4788187, %v7196
    %v7198 = vand.u32 2147483647, %v7197
    %v7200 = vcvt.s32.f32 %v7193
    %v7201 = vmul.f32 %v7200, %v7198
    %v7202 = vxor.u32 %v7201, 2147483648
    %v7203 = vsel %vm7120, %v7202, %v7201
    %v7204 = vsub.s32 4, %v7180
    %v7205 = vsel %vm7120, %v7204, %v7180
    %v7206 = vsel %vm7119, %v1318, %v7203
    %v7207 = vsel %vm7119, 0, %v7205
    %v7208 = vcosq.f32.pop %v7206
    %v7209 = vsinq.f32.pop %v7206
    %vm7210 = vweird.f32 %v1318
    %v7211 = vadd.s32 %v7207, 3
    %v7212 = vand.u32 %v7211, 3
    %vm7213 = vcmp.lt.s32.totalorder %v7212, 2
    %vm7214 = vcmp.eq.s32.totalorder %v7212, 0
    %v7215 = vxor.u32 %v7209, 2147483648
    %v7216 = vsel %vm7214, %v7208, %v7215
    %vm7217 = vcmp.eq.s32.totalorder %v7212, 2
    %v7218 = vxor.u32 %v7208, 2147483648
    %v7219 = vsel %vm7217, %v7218, %v7209
    %v7220 = vsel %vm7213, %v7216, %v7219
    %v7221 = vsel %vm7210, nan, %v7220
    %v7222 = vand.u32 2147483647, %v1319
    %vm7223 = vcmp.le.f32.partialorder %v7222, 0.7853982
    %vm7224 = vcmp.lt.s32.totalorder %v1319, 0
    %v7225 = vand.u32 %v1319, 2139095040
    %v7226 = vshrl.u32 %v7225, 23
    %v7227 = vsub.s32 %v7226, 127
    %v7228 = vand.u32 2147483647, %v1319
    %v7229 = vand.u32 %v7228, 8388607
    %v7230 = vor.u32 %v7229, 8388608
    %v7231 = vsub.s32 0, %v7230
    %v7232 = vadd.s32 %v7227, 1
    %vm7233 = vcmp.gt.s32.totalorder %v7232, 0
    %v7234 = vsel %vm7233, %v7232, 0
    %v7235 = vshrl.u32 %v7234, 5
    %v7236 = vand.u32 %v7234, 31
    %v7237 = vsub.s32 32, %v7236
    %v7238 = vshrl.u32 683565275, %v7237
    %v7239 = vshll.u32 683565275, %v7236
    %v7240 = vshrl.u32 2475754826, %v7237
    %v7241 = vor.u32 %v7239, %v7240
    %v7242 = vshll.u32 2475754826, %v7236
    %v7243 = vshrl.u32 2131351028, %v7237
    %v7244 = vor.u32 %v7242, %v7243
    %v7245 = vshll.u32 2131351028, %v7236
    %v7246 = vshrl.u32 2102212464, %v7237
    %v7247 = vor.u32 %v7245, %v7246
    %v7248 = vshll.u32 2102212464, %v7236
    %v7249 = vshrl.u32 920167782, %v7237
    %v7250 = vor.u32 %v7248, %v7249
    %v7251 = vshll.u32 920167782, %v7236
    %v7252 = vshrl.u32 1326507024, %v7237
    %v7253 = vor.u32 %v7251, %v7252
    %vm7254 = vcmp.lt.s32.totalorder %v7235, 1
    %vm7255 = vcmp.lt.s32.totalorder %v7235, 2
    %vm7256 = vcmp.lt.s32.totalorder %v7235, 3
    %vm7257 = vcmp.lt.s32.totalorder %v7235, 4
    %v7258 = vsel %vm7254, %v7238, %v7241
    %v7259 = vsel %vm7257, %v7247, 2102212464
    %v7260 = vsel %vm7256, %v7244, %v7259
    %v7261 = vsel %vm7255, %v7258, %v7260
    %v7262 = vsel %vm7254, %v7241, %v7244
    %v7263 = vsel %vm7257, %v7250, 920167782
    %v7264 = vsel %vm7256, %v7247, %v7263
    %v7265 = vsel %vm7255, %v7262, %v7264
    %v7266 = vsel %vm7254, %v7244, %v7247
    %v7267 = vsel %vm7257, %v7253, 1326507024
    %v7268 = vsel %vm7256, %v7250, %v7267
    %v7269 = vsel %vm7255, %v7266, %v7268
    %v7270 = vshll.u32 %v7230, 8
    %v7271 = vmul.u32.u64.compose %v7270, %v7269
    %v7272 = vextract.low.u32 %v7271
    %v7273 = vextract.high.u32 %v7271
    %v7274 = vmul.u32.u64.compose %v7270, %v7265
    %v7275 = vextract.low.u32 %v7274
    %v7276 = vextract.high.u32 %v7274
    %v7277 = vmul.u32 %v7270, %v7261
    %v7278 = vadd.s32 %v7273, %v7275
    %vm7279 = vc.u32 %v7273, %v7275
    %v7280 = vadd.s32 %v7276, 1
    %v7281 = vsel %vm7279, %v7280, %v7276
    %v7282 = vadd.s32 %v7277, %v7281
    %v7283 = vadd.s32 %v7282, 536870912
    %v7284 = vshrl.u32 %v7283, 30
    %v7285 = vshll.u32 %v7284, 30
    %v7286 = vsub.s32 %v7282, %v7285
    %vm7287 = vcmp.lt.s32.totalorder %v7286, 0
    %v7288 = vsub.s32 0, %v7286
    %v7289 = vsel %vm7287, %v7288, %v7286
    %v7290 = vclz %v7289
    %v7291 = vsub.s32 %v7290, 2
    %vm7292 = vcmp.gt.s32.totalorder 0, %v7291
    %v7293 = vsel %vm7292, 0, %v7291
    %v7294 = vsub.s32 32, %v7293
    %v7295 = vshll.u32 %v7286, %v7293
    %v7296 = vshrl.u32 %v7278, %v7294
    %v7297 = vor.u32 %v7295, %v7296
    %v7298 = vsub.s32 4294967266, %v7293
    %v7299 = vadd.s32 %v7298, 127
    %v7300 = vshll.u32 %v7299, 23
    %v7301 = vor.u32 4788187, %v7300
    %v7302 = vand.u32 2147483647, %v7301
    %v7304 = vcvt.s32.f32 %v7297
    %v7305 = vmul.f32 %v7304, %v7302
    %v7306 = vxor.u32 %v7305, 2147483648
    %v7307 = vsel %vm7224, %v7306, %v7305
    %v7308 = vsub.s32 4, %v7284
    %v7309 = vsel %vm7224, %v7308, %v7284
    %v7310 = vsel %vm7223, %v1319, %v7307
    %v7311 = vsel %vm7223, 0, %v7309
    %v7312 = vcosq.f32.pop %v7310
    %v7313 = vsinq.f32.pop %v7310
    %vm7314 = vweird.f32 %v1319
    %v7315 = vadd.s32 %v7311, 3
    %v7316 = vand.u32 %v7315, 3
    %vm7317 = vcmp.lt.s32.totalorder %v7316, 2
    %vm7318 = vcmp.eq.s32.totalorder %v7316, 0
    %v7319 = vxor.u32 %v7313, 2147483648
    %v7320 = vsel %vm7318, %v7312, %v7319
    %vm7321 = vcmp.eq.s32.totalorder %v7316, 2
    %v7322 = vxor.u32 %v7312, 2147483648
    %v7323 = vsel %vm7321, %v7322, %v7313
    %v7324 = vsel %vm7317, %v7320, %v7323
    %v7325 = vsel %vm7314, nan, %v7324
    %v7326 = vand.u32 2147483647, %v1320
    %vm7327 = vcmp.le.f32.partialorder %v7326, 0.7853982
    %vm7328 = vcmp.lt.s32.totalorder %v1320, 0
    %v7329 = vand.u32 %v1320, 2139095040
    %v7330 = vshrl.u32 %v7329, 23
    %v7331 = vsub.s32 %v7330, 127
    %v7332 = vand.u32 2147483647, %v1320
    %v7333 = vand.u32 %v7332, 8388607
    %v7334 = vor.u32 %v7333, 8388608
    %v7335 = vsub.s32 0, %v7334
    %v7336 = vadd.s32 %v7331, 1
    %vm7337 = vcmp.gt.s32.totalorder %v7336, 0
    %v7338 = vsel %vm7337, %v7336, 0
    %v7339 = vshrl.u32 %v7338, 5
    %v7340 = vand.u32 %v7338, 31
    %v7341 = vsub.s32 32, %v7340
    %v7342 = vshrl.u32 683565275, %v7341
    %v7343 = vshll.u32 683565275, %v7340
    %v7344 = vshrl.u32 2475754826, %v7341
    %v7345 = vor.u32 %v7343, %v7344
    %v7346 = vshll.u32 2475754826, %v7340
    %v7347 = vshrl.u32 2131351028, %v7341
    %v7348 = vor.u32 %v7346, %v7347
    %v7349 = vshll.u32 2131351028, %v7340
    %v7350 = vshrl.u32 2102212464, %v7341
    %v7351 = vor.u32 %v7349, %v7350
    %v7352 = vshll.u32 2102212464, %v7340
    %v7353 = vshrl.u32 920167782, %v7341
    %v7354 = vor.u32 %v7352, %v7353
    %v7355 = vshll.u32 920167782, %v7340
    %v7356 = vshrl.u32 1326507024, %v7341
    %v7357 = vor.u32 %v7355, %v7356
    %vm7358 = vcmp.lt.s32.totalorder %v7339, 1
    %vm7359 = vcmp.lt.s32.totalorder %v7339, 2
    %vm7360 = vcmp.lt.s32.totalorder %v7339, 3
    %vm7361 = vcmp.lt.s32.totalorder %v7339, 4
    %v7362 = vsel %vm7358, %v7342, %v7345
    %v7363 = vsel %vm7361, %v7351, 2102212464
    %v7364 = vsel %vm7360, %v7348, %v7363
    %v7365 = vsel %vm7359, %v7362, %v7364
    %v7366 = vsel %vm7358, %v7345, %v7348
    %v7367 = vsel %vm7361, %v7354, 920167782
    %v7368 = vsel %vm7360, %v7351, %v7367
    %v7369 = vsel %vm7359, %v7366, %v7368
    %v7370 = vsel %vm7358, %v7348, %v7351
    %v7371 = vsel %vm7361, %v7357, 1326507024
    %v7372 = vsel %vm7360, %v7354, %v7371
    %v7373 = vsel %vm7359, %v7370, %v7372
    %v7374 = vshll.u32 %v7334, 8
    %v7375 = vmul.u32.u64.compose %v7374, %v7373
    %v7376 = vextract.low.u32 %v7375
    %v7377 = vextract.high.u32 %v7375
    %v7378 = vmul.u32.u64.compose %v7374, %v7369
    %v7379 = vextract.low.u32 %v7378
    %v7380 = vextract.high.u32 %v7378
    %v7381 = vmul.u32 %v7374, %v7365
    %v7382 = vadd.s32 %v7377, %v7379
    %vm7383 = vc.u32 %v7377, %v7379
    %v7384 = vadd.s32 %v7380, 1
    %v7385 = vsel %vm7383, %v7384, %v7380
    %v7386 = vadd.s32 %v7381, %v7385
    %v7387 = vadd.s32 %v7386, 536870912
    %v7388 = vshrl.u32 %v7387, 30
    %v7389 = vshll.u32 %v7388, 30
    %v7390 = vsub.s32 %v7386, %v7389
    %vm7391 = vcmp.lt.s32.totalorder %v7390, 0
    %v7392 = vsub.s32 0, %v7390
    %v7393 = vsel %vm7391, %v7392, %v7390
    %v7394 = vclz %v7393
    %v7395 = vsub.s32 %v7394, 2
    %vm7396 = vcmp.gt.s32.totalorder 0, %v7395
    %v7397 = vsel %vm7396, 0, %v7395
    %v7398 = vsub.s32 32, %v7397
    %v7399 = vshll.u32 %v7390, %v7397
    %v7400 = vshrl.u32 %v7382, %v7398
    %v7401 = vor.u32 %v7399, %v7400
    %v7402 = vsub.s32 4294967266, %v7397
    %v7403 = vadd.s32 %v7402, 127
    %v7404 = vshll.u32 %v7403, 23
    %v7405 = vor.u32 4788187, %v7404
    %v7406 = vand.u32 2147483647, %v7405
    %v7408 = vcvt.s32.f32 %v7401
    %v7409 = vmul.f32 %v7408, %v7406
    %v7410 = vxor.u32 %v7409, 2147483648
    %v7411 = vsel %vm7328, %v7410, %v7409
    %v7412 = vsub.s32 4, %v7388
    %v7413 = vsel %vm7328, %v7412, %v7388
    %v7414 = vsel %vm7327, %v1320, %v7411
    %v7415 = vsel %vm7327, 0, %v7413
    %v7416 = vcosq.f32.pop %v7414
    %v7417 = vsinq.f32.pop %v7414
    %vm7418 = vweird.f32 %v1320
    %v7419 = vadd.s32 %v7415, 3
    %v7420 = vand.u32 %v7419, 3
    %vm7421 = vcmp.lt.s32.totalorder %v7420, 2
    %vm7422 = vcmp.eq.s32.totalorder %v7420, 0
    %v7423 = vxor.u32 %v7417, 2147483648
    %v7424 = vsel %vm7422, %v7416, %v7423
    %vm7425 = vcmp.eq.s32.totalorder %v7420, 2
    %v7426 = vxor.u32 %v7416, 2147483648
    %v7427 = vsel %vm7425, %v7426, %v7417
    %v7428 = vsel %vm7421, %v7424, %v7427
    %v7429 = vsel %vm7418, nan, %v7428
    %v7430 = vand.u32 2147483647, %v1321
    %vm7431 = vcmp.le.f32.partialorder %v7430, 0.7853982
    %vm7432 = vcmp.lt.s32.totalorder %v1321, 0
    %v7433 = vand.u32 %v1321, 2139095040
    %v7434 = vshrl.u32 %v7433, 23
    %v7435 = vsub.s32 %v7434, 127
    %v7436 = vand.u32 2147483647, %v1321
    %v7437 = vand.u32 %v7436, 8388607
    %v7438 = vor.u32 %v7437, 8388608
    %v7439 = vsub.s32 0, %v7438
    %v7440 = vadd.s32 %v7435, 1
    %vm7441 = vcmp.gt.s32.totalorder %v7440, 0
    %v7442 = vsel %vm7441, %v7440, 0
    %v7443 = vshrl.u32 %v7442, 5
    %v7444 = vand.u32 %v7442, 31
    %v7445 = vsub.s32 32, %v7444
    %v7446 = vshrl.u32 683565275, %v7445
    %v7447 = vshll.u32 683565275, %v7444
    %v7448 = vshrl.u32 2475754826, %v7445
    %v7449 = vor.u32 %v7447, %v7448
    %v7450 = vshll.u32 2475754826, %v7444
    %v7451 = vshrl.u32 2131351028, %v7445
    %v7452 = vor.u32 %v7450, %v7451
    %v7453 = vshll.u32 2131351028, %v7444
    %v7454 = vshrl.u32 2102212464, %v7445
    %v7455 = vor.u32 %v7453, %v7454
    %v7456 = vshll.u32 2102212464, %v7444
    %v7457 = vshrl.u32 920167782, %v7445
    %v7458 = vor.u32 %v7456, %v7457
    %v7459 = vshll.u32 920167782, %v7444
    %v7460 = vshrl.u32 1326507024, %v7445
    %v7461 = vor.u32 %v7459, %v7460
    %vm7462 = vcmp.lt.s32.totalorder %v7443, 1
    %vm7463 = vcmp.lt.s32.totalorder %v7443, 2
    %vm7464 = vcmp.lt.s32.totalorder %v7443, 3
    %vm7465 = vcmp.lt.s32.totalorder %v7443, 4
    %v7466 = vsel %vm7462, %v7446, %v7449
    %v7467 = vsel %vm7465, %v7455, 2102212464
    %v7468 = vsel %vm7464, %v7452, %v7467
    %v7469 = vsel %vm7463, %v7466, %v7468
    %v7470 = vsel %vm7462, %v7449, %v7452
    %v7471 = vsel %vm7465, %v7458, 920167782
    %v7472 = vsel %vm7464, %v7455, %v7471
    %v7473 = vsel %vm7463, %v7470, %v7472
    %v7474 = vsel %vm7462, %v7452, %v7455
    %v7475 = vsel %vm7465, %v7461, 1326507024
    %v7476 = vsel %vm7464, %v7458, %v7475
    %v7477 = vsel %vm7463, %v7474, %v7476
    %v7478 = vshll.u32 %v7438, 8
    %v7479 = vmul.u32.u64.compose %v7478, %v7477
    %v7480 = vextract.low.u32 %v7479
    %v7481 = vextract.high.u32 %v7479
    %v7482 = vmul.u32.u64.compose %v7478, %v7473
    %v7483 = vextract.low.u32 %v7482
    %v7484 = vextract.high.u32 %v7482
    %v7485 = vmul.u32 %v7478, %v7469
    %v7486 = vadd.s32 %v7481, %v7483
    %vm7487 = vc.u32 %v7481, %v7483
    %v7488 = vadd.s32 %v7484, 1
    %v7489 = vsel %vm7487, %v7488, %v7484
    %v7490 = vadd.s32 %v7485, %v7489
    %v7491 = vadd.s32 %v7490, 536870912
    %v7492 = vshrl.u32 %v7491, 30
    %v7493 = vshll.u32 %v7492, 30
    %v7494 = vsub.s32 %v7490, %v7493
    %vm7495 = vcmp.lt.s32.totalorder %v7494, 0
    %v7496 = vsub.s32 0, %v7494
    %v7497 = vsel %vm7495, %v7496, %v7494
    %v7498 = vclz %v7497
    %v7499 = vsub.s32 %v7498, 2
    %vm7500 = vcmp.gt.s32.totalorder 0, %v7499
    %v7501 = vsel %vm7500, 0, %v7499
    %v7502 = vsub.s32 32, %v7501
    %v7503 = vshll.u32 %v7494, %v7501
    %v7504 = vshrl.u32 %v7486, %v7502
    %v7505 = vor.u32 %v7503, %v7504
    %v7506 = vsub.s32 4294967266, %v7501
    %v7507 = vadd.s32 %v7506, 127
    %v7508 = vshll.u32 %v7507, 23
    %v7509 = vor.u32 4788187, %v7508
    %v7510 = vand.u32 2147483647, %v7509
    %v7512 = vcvt.s32.f32 %v7505
    %v7513 = vmul.f32 %v7512, %v7510
    %v7514 = vxor.u32 %v7513, 2147483648
    %v7515 = vsel %vm7432, %v7514, %v7513
    %v7516 = vsub.s32 4, %v7492
    %v7517 = vsel %vm7432, %v7516, %v7492
    %v7518 = vsel %vm7431, %v1321, %v7515
    %v7519 = vsel %vm7431, 0, %v7517
    %v7520 = vcosq.f32.pop %v7518
    %v7521 = vsinq.f32.pop %v7518
    %vm7522 = vweird.f32 %v1321
    %v7523 = vadd.s32 %v7519, 3
    %v7524 = vand.u32 %v7523, 3
    %vm7525 = vcmp.lt.s32.totalorder %v7524, 2
    %vm7526 = vcmp.eq.s32.totalorder %v7524, 0
    %v7527 = vxor.u32 %v7521, 2147483648
    %v7528 = vsel %vm7526, %v7520, %v7527
    %vm7529 = vcmp.eq.s32.totalorder %v7524, 2
    %v7530 = vxor.u32 %v7520, 2147483648
    %v7531 = vsel %vm7529, %v7530, %v7521
    %v7532 = vsel %vm7525, %v7528, %v7531
    %v7533 = vsel %vm7522, nan, %v7532
    %v7534 = vand.u32 2147483647, %v1322
    %vm7535 = vcmp.le.f32.partialorder %v7534, 0.7853982
    %vm7536 = vcmp.lt.s32.totalorder %v1322, 0
    %v7537 = vand.u32 %v1322, 2139095040
    %v7538 = vshrl.u32 %v7537, 23
    %v7539 = vsub.s32 %v7538, 127
    %v7540 = vand.u32 2147483647, %v1322
    %v7541 = vand.u32 %v7540, 8388607
    %v7542 = vor.u32 %v7541, 8388608
    %v7543 = vsub.s32 0, %v7542
    %v7544 = vadd.s32 %v7539, 1
    %vm7545 = vcmp.gt.s32.totalorder %v7544, 0
    %v7546 = vsel %vm7545, %v7544, 0
    %v7547 = vshrl.u32 %v7546, 5
    %v7548 = vand.u32 %v7546, 31
    %v7549 = vsub.s32 32, %v7548
    %v7550 = vshrl.u32 683565275, %v7549
    %v7551 = vshll.u32 683565275, %v7548
    %v7552 = vshrl.u32 2475754826, %v7549
    %v7553 = vor.u32 %v7551, %v7552
    %v7554 = vshll.u32 2475754826, %v7548
    %v7555 = vshrl.u32 2131351028, %v7549
    %v7556 = vor.u32 %v7554, %v7555
    %v7557 = vshll.u32 2131351028, %v7548
    %v7558 = vshrl.u32 2102212464, %v7549
    %v7559 = vor.u32 %v7557, %v7558
    %v7560 = vshll.u32 2102212464, %v7548
    %v7561 = vshrl.u32 920167782, %v7549
    %v7562 = vor.u32 %v7560, %v7561
    %v7563 = vshll.u32 920167782, %v7548
    %v7564 = vshrl.u32 1326507024, %v7549
    %v7565 = vor.u32 %v7563, %v7564
    %vm7566 = vcmp.lt.s32.totalorder %v7547, 1
    %vm7567 = vcmp.lt.s32.totalorder %v7547, 2
    %vm7568 = vcmp.lt.s32.totalorder %v7547, 3
    %vm7569 = vcmp.lt.s32.totalorder %v7547, 4
    %v7570 = vsel %vm7566, %v7550, %v7553
    %v7571 = vsel %vm7569, %v7559, 2102212464
    %v7572 = vsel %vm7568, %v7556, %v7571
    %v7573 = vsel %vm7567, %v7570, %v7572
    %v7574 = vsel %vm7566, %v7553, %v7556
    %v7575 = vsel %vm7569, %v7562, 920167782
    %v7576 = vsel %vm7568, %v7559, %v7575
    %v7577 = vsel %vm7567, %v7574, %v7576
    %v7578 = vsel %vm7566, %v7556, %v7559
    %v7579 = vsel %vm7569, %v7565, 1326507024
    %v7580 = vsel %vm7568, %v7562, %v7579
    %v7581 = vsel %vm7567, %v7578, %v7580
    %v7582 = vshll.u32 %v7542, 8
    %v7583 = vmul.u32.u64.compose %v7582, %v7581
    %v7584 = vextract.low.u32 %v7583
    %v7585 = vextract.high.u32 %v7583
    %v7586 = vmul.u32.u64.compose %v7582, %v7577
    %v7587 = vextract.low.u32 %v7586
    %v7588 = vextract.high.u32 %v7586
    %v7589 = vmul.u32 %v7582, %v7573
    %v7590 = vadd.s32 %v7585, %v7587
    %vm7591 = vc.u32 %v7585, %v7587
    %v7592 = vadd.s32 %v7588, 1
    %v7593 = vsel %vm7591, %v7592, %v7588
    %v7594 = vadd.s32 %v7589, %v7593
    %v7595 = vadd.s32 %v7594, 536870912
    %v7596 = vshrl.u32 %v7595, 30
    %v7597 = vshll.u32 %v7596, 30
    %v7598 = vsub.s32 %v7594, %v7597
    %vm7599 = vcmp.lt.s32.totalorder %v7598, 0
    %v7600 = vsub.s32 0, %v7598
    %v7601 = vsel %vm7599, %v7600, %v7598
    %v7602 = vclz %v7601
    %v7603 = vsub.s32 %v7602, 2
    %vm7604 = vcmp.gt.s32.totalorder 0, %v7603
    %v7605 = vsel %vm7604, 0, %v7603
    %v7606 = vsub.s32 32, %v7605
    %v7607 = vshll.u32 %v7598, %v7605
    %v7608 = vshrl.u32 %v7590, %v7606
    %v7609 = vor.u32 %v7607, %v7608
    %v7610 = vsub.s32 4294967266, %v7605
    %v7611 = vadd.s32 %v7610, 127
    %v7612 = vshll.u32 %v7611, 23
    %v7613 = vor.u32 4788187, %v7612
    %v7614 = vand.u32 2147483647, %v7613
    %v7616 = vcvt.s32.f32 %v7609
    %v7617 = vmul.f32 %v7616, %v7614
    %v7618 = vxor.u32 %v7617, 2147483648
    %v7619 = vsel %vm7536, %v7618, %v7617
    %v7620 = vsub.s32 4, %v7596
    %v7621 = vsel %vm7536, %v7620, %v7596
    %v7622 = vsel %vm7535, %v1322, %v7619
    %v7623 = vsel %vm7535, 0, %v7621
    %v7624 = vcosq.f32.pop %v7622
    %v7625 = vsinq.f32.pop %v7622
    %vm7626 = vweird.f32 %v1322
    %v7627 = vadd.s32 %v7623, 3
    %v7628 = vand.u32 %v7627, 3
    %vm7629 = vcmp.lt.s32.totalorder %v7628, 2
    %vm7630 = vcmp.eq.s32.totalorder %v7628, 0
    %v7631 = vxor.u32 %v7625, 2147483648
    %v7632 = vsel %vm7630, %v7624, %v7631
    %vm7633 = vcmp.eq.s32.totalorder %v7628, 2
    %v7634 = vxor.u32 %v7624, 2147483648
    %v7635 = vsel %vm7633, %v7634, %v7625
    %v7636 = vsel %vm7629, %v7632, %v7635
    %v7637 = vsel %vm7626, nan, %v7636
    %v7638 = vand.u32 2147483647, %v1323
    %vm7639 = vcmp.le.f32.partialorder %v7638, 0.7853982
    %vm7640 = vcmp.lt.s32.totalorder %v1323, 0
    %v7641 = vand.u32 %v1323, 2139095040
    %v7642 = vshrl.u32 %v7641, 23
    %v7643 = vsub.s32 %v7642, 127
    %v7644 = vand.u32 2147483647, %v1323
    %v7645 = vand.u32 %v7644, 8388607
    %v7646 = vor.u32 %v7645, 8388608
    %v7647 = vsub.s32 0, %v7646
    %v7648 = vadd.s32 %v7643, 1
    %vm7649 = vcmp.gt.s32.totalorder %v7648, 0
    %v7650 = vsel %vm7649, %v7648, 0
    %v7651 = vshrl.u32 %v7650, 5
    %v7652 = vand.u32 %v7650, 31
    %v7653 = vsub.s32 32, %v7652
    %v7654 = vshrl.u32 683565275, %v7653
    %v7655 = vshll.u32 683565275, %v7652
    %v7656 = vshrl.u32 2475754826, %v7653
    %v7657 = vor.u32 %v7655, %v7656
    %v7658 = vshll.u32 2475754826, %v7652
    %v7659 = vshrl.u32 2131351028, %v7653
    %v7660 = vor.u32 %v7658, %v7659
    %v7661 = vshll.u32 2131351028, %v7652
    %v7662 = vshrl.u32 2102212464, %v7653
    %v7663 = vor.u32 %v7661, %v7662
    %v7664 = vshll.u32 2102212464, %v7652
    %v7665 = vshrl.u32 920167782, %v7653
    %v7666 = vor.u32 %v7664, %v7665
    %v7667 = vshll.u32 920167782, %v7652
    %v7668 = vshrl.u32 1326507024, %v7653
    %v7669 = vor.u32 %v7667, %v7668
    %vm7670 = vcmp.lt.s32.totalorder %v7651, 1
    %vm7671 = vcmp.lt.s32.totalorder %v7651, 2
    %vm7672 = vcmp.lt.s32.totalorder %v7651, 3
    %vm7673 = vcmp.lt.s32.totalorder %v7651, 4
    %v7674 = vsel %vm7670, %v7654, %v7657
    %v7675 = vsel %vm7673, %v7663, 2102212464
    %v7676 = vsel %vm7672, %v7660, %v7675
    %v7677 = vsel %vm7671, %v7674, %v7676
    %v7678 = vsel %vm7670, %v7657, %v7660
    %v7679 = vsel %vm7673, %v7666, 920167782
    %v7680 = vsel %vm7672, %v7663, %v7679
    %v7681 = vsel %vm7671, %v7678, %v7680
    %v7682 = vsel %vm7670, %v7660, %v7663
    %v7683 = vsel %vm7673, %v7669, 1326507024
    %v7684 = vsel %vm7672, %v7666, %v7683
    %v7685 = vsel %vm7671, %v7682, %v7684
    %v7686 = vshll.u32 %v7646, 8
    %v7687 = vmul.u32.u64.compose %v7686, %v7685
    %v7688 = vextract.low.u32 %v7687
    %v7689 = vextract.high.u32 %v7687
    %v7690 = vmul.u32.u64.compose %v7686, %v7681
    %v7691 = vextract.low.u32 %v7690
    %v7692 = vextract.high.u32 %v7690
    %v7693 = vmul.u32 %v7686, %v7677
    %v7694 = vadd.s32 %v7689, %v7691
    %vm7695 = vc.u32 %v7689, %v7691
    %v7696 = vadd.s32 %v7692, 1
    %v7697 = vsel %vm7695, %v7696, %v7692
    %v7698 = vadd.s32 %v7693, %v7697
    %v7699 = vadd.s32 %v7698, 536870912
    %v7700 = vshrl.u32 %v7699, 30
    %v7701 = vshll.u32 %v7700, 30
    %v7702 = vsub.s32 %v7698, %v7701
    %vm7703 = vcmp.lt.s32.totalorder %v7702, 0
    %v7704 = vsub.s32 0, %v7702
    %v7705 = vsel %vm7703, %v7704, %v7702
    %v7706 = vclz %v7705
    %v7707 = vsub.s32 %v7706, 2
    %vm7708 = vcmp.gt.s32.totalorder 0, %v7707
    %v7709 = vsel %vm7708, 0, %v7707
    %v7710 = vsub.s32 32, %v7709
    %v7711 = vshll.u32 %v7702, %v7709
    %v7712 = vshrl.u32 %v7694, %v7710
    %v7713 = vor.u32 %v7711, %v7712
    %v7714 = vsub.s32 4294967266, %v7709
    %v7715 = vadd.s32 %v7714, 127
    %v7716 = vshll.u32 %v7715, 23
    %v7717 = vor.u32 4788187, %v7716
    %v7718 = vand.u32 2147483647, %v7717
    %v7720 = vcvt.s32.f32 %v7713
    %v7721 = vmul.f32 %v7720, %v7718
    %v7722 = vxor.u32 %v7721, 2147483648
    %v7723 = vsel %vm7640, %v7722, %v7721
    %v7724 = vsub.s32 4, %v7700
    %v7725 = vsel %vm7640, %v7724, %v7700
    %v7726 = vsel %vm7639, %v1323, %v7723
    %v7727 = vsel %vm7639, 0, %v7725
    %v7728 = vcosq.f32.pop %v7726
    %v7729 = vsinq.f32.pop %v7726
    %vm7730 = vweird.f32 %v1323
    %v7731 = vadd.s32 %v7727, 3
    %v7732 = vand.u32 %v7731, 3
    %vm7733 = vcmp.lt.s32.totalorder %v7732, 2
    %vm7734 = vcmp.eq.s32.totalorder %v7732, 0
    %v7735 = vxor.u32 %v7729, 2147483648
    %v7736 = vsel %vm7734, %v7728, %v7735
    %vm7737 = vcmp.eq.s32.totalorder %v7732, 2
    %v7738 = vxor.u32 %v7728, 2147483648
    %v7739 = vsel %vm7737, %v7738, %v7729
    %v7740 = vsel %vm7733, %v7736, %v7739
    %v7741 = vsel %vm7730, nan, %v7740
    %v7742 = vand.u32 2147483647, %v1324
    %vm7743 = vcmp.le.f32.partialorder %v7742, 0.7853982
    %vm7744 = vcmp.lt.s32.totalorder %v1324, 0
    %v7745 = vand.u32 %v1324, 2139095040
    %v7746 = vshrl.u32 %v7745, 23
    %v7747 = vsub.s32 %v7746, 127
    %v7748 = vand.u32 2147483647, %v1324
    %v7749 = vand.u32 %v7748, 8388607
    %v7750 = vor.u32 %v7749, 8388608
    %v7751 = vsub.s32 0, %v7750
    %v7752 = vadd.s32 %v7747, 1
    %vm7753 = vcmp.gt.s32.totalorder %v7752, 0
    %v7754 = vsel %vm7753, %v7752, 0
    %v7755 = vshrl.u32 %v7754, 5
    %v7756 = vand.u32 %v7754, 31
    %v7757 = vsub.s32 32, %v7756
    %v7758 = vshrl.u32 683565275, %v7757
    %v7759 = vshll.u32 683565275, %v7756
    %v7760 = vshrl.u32 2475754826, %v7757
    %v7761 = vor.u32 %v7759, %v7760
    %v7762 = vshll.u32 2475754826, %v7756
    %v7763 = vshrl.u32 2131351028, %v7757
    %v7764 = vor.u32 %v7762, %v7763
    %v7765 = vshll.u32 2131351028, %v7756
    %v7766 = vshrl.u32 2102212464, %v7757
    %v7767 = vor.u32 %v7765, %v7766
    %v7768 = vshll.u32 2102212464, %v7756
    %v7769 = vshrl.u32 920167782, %v7757
    %v7770 = vor.u32 %v7768, %v7769
    %v7771 = vshll.u32 920167782, %v7756
    %v7772 = vshrl.u32 1326507024, %v7757
    %v7773 = vor.u32 %v7771, %v7772
    %vm7774 = vcmp.lt.s32.totalorder %v7755, 1
    %vm7775 = vcmp.lt.s32.totalorder %v7755, 2
    %vm7776 = vcmp.lt.s32.totalorder %v7755, 3
    %vm7777 = vcmp.lt.s32.totalorder %v7755, 4
    %v7778 = vsel %vm7774, %v7758, %v7761
    %v7779 = vsel %vm7777, %v7767, 2102212464
    %v7780 = vsel %vm7776, %v7764, %v7779
    %v7781 = vsel %vm7775, %v7778, %v7780
    %v7782 = vsel %vm7774, %v7761, %v7764
    %v7783 = vsel %vm7777, %v7770, 920167782
    %v7784 = vsel %vm7776, %v7767, %v7783
    %v7785 = vsel %vm7775, %v7782, %v7784
    %v7786 = vsel %vm7774, %v7764, %v7767
    %v7787 = vsel %vm7777, %v7773, 1326507024
    %v7788 = vsel %vm7776, %v7770, %v7787
    %v7789 = vsel %vm7775, %v7786, %v7788
    %v7790 = vshll.u32 %v7750, 8
    %v7791 = vmul.u32.u64.compose %v7790, %v7789
    %v7792 = vextract.low.u32 %v7791
    %v7793 = vextract.high.u32 %v7791
    %v7794 = vmul.u32.u64.compose %v7790, %v7785
    %v7795 = vextract.low.u32 %v7794
    %v7796 = vextract.high.u32 %v7794
    %v7797 = vmul.u32 %v7790, %v7781
    %v7798 = vadd.s32 %v7793, %v7795
    %vm7799 = vc.u32 %v7793, %v7795
    %v7800 = vadd.s32 %v7796, 1
    %v7801 = vsel %vm7799, %v7800, %v7796
    %v7802 = vadd.s32 %v7797, %v7801
    %v7803 = vadd.s32 %v7802, 536870912
    %v7804 = vshrl.u32 %v7803, 30
    %v7805 = vshll.u32 %v7804, 30
    %v7806 = vsub.s32 %v7802, %v7805
    %vm7807 = vcmp.lt.s32.totalorder %v7806, 0
    %v7808 = vsub.s32 0, %v7806
    %v7809 = vsel %vm7807, %v7808, %v7806
    %v7810 = vclz %v7809
    %v7811 = vsub.s32 %v7810, 2
    %vm7812 = vcmp.gt.s32.totalorder 0, %v7811
    %v7813 = vsel %vm7812, 0, %v7811
    %v7814 = vsub.s32 32, %v7813
    %v7815 = vshll.u32 %v7806, %v7813
    %v7816 = vshrl.u32 %v7798, %v7814
    %v7817 = vor.u32 %v7815, %v7816
    %v7818 = vsub.s32 4294967266, %v7813
    %v7819 = vadd.s32 %v7818, 127
    %v7820 = vshll.u32 %v7819, 23
    %v7821 = vor.u32 4788187, %v7820
    %v7822 = vand.u32 2147483647, %v7821
    %v7824 = vcvt.s32.f32 %v7817
    %v7825 = vmul.f32 %v7824, %v7822
    %v7826 = vxor.u32 %v7825, 2147483648
    %v7827 = vsel %vm7744, %v7826, %v7825
    %v7828 = vsub.s32 4, %v7804
    %v7829 = vsel %vm7744, %v7828, %v7804
    %v7830 = vsel %vm7743, %v1324, %v7827
    %v7831 = vsel %vm7743, 0, %v7829
    %v7832 = vcosq.f32.pop %v7830
    %v7833 = vsinq.f32.pop %v7830
    %vm7834 = vweird.f32 %v1324
    %v7835 = vadd.s32 %v7831, 3
    %v7836 = vand.u32 %v7835, 3
    %vm7837 = vcmp.lt.s32.totalorder %v7836, 2
    %vm7838 = vcmp.eq.s32.totalorder %v7836, 0
    %v7839 = vxor.u32 %v7833, 2147483648
    %v7840 = vsel %vm7838, %v7832, %v7839
    %vm7841 = vcmp.eq.s32.totalorder %v7836, 2
    %v7842 = vxor.u32 %v7832, 2147483648
    %v7843 = vsel %vm7841, %v7842, %v7833
    %v7844 = vsel %vm7837, %v7840, %v7843
    %v7845 = vsel %vm7834, nan, %v7844
    %v7846 = vand.u32 2147483647, %v1325
    %vm7847 = vcmp.le.f32.partialorder %v7846, 0.7853982
    %vm7848 = vcmp.lt.s32.totalorder %v1325, 0
    %v7849 = vand.u32 %v1325, 2139095040
    %v7850 = vshrl.u32 %v7849, 23
    %v7851 = vsub.s32 %v7850, 127
    %v7852 = vand.u32 2147483647, %v1325
    %v7853 = vand.u32 %v7852, 8388607
    %v7854 = vor.u32 %v7853, 8388608
    %v7855 = vsub.s32 0, %v7854
    %v7856 = vadd.s32 %v7851, 1
    %vm7857 = vcmp.gt.s32.totalorder %v7856, 0
    %v7858 = vsel %vm7857, %v7856, 0
    %v7859 = vshrl.u32 %v7858, 5
    %v7860 = vand.u32 %v7858, 31
    %v7861 = vsub.s32 32, %v7860
    %v7862 = vshrl.u32 683565275, %v7861
    %v7863 = vshll.u32 683565275, %v7860
    %v7864 = vshrl.u32 2475754826, %v7861
    %v7865 = vor.u32 %v7863, %v7864
    %v7866 = vshll.u32 2475754826, %v7860
    %v7867 = vshrl.u32 2131351028, %v7861
    %v7868 = vor.u32 %v7866, %v7867
    %v7869 = vshll.u32 2131351028, %v7860
    %v7870 = vshrl.u32 2102212464, %v7861
    %v7871 = vor.u32 %v7869, %v7870
    %v7872 = vshll.u32 2102212464, %v7860
    %v7873 = vshrl.u32 920167782, %v7861
    %v7874 = vor.u32 %v7872, %v7873
    %v7875 = vshll.u32 920167782, %v7860
    %v7876 = vshrl.u32 1326507024, %v7861
    %v7877 = vor.u32 %v7875, %v7876
    %vm7878 = vcmp.lt.s32.totalorder %v7859, 1
    %vm7879 = vcmp.lt.s32.totalorder %v7859, 2
    %vm7880 = vcmp.lt.s32.totalorder %v7859, 3
    %vm7881 = vcmp.lt.s32.totalorder %v7859, 4
    %v7882 = vsel %vm7878, %v7862, %v7865
    %v7883 = vsel %vm7881, %v7871, 2102212464
    %v7884 = vsel %vm7880, %v7868, %v7883
    %v7885 = vsel %vm7879, %v7882, %v7884
    %v7886 = vsel %vm7878, %v7865, %v7868
    %v7887 = vsel %vm7881, %v7874, 920167782
    %v7888 = vsel %vm7880, %v7871, %v7887
    %v7889 = vsel %vm7879, %v7886, %v7888
    %v7890 = vsel %vm7878, %v7868, %v7871
    %v7891 = vsel %vm7881, %v7877, 1326507024
    %v7892 = vsel %vm7880, %v7874, %v7891
    %v7893 = vsel %vm7879, %v7890, %v7892
    %v7894 = vshll.u32 %v7854, 8
    %v7895 = vmul.u32.u64.compose %v7894, %v7893
    %v7896 = vextract.low.u32 %v7895
    %v7897 = vextract.high.u32 %v7895
    %v7898 = vmul.u32.u64.compose %v7894, %v7889
    %v7899 = vextract.low.u32 %v7898
    %v7900 = vextract.high.u32 %v7898
    %v7901 = vmul.u32 %v7894, %v7885
    %v7902 = vadd.s32 %v7897, %v7899
    %vm7903 = vc.u32 %v7897, %v7899
    %v7904 = vadd.s32 %v7900, 1
    %v7905 = vsel %vm7903, %v7904, %v7900
    %v7906 = vadd.s32 %v7901, %v7905
    %v7907 = vadd.s32 %v7906, 536870912
    %v7908 = vshrl.u32 %v7907, 30
    %v7909 = vshll.u32 %v7908, 30
    %v7910 = vsub.s32 %v7906, %v7909
    %vm7911 = vcmp.lt.s32.totalorder %v7910, 0
    %v7912 = vsub.s32 0, %v7910
    %v7913 = vsel %vm7911, %v7912, %v7910
    %v7914 = vclz %v7913
    %v7915 = vsub.s32 %v7914, 2
    %vm7916 = vcmp.gt.s32.totalorder 0, %v7915
    %v7917 = vsel %vm7916, 0, %v7915
    %v7918 = vsub.s32 32, %v7917
    %v7919 = vshll.u32 %v7910, %v7917
    %v7920 = vshrl.u32 %v7902, %v7918
    %v7921 = vor.u32 %v7919, %v7920
    %v7922 = vsub.s32 4294967266, %v7917
    %v7923 = vadd.s32 %v7922, 127
    %v7924 = vshll.u32 %v7923, 23
    %v7925 = vor.u32 4788187, %v7924
    %v7926 = vand.u32 2147483647, %v7925
    %v7928 = vcvt.s32.f32 %v7921
    %v7929 = vmul.f32 %v7928, %v7926
    %v7930 = vxor.u32 %v7929, 2147483648
    %v7931 = vsel %vm7848, %v7930, %v7929
    %v7932 = vsub.s32 4, %v7908
    %v7933 = vsel %vm7848, %v7932, %v7908
    %v7934 = vsel %vm7847, %v1325, %v7931
    %v7935 = vsel %vm7847, 0, %v7933
    %v7936 = vcosq.f32.pop %v7934
    %v7937 = vsinq.f32.pop %v7934
    %vm7938 = vweird.f32 %v1325
    %v7939 = vadd.s32 %v7935, 3
    %v7940 = vand.u32 %v7939, 3
    %vm7941 = vcmp.lt.s32.totalorder %v7940, 2
    %vm7942 = vcmp.eq.s32.totalorder %v7940, 0
    %v7943 = vxor.u32 %v7937, 2147483648
    %v7944 = vsel %vm7942, %v7936, %v7943
    %vm7945 = vcmp.eq.s32.totalorder %v7940, 2
    %v7946 = vxor.u32 %v7936, 2147483648
    %v7947 = vsel %vm7945, %v7946, %v7937
    %v7948 = vsel %vm7941, %v7944, %v7947
    %v7949 = vsel %vm7938, nan, %v7948
    %v7950 = vsel %vm1161, 1, 0
    %v7951 = vlaneseq
    %v7952 = vshrl.u32 %v7951, 7
    %v7953 = vsub.s32 0, %v7952
    %v7954 = vrot.slane %v7950, %v7953
    %vm7955 = vcmp.eq.s32.totalorder %v7954, 1
    %v7956 = vsel %vm7955, %v1428, %v4725
    %v7957 = vsel %vm7955, %v1531, %v4829
    %v7958 = vsel %vm7955, %v1634, %v4933
    %v7959 = vsel %vm7955, %v1737, %v5037
    %v7960 = vsel %vm7955, %v1840, %v5141
    %v7961 = vsel %vm7955, %v1943, %v5245
    %v7962 = vsel %vm7955, %v2046, %v5349
    %v7963 = vsel %vm7955, %v2149, %v5453
    %v7964 = vsel %vm7955, %v2252, %v5557
    %v7965 = vsel %vm7955, %v2355, %v5661
    %v7966 = vsel %vm7955, %v2458, %v5765
    %v7967 = vsel %vm7955, %v2561, %v5869
    %v7968 = vsel %vm7955, %v2664, %v5973
    %v7969 = vsel %vm7955, %v2767, %v6077
    %v7970 = vsel %vm7955, %v2870, %v6181
    %v7971 = vsel %vm7955, %v2973, %v6285
    %v7972 = vsel %vm7955, %v3076, %v6389
    %v7973 = vsel %vm7955, %v3179, %v6493
    %v7974 = vsel %vm7955, %v3282, %v6597
    %v7975 = vsel %vm7955, %v3385, %v6701
    %v7976 = vsel %vm7955, %v3488, %v6805
    %v7977 = vsel %vm7955, %v3591, %v6909
    %v7978 = vsel %vm7955, %v3694, %v7013
    %v7979 = vsel %vm7955, %v3797, %v7117
    %v7980 = vsel %vm7955, %v3900, %v7221
    %v7981 = vsel %vm7955, %v4003, %v7325
    %v7982 = vsel %vm7955, %v4106, %v7429
    %v7983 = vsel %vm7955, %v4209, %v7533
    %v7984 = vsel %vm7955, %v4312, %v7637
    %v7985 = vsel %vm7955, %v4415, %v7741
    %v7986 = vsel %vm7955, %v4518, %v7845
    %v7987 = vsel %vm7955, %v4621, %v7949
    %v7988 = vpack.c.bf16 %v7957, %v7956
    %v7989 = vpack.c.bf16 %v7959, %v7958
    %v7990 = vpack.c.bf16 %v7961, %v7960
    %v7991 = vpack.c.bf16 %v7963, %v7962
    %v7992 = vpack.c.bf16 %v7965, %v7964
    %v7993 = vpack.c.bf16 %v7967, %v7966
    %v7994 = vpack.c.bf16 %v7969, %v7968
    %v7995 = vpack.c.bf16 %v7971, %v7970
    %v7996 = vpack.c.bf16 %v7973, %v7972
    %v7997 = vpack.c.bf16 %v7975, %v7974
    %v7998 = vpack.c.bf16 %v7977, %v7976
    %v7999 = vpack.c.bf16 %v7979, %v7978
    %v8000 = vpack.c.bf16 %v7981, %v7980
    %v8001 = vpack.c.bf16 %v7983, %v7982
    %v8002 = vpack.c.bf16 %v7985, %v7984
    %v8003 = vpack.c.bf16 %v7987, %v7986
    %v8004 = vld [vmem:[%s5 + $0x100] sm:$0xff]
    %v8005 = vld [vmem:[%s5 + $0x108] sm:$0xff]
    %v8006 = vld [vmem:[%s5 + $0x110] sm:$0xff]
    %v8007 = vld [vmem:[%s5 + $0x118] sm:$0xff]
    %v8008 = vld [vmem:[%s5 + $0x120] sm:$0xff]
    %v8009 = vld [vmem:[%s5 + $0x128] sm:$0xff]
    %v8010 = vld [vmem:[%s5 + $0x130] sm:$0xff]
    %v8011 = vld [vmem:[%s5 + $0x138] sm:$0xff]
    %v8012 = vld [vmem:[%s5 + $0x140] sm:$0xff]
    %v8013 = vld [vmem:[%s5 + $0x148] sm:$0xff]
    %v8014 = vld [vmem:[%s5 + $0x150] sm:$0xff]
    %v8015 = vld [vmem:[%s5 + $0x158] sm:$0xff]
    %v8016 = vld [vmem:[%s5 + $0x160] sm:$0xff]
    %v8017 = vld [vmem:[%s5 + $0x168] sm:$0xff]
    %v8018 = vld [vmem:[%s5 + $0x170] sm:$0xff]
    %v8019 = vld [vmem:[%s5 + $0x178] sm:$0xff]
    %v8036 = vunpack.c.l.b16 %v8004
    %v8037 = vunpack.c.h.b16 %v8004
    %v8038 = vunpack.c.l.b16 %v8005
    %v8039 = vunpack.c.h.b16 %v8005
    %v8040 = vunpack.c.l.b16 %v8006
    %v8041 = vunpack.c.h.b16 %v8006
    %v8042 = vunpack.c.l.b16 %v8007
    %v8043 = vunpack.c.h.b16 %v8007
    %v8044 = vunpack.c.l.b16 %v8008
    %v8045 = vunpack.c.h.b16 %v8008
    %v8046 = vunpack.c.l.b16 %v8009
    %v8047 = vunpack.c.h.b16 %v8009
    %v8048 = vunpack.c.l.b16 %v8010
    %v8049 = vunpack.c.h.b16 %v8010
    %v8050 = vunpack.c.l.b16 %v8011
    %v8051 = vunpack.c.h.b16 %v8011
    %v8052 = vunpack.c.l.b16 %v8012
    %v8053 = vunpack.c.h.b16 %v8012
    %v8054 = vunpack.c.l.b16 %v8013
    %v8055 = vunpack.c.h.b16 %v8013
    %v8056 = vunpack.c.l.b16 %v8014
    %v8057 = vunpack.c.h.b16 %v8014
    %v8058 = vunpack.c.l.b16 %v8015
    %v8059 = vunpack.c.h.b16 %v8015
    %v8060 = vunpack.c.l.b16 %v8016
    %v8061 = vunpack.c.h.b16 %v8016
    %v8062 = vunpack.c.l.b16 %v8017
    %v8063 = vunpack.c.h.b16 %v8017
    %v8064 = vunpack.c.l.b16 %v8018
    %v8065 = vunpack.c.h.b16 %v8018
    %v8066 = vunpack.c.l.b16 %v8019
    %v8067 = vunpack.c.h.b16 %v8019
    %v8068 = vpack.c.b16 %v8038, %v8036
    %v8069 = vpack.c.b16 %v8039, %v8037
    %v8070 = vpack.c.b16 %v8042, %v8040
    %v8071 = vpack.c.b16 %v8043, %v8041
    %v8072 = vpack.c.b16 %v8046, %v8044
    %v8073 = vpack.c.b16 %v8047, %v8045
    %v8074 = vpack.c.b16 %v8050, %v8048
    %v8075 = vpack.c.b16 %v8051, %v8049
    %v8076 = vpack.c.b16 %v8054, %v8052
    %v8077 = vpack.c.b16 %v8055, %v8053
    %v8078 = vpack.c.b16 %v8058, %v8056
    %v8079 = vpack.c.b16 %v8059, %v8057
    %v8080 = vpack.c.b16 %v8062, %v8060
    %v8081 = vpack.c.b16 %v8063, %v8061
    %v8082 = vpack.c.b16 %v8066, %v8064
    %v8083 = vpack.c.b16 %v8067, %v8065
    %8100 = vmatprep.subr.bf16.mxu0 %v8069
    %8101 = vmatpush1.bf16.msra.mxu0 %v8068
    %8102 = vmatprep.subr.bf16.mxu0 %v8071
    %8103 = vmatpush1.bf16.msra.mxu0 %v8070
    %8104 = vmatprep.subr.bf16.mxu0 %v8073
    %8105 = vmatpush1.bf16.msra.mxu0 %v8072
    %8106 = vmatprep.subr.bf16.mxu0 %v8075
    %8107 = vmatpush1.bf16.msra.mxu0 %v8074
    %8108 = vmatprep.subr.bf16.mxu0 %v8077
    %8109 = vmatpush1.bf16.msra.mxu0 %v8076
    %8110 = vmatprep.subr.bf16.mxu0 %v8079
    %8111 = vmatpush1.bf16.msra.mxu0 %v8078
    %8112 = vmatprep.subr.bf16.mxu0 %v8081
    %8113 = vmatpush1.bf16.msra.mxu0 %v8080
    %8114 = vmatprep.subr.bf16.mxu0 %v8083
    %8115 = vmatpush1.bf16.msra.mxu0 %v8082
    %8116 = vmatprep.subr.bf16.mxu0 0
    %8117 = vmatpush1.bf16.msra.mxu0 0
    %8118 = vmatprep.subr.bf16.mxu0 0
    %8119 = vmatpush1.bf16.msra.mxu0 0
    %8120 = vmatprep.subr.bf16.mxu0 0
    %8121 = vmatpush1.bf16.msra.mxu0 0
    %8122 = vmatprep.subr.bf16.mxu0 0
    %8123 = vmatpush1.bf16.msra.mxu0 0
    %8124 = vmatprep.subr.bf16.mxu0 0
    %8125 = vmatpush1.bf16.msra.mxu0 0
    %8126 = vmatprep.subr.bf16.mxu0 0
    %8127 = vmatpush1.bf16.msra.mxu0 0
    %8128 = vmatprep.subr.bf16.mxu0 0
    %8129 = vmatpush1.bf16.msra.mxu0 0
    %8130 = vmatprep.subr.bf16.mxu0 0
    %8131 = vmatpush1.bf16.msra.mxu0 0
    %8132 = vmatprep.mubr.bf16.mxu0 0
    %8133 = vmatmul.mubr.bf16.gmra.mrb[0].mxu0 %v7988
    %v8134 = vpop.f32.mrb[0].mxu0
    %v8135 = vadd.f32 0.0, %v8134
    %v8136 = vpop.f32.mrb[0].mxu0
    %v8137 = vadd.f32 0.0, %v8136
    %v8138 = vpop.f32.mrb[0].mxu0
    %v8139 = vadd.f32 0.0, %v8138
    %v8140 = vpop.f32.mrb[0].mxu0
    %v8141 = vadd.f32 0.0, %v8140
    %8142 = vmatprep.mubr.bf16.mxu0 0
    %8143 = vmatmul.mubr.bf16.gmra.mrb[0].mxu0 %v7989
    %v8144 = vpop.f32.mrb[0].mxu0
    %v8145 = vadd.f32 0.0, %v8144
    %v8146 = vpop.f32.mrb[0].mxu0
    %v8147 = vadd.f32 0.0, %v8146
    %v8148 = vpop.f32.mrb[0].mxu0
    %v8149 = vadd.f32 0.0, %v8148
    %v8150 = vpop.f32.mrb[0].mxu0
    %v8151 = vadd.f32 0.0, %v8150
    %8152 = vmatprep.mubr.bf16.mxu0 0
    %8153 = vmatmul.mubr.bf16.gmra.mrb[0].mxu0 %v7990
    %v8154 = vpop.f32.mrb[0].mxu0
    %v8155 = vadd.f32 0.0, %v8154
    %v8156 = vpop.f32.mrb[0].mxu0
    %v8157 = vadd.f32 0.0, %v8156
    %v8158 = vpop.f32.mrb[0].mxu0
    %v8159 = vadd.f32 0.0, %v8158
    %v8160 = vpop.f32.mrb[0].mxu0
    %v8161 = vadd.f32 0.0, %v8160
    %8162 = vmatprep.mubr.bf16.mxu0 0
    %8163 = vmatmul.mubr.bf16.gmra.mrb[0].mxu0 %v7991
    %v8164 = vpop.f32.mrb[0].mxu0
    %v8165 = vadd.f32 0.0, %v8164
    %v8166 = vpop.f32.mrb[0].mxu0
    %v8167 = vadd.f32 0.0, %v8166
    %v8168 = vpop.f32.mrb[0].mxu0
    %v8169 = vadd.f32 0.0, %v8168
    %v8170 = vpop.f32.mrb[0].mxu0
    %v8171 = vadd.f32 0.0, %v8170
    %8172 = vmatprep.mubr.bf16.mxu0 0
    %8173 = vmatmul.mubr.bf16.gmra.mrb[0].mxu0 %v7992
    %v8174 = vpop.f32.mrb[0].mxu0
    %v8175 = vadd.f32 0.0, %v8174
    %v8176 = vpop.f32.mrb[0].mxu0
    %v8177 = vadd.f32 0.0, %v8176
    %v8178 = vpop.f32.mrb[0].mxu0
    %v8179 = vadd.f32 0.0, %v8178
    %v8180 = vpop.f32.mrb[0].mxu0
    %v8181 = vadd.f32 0.0, %v8180
    %8182 = vmatprep.mubr.bf16.mxu0 0
    %8183 = vmatmul.mubr.bf16.gmra.mrb[0].mxu0 %v7993
    %v8184 = vpop.f32.mrb[0].mxu0
    %v8185 = vadd.f32 0.0, %v8184
    %v8186 = vpop.f32.mrb[0].mxu0
    %v8187 = vadd.f32 0.0, %v8186
    %v8188 = vpop.f32.mrb[0].mxu0
    %v8189 = vadd.f32 0.0, %v8188
    %v8190 = vpop.f32.mrb[0].mxu0
    %v8191 = vadd.f32 0.0, %v8190
    %8192 = vmatprep.mubr.bf16.mxu0 0
    %8193 = vmatmul.mubr.bf16.gmra.mrb[0].mxu0 %v7994
    %v8194 = vpop.f32.mrb[0].mxu0
    %v8195 = vadd.f32 0.0, %v8194
    %v8196 = vpop.f32.mrb[0].mxu0
    %v8197 = vadd.f32 0.0, %v8196
    %v8198 = vpop.f32.mrb[0].mxu0
    %v8199 = vadd.f32 0.0, %v8198
    %v8200 = vpop.f32.mrb[0].mxu0
    %v8201 = vadd.f32 0.0, %v8200
    %8202 = vmatprep.mubr.bf16.mxu0 0
    %8203 = vmatmul.mubr.bf16.gmra.mrb[0].mxu0 %v7995
    %v8204 = vpop.f32.mrb[0].mxu0
    %v8205 = vadd.f32 0.0, %v8204
    %v8206 = vpop.f32.mrb[0].mxu0
    %v8207 = vadd.f32 0.0, %v8206
    %v8208 = vpop.f32.mrb[0].mxu0
    %v8209 = vadd.f32 0.0, %v8208
    %v8210 = vpop.f32.mrb[0].mxu0
    %v8211 = vadd.f32 0.0, %v8210
    %8212 = vmatprep.mubr.bf16.mxu0 0
    %8213 = vmatmul.mubr.bf16.gmra.mrb[0].mxu0 %v7996
    %v8214 = vpop.f32.mrb[0].mxu0
    %v8215 = vadd.f32 0.0, %v8214
    %v8216 = vpop.f32.mrb[0].mxu0
    %v8217 = vadd.f32 0.0, %v8216
    %v8218 = vpop.f32.mrb[0].mxu0
    %v8219 = vadd.f32 0.0, %v8218
    %v8220 = vpop.f32.mrb[0].mxu0
    %v8221 = vadd.f32 0.0, %v8220
    %8222 = vmatprep.mubr.bf16.mxu0 0
    %8223 = vmatmul.mubr.bf16.gmra.mrb[0].mxu0 %v7997
    %v8224 = vpop.f32.mrb[0].mxu0
    %v8225 = vadd.f32 0.0, %v8224
    %v8226 = vpop.f32.mrb[0].mxu0
    %v8227 = vadd.f32 0.0, %v8226
    %v8228 = vpop.f32.mrb[0].mxu0
    %v8229 = vadd.f32 0.0, %v8228
    %v8230 = vpop.f32.mrb[0].mxu0
    %v8231 = vadd.f32 0.0, %v8230
    %8232 = vmatprep.mubr.bf16.mxu0 0
    %8233 = vmatmul.mubr.bf16.gmra.mrb[0].mxu0 %v7998
    %v8234 = vpop.f32.mrb[0].mxu0
    %v8235 = vadd.f32 0.0, %v8234
    %v8236 = vpop.f32.mrb[0].mxu0
    %v8237 = vadd.f32 0.0, %v8236
    %v8238 = vpop.f32.mrb[0].mxu0
    %v8239 = vadd.f32 0.0, %v8238
    %v8240 = vpop.f32.mrb[0].mxu0
    %v8241 = vadd.f32 0.0, %v8240
    %8242 = vmatprep.mubr.bf16.mxu0 0
    %8243 = vmatmul.mubr.bf16.gmra.mrb[0].mxu0 %v7999
    %v8244 = vpop.f32.mrb[0].mxu0
    %v8245 = vadd.f32 0.0, %v8244
    %v8246 = vpop.f32.mrb[0].mxu0
    %v8247 = vadd.f32 0.0, %v8246
    %v8248 = vpop.f32.mrb[0].mxu0
    %v8249 = vadd.f32 0.0, %v8248
    %v8250 = vpop.f32.mrb[0].mxu0
    %v8251 = vadd.f32 0.0, %v8250
    %8252 = vmatprep.mubr.bf16.mxu0 0
    %8253 = vmatmul.mubr.bf16.gmra.mrb[0].mxu0 %v8000
    %v8254 = vpop.f32.mrb[0].mxu0
    %v8255 = vadd.f32 0.0, %v8254
    %v8256 = vpop.f32.mrb[0].mxu0
    %v8257 = vadd.f32 0.0, %v8256
    %v8258 = vpop.f32.mrb[0].mxu0
    %v8259 = vadd.f32 0.0, %v8258
    %v8260 = vpop.f32.mrb[0].mxu0
    %v8261 = vadd.f32 0.0, %v8260
    %8262 = vmatprep.mubr.bf16.mxu0 0
    %8263 = vmatmul.mubr.bf16.gmra.mrb[0].mxu0 %v8001
    %v8264 = vpop.f32.mrb[0].mxu0
    %v8265 = vadd.f32 0.0, %v8264
    %v8266 = vpop.f32.mrb[0].mxu0
    %v8267 = vadd.f32 0.0, %v8266
    %v8268 = vpop.f32.mrb[0].mxu0
    %v8269 = vadd.f32 0.0, %v8268
    %v8270 = vpop.f32.mrb[0].mxu0
    %v8271 = vadd.f32 0.0, %v8270
    %8272 = vmatprep.mubr.bf16.mxu0 0
    %8273 = vmatmul.mubr.bf16.gmra.mrb[0].mxu0 %v8002
    %v8274 = vpop.f32.mrb[0].mxu0
    %v8275 = vadd.f32 0.0, %v8274
    %v8276 = vpop.f32.mrb[0].mxu0
    %v8277 = vadd.f32 0.0, %v8276
    %v8278 = vpop.f32.mrb[0].mxu0
    %v8279 = vadd.f32 0.0, %v8278
    %v8280 = vpop.f32.mrb[0].mxu0
    %v8281 = vadd.f32 0.0, %v8280
    %8282 = vmatprep.mubr.bf16.mxu0 0
    %8283 = vmatmul.mubr.bf16.gmra.mrb[0].mxu0 %v8003
    %v8284 = vpop.f32.mrb[0].mxu0
    %v8285 = vadd.f32 0.0, %v8284
    %v8286 = vpop.f32.mrb[0].mxu0
    %v8287 = vadd.f32 0.0, %v8286
    %v8288 = vpop.f32.mrb[0].mxu0
    %v8289 = vadd.f32 0.0, %v8288
    %v8290 = vpop.f32.mrb[0].mxu0
    %v8291 = vadd.f32 0.0, %v8290
    %8292 = vdwg.mxu0
    %v8293 = vadd.f32 %v1001, %v8135
    %v8294 = vadd.f32 %v1003, %v8137
    %v8295 = vadd.f32 %v1005, %v8139
    %v8296 = vadd.f32 %v1007, %v8141
    %v8297 = vadd.f32 %v1011, %v8145
    %v8298 = vadd.f32 %v1013, %v8147
    %v8299 = vadd.f32 %v1015, %v8149
    %v8300 = vadd.f32 %v1017, %v8151
    %v8301 = vadd.f32 %v1021, %v8155
    %v8302 = vadd.f32 %v1023, %v8157
    %v8303 = vadd.f32 %v1025, %v8159
    %v8304 = vadd.f32 %v1027, %v8161
    %v8305 = vadd.f32 %v1031, %v8165
    %v8306 = vadd.f32 %v1033, %v8167
    %v8307 = vadd.f32 %v1035, %v8169
    %v8308 = vadd.f32 %v1037, %v8171
    %v8309 = vadd.f32 %v1041, %v8175
    %v8310 = vadd.f32 %v1043, %v8177
    %v8311 = vadd.f32 %v1045, %v8179
    %v8312 = vadd.f32 %v1047, %v8181
    %v8313 = vadd.f32 %v1051, %v8185
    %v8314 = vadd.f32 %v1053, %v8187
    %v8315 = vadd.f32 %v1055, %v8189
    %v8316 = vadd.f32 %v1057, %v8191
    %v8317 = vadd.f32 %v1061, %v8195
    %v8318 = vadd.f32 %v1063, %v8197
    %v8319 = vadd.f32 %v1065, %v8199
    %v8320 = vadd.f32 %v1067, %v8201
    %v8321 = vadd.f32 %v1071, %v8205
    %v8322 = vadd.f32 %v1073, %v8207
    %v8323 = vadd.f32 %v1075, %v8209
    %v8324 = vadd.f32 %v1077, %v8211
    %v8325 = vadd.f32 %v1081, %v8215
    %v8326 = vadd.f32 %v1083, %v8217
    %v8327 = vadd.f32 %v1085, %v8219
    %v8328 = vadd.f32 %v1087, %v8221
    %v8329 = vadd.f32 %v1091, %v8225
    %v8330 = vadd.f32 %v1093, %v8227
    %v8331 = vadd.f32 %v1095, %v8229
    %v8332 = vadd.f32 %v1097, %v8231
    %v8333 = vadd.f32 %v1101, %v8235
    %v8334 = vadd.f32 %v1103, %v8237
    %v8335 = vadd.f32 %v1105, %v8239
    %v8336 = vadd.f32 %v1107, %v8241
    %v8337 = vadd.f32 %v1111, %v8245
    %v8338 = vadd.f32 %v1113, %v8247
    %v8339 = vadd.f32 %v1115, %v8249
    %v8340 = vadd.f32 %v1117, %v8251
    %v8341 = vadd.f32 %v1121, %v8255
    %v8342 = vadd.f32 %v1123, %v8257
    %v8343 = vadd.f32 %v1125, %v8259
    %v8344 = vadd.f32 %v1127, %v8261
    %v8345 = vadd.f32 %v1131, %v8265
    %v8346 = vadd.f32 %v1133, %v8267
    %v8347 = vadd.f32 %v1135, %v8269
    %v8348 = vadd.f32 %v1137, %v8271
    %v8349 = vadd.f32 %v1141, %v8275
    %v8350 = vadd.f32 %v1143, %v8277
    %v8351 = vadd.f32 %v1145, %v8279
    %v8352 = vadd.f32 %v1147, %v8281
    %v8353 = vadd.f32 %v1151, %v8285
    %v8354 = vadd.f32 %v1153, %v8287
    %v8355 = vadd.f32 %v1155, %v8289
    %v8356 = vadd.f32 %v1157, %v8291
    %v8357 = vld [vmem:[%s6] sm:$0x3]
    %v8359 = vlaneseq
    %v8360 = vshrl.u32 %v8359, 7
    %v8361 = vsub.s32 0, %v8360
    %v8362 = vrot.slane %v8357, %v8361
    %v8363 = vlaneseq
    %v8364 = vshrl.u32 %v8363, 7
    %v8365 = vsub.s32 1, %v8364
    %v8366 = vrot.slane %v8357, %v8365
    %v8369 = vadd.f32 %v8293, %v8362
    %v8370 = vadd.f32 %v8294, %v8366
    %v8371 = vadd.f32 %v8295, %v8362
    %v8372 = vadd.f32 %v8296, %v8366
    %v8373 = vadd.f32 %v8297, %v8362
    %v8374 = vadd.f32 %v8298, %v8366
    %v8375 = vadd.f32 %v8299, %v8362
    %v8376 = vadd.f32 %v8300, %v8366
    %v8377 = vadd.f32 %v8301, %v8362
    %v8378 = vadd.f32 %v8302, %v8366
    %v8379 = vadd.f32 %v8303, %v8362
    %v8380 = vadd.f32 %v8304, %v8366
    %v8381 = vadd.f32 %v8305, %v8362
    %v8382 = vadd.f32 %v8306, %v8366
    %v8383 = vadd.f32 %v8307, %v8362
    %v8384 = vadd.f32 %v8308, %v8366
    %v8385 = vadd.f32 %v8309, %v8362
    %v8386 = vadd.f32 %v8310, %v8366
    %v8387 = vadd.f32 %v8311, %v8362
    %v8388 = vadd.f32 %v8312, %v8366
    %v8389 = vadd.f32 %v8313, %v8362
    %v8390 = vadd.f32 %v8314, %v8366
    %v8391 = vadd.f32 %v8315, %v8362
    %v8392 = vadd.f32 %v8316, %v8366
    %v8393 = vadd.f32 %v8317, %v8362
    %v8394 = vadd.f32 %v8318, %v8366
    %v8395 = vadd.f32 %v8319, %v8362
    %v8396 = vadd.f32 %v8320, %v8366
    %v8397 = vadd.f32 %v8321, %v8362
    %v8398 = vadd.f32 %v8322, %v8366
    %v8399 = vadd.f32 %v8323, %v8362
    %v8400 = vadd.f32 %v8324, %v8366
    %v8401 = vadd.f32 %v8325, %v8362
    %v8402 = vadd.f32 %v8326, %v8366
    %v8403 = vadd.f32 %v8327, %v8362
    %v8404 = vadd.f32 %v8328, %v8366
    %v8405 = vadd.f32 %v8329, %v8362
    %v8406 = vadd.f32 %v8330, %v8366
    %v8407 = vadd.f32 %v8331, %v8362
    %v8408 = vadd.f32 %v8332, %v8366
    %v8409 = vadd.f32 %v8333, %v8362
    %v8410 = vadd.f32 %v8334, %v8366
    %v8411 = vadd.f32 %v8335, %v8362
    %v8412 = vadd.f32 %v8336, %v8366
    %v8413 = vadd.f32 %v8337, %v8362
    %v8414 = vadd.f32 %v8338, %v8366
    %v8415 = vadd.f32 %v8339, %v8362
    %v8416 = vadd.f32 %v8340, %v8366
    %v8417 = vadd.f32 %v8341, %v8362
    %v8418 = vadd.f32 %v8342, %v8366
    %v8419 = vadd.f32 %v8343, %v8362
    %v8420 = vadd.f32 %v8344, %v8366
    %v8421 = vadd.f32 %v8345, %v8362
    %v8422 = vadd.f32 %v8346, %v8366
    %v8423 = vadd.f32 %v8347, %v8362
    %v8424 = vadd.f32 %v8348, %v8366
    %v8425 = vadd.f32 %v8349, %v8362
    %v8426 = vadd.f32 %v8350, %v8366
    %v8427 = vadd.f32 %v8351, %v8362
    %v8428 = vadd.f32 %v8352, %v8366
    %v8429 = vadd.f32 %v8353, %v8362
    %v8430 = vadd.f32 %v8354, %v8366
    %v8431 = vadd.f32 %v8355, %v8362
    %v8432 = vadd.f32 %v8356, %v8366
    %v8433 = vmax.f32 %v8369, 0.0
    %v8434 = vmax.f32 %v8370, 0.0
    %v8435 = vmax.f32 %v8371, 0.0
    %v8436 = vmax.f32 %v8372, 0.0
    %v8437 = vmax.f32 %v8373, 0.0
    %v8438 = vmax.f32 %v8374, 0.0
    %v8439 = vmax.f32 %v8375, 0.0
    %v8440 = vmax.f32 %v8376, 0.0
    %v8441 = vmax.f32 %v8377, 0.0
    %v8442 = vmax.f32 %v8378, 0.0
    %v8443 = vmax.f32 %v8379, 0.0
    %v8444 = vmax.f32 %v8380, 0.0
    %v8445 = vmax.f32 %v8381, 0.0
    %v8446 = vmax.f32 %v8382, 0.0
    %v8447 = vmax.f32 %v8383, 0.0
    %v8448 = vmax.f32 %v8384, 0.0
    %v8449 = vmax.f32 %v8385, 0.0
    %v8450 = vmax.f32 %v8386, 0.0
    %v8451 = vmax.f32 %v8387, 0.0
    %v8452 = vmax.f32 %v8388, 0.0
    %v8453 = vmax.f32 %v8389, 0.0
    %v8454 = vmax.f32 %v8390, 0.0
    %v8455 = vmax.f32 %v8391, 0.0
    %v8456 = vmax.f32 %v8392, 0.0
    %v8457 = vmax.f32 %v8393, 0.0
    %v8458 = vmax.f32 %v8394, 0.0
    %v8459 = vmax.f32 %v8395, 0.0
    %v8460 = vmax.f32 %v8396, 0.0
    %v8461 = vmax.f32 %v8397, 0.0
    %v8462 = vmax.f32 %v8398, 0.0
    %v8463 = vmax.f32 %v8399, 0.0
    %v8464 = vmax.f32 %v8400, 0.0
    %v8465 = vmax.f32 %v8401, 0.0
    %v8466 = vmax.f32 %v8402, 0.0
    %v8467 = vmax.f32 %v8403, 0.0
    %v8468 = vmax.f32 %v8404, 0.0
    %v8469 = vmax.f32 %v8405, 0.0
    %v8470 = vmax.f32 %v8406, 0.0
    %v8471 = vmax.f32 %v8407, 0.0
    %v8472 = vmax.f32 %v8408, 0.0
    %v8473 = vmax.f32 %v8409, 0.0
    %v8474 = vmax.f32 %v8410, 0.0
    %v8475 = vmax.f32 %v8411, 0.0
    %v8476 = vmax.f32 %v8412, 0.0
    %v8477 = vmax.f32 %v8413, 0.0
    %v8478 = vmax.f32 %v8414, 0.0
    %v8479 = vmax.f32 %v8415, 0.0
    %v8480 = vmax.f32 %v8416, 0.0
    %v8481 = vmax.f32 %v8417, 0.0
    %v8482 = vmax.f32 %v8418, 0.0
    %v8483 = vmax.f32 %v8419, 0.0
    %v8484 = vmax.f32 %v8420, 0.0
    %v8485 = vmax.f32 %v8421, 0.0
    %v8486 = vmax.f32 %v8422, 0.0
    %v8487 = vmax.f32 %v8423, 0.0
    %v8488 = vmax.f32 %v8424, 0.0
    %v8489 = vmax.f32 %v8425, 0.0
    %v8490 = vmax.f32 %v8426, 0.0
    %v8491 = vmax.f32 %v8427, 0.0
    %v8492 = vmax.f32 %v8428, 0.0
    %v8493 = vmax.f32 %v8429, 0.0
    %v8494 = vmax.f32 %v8430, 0.0
    %v8495 = vmax.f32 %v8431, 0.0
    %v8496 = vmax.f32 %v8432, 0.0
    %v8497 = vpack.c.bf16 %v8435, %v8433
    %v8498 = vpack.c.bf16 %v8436, %v8434
    %v8499 = vpack.c.bf16 %v8439, %v8437
    %v8500 = vpack.c.bf16 %v8440, %v8438
    %v8501 = vpack.c.bf16 %v8443, %v8441
    %v8502 = vpack.c.bf16 %v8444, %v8442
    %v8503 = vpack.c.bf16 %v8447, %v8445
    %v8504 = vpack.c.bf16 %v8448, %v8446
    %v8505 = vpack.c.bf16 %v8451, %v8449
    %v8506 = vpack.c.bf16 %v8452, %v8450
    %v8507 = vpack.c.bf16 %v8455, %v8453
    %v8508 = vpack.c.bf16 %v8456, %v8454
    %v8509 = vpack.c.bf16 %v8459, %v8457
    %v8510 = vpack.c.bf16 %v8460, %v8458
    %v8511 = vpack.c.bf16 %v8463, %v8461
    %v8512 = vpack.c.bf16 %v8464, %v8462
    %v8513 = vpack.c.bf16 %v8467, %v8465
    %v8514 = vpack.c.bf16 %v8468, %v8466
    %v8515 = vpack.c.bf16 %v8471, %v8469
    %v8516 = vpack.c.bf16 %v8472, %v8470
    %v8517 = vpack.c.bf16 %v8475, %v8473
    %v8518 = vpack.c.bf16 %v8476, %v8474
    %v8519 = vpack.c.bf16 %v8479, %v8477
    %v8520 = vpack.c.bf16 %v8480, %v8478
    %v8521 = vpack.c.bf16 %v8483, %v8481
    %v8522 = vpack.c.bf16 %v8484, %v8482
    %v8523 = vpack.c.bf16 %v8487, %v8485
    %v8524 = vpack.c.bf16 %v8488, %v8486
    %v8525 = vpack.c.bf16 %v8491, %v8489
    %v8526 = vpack.c.bf16 %v8492, %v8490
    %v8527 = vpack.c.bf16 %v8495, %v8493
    %v8528 = vpack.c.bf16 %v8496, %v8494
    %v8529 = vld [vmem:[%s7] sm:$0xf]
    %v8530 = vld [vmem:[%s7 + $0x4] sm:$0xf]
    %v8531 = vld [vmem:[%s7 + $0x8] sm:$0xf]
    %v8532 = vld [vmem:[%s7 + $0xc] sm:$0xf]
    %v8533 = vld [vmem:[%s7 + $0x10] sm:$0xf]
    %v8534 = vld [vmem:[%s7 + $0x14] sm:$0xf]
    %v8535 = vld [vmem:[%s7 + $0x18] sm:$0xf]
    %v8536 = vld [vmem:[%s7 + $0x1c] sm:$0xf]
    %v8537 = vld [vmem:[%s7 + $0x20] sm:$0xf]
    %v8538 = vld [vmem:[%s7 + $0x24] sm:$0xf]
    %v8539 = vld [vmem:[%s7 + $0x28] sm:$0xf]
    %v8540 = vld [vmem:[%s7 + $0x2c] sm:$0xf]
    %v8541 = vld [vmem:[%s7 + $0x30] sm:$0xf]
    %v8542 = vld [vmem:[%s7 + $0x34] sm:$0xf]
    %v8543 = vld [vmem:[%s7 + $0x38] sm:$0xf]
    %v8544 = vld [vmem:[%s7 + $0x3c] sm:$0xf]
    %v8545 = vld [vmem:[%s7 + $0x40] sm:$0xf]
    %v8546 = vld [vmem:[%s7 + $0x44] sm:$0xf]
    %v8547 = vld [vmem:[%s7 + $0x48] sm:$0xf]
    %v8548 = vld [vmem:[%s7 + $0x4c] sm:$0xf]
    %v8549 = vld [vmem:[%s7 + $0x50] sm:$0xf]
    %v8550 = vld [vmem:[%s7 + $0x54] sm:$0xf]
    %v8551 = vld [vmem:[%s7 + $0x58] sm:$0xf]
    %v8552 = vld [vmem:[%s7 + $0x5c] sm:$0xf]
    %v8553 = vld [vmem:[%s7 + $0x60] sm:$0xf]
    %v8554 = vld [vmem:[%s7 + $0x64] sm:$0xf]
    %v8555 = vld [vmem:[%s7 + $0x68] sm:$0xf]
    %v8556 = vld [vmem:[%s7 + $0x6c] sm:$0xf]
    %v8557 = vld [vmem:[%s7 + $0x70] sm:$0xf]
    %v8558 = vld [vmem:[%s7 + $0x74] sm:$0xf]
    %v8559 = vld [vmem:[%s7 + $0x78] sm:$0xf]
    %v8560 = vld [vmem:[%s7 + $0x7c] sm:$0xf]
    %v8561 = vld [vmem:[%s8] sm:$0x1]
    %v8563 = vlaneseq
    %v8564 = vshrl.u32 %v8563, 7
    %v8565 = vsub.s32 0, %v8564
    %v8566 = vrot.slane %v8561, %v8565
    %v8600 = vunpack.c.l.b16 %v8529
    %v8601 = vunpack.c.l.b16 %v8530
    %v8602 = vunpack.c.l.b16 %v8531
    %v8603 = vunpack.c.l.b16 %v8532
    %v8604 = vunpack.c.l.b16 %v8533
    %v8605 = vunpack.c.l.b16 %v8534
    %v8606 = vunpack.c.l.b16 %v8535
    %v8607 = vunpack.c.l.b16 %v8536
    %v8608 = vunpack.c.l.b16 %v8537
    %v8609 = vunpack.c.l.b16 %v8538
    %v8610 = vunpack.c.l.b16 %v8539
    %v8611 = vunpack.c.l.b16 %v8540
    %v8612 = vunpack.c.l.b16 %v8541
    %v8613 = vunpack.c.l.b16 %v8542
    %v8614 = vunpack.c.l.b16 %v8543
    %v8615 = vunpack.c.l.b16 %v8544
    %v8616 = vunpack.c.l.b16 %v8545
    %v8617 = vunpack.c.l.b16 %v8546
    %v8618 = vunpack.c.l.b16 %v8547
    %v8619 = vunpack.c.l.b16 %v8548
    %v8620 = vunpack.c.l.b16 %v8549
    %v8621 = vunpack.c.l.b16 %v8550
    %v8622 = vunpack.c.l.b16 %v8551
    %v8623 = vunpack.c.l.b16 %v8552
    %v8624 = vunpack.c.l.b16 %v8553
    %v8625 = vunpack.c.l.b16 %v8554
    %v8626 = vunpack.c.l.b16 %v8555
    %v8627 = vunpack.c.l.b16 %v8556
    %v8628 = vunpack.c.l.b16 %v8557
    %v8629 = vunpack.c.l.b16 %v8558
    %v8630 = vunpack.c.l.b16 %v8559
    %v8631 = vunpack.c.l.b16 %v8560
    %v8632 = vpack.c.b16 %v8601, %v8600
    %v8633 = vpack.c.b16 %v8603, %v8602
    %v8634 = vpack.c.b16 %v8605, %v8604
    %v8635 = vpack.c.b16 %v8607, %v8606
    %v8636 = vpack.c.b16 %v8609, %v8608
    %v8637 = vpack.c.b16 %v8611, %v8610
    %v8638 = vpack.c.b16 %v8613, %v8612
    %v8639 = vpack.c.b16 %v8615, %v8614
    %v8640 = vpack.c.b16 %v8617, %v8616
    %v8641 = vpack.c.b16 %v8619, %v8618
    %v8642 = vpack.c.b16 %v8621, %v8620
    %v8643 = vpack.c.b16 %v8623, %v8622
    %v8644 = vpack.c.b16 %v8625, %v8624
    %v8645 = vpack.c.b16 %v8627, %v8626
    %v8646 = vpack.c.b16 %v8629, %v8628
    %v8647 = vpack.c.b16 %v8631, %v8630
    %8664 = vmatprep.subr.bf16.mxu0 0
    %8665 = vmatpush1.bf16.msra.mxu0 %v8632
    %8666 = vmatprep.subr.bf16.mxu0 0
    %8667 = vmatpush1.bf16.msra.mxu0 %v8633
    %8668 = vmatprep.subr.bf16.mxu0 0
    %8669 = vmatpush1.bf16.msra.mxu0 %v8634
    %8670 = vmatprep.subr.bf16.mxu0 0
    %8671 = vmatpush1.bf16.msra.mxu0 %v8635
    %8672 = vmatprep.subr.bf16.mxu0 0
    %8673 = vmatpush1.bf16.msra.mxu0 %v8636
    %8674 = vmatprep.subr.bf16.mxu0 0
    %8675 = vmatpush1.bf16.msra.mxu0 %v8637
    %8676 = vmatprep.subr.bf16.mxu0 0
    %8677 = vmatpush1.bf16.msra.mxu0 %v8638
    %8678 = vmatprep.subr.bf16.mxu0 0
    %8679 = vmatpush1.bf16.msra.mxu0 %v8639
    %8680 = vmatprep.subr.bf16.mxu0 0
    %8681 = vmatpush1.bf16.msra.mxu0 %v8640
    %8682 = vmatprep.subr.bf16.mxu0 0
    %8683 = vmatpush1.bf16.msra.mxu0 %v8641
    %8684 = vmatprep.subr.bf16.mxu0 0
    %8685 = vmatpush1.bf16.msra.mxu0 %v8642
    %8686 = vmatprep.subr.bf16.mxu0 0
    %8687 = vmatpush1.bf16.msra.mxu0 %v8643
    %8688 = vmatprep.subr.bf16.mxu0 0
    %8689 = vmatpush1.bf16.msra.mxu0 %v8644
    %8690 = vmatprep.subr.bf16.mxu0 0
    %8691 = vmatpush1.bf16.msra.mxu0 %v8645
    %8692 = vmatprep.subr.bf16.mxu0 0
    %8693 = vmatpush1.bf16.msra.mxu0 %v8646
    %8694 = vmatprep.subr.bf16.mxu0 0
    %8695 = vmatpush1.bf16.msra.mxu0 %v8647
    %8696 = vmatprep.mubr.bf16.mxu0 %v8498
    %8697 = vmatmul.mubr.bf16.gmra.mrb[0].mxu0 %v8497
    %v8698 = vpop.f32.mrb[0].mxu0
    %v8699 = vadd.f32 %v8566, %v8698
    %v8700 = vpop.f32.mrb[0].mxu0
    %v8701 = vpop.f32.mrb[0].mxu0
    %v8702 = vadd.f32 %v8566, %v8701
    %v8703 = vpop.f32.mrb[0].mxu0
    %8704 = vmatprep.mubr.bf16.mxu0 %v8500
    %8705 = vmatmul.mubr.bf16.gmra.mrb[0].mxu0 %v8499
    %v8706 = vpop.f32.mrb[0].mxu0
    %v8707 = vadd.f32 %v8566, %v8706
    %v8708 = vpop.f32.mrb[0].mxu0
    %v8709 = vpop.f32.mrb[0].mxu0
    %v8710 = vadd.f32 %v8566, %v8709
    %v8711 = vpop.f32.mrb[0].mxu0
    %8712 = vmatprep.mubr.bf16.mxu0 %v8502
    %8713 = vmatmul.mubr.bf16.gmra.mrb[0].mxu0 %v8501
    %v8714 = vpop.f32.mrb[0].mxu0
    %v8715 = vadd.f32 %v8566, %v8714
    %v8716 = vpop.f32.mrb[0].mxu0
    %v8717 = vpop.f32.mrb[0].mxu0
    %v8718 = vadd.f32 %v8566, %v8717
    %v8719 = vpop.f32.mrb[0].mxu0
    %8720 = vmatprep.mubr.bf16.mxu0 %v8504
    %8721 = vmatmul.mubr.bf16.gmra.mrb[0].mxu0 %v8503
    %v8722 = vpop.f32.mrb[0].mxu0
    %v8723 = vadd.f32 %v8566, %v8722
    %v8724 = vpop.f32.mrb[0].mxu0
    %v8725 = vpop.f32.mrb[0].mxu0
    %v8726 = vadd.f32 %v8566, %v8725
    %v8727 = vpop.f32.mrb[0].mxu0
    %8728 = vmatprep.mubr.bf16.mxu0 %v8506
    %8729 = vmatmul.mubr.bf16.gmra.mrb[0].mxu0 %v8505
    %v8730 = vpop.f32.mrb[0].mxu0
    %v8731 = vadd.f32 %v8566, %v8730
    %v8732 = vpop.f32.mrb[0].mxu0
    %v8733 = vpop.f32.mrb[0].mxu0
    %v8734 = vadd.f32 %v8566, %v8733
    %v8735 = vpop.f32.mrb[0].mxu0
    %8736 = vmatprep.mubr.bf16.mxu0 %v8508
    %8737 = vmatmul.mubr.bf16.gmra.mrb[0].mxu0 %v8507
    %v8738 = vpop.f32.mrb[0].mxu0
    %v8739 = vadd.f32 %v8566, %v8738
    %v8740 = vpop.f32.mrb[0].mxu0
    %v8741 = vpop.f32.mrb[0].mxu0
    %v8742 = vadd.f32 %v8566, %v8741
    %v8743 = vpop.f32.mrb[0].mxu0
    %8744 = vmatprep.mubr.bf16.mxu0 %v8510
    %8745 = vmatmul.mubr.bf16.gmra.mrb[0].mxu0 %v8509
    %v8746 = vpop.f32.mrb[0].mxu0
    %v8747 = vadd.f32 %v8566, %v8746
    %v8748 = vpop.f32.mrb[0].mxu0
    %v8749 = vpop.f32.mrb[0].mxu0
    %v8750 = vadd.f32 %v8566, %v8749
    %v8751 = vpop.f32.mrb[0].mxu0
    %8752 = vmatprep.mubr.bf16.mxu0 %v8512
    %8753 = vmatmul.mubr.bf16.gmra.mrb[0].mxu0 %v8511
    %v8754 = vpop.f32.mrb[0].mxu0
    %v8755 = vadd.f32 %v8566, %v8754
    %v8756 = vpop.f32.mrb[0].mxu0
    %v8757 = vpop.f32.mrb[0].mxu0
    %v8758 = vadd.f32 %v8566, %v8757
    %v8759 = vpop.f32.mrb[0].mxu0
    %8760 = vmatprep.mubr.bf16.mxu0 %v8514
    %8761 = vmatmul.mubr.bf16.gmra.mrb[0].mxu0 %v8513
    %v8762 = vpop.f32.mrb[0].mxu0
    %v8763 = vadd.f32 %v8566, %v8762
    %v8764 = vpop.f32.mrb[0].mxu0
    %v8765 = vpop.f32.mrb[0].mxu0
    %v8766 = vadd.f32 %v8566, %v8765
    %v8767 = vpop.f32.mrb[0].mxu0
    %8768 = vmatprep.mubr.bf16.mxu0 %v8516
    %8769 = vmatmul.mubr.bf16.gmra.mrb[0].mxu0 %v8515
    %v8770 = vpop.f32.mrb[0].mxu0
    %v8771 = vadd.f32 %v8566, %v8770
    %v8772 = vpop.f32.mrb[0].mxu0
    %v8773 = vpop.f32.mrb[0].mxu0
    %v8774 = vadd.f32 %v8566, %v8773
    %v8775 = vpop.f32.mrb[0].mxu0
    %8776 = vmatprep.mubr.bf16.mxu0 %v8518
    %8777 = vmatmul.mubr.bf16.gmra.mrb[0].mxu0 %v8517
    %v8778 = vpop.f32.mrb[0].mxu0
    %v8779 = vadd.f32 %v8566, %v8778
    %v8780 = vpop.f32.mrb[0].mxu0
    %v8781 = vpop.f32.mrb[0].mxu0
    %v8782 = vadd.f32 %v8566, %v8781
    %v8783 = vpop.f32.mrb[0].mxu0
    %8784 = vmatprep.mubr.bf16.mxu0 %v8520
    %8785 = vmatmul.mubr.bf16.gmra.mrb[0].mxu0 %v8519
    %v8786 = vpop.f32.mrb[0].mxu0
    %v8787 = vadd.f32 %v8566, %v8786
    %v8788 = vpop.f32.mrb[0].mxu0
    %v8789 = vpop.f32.mrb[0].mxu0
    %v8790 = vadd.f32 %v8566, %v8789
    %v8791 = vpop.f32.mrb[0].mxu0
    %8792 = vmatprep.mubr.bf16.mxu0 %v8522
    %8793 = vmatmul.mubr.bf16.gmra.mrb[0].mxu0 %v8521
    %v8794 = vpop.f32.mrb[0].mxu0
    %v8795 = vadd.f32 %v8566, %v8794
    %v8796 = vpop.f32.mrb[0].mxu0
    %v8797 = vpop.f32.mrb[0].mxu0
    %v8798 = vadd.f32 %v8566, %v8797
    %v8799 = vpop.f32.mrb[0].mxu0
    %8800 = vmatprep.mubr.bf16.mxu0 %v8524
    %8801 = vmatmul.mubr.bf16.gmra.mrb[0].mxu0 %v8523
    %v8802 = vpop.f32.mrb[0].mxu0
    %v8803 = vadd.f32 %v8566, %v8802
    %v8804 = vpop.f32.mrb[0].mxu0
    %v8805 = vpop.f32.mrb[0].mxu0
    %v8806 = vadd.f32 %v8566, %v8805
    %v8807 = vpop.f32.mrb[0].mxu0
    %8808 = vmatprep.mubr.bf16.mxu0 %v8526
    %8809 = vmatmul.mubr.bf16.gmra.mrb[0].mxu0 %v8525
    %v8810 = vpop.f32.mrb[0].mxu0
    %v8811 = vadd.f32 %v8566, %v8810
    %v8812 = vpop.f32.mrb[0].mxu0
    %v8813 = vpop.f32.mrb[0].mxu0
    %v8814 = vadd.f32 %v8566, %v8813
    %v8815 = vpop.f32.mrb[0].mxu0
    %8816 = vmatprep.mubr.bf16.mxu0 %v8528
    %8817 = vmatmul.mubr.bf16.gmra.mrb[0].mxu0 %v8527
    %v8818 = vpop.f32.mrb[0].mxu0
    %v8819 = vadd.f32 %v8566, %v8818
    %v8820 = vpop.f32.mrb[0].mxu0
    %v8821 = vpop.f32.mrb[0].mxu0
    %v8822 = vadd.f32 %v8566, %v8821
    %v8823 = vpop.f32.mrb[0].mxu0
    %8824 = vdwg.mxu0
    %8825 = vst [vmem:[#allocation2] sm:$0xff] %v8699
    %8826 = vst [vmem:[#allocation2 + $0x8] sm:$0xff] %v8702
    %8827 = vst [vmem:[#allocation2 + $0x10] sm:$0xff] %v8707
    %8828 = vst [vmem:[#allocation2 + $0x18] sm:$0xff] %v8710
    %8829 = vst [vmem:[#allocation2 + $0x20] sm:$0xff] %v8715
    %8830 = vst [vmem:[#allocation2 + $0x28] sm:$0xff] %v8718
    %8831 = vst [vmem:[#allocation2 + $0x30] sm:$0xff] %v8723
    %8832 = vst [vmem:[#allocation2 + $0x38] sm:$0xff] %v8726
    %8833 = vst [vmem:[#allocation2 + $0x40] sm:$0xff] %v8731
    %8834 = vst [vmem:[#allocation2 + $0x48] sm:$0xff] %v8734
    %8835 = vst [vmem:[#allocation2 + $0x50] sm:$0xff] %v8739
    %8836 = vst [vmem:[#allocation2 + $0x58] sm:$0xff] %v8742
    %8837 = vst [vmem:[#allocation2 + $0x60] sm:$0xff] %v8747
    %8838 = vst [vmem:[#allocation2 + $0x68] sm:$0xff] %v8750
    %8839 = vst [vmem:[#allocation2 + $0x70] sm:$0xff] %v8755
    %8840 = vst [vmem:[#allocation2 + $0x78] sm:$0xff] %v8758
    %8841 = vst [vmem:[#allocation2 + $0x80] sm:$0xff] %v8763
    %8842 = vst [vmem:[#allocation2 + $0x88] sm:$0xff] %v8766
    %8843 = vst [vmem:[#allocation2 + $0x90] sm:$0xff] %v8771
    %8844 = vst [vmem:[#allocation2 + $0x98] sm:$0xff] %v8774
    %8845 = vst [vmem:[#allocation2 + $0xa0] sm:$0xff] %v8779
    %8846 = vst [vmem:[#allocation2 + $0xa8] sm:$0xff] %v8782
    %8847 = vst [vmem:[#allocation2 + $0xb0] sm:$0xff] %v8787
    %8848 = vst [vmem:[#allocation2 + $0xb8] sm:$0xff] %v8790
    %8849 = vst [vmem:[#allocation2 + $0xc0] sm:$0xff] %v8795
    %8850 = vst [vmem:[#allocation2 + $0xc8] sm:$0xff] %v8798
    %8851 = vst [vmem:[#allocation2 + $0xd0] sm:$0xff] %v8803
    %8852 = vst [vmem:[#allocation2 + $0xd8] sm:$0xff] %v8806
    %8853 = vst [vmem:[#allocation2 + $0xe0] sm:$0xff] %v8811
    %8854 = vst [vmem:[#allocation2 + $0xe8] sm:$0xff] %v8814
    %8855 = vst [vmem:[#allocation2 + $0xf0] sm:$0xff] %v8819
    %8856 = vst [vmem:[#allocation2 + $0xf8] sm:$0xff] %v8822
    %8857 = vset.pattern.permute.xlu0 2
    %8858 = vperm.xlu0 %8857, %v37
    %v8859 = vpop.permute.xlu0 %8858
    %8861 = vset.pattern.permute.xlu0 2
    %8862 = vperm.xlu0 %8861, %v38
    %v8863 = vpop.permute.xlu0 %8862
    %8865 = vset.pattern.permute.xlu0 2
    %8866 = vperm.xlu0 %8865, %v39
    %v8867 = vpop.permute.xlu0 %8866
    %8869 = vset.pattern.permute.xlu0 2
    %8870 = vperm.xlu0 %8869, %v40
    %v8871 = vpop.permute.xlu0 %8870
    %8873 = vset.pattern.permute.xlu0 2
    %8874 = vperm.xlu0 %8873, %v41
    %v8875 = vpop.permute.xlu0 %8874
    %8877 = vset.pattern.permute.xlu0 2
    %8878 = vperm.xlu0 %8877, %v42
    %v8879 = vpop.permute.xlu0 %8878
    %8881 = vset.pattern.permute.xlu0 2
    %8882 = vperm.xlu0 %8881, %v43
    %v8883 = vpop.permute.xlu0 %8882
    %8885 = vset.pattern.permute.xlu0 2
    %8886 = vperm.xlu0 %8885, %v44
    %v8887 = vpop.permute.xlu0 %8886
    %8889 = vset.pattern.permute.xlu0 2
    %8890 = vperm.xlu0 %8889, %v45
    %v8891 = vpop.permute.xlu0 %8890
    %8893 = vset.pattern.permute.xlu0 2
    %8894 = vperm.xlu0 %8893, %v46
    %v8895 = vpop.permute.xlu0 %8894
    %8897 = vset.pattern.permute.xlu0 2
    %8898 = vperm.xlu0 %8897, %v47
    %v8899 = vpop.permute.xlu0 %8898
    %8901 = vset.pattern.permute.xlu0 2
    %8902 = vperm.xlu0 %8901, %v48
    %v8903 = vpop.permute.xlu0 %8902
    %8905 = vset.pattern.permute.xlu0 2
    %8906 = vperm.xlu0 %8905, %v49
    %v8907 = vpop.permute.xlu0 %8906
    %8909 = vset.pattern.permute.xlu0 2
    %8910 = vperm.xlu0 %8909, %v50
    %v8911 = vpop.permute.xlu0 %8910
    %8913 = vset.pattern.permute.xlu0 2
    %8914 = vperm.xlu0 %8913, %v51
    %v8915 = vpop.permute.xlu0 %8914
    %8917 = vset.pattern.permute.xlu0 2
    %8918 = vperm.xlu0 %8917, %v52
    %v8919 = vpop.permute.xlu0 %8918
    %8921 = vset.pattern.permute.xlu0 2
    %8922 = vperm.xlu0 %8921, %v53
    %v8923 = vpop.permute.xlu0 %8922
    %8925 = vset.pattern.permute.xlu0 2
    %8926 = vperm.xlu0 %8925, %v54
    %v8927 = vpop.permute.xlu0 %8926
    %8929 = vset.pattern.permute.xlu0 2
    %8930 = vperm.xlu0 %8929, %v55
    %v8931 = vpop.permute.xlu0 %8930
    %8933 = vset.pattern.permute.xlu0 2
    %8934 = vperm.xlu0 %8933, %v56
    %v8935 = vpop.permute.xlu0 %8934
    %8937 = vset.pattern.permute.xlu0 2
    %8938 = vperm.xlu0 %8937, %v57
    %v8939 = vpop.permute.xlu0 %8938
    %8941 = vset.pattern.permute.xlu0 2
    %8942 = vperm.xlu0 %8941, %v58
    %v8943 = vpop.permute.xlu0 %8942
    %8945 = vset.pattern.permute.xlu0 2
    %8946 = vperm.xlu0 %8945, %v59
    %v8947 = vpop.permute.xlu0 %8946
    %8949 = vset.pattern.permute.xlu0 2
    %8950 = vperm.xlu0 %8949, %v60
    %v8951 = vpop.permute.xlu0 %8950
    %8953 = vset.pattern.permute.xlu0 2
    %8954 = vperm.xlu0 %8953, %v61
    %v8955 = vpop.permute.xlu0 %8954
    %8957 = vset.pattern.permute.xlu0 2
    %8958 = vperm.xlu0 %8957, %v62
    %v8959 = vpop.permute.xlu0 %8958
    %8961 = vset.pattern.permute.xlu0 2
    %8962 = vperm.xlu0 %8961, %v63
    %v8963 = vpop.permute.xlu0 %8962
    %8965 = vset.pattern.permute.xlu0 2
    %8966 = vperm.xlu0 %8965, %v64
    %v8967 = vpop.permute.xlu0 %8966
    %8969 = vset.pattern.permute.xlu0 2
    %8970 = vperm.xlu0 %8969, %v65
    %v8971 = vpop.permute.xlu0 %8970
    %8973 = vset.pattern.permute.xlu0 2
    %8974 = vperm.xlu0 %8973, %v66
    %v8975 = vpop.permute.xlu0 %8974
    %8977 = vset.pattern.permute.xlu0 2
    %8978 = vperm.xlu0 %8977, %v67
    %v8979 = vpop.permute.xlu0 %8978
    %8981 = vset.pattern.permute.xlu0 2
    %8982 = vperm.xlu0 %8981, %v68
    %v8983 = vpop.permute.xlu0 %8982
    %v8985 = vmul.f32 %v8859, %v549
    %v8986 = vmul.f32 %v8863, %v550
    %v8987 = vmul.f32 %v8867, %v551
    %v8988 = vmul.f32 %v8871, %v552
    %v8989 = vmul.f32 %v8875, %v553
    %v8990 = vmul.f32 %v8879, %v554
    %v8991 = vmul.f32 %v8883, %v555
    %v8992 = vmul.f32 %v8887, %v556
    %v8993 = vmul.f32 %v8891, %v557
    %v8994 = vmul.f32 %v8895, %v558
    %v8995 = vmul.f32 %v8899, %v559
    %v8996 = vmul.f32 %v8903, %v560
    %v8997 = vmul.f32 %v8907, %v561
    %v8998 = vmul.f32 %v8911, %v562
    %v8999 = vmul.f32 %v8915, %v563
    %v9000 = vmul.f32 %v8919, %v564
    %v9001 = vmul.f32 %v8923, %v565
    %v9002 = vmul.f32 %v8927, %v566
    %v9003 = vmul.f32 %v8931, %v567
    %v9004 = vmul.f32 %v8935, %v568
    %v9005 = vmul.f32 %v8939, %v569
    %v9006 = vmul.f32 %v8943, %v570
    %v9007 = vmul.f32 %v8947, %v571
    %v9008 = vmul.f32 %v8951, %v572
    %v9009 = vmul.f32 %v8955, %v573
    %v9010 = vmul.f32 %v8959, %v574
    %v9011 = vmul.f32 %v8963, %v575
    %v9012 = vmul.f32 %v8967, %v576
    %v9013 = vmul.f32 %v8971, %v577
    %v9014 = vmul.f32 %v8975, %v578
    %v9015 = vmul.f32 %v8979, %v579
    %v9016 = vmul.f32 %v8983, %v580
    %9017 = vset.pattern.permute.xlu0 3
    %9018 = vperm.xlu0 %9017, %v37
    %v9019 = vpop.permute.xlu0 %9018
    %9021 = vset.pattern.permute.xlu0 3
    %9022 = vperm.xlu0 %9021, %v38
    %v9023 = vpop.permute.xlu0 %9022
    %9025 = vset.pattern.permute.xlu0 3
    %9026 = vperm.xlu0 %9025, %v39
    %v9027 = vpop.permute.xlu0 %9026
    %9029 = vset.pattern.permute.xlu0 3
    %9030 = vperm.xlu0 %9029, %v40
    %v9031 = vpop.permute.xlu0 %9030
    %9033 = vset.pattern.permute.xlu0 3
    %9034 = vperm.xlu0 %9033, %v41
    %v9035 = vpop.permute.xlu0 %9034
    %9037 = vset.pattern.permute.xlu0 3
    %9038 = vperm.xlu0 %9037, %v42
    %v9039 = vpop.permute.xlu0 %9038
    %9041 = vset.pattern.permute.xlu0 3
    %9042 = vperm.xlu0 %9041, %v43
    %v9043 = vpop.permute.xlu0 %9042
    %9045 = vset.pattern.permute.xlu0 3
    %9046 = vperm.xlu0 %9045, %v44
    %v9047 = vpop.permute.xlu0 %9046
    %9049 = vset.pattern.permute.xlu0 3
    %9050 = vperm.xlu0 %9049, %v45
    %v9051 = vpop.permute.xlu0 %9050
    %9053 = vset.pattern.permute.xlu0 3
    %9054 = vperm.xlu0 %9053, %v46
    %v9055 = vpop.permute.xlu0 %9054
    %9057 = vset.pattern.permute.xlu0 3
    %9058 = vperm.xlu0 %9057, %v47
    %v9059 = vpop.permute.xlu0 %9058
    %9061 = vset.pattern.permute.xlu0 3
    %9062 = vperm.xlu0 %9061, %v48
    %v9063 = vpop.permute.xlu0 %9062
    %9065 = vset.pattern.permute.xlu0 3
    %9066 = vperm.xlu0 %9065, %v49
    %v9067 = vpop.permute.xlu0 %9066
    %9069 = vset.pattern.permute.xlu0 3
    %9070 = vperm.xlu0 %9069, %v50
    %v9071 = vpop.permute.xlu0 %9070
    %9073 = vset.pattern.permute.xlu0 3
    %9074 = vperm.xlu0 %9073, %v51
    %v9075 = vpop.permute.xlu0 %9074
    %9077 = vset.pattern.permute.xlu0 3
    %9078 = vperm.xlu0 %9077, %v52
    %v9079 = vpop.permute.xlu0 %9078
    %9081 = vset.pattern.permute.xlu0 3
    %9082 = vperm.xlu0 %9081, %v53
    %v9083 = vpop.permute.xlu0 %9082
    %9085 = vset.pattern.permute.xlu0 3
    %9086 = vperm.xlu0 %9085, %v54
    %v9087 = vpop.permute.xlu0 %9086
    %9089 = vset.pattern.permute.xlu0 3
    %9090 = vperm.xlu0 %9089, %v55
    %v9091 = vpop.permute.xlu0 %9090
    %9093 = vset.pattern.permute.xlu0 3
    %9094 = vperm.xlu0 %9093, %v56
    %v9095 = vpop.permute.xlu0 %9094
    %9097 = vset.pattern.permute.xlu0 3
    %9098 = vperm.xlu0 %9097, %v57
    %v9099 = vpop.permute.xlu0 %9098
    %9101 = vset.pattern.permute.xlu0 3
    %9102 = vperm.xlu0 %9101, %v58
    %v9103 = vpop.permute.xlu0 %9102
    %9105 = vset.pattern.permute.xlu0 3
    %9106 = vperm.xlu0 %9105, %v59
    %v9107 = vpop.permute.xlu0 %9106
    %9109 = vset.pattern.permute.xlu0 3
    %9110 = vperm.xlu0 %9109, %v60
    %v9111 = vpop.permute.xlu0 %9110
    %9113 = vset.pattern.permute.xlu0 3
    %9114 = vperm.xlu0 %9113, %v61
    %v9115 = vpop.permute.xlu0 %9114
    %9117 = vset.pattern.permute.xlu0 3
    %9118 = vperm.xlu0 %9117, %v62
    %v9119 = vpop.permute.xlu0 %9118
    %9121 = vset.pattern.permute.xlu0 3
    %9122 = vperm.xlu0 %9121, %v63
    %v9123 = vpop.permute.xlu0 %9122
    %9125 = vset.pattern.permute.xlu0 3
    %9126 = vperm.xlu0 %9125, %v64
    %v9127 = vpop.permute.xlu0 %9126
    %9129 = vset.pattern.permute.xlu0 3
    %9130 = vperm.xlu0 %9129, %v65
    %v9131 = vpop.permute.xlu0 %9130
    %9133 = vset.pattern.permute.xlu0 3
    %9134 = vperm.xlu0 %9133, %v66
    %v9135 = vpop.permute.xlu0 %9134
    %9137 = vset.pattern.permute.xlu0 3
    %9138 = vperm.xlu0 %9137, %v67
    %v9139 = vpop.permute.xlu0 %9138
    %9141 = vset.pattern.permute.xlu0 3
    %9142 = vperm.xlu0 %9141, %v68
    %v9143 = vpop.permute.xlu0 %9142
    %v9145 = vmul.f32 %v9019, %v8699
    %v9146 = vmul.f32 %v9023, %v8702
    %v9147 = vmul.f32 %v9027, %v8707
    %v9148 = vmul.f32 %v9031, %v8710
    %v9149 = vmul.f32 %v9035, %v8715
    %v9150 = vmul.f32 %v9039, %v8718
    %v9151 = vmul.f32 %v9043, %v8723
    %v9152 = vmul.f32 %v9047, %v8726
    %v9153 = vmul.f32 %v9051, %v8731
    %v9154 = vmul.f32 %v9055, %v8734
    %v9155 = vmul.f32 %v9059, %v8739
    %v9156 = vmul.f32 %v9063, %v8742
    %v9157 = vmul.f32 %v9067, %v8747
    %v9158 = vmul.f32 %v9071, %v8750
    %v9159 = vmul.f32 %v9075, %v8755
    %v9160 = vmul.f32 %v9079, %v8758
    %v9161 = vmul.f32 %v9083, %v8763
    %v9162 = vmul.f32 %v9087, %v8766
    %v9163 = vmul.f32 %v9091, %v8771
    %v9164 = vmul.f32 %v9095, %v8774
    %v9165 = vmul.f32 %v9099, %v8779
    %v9166 = vmul.f32 %v9103, %v8782
    %v9167 = vmul.f32 %v9107, %v8787
    %v9168 = vmul.f32 %v9111, %v8790
    %v9169 = vmul.f32 %v9115, %v8795
    %v9170 = vmul.f32 %v9119, %v8798
    %v9171 = vmul.f32 %v9123, %v8803
    %v9172 = vmul.f32 %v9127, %v8806
    %v9173 = vmul.f32 %v9131, %v8811
    %v9174 = vmul.f32 %v9135, %v8814
    %v9175 = vmul.f32 %v9139, %v8819
    %v9176 = vmul.f32 %v9143, %v8822
    %v9177 = vsub.f32 %v8985, %v9145
    %v9178 = vsub.f32 %v8986, %v9146
    %v9179 = vsub.f32 %v8987, %v9147
    %v9180 = vsub.f32 %v8988, %v9148
    %v9181 = vsub.f32 %v8989, %v9149
    %v9182 = vsub.f32 %v8990, %v9150
    %v9183 = vsub.f32 %v8991, %v9151
    %v9184 = vsub.f32 %v8992, %v9152
    %v9185 = vsub.f32 %v8993, %v9153
    %v9186 = vsub.f32 %v8994, %v9154
    %v9187 = vsub.f32 %v8995, %v9155
    %v9188 = vsub.f32 %v8996, %v9156
    %v9189 = vsub.f32 %v8997, %v9157
    %v9190 = vsub.f32 %v8998, %v9158
    %v9191 = vsub.f32 %v8999, %v9159
    %v9192 = vsub.f32 %v9000, %v9160
    %v9193 = vsub.f32 %v9001, %v9161
    %v9194 = vsub.f32 %v9002, %v9162
    %v9195 = vsub.f32 %v9003, %v9163
    %v9196 = vsub.f32 %v9004, %v9164
    %v9197 = vsub.f32 %v9005, %v9165
    %v9198 = vsub.f32 %v9006, %v9166
    %v9199 = vsub.f32 %v9007, %v9167
    %v9200 = vsub.f32 %v9008, %v9168
    %v9201 = vsub.f32 %v9009, %v9169
    %v9202 = vsub.f32 %v9010, %v9170
    %v9203 = vsub.f32 %v9011, %v9171
    %v9204 = vsub.f32 %v9012, %v9172
    %v9205 = vsub.f32 %v9013, %v9173
    %v9206 = vsub.f32 %v9014, %v9174
    %v9207 = vsub.f32 %v9015, %v9175
    %v9208 = vsub.f32 %v9016, %v9176
    %v9209 = vmax.f32 %v9177, -1.0
    %v9210 = vmax.f32 %v9178, -1.0
    %v9211 = vmax.f32 %v9179, -1.0
    %v9212 = vmax.f32 %v9180, -1.0
    %v9213 = vmax.f32 %v9181, -1.0
    %v9214 = vmax.f32 %v9182, -1.0
    %v9215 = vmax.f32 %v9183, -1.0
    %v9216 = vmax.f32 %v9184, -1.0
    %v9217 = vmax.f32 %v9185, -1.0
    %v9218 = vmax.f32 %v9186, -1.0
    %v9219 = vmax.f32 %v9187, -1.0
    %v9220 = vmax.f32 %v9188, -1.0
    %v9221 = vmax.f32 %v9189, -1.0
    %v9222 = vmax.f32 %v9190, -1.0
    %v9223 = vmax.f32 %v9191, -1.0
    %v9224 = vmax.f32 %v9192, -1.0
    %v9225 = vmax.f32 %v9193, -1.0
    %v9226 = vmax.f32 %v9194, -1.0
    %v9227 = vmax.f32 %v9195, -1.0
    %v9228 = vmax.f32 %v9196, -1.0
    %v9229 = vmax.f32 %v9197, -1.0
    %v9230 = vmax.f32 %v9198, -1.0
    %v9231 = vmax.f32 %v9199, -1.0
    %v9232 = vmax.f32 %v9200, -1.0
    %v9233 = vmax.f32 %v9201, -1.0
    %v9234 = vmax.f32 %v9202, -1.0
    %v9235 = vmax.f32 %v9203, -1.0
    %v9236 = vmax.f32 %v9204, -1.0
    %v9237 = vmax.f32 %v9205, -1.0
    %v9238 = vmax.f32 %v9206, -1.0
    %v9239 = vmax.f32 %v9207, -1.0
    %v9240 = vmax.f32 %v9208, -1.0
    %v9241 = vmin.f32 %v9209, 1.0
    %v9242 = vmin.f32 %v9210, 1.0
    %v9243 = vmin.f32 %v9211, 1.0
    %v9244 = vmin.f32 %v9212, 1.0
    %v9245 = vmin.f32 %v9213, 1.0
    %v9246 = vmin.f32 %v9214, 1.0
    %v9247 = vmin.f32 %v9215, 1.0
    %v9248 = vmin.f32 %v9216, 1.0
    %v9249 = vmin.f32 %v9217, 1.0
    %v9250 = vmin.f32 %v9218, 1.0
    %v9251 = vmin.f32 %v9219, 1.0
    %v9252 = vmin.f32 %v9220, 1.0
    %v9253 = vmin.f32 %v9221, 1.0
    %v9254 = vmin.f32 %v9222, 1.0
    %v9255 = vmin.f32 %v9223, 1.0
    %v9256 = vmin.f32 %v9224, 1.0
    %v9257 = vmin.f32 %v9225, 1.0
    %v9258 = vmin.f32 %v9226, 1.0
    %v9259 = vmin.f32 %v9227, 1.0
    %v9260 = vmin.f32 %v9228, 1.0
    %v9261 = vmin.f32 %v9229, 1.0
    %v9262 = vmin.f32 %v9230, 1.0
    %v9263 = vmin.f32 %v9231, 1.0
    %v9264 = vmin.f32 %v9232, 1.0
    %v9265 = vmin.f32 %v9233, 1.0
    %v9266 = vmin.f32 %v9234, 1.0
    %v9267 = vmin.f32 %v9235, 1.0
    %v9268 = vmin.f32 %v9236, 1.0
    %v9269 = vmin.f32 %v9237, 1.0
    %v9270 = vmin.f32 %v9238, 1.0
    %v9271 = vmin.f32 %v9239, 1.0
    %v9272 = vmin.f32 %v9240, 1.0
    %9273 = vst [vmem:[#allocation4] sm:$0xff] %v9241
    %9274 = vst [vmem:[#allocation4 + $0x8] sm:$0xff] %v9242
    %9275 = vst [vmem:[#allocation4 + $0x10] sm:$0xff] %v9243
    %9276 = vst [vmem:[#allocation4 + $0x18] sm:$0xff] %v9244
    %9277 = vst [vmem:[#allocation4 + $0x20] sm:$0xff] %v9245
    %9278 = vst [vmem:[#allocation4 + $0x28] sm:$0xff] %v9246
    %9279 = vst [vmem:[#allocation4 + $0x30] sm:$0xff] %v9247
    %9280 = vst [vmem:[#allocation4 + $0x38] sm:$0xff] %v9248
    %9281 = vst [vmem:[#allocation4 + $0x40] sm:$0xff] %v9249
    %9282 = vst [vmem:[#allocation4 + $0x48] sm:$0xff] %v9250
    %9283 = vst [vmem:[#allocation4 + $0x50] sm:$0xff] %v9251
    %9284 = vst [vmem:[#allocation4 + $0x58] sm:$0xff] %v9252
    %9285 = vst [vmem:[#allocation4 + $0x60] sm:$0xff] %v9253
    %9286 = vst [vmem:[#allocation4 + $0x68] sm:$0xff] %v9254
    %9287 = vst [vmem:[#allocation4 + $0x70] sm:$0xff] %v9255
    %9288 = vst [vmem:[#allocation4 + $0x78] sm:$0xff] %v9256
    %9289 = vst [vmem:[#allocation4 + $0x80] sm:$0xff] %v9257
    %9290 = vst [vmem:[#allocation4 + $0x88] sm:$0xff] %v9258
    %9291 = vst [vmem:[#allocation4 + $0x90] sm:$0xff] %v9259
    %9292 = vst [vmem:[#allocation4 + $0x98] sm:$0xff] %v9260
    %9293 = vst [vmem:[#allocation4 + $0xa0] sm:$0xff] %v9261
    %9294 = vst [vmem:[#allocation4 + $0xa8] sm:$0xff] %v9262
    %9295 = vst [vmem:[#allocation4 + $0xb0] sm:$0xff] %v9263
    %9296 = vst [vmem:[#allocation4 + $0xb8] sm:$0xff] %v9264
    %9297 = vst [vmem:[#allocation4 + $0xc0] sm:$0xff] %v9265
    %9298 = vst [vmem:[#allocation4 + $0xc8] sm:$0xff] %v9266
    %9299 = vst [vmem:[#allocation4 + $0xd0] sm:$0xff] %v9267
    %9300 = vst [vmem:[#allocation4 + $0xd8] sm:$0xff] %v9268
    %9301 = vst [vmem:[#allocation4 + $0xe0] sm:$0xff] %v9269
    %9302 = vst [vmem:[#allocation4 + $0xe8] sm:$0xff] %v9270
    %9303 = vst [vmem:[#allocation4 + $0xf0] sm:$0xff] %v9271
    %9304 = vst [vmem:[#allocation4 + $0xf8] sm:$0xff] %v9272
    // Predicated region
    $region38: #{diffusion_e2e_forward.1} parent=1 // pred_check
      _
    $region39: #{diffusion_e2e_forward.1} parent=1 // pred_check_branch
      %9306 = sbr.rel (0) target = $region41
    $region40: #{diffusion_e2e_forward.1} parent=1 // pred_region
      %s9308 = ssub.s32 4096, 4096
      %9309 = vsyncadd [#allocation3], %s9308
      %s9310 = sshll.u32 [#allocation2], 4
      %s9311 = int_to_ptr.vmem [resolvable:$true] %s9310
      %9316 = dma.vmem_to_hbm [thread:$0]  %s9311, 4096, %s9, [#allocation3], 128, 128, 8
    $region41: #{diffusion_e2e_forward.1} parent=1 // pred_fallthru
      _
    // Predicated region
    $region42: #{diffusion_e2e_forward.1} parent=1 // pred_check
      _
    $region43: #{diffusion_e2e_forward.1} parent=1 // pred_check_branch
      %9318 = sbr.rel (0) target = $region45
    $region44: #{diffusion_e2e_forward.1} parent=1 // pred_region
      %s9320 = ssub.s32 4096, 4096
      %9321 = vsyncadd [#allocation5], %s9320
      %s9322 = sshll.u32 [#allocation4], 4
      %s9323 = int_to_ptr.vmem [resolvable:$true] %s9322
      %9328 = dma.vmem_to_hbm [thread:$0]  %s9323, 4096, %s10, [#allocation5], 128, 128, 8
    $region45: #{diffusion_e2e_forward.1} parent=1 // pred_fallthru
      _
    // Predicated region
    $region46: #{diffusion_e2e_forward.1} parent=1 // pred_check
      _
    $region47: #{diffusion_e2e_forward.1} parent=1 // pred_check_branch
      %9330 = sbr.rel (0) target = $region49
    $region48: #{diffusion_e2e_forward.1} parent=1 // pred_region
      %9331 = dma.done [#allocation3], 4096
    $region49: #{diffusion_e2e_forward.1} parent=1 // pred_fallthru
      _
    // Predicated region
    $region50: #{diffusion_e2e_forward.1} parent=1 // pred_check
      _
    $region51: #{diffusion_e2e_forward.1} parent=1 // pred_check_branch
      %9333 = sbr.rel (0) target = $region53
    $region52: #{diffusion_e2e_forward.1} parent=1 // pred_region
      %9334 = dma.done [#allocation5], 4096
    $region53: #{diffusion_e2e_forward.1} parent=1 // pred_fallthru
      _
    %9335 = vsyncpa [#allocation3], 1
    %9336 = vsyncpa [#allocation5], 1

</llo_original>
